<compile_context>
chip_gen: v6e
topology: v6e:2x2x1
jax: 0.10.0
libtpu: 0.0.40
codegen_flags: <defaults>
</compile_context>

<pallas_src>
import functools

import jax
import jax.numpy as jnp
from jax.experimental import pallas as pl
from jax.experimental.pallas import tpu as pltpu

_LANES = 128


def _round_up(x, m):
    return ((x + m - 1) // m) * m


def _clip(g, norm=10.0):
    # Exact semantics of MetaLearnerRegression.clip_grad: values strictly
    # inside (-norm, norm) pass through, values beyond saturate, and values
    # EXACTLY equal to +/-norm map to 0.  Compare+select form (fewer dependent
    # VALU ops on the serial K-step chain than the mask-cast-multiply-add).
    sat = jnp.clip(g, -norm, norm)
    return jnp.where(jnp.abs(g) == norm, 0.0, sat)


# --------------------------------------------------------------------------
# Pallas kernel: whole inner-loop MAML adaptation + both query losses.
# One grid step == one block of TB tasks, lane-packed (task == lane axis).
# --------------------------------------------------------------------------
def meta_kernel(traj_ref, rand_ref, param_ref, loss_ref, *,
                update_lr, n_steps, in_dim, n_support, n_query):
    """
    traj_ref : (1, K*N, D+1, TB)  support data, [x | y] packed, task-minor
    rand_ref : (1, M,   D+1, TB)  query   data, [x | y] packed, task-minor
    param_ref: (D+3, H, TB)       slow params broadcast over the task lanes
                                  rows: [w1 (D rows) | b1 | w2 | b2]
    loss_ref : (1, 2, TB)         row 0 = first_loss, row 1 = final_meta_loss
    """
    D = in_dim
    N = n_support
    two_over_n = 2.0 / float(n_support)   # d(MSE)/d(pred) scale (support set)
    inv_m = 1.0 / float(n_query)          # MSE scale (query set)
    lr = float(update_lr)

    # ---- slow (meta) parameters, already broadcast over the task lanes ----
    w1_slow = [param_ref[d:d + 1, :, :] for d in range(D)]   # D x (1, H, TB)
    b1_slow = param_ref[D:D + 1, :, :]                       # (1, H, TB)
    w2_slow = param_ref[D + 1:D + 2, :, :]                   # (1, H, TB)
    b2_slow = param_ref[D + 2:D + 3, 0:1, :]                 # (1, 1, TB)
    slow = (w1_slow, b1_slow, w2_slow, b2_slow)

    def forward(p, xy):
        """xy: (S, D+1, TB) -> pred (S, 1, TB), h (S, H, TB)."""
        w1l, b1, w2, b2 = p
        # first layer as D broadcast multiply-adds: no tiny-MXU round trips
        z1 = b1
        for d in range(D):
            z1 = z1 + xy[:, d:d + 1, :] * w1l[d]       # (S,1,TB)*(1,H,TB)
        h = jnp.maximum(z1, 0.0)                       # (S, H, TB)
        # width-1 output layer: VPU multiply + sublane reduce
        pred = jnp.sum(h * w2, axis=1, keepdims=True) + b2   # (S, 1, TB)
        return pred, h

    def inner_step(p, k):
        w1l, b1, w2, b2 = p
        xy = traj_ref[0, k * N:(k + 1) * N]            # (N, D+1, TB)
        y = xy[:, D:D + 1, :]                          # (N, 1, TB)
        pred, h = forward(p, xy)
        # manual MSE backprop, everything lane-packed over tasks
        dpred = two_over_n * (pred - y)                # (N, 1, TB)
        dw2 = jnp.sum(dpred * h, axis=0, keepdims=True)     # (1, H, TB)
        db2 = jnp.sum(dpred, axis=0, keepdims=True)         # (1, 1, TB)
        # h > 0  <=>  z1 > 0: reuse h as the ReLU mask (one fewer live slab)
        dz1 = jnp.where(h > 0.0, dpred * w2, 0.0)           # (N, H, TB)
        db1 = jnp.sum(dz1, axis=0, keepdims=True)           # (1, H, TB)
        new_w1 = []
        for d in range(D):
            dw1_d = jnp.sum(xy[:, d:d + 1, :] * dz1, axis=0, keepdims=True)
            new_w1.append(w1l[d] - lr * _clip(dw1_d))
        return (new_w1,
                b1 - lr * _clip(db1),
                w2 - lr * _clip(dw2),
                b2 - lr * _clip(db2))

    def query_loss(p, rand):
        pred, _ = forward(p, rand)                     # (M, 1, TB)
        yq = rand[:, D:D + 1, :]                       # (M, 1, TB)
        d = pred - yq
        return jnp.sum(d * d, axis=0) * inv_m          # (1, TB)

    rand = rand_ref[0]                                 # (M, D+1, TB)

    # ---- inner update 0: gradients w.r.t. the slow (meta) weights ---------
    fast = inner_step(slow, 0)

    # ---- first_loss: query set with the ORIGINAL weights (torch.no_grad) --
    first_loss = query_loss(slow, rand)

    # ---- remaining inner-loop adaptation steps (K small, static unroll) ---
    # TODO(synk): switch to lax.fori_loop with the fast weights as carry if
    # the inner-loop length is ever configured large (>~16).
    for k in range(1, n_steps):
        fast = inner_step(fast, k)

    # ---- final meta loss on the query set with the fast weights -----------
    final_loss = query_loss(fast, rand)

    # single lane-row store per block of TB tasks
    loss_ref[0] = jnp.concatenate([first_loss, final_loss], axis=0)  # (2, TB)


# --------------------------------------------------------------------------
# wrappers
# --------------------------------------------------------------------------
def _choose_task_tile(b):
    """Tasks per grid step: lane-pack up to 128 tasks, keep blocks balanced."""
    b8 = _round_up(max(int(b), 1), 8)
    n_blocks = -(-b8 // _LANES)
    tb = _round_up(-(-b8 // n_blocks), 8)
    return min(tb, _LANES)


def meta_learner_forward_batched(x_traj, y_traj, x_rand, y_rand, params,
                                 update_lr, task_tile=None):
    """Batched over independent tasks.

    x_traj (B,K,N,D), y_traj (B,K,N,1), x_rand (B,1,M,D), y_rand (B,1,M,1).
    The (slow) parameters are shared by all tasks.
    Returns (first_loss[B], final_loss[B]).
    """
    w1, b1, w2, b2 = params
    B, K, N, D = x_traj.shape
    M = x_rand.shape[2]
    H = w1.shape[1]

    TB = _choose_task_tile(B) if task_tile is None else int(task_tile)
    G = -(-B // TB)
    Bp = G * TB
    # NOTE(v7x): for large meta-batches pick B (or task_tile) so the grid
    # length G is even -- the parallel grid axis shards blocks across the two
    # TensorCores.

    f32 = jnp.float32
    # pack [x | y] per example, pad the task batch, then move the task index
    # to the minor (lane) axis so every VPU op processes TB tasks per vreg
    traj = jnp.concatenate([x_traj.astype(f32), y_traj.astype(f32)], axis=-1)
    rand = jnp.concatenate([x_rand[:, 0].astype(f32),
                            y_rand[:, 0].astype(f32)], axis=-1)
    if Bp != B:
        traj = jnp.pad(traj, ((0, Bp - B), (0, 0), (0, 0), (0, 0)))
        rand = jnp.pad(rand, ((0, Bp - B), (0, 0), (0, 0)))
    traj = traj.reshape(G, TB, K * N, D + 1).transpose(0, 2, 3, 1)  # (G,K*N,D+1,TB)
    rand = rand.reshape(G, TB, M, D + 1).transpose(0, 2, 3, 1)      # (G,M,D+1,TB)

    # single parameter slab, broadcast over the task lanes (shared by tasks)
    slab2d = jnp.concatenate(
        [w1.astype(f32),
         b1.astype(f32).reshape(1, H),
         w2.astype(f32).reshape(1, H),
         jnp.broadcast_to(b2.astype(f32).reshape(1, 1), (1, H))],
        axis=0)                                                      # (D+3, H)
    slab = jnp.broadcast_to(slab2d[:, :, None], (D + 3, H, TB))

    kernel = functools.partial(
        meta_kernel, update_lr=float(update_lr), n_steps=int(K),
        in_dim=int(D), n_support=int(N), n_query=int(M))

    losses = pl.pallas_call(
        kernel,
        out_shape=jax.ShapeDtypeStruct((G, 2, TB), jnp.float32),
        grid=(G,),
        in_specs=[
            pl.BlockSpec((1, K * N, D + 1, TB), lambda g: (g, 0, 0, 0)),
            pl.BlockSpec((1, M, D + 1, TB), lambda g: (g, 0, 0, 0)),
            pl.BlockSpec((D + 3, H, TB), lambda g: (0, 0, 0)),
        ],
        out_specs=pl.BlockSpec((1, 2, TB), lambda g: (g, 0, 0)),
        compiler_params=pltpu.CompilerParams(
            dimension_semantics=("parallel",)),
    )(traj, rand, slab)

    losses = losses.transpose(0, 2, 1).reshape(Bp, 2)[:B]
    return losses[:, 0], losses[:, 1]


def meta_learner_forward(x_traj, y_traj, x_rand, y_rand, params, update_lr):
    """Single-task API matching MetaLearnerRegression.forward()."""
    first, final = meta_learner_forward_batched(
        x_traj[None], y_traj[None], x_rand[None], y_rand[None], params,
        update_lr)
    return first[0], final[0]


# --------------------------------------------------------------------------
# pure-JAX reference (uses autodiff) for verification
# --------------------------------------------------------------------------
def _ref_forward(x_traj, y_traj, x_rand, y_rand, params, update_lr):
    def predict(p, x):
        w1, b1, w2, b2 = p
        h = jnp.maximum(x @ w1 + b1, 0.0)
        return h @ w2 + b2

    def loss_fn(p, x, y):
        return jnp.mean((predict(p, x) - y) ** 2)

    fast = params
    first_loss = None
    for k in range(x_traj.shape[0]):
        g = jax.grad(loss_fn)(fast, x_traj[k], y_traj[k])
        g = tuple(_clip(gi) for gi in g)
        fast = tuple(p - update_lr * gi for p, gi in zip(fast, g))
        if k == 0:
            first_loss = loss_fn(params, x_rand[0], y_rand[0])
    final_loss = loss_fn(fast, x_rand[0], y_rand[0])
    return first_loss, final_loss


# --------------------------------------------------------------------------
if __name__ == "__main__":
    K, N, M, D, H = 5, 8, 16, 4, 32     # traj steps, support, query, in, hidden
    update_lr = 0.01

    key = jax.random.PRNGKey(0)
    keys = jax.random.split(key, 10)

    # deterministic synthetic parameters (shapes implied by the regression MLP)
    w1 = (jax.random.normal(keys[0], (D, H), jnp.float32) / jnp.sqrt(D)).astype(jnp.float32)
    b1 = jnp.zeros((1, H), jnp.float32)
    w2 = (jax.random.normal(keys[1], (H, 1), jnp.float32) / jnp.sqrt(H)).astype(jnp.float32)
    b2 = jnp.zeros((1, 1), jnp.float32)
    params = (w1, b1, w2, b2)

    ref_fn = jax.jit(functools.partial(_ref_forward, update_lr=update_lr))

    # ---- single task (matches the PyTorch module interface) --------------
    x_traj = jax.random.normal(keys[2], (K, N, D), jnp.float32)
    y_traj = jnp.sin(jnp.sum(x_traj, axis=-1, keepdims=True)) \
        + 0.1 * jax.random.normal(keys[3], (K, N, 1), jnp.float32)
    x_rand = jax.random.normal(keys[4], (1, M, D), jnp.float32)
    y_rand = jnp.sin(jnp.sum(x_rand, axis=-1, keepdims=True)) \
        + 0.1 * jax.random.normal(keys[5], (1, M, 1), jnp.float32)

    fwd = jax.jit(functools.partial(meta_learner_forward, update_lr=update_lr))
    first_loss, final_loss = fwd(x_traj, y_traj, x_rand, y_rand, params)
    jax.block_until_ready((first_loss, final_loss))

    ref_first, ref_final = ref_fn(x_traj, y_traj, x_rand, y_rand, params)
    assert jnp.allclose(first_loss, ref_first, rtol=1e-3, atol=1e-4), \
        (first_loss, ref_first)
    assert jnp.allclose(final_loss, ref_final, rtol=1e-3, atol=1e-4), \
        (final_loss, ref_final)

    # ---- batched tasks: lane-packed blocks, parallel grid over blocks -----
    B = 10
    xb_traj = jax.random.normal(keys[6], (B, K, N, D), jnp.float32)
    yb_traj = jnp.sin(jnp.sum(xb_traj, axis=-1, keepdims=True)) \
        + 0.1 * jax.random.normal(keys[7], (B, K, N, 1), jnp.float32)
    xb_rand = jax.random.normal(keys[8], (B, 1, M, D), jnp.float32)
    yb_rand = jnp.sin(jnp.sum(xb_rand, axis=-1, keepdims=True)) \
        + 0.1 * jax.random.normal(keys[9], (B, 1, M, 1), jnp.float32)

    # default tiling (one block of 16 lanes) and a forced 2-block grid with
    # task padding, to exercise both code paths
    fwd_b = jax.jit(functools.partial(meta_learner_forward_batched,
                                      update_lr=update_lr))
    fwd_b2 = jax.jit(functools.partial(meta_learner_forward_batched,
                                       update_lr=update_lr, task_tile=8))
    first_b, final_b = fwd_b(xb_traj, yb_traj, xb_rand, yb_rand, params)
    first_b2, final_b2 = fwd_b2(xb_traj, yb_traj, xb_rand, yb_rand, params)
    jax.block_until_ready((first_b, final_b, first_b2, final_b2))

    for t in range(B):
        rf, rl = ref_fn(xb_traj[t], yb_traj[t], xb_rand[t], yb_rand[t], params)
        assert jnp.allclose(first_b[t], rf, rtol=1e-3, atol=1e-4), \
            (t, first_b[t], rf)
        assert jnp.allclose(final_b[t], rl, rtol=1e-3, atol=1e-4), \
            (t, final_b[t], rl)
        assert jnp.allclose(first_b2[t], rf, rtol=1e-3, atol=1e-4), \
            (t, first_b2[t], rf)
        assert jnp.allclose(final_b2[t], rl, rtol=1e-3, atol=1e-4), \
            (t, final_b2[t], rl)

    print("KERNEL_OK")
</pallas_src>

<mosaic_0001>
module attributes {stable_mosaic.version = 11 : i64} {
  func.func @meta_kernel(%arg0: i32, %arg1: memref<1x40x5x8xf32, #tpu.memory_space<vmem>>, %arg2: memref<1x16x5x8xf32, #tpu.memory_space<vmem>>, %arg3: memref<7x32x8xf32, #tpu.memory_space<vmem>>, %arg4: memref<1x2x8xf32, #tpu.memory_space<vmem>>) attributes {dimension_semantics = [#tpu.dimension_semantics<parallel>], iteration_bounds = array<i64: 1>, scalar_prefetch = 0 : i64, scratch_operands = 0 : i64, tpu.core_type = #tpu.core_type<tc>, window_params = [{transform_indices = @transform_0, window_bounds = array<i64: 1, 40, 5, 8>}, {transform_indices = @transform_1, window_bounds = array<i64: 1, 16, 5, 8>}, {pipeline_mode = #tpu.pipeline_mode<synchronous>, transform_indices = @transform_2, window_bounds = array<i64: 7, 32, 8>}, {transform_indices = @transform_3, window_bounds = array<i64: 1, 2, 8>}]} {
    %c0 = arith.constant 0 : index
    %c0_0 = arith.constant 0 : index
    %c0_1 = arith.constant 0 : index
    %0 = vector.load %arg3[%c0, %c0_0, %c0_1] : memref<7x32x8xf32, #tpu.memory_space<vmem>>, vector<1x32x8xf32>
    %c1 = arith.constant 1 : index
    %c0_2 = arith.constant 0 : index
    %c0_3 = arith.constant 0 : index
    %1 = vector.load %arg3[%c1, %c0_2, %c0_3] : memref<7x32x8xf32, #tpu.memory_space<vmem>>, vector<1x32x8xf32>
    %c2 = arith.constant 2 : index
    %c0_4 = arith.constant 0 : index
    %c0_5 = arith.constant 0 : index
    %2 = vector.load %arg3[%c2, %c0_4, %c0_5] : memref<7x32x8xf32, #tpu.memory_space<vmem>>, vector<1x32x8xf32>
    %c3 = arith.constant 3 : index
    %c0_6 = arith.constant 0 : index
    %c0_7 = arith.constant 0 : index
    %3 = vector.load %arg3[%c3, %c0_6, %c0_7] : memref<7x32x8xf32, #tpu.memory_space<vmem>>, vector<1x32x8xf32>
    %c4 = arith.constant 4 : index
    %c0_8 = arith.constant 0 : index
    %c0_9 = arith.constant 0 : index
    %4 = vector.load %arg3[%c4, %c0_8, %c0_9] : memref<7x32x8xf32, #tpu.memory_space<vmem>>, vector<1x32x8xf32>
    %c5 = arith.constant 5 : index
    %c0_10 = arith.constant 0 : index
    %c0_11 = arith.constant 0 : index
    %5 = vector.load %arg3[%c5, %c0_10, %c0_11] : memref<7x32x8xf32, #tpu.memory_space<vmem>>, vector<1x32x8xf32>
    %c6 = arith.constant 6 : index
    %c0_12 = arith.constant 0 : index
    %c0_13 = arith.constant 0 : index
    %6 = vector.load %arg3[%c6, %c0_12, %c0_13] : memref<7x32x8xf32, #tpu.memory_space<vmem>>, vector<1x1x8xf32>
    %c0_14 = arith.constant 0 : index
    %c0_15 = arith.constant 0 : index
    %c0_16 = arith.constant 0 : index
    %c0_17 = arith.constant 0 : index
    %7 = vector.load %arg2[%c0_14, %c0_15, %c0_16, %c0_17] : memref<1x16x5x8xf32, #tpu.memory_space<vmem>>, vector<1x16x5x8xf32>
    %8 = vector.shape_cast %7 : vector<1x16x5x8xf32> to vector<16x5x8xf32>
    %c0_18 = arith.constant 0 : index
    %c0_19 = arith.constant 0 : index
    %c0_20 = arith.constant 0 : index
    %c0_21 = arith.constant 0 : index
    %9 = vector.load %arg1[%c0_18, %c0_19, %c0_20, %c0_21] : memref<1x40x5x8xf32, #tpu.memory_space<vmem>>, vector<1x8x5x8xf32>
    %10 = vector.shape_cast %9 : vector<1x8x5x8xf32> to vector<8x5x8xf32>
    %11 = vector.extract_strided_slice %10 {offsets = [0, 4, 0], sizes = [8, 1, 8], strides = [1, 1, 1]} : vector<8x5x8xf32> to vector<8x1x8xf32>
    %12 = vector.extract_strided_slice %10 {offsets = [0, 0, 0], sizes = [8, 1, 8], strides = [1, 1, 1]} : vector<8x5x8xf32> to vector<8x1x8xf32>
    %13 = vector.broadcast %12 : vector<8x1x8xf32> to vector<8x32x8xf32>
    %14 = vector.broadcast %0 : vector<1x32x8xf32> to vector<8x32x8xf32>
    %15 = arith.mulf %13, %14 : vector<8x32x8xf32>
    %16 = vector.broadcast %4 : vector<1x32x8xf32> to vector<8x32x8xf32>
    %17 = arith.addf %16, %15 : vector<8x32x8xf32>
    %18 = vector.extract_strided_slice %10 {offsets = [0, 1, 0], sizes = [8, 1, 8], strides = [1, 1, 1]} : vector<8x5x8xf32> to vector<8x1x8xf32>
    %19 = vector.broadcast %18 : vector<8x1x8xf32> to vector<8x32x8xf32>
    %20 = vector.broadcast %1 : vector<1x32x8xf32> to vector<8x32x8xf32>
    %21 = arith.mulf %19, %20 : vector<8x32x8xf32>
    %22 = arith.addf %17, %21 : vector<8x32x8xf32>
    %23 = vector.extract_strided_slice %10 {offsets = [0, 2, 0], sizes = [8, 1, 8], strides = [1, 1, 1]} : vector<8x5x8xf32> to vector<8x1x8xf32>
    %24 = vector.broadcast %23 : vector<8x1x8xf32> to vector<8x32x8xf32>
    %25 = vector.broadcast %2 : vector<1x32x8xf32> to vector<8x32x8xf32>
    %26 = arith.mulf %24, %25 : vector<8x32x8xf32>
    %27 = arith.addf %22, %26 : vector<8x32x8xf32>
    %28 = vector.extract_strided_slice %10 {offsets = [0, 3, 0], sizes = [8, 1, 8], strides = [1, 1, 1]} : vector<8x5x8xf32> to vector<8x1x8xf32>
    %29 = vector.broadcast %28 : vector<8x1x8xf32> to vector<8x32x8xf32>
    %30 = vector.broadcast %3 : vector<1x32x8xf32> to vector<8x32x8xf32>
    %31 = arith.mulf %29, %30 : vector<8x32x8xf32>
    %32 = arith.addf %27, %31 : vector<8x32x8xf32>
    %cst = arith.constant 0.000000e+00 : f32
    %33 = vector.broadcast %cst : f32 to vector<8x32x8xf32>
    %34 = arith.maximumf %32, %33 : vector<8x32x8xf32>
    %35 = vector.broadcast %5 : vector<1x32x8xf32> to vector<8x32x8xf32>
    %36 = arith.mulf %34, %35 : vector<8x32x8xf32>
    %cst_22 = arith.constant dense<0.000000e+00> : vector<8x8xf32>
    %37 = vector.multi_reduction <add>, %36, %cst_22 [1] : vector<8x32x8xf32> to vector<8x8xf32>
    %38 = vector.shape_cast %37 : vector<8x8xf32> to vector<8x1x8xf32>
    %39 = vector.broadcast %6 : vector<1x1x8xf32> to vector<8x1x8xf32>
    %40 = arith.addf %38, %39 : vector<8x1x8xf32>
    %41 = arith.subf %40, %11 : vector<8x1x8xf32>
    %cst_23 = arith.constant 2.500000e-01 : f32
    %42 = vector.broadcast %cst_23 : f32 to vector<8x1x8xf32>
    %43 = arith.mulf %42, %41 : vector<8x1x8xf32>
    %44 = vector.broadcast %43 : vector<8x1x8xf32> to vector<8x32x8xf32>
    %45 = arith.mulf %44, %34 : vector<8x32x8xf32>
    %cst_24 = arith.constant dense<0.000000e+00> : vector<32x8xf32>
    %46 = vector.multi_reduction <add>, %45, %cst_24 [0] : vector<8x32x8xf32> to vector<32x8xf32>
    %47 = vector.shape_cast %46 : vector<32x8xf32> to vector<1x32x8xf32>
    %cst_25 = arith.constant dense<0.000000e+00> : vector<1x8xf32>
    %48 = vector.multi_reduction <add>, %43, %cst_25 [0] : vector<8x1x8xf32> to vector<1x8xf32>
    %49 = vector.shape_cast %48 : vector<1x8xf32> to vector<1x1x8xf32>
    %cst_26 = arith.constant 0.000000e+00 : f32
    %50 = vector.broadcast %cst_26 : f32 to vector<8x32x8xf32>
    %51 = arith.cmpf ogt, %34, %50 : vector<8x32x8xf32>
    %52 = vector.broadcast %43 : vector<8x1x8xf32> to vector<8x32x8xf32>
    %53 = vector.broadcast %5 : vector<1x32x8xf32> to vector<8x32x8xf32>
    %54 = arith.mulf %52, %53 : vector<8x32x8xf32>
    %cst_27 = arith.constant 0.000000e+00 : f32
    %55 = vector.broadcast %cst_27 : f32 to vector<8x32x8xf32>
    %56 = arith.select %51, %54, %55 : vector<8x32x8xi1>, vector<8x32x8xf32>
    %cst_28 = arith.constant dense<0.000000e+00> : vector<32x8xf32>
    %57 = vector.multi_reduction <add>, %56, %cst_28 [0] : vector<8x32x8xf32> to vector<32x8xf32>
    %58 = vector.shape_cast %57 : vector<32x8xf32> to vector<1x32x8xf32>
    %59 = vector.extract_strided_slice %10 {offsets = [0, 0, 0], sizes = [8, 1, 8], strides = [1, 1, 1]} : vector<8x5x8xf32> to vector<8x1x8xf32>
    %60 = vector.broadcast %59 : vector<8x1x8xf32> to vector<8x32x8xf32>
    %61 = arith.mulf %60, %56 : vector<8x32x8xf32>
    %cst_29 = arith.constant dense<0.000000e+00> : vector<32x8xf32>
    %62 = vector.multi_reduction <add>, %61, %cst_29 [0] : vector<8x32x8xf32> to vector<32x8xf32>
    %63 = vector.shape_cast %62 : vector<32x8xf32> to vector<1x32x8xf32>
    %cst_30 = arith.constant -1.000000e+01 : f32
    %cst_31 = arith.constant 1.000000e+01 : f32
    %64 = vector.broadcast %cst_30 : f32 to vector<1x32x8xf32>
    %65 = arith.maximumf %64, %63 : vector<1x32x8xf32>
    %66 = vector.broadcast %cst_31 : f32 to vector<1x32x8xf32>
    %67 = arith.minimumf %66, %65 : vector<1x32x8xf32>
    %68 = math.absf %63 : vector<1x32x8xf32>
    %cst_32 = arith.constant 1.000000e+01 : f32
    %69 = vector.broadcast %cst_32 : f32 to vector<1x32x8xf32>
    %70 = arith.cmpf oeq, %68, %69 : vector<1x32x8xf32>
    %cst_33 = arith.constant 0.000000e+00 : f32
    %71 = vector.broadcast %cst_33 : f32 to vector<1x32x8xf32>
    %72 = arith.select %70, %71, %67 : vector<1x32x8xi1>, vector<1x32x8xf32>
    %cst_34 = arith.constant 0.00999999977 : f32
    %73 = vector.broadcast %cst_34 : f32 to vector<1x32x8xf32>
    %74 = arith.mulf %73, %72 : vector<1x32x8xf32>
    %75 = arith.subf %0, %74 : vector<1x32x8xf32>
    %76 = vector.extract_strided_slice %10 {offsets = [0, 1, 0], sizes = [8, 1, 8], strides = [1, 1, 1]} : vector<8x5x8xf32> to vector<8x1x8xf32>
    %77 = vector.broadcast %76 : vector<8x1x8xf32> to vector<8x32x8xf32>
    %78 = arith.mulf %77, %56 : vector<8x32x8xf32>
    %cst_35 = arith.constant dense<0.000000e+00> : vector<32x8xf32>
    %79 = vector.multi_reduction <add>, %78, %cst_35 [0] : vector<8x32x8xf32> to vector<32x8xf32>
    %80 = vector.shape_cast %79 : vector<32x8xf32> to vector<1x32x8xf32>
    %cst_36 = arith.constant -1.000000e+01 : f32
    %cst_37 = arith.constant 1.000000e+01 : f32
    %81 = vector.broadcast %cst_36 : f32 to vector<1x32x8xf32>
    %82 = arith.maximumf %81, %80 : vector<1x32x8xf32>
    %83 = vector.broadcast %cst_37 : f32 to vector<1x32x8xf32>
    %84 = arith.minimumf %83, %82 : vector<1x32x8xf32>
    %85 = math.absf %80 : vector<1x32x8xf32>
    %cst_38 = arith.constant 1.000000e+01 : f32
    %86 = vector.broadcast %cst_38 : f32 to vector<1x32x8xf32>
    %87 = arith.cmpf oeq, %85, %86 : vector<1x32x8xf32>
    %cst_39 = arith.constant 0.000000e+00 : f32
    %88 = vector.broadcast %cst_39 : f32 to vector<1x32x8xf32>
    %89 = arith.select %87, %88, %84 : vector<1x32x8xi1>, vector<1x32x8xf32>
    %cst_40 = arith.constant 0.00999999977 : f32
    %90 = vector.broadcast %cst_40 : f32 to vector<1x32x8xf32>
    %91 = arith.mulf %90, %89 : vector<1x32x8xf32>
    %92 = arith.subf %1, %91 : vector<1x32x8xf32>
    %93 = vector.extract_strided_slice %10 {offsets = [0, 2, 0], sizes = [8, 1, 8], strides = [1, 1, 1]} : vector<8x5x8xf32> to vector<8x1x8xf32>
    %94 = vector.broadcast %93 : vector<8x1x8xf32> to vector<8x32x8xf32>
    %95 = arith.mulf %94, %56 : vector<8x32x8xf32>
    %cst_41 = arith.constant dense<0.000000e+00> : vector<32x8xf32>
    %96 = vector.multi_reduction <add>, %95, %cst_41 [0] : vector<8x32x8xf32> to vector<32x8xf32>
    %97 = vector.shape_cast %96 : vector<32x8xf32> to vector<1x32x8xf32>
    %cst_42 = arith.constant -1.000000e+01 : f32
    %cst_43 = arith.constant 1.000000e+01 : f32
    %98 = vector.broadcast %cst_42 : f32 to vector<1x32x8xf32>
    %99 = arith.maximumf %98, %97 : vector<1x32x8xf32>
    %100 = vector.broadcast %cst_43 : f32 to vector<1x32x8xf32>
    %101 = arith.minimumf %100, %99 : vector<1x32x8xf32>
    %102 = math.absf %97 : vector<1x32x8xf32>
    %cst_44 = arith.constant 1.000000e+01 : f32
    %103 = vector.broadcast %cst_44 : f32 to vector<1x32x8xf32>
    %104 = arith.cmpf oeq, %102, %103 : vector<1x32x8xf32>
    %cst_45 = arith.constant 0.000000e+00 : f32
    %105 = vector.broadcast %cst_45 : f32 to vector<1x32x8xf32>
    %106 = arith.select %104, %105, %101 : vector<1x32x8xi1>, vector<1x32x8xf32>
    %cst_46 = arith.constant 0.00999999977 : f32
    %107 = vector.broadcast %cst_46 : f32 to vector<1x32x8xf32>
    %108 = arith.mulf %107, %106 : vector<1x32x8xf32>
    %109 = arith.subf %2, %108 : vector<1x32x8xf32>
    %110 = vector.extract_strided_slice %10 {offsets = [0, 3, 0], sizes = [8, 1, 8], strides = [1, 1, 1]} : vector<8x5x8xf32> to vector<8x1x8xf32>
    %111 = vector.broadcast %110 : vector<8x1x8xf32> to vector<8x32x8xf32>
    %112 = arith.mulf %111, %56 : vector<8x32x8xf32>
    %cst_47 = arith.constant dense<0.000000e+00> : vector<32x8xf32>
    %113 = vector.multi_reduction <add>, %112, %cst_47 [0] : vector<8x32x8xf32> to vector<32x8xf32>
    %114 = vector.shape_cast %113 : vector<32x8xf32> to vector<1x32x8xf32>
    %cst_48 = arith.constant -1.000000e+01 : f32
    %cst_49 = arith.constant 1.000000e+01 : f32
    %115 = vector.broadcast %cst_48 : f32 to vector<1x32x8xf32>
    %116 = arith.maximumf %115, %114 : vector<1x32x8xf32>
    %117 = vector.broadcast %cst_49 : f32 to vector<1x32x8xf32>
    %118 = arith.minimumf %117, %116 : vector<1x32x8xf32>
    %119 = math.absf %114 : vector<1x32x8xf32>
    %cst_50 = arith.constant 1.000000e+01 : f32
    %120 = vector.broadcast %cst_50 : f32 to vector<1x32x8xf32>
    %121 = arith.cmpf oeq, %119, %120 : vector<1x32x8xf32>
    %cst_51 = arith.constant 0.000000e+00 : f32
    %122 = vector.broadcast %cst_51 : f32 to vector<1x32x8xf32>
    %123 = arith.select %121, %122, %118 : vector<1x32x8xi1>, vector<1x32x8xf32>
    %cst_52 = arith.constant 0.00999999977 : f32
    %124 = vector.broadcast %cst_52 : f32 to vector<1x32x8xf32>
    %125 = arith.mulf %124, %123 : vector<1x32x8xf32>
    %126 = arith.subf %3, %125 : vector<1x32x8xf32>
    %cst_53 = arith.constant -1.000000e+01 : f32
    %cst_54 = arith.constant 1.000000e+01 : f32
    %127 = vector.broadcast %cst_53 : f32 to vector<1x32x8xf32>
    %128 = arith.maximumf %127, %58 : vector<1x32x8xf32>
    %129 = vector.broadcast %cst_54 : f32 to vector<1x32x8xf32>
    %130 = arith.minimumf %129, %128 : vector<1x32x8xf32>
    %131 = math.absf %58 : vector<1x32x8xf32>
    %cst_55 = arith.constant 1.000000e+01 : f32
    %132 = vector.broadcast %cst_55 : f32 to vector<1x32x8xf32>
    %133 = arith.cmpf oeq, %131, %132 : vector<1x32x8xf32>
    %cst_56 = arith.constant 0.000000e+00 : f32
    %134 = vector.broadcast %cst_56 : f32 to vector<1x32x8xf32>
    %135 = arith.select %133, %134, %130 : vector<1x32x8xi1>, vector<1x32x8xf32>
    %cst_57 = arith.constant 0.00999999977 : f32
    %136 = vector.broadcast %cst_57 : f32 to vector<1x32x8xf32>
    %137 = arith.mulf %136, %135 : vector<1x32x8xf32>
    %138 = arith.subf %4, %137 : vector<1x32x8xf32>
    %cst_58 = arith.constant -1.000000e+01 : f32
    %cst_59 = arith.constant 1.000000e+01 : f32
    %139 = vector.broadcast %cst_58 : f32 to vector<1x32x8xf32>
    %140 = arith.maximumf %139, %47 : vector<1x32x8xf32>
    %141 = vector.broadcast %cst_59 : f32 to vector<1x32x8xf32>
    %142 = arith.minimumf %141, %140 : vector<1x32x8xf32>
    %143 = math.absf %47 : vector<1x32x8xf32>
    %cst_60 = arith.constant 1.000000e+01 : f32
    %144 = vector.broadcast %cst_60 : f32 to vector<1x32x8xf32>
    %145 = arith.cmpf oeq, %143, %144 : vector<1x32x8xf32>
    %cst_61 = arith.constant 0.000000e+00 : f32
    %146 = vector.broadcast %cst_61 : f32 to vector<1x32x8xf32>
    %147 = arith.select %145, %146, %142 : vector<1x32x8xi1>, vector<1x32x8xf32>
    %cst_62 = arith.constant 0.00999999977 : f32
    %148 = vector.broadcast %cst_62 : f32 to vector<1x32x8xf32>
    %149 = arith.mulf %148, %147 : vector<1x32x8xf32>
    %150 = arith.subf %5, %149 : vector<1x32x8xf32>
    %cst_63 = arith.constant -1.000000e+01 : f32
    %cst_64 = arith.constant 1.000000e+01 : f32
    %151 = vector.broadcast %cst_63 : f32 to vector<1x1x8xf32>
    %152 = arith.maximumf %151, %49 : vector<1x1x8xf32>
    %153 = vector.broadcast %cst_64 : f32 to vector<1x1x8xf32>
    %154 = arith.minimumf %153, %152 : vector<1x1x8xf32>
    %155 = math.absf %49 : vector<1x1x8xf32>
    %cst_65 = arith.constant 1.000000e+01 : f32
    %156 = vector.broadcast %cst_65 : f32 to vector<1x1x8xf32>
    %157 = arith.cmpf oeq, %155, %156 : vector<1x1x8xf32>
    %cst_66 = arith.constant 0.000000e+00 : f32
    %158 = vector.broadcast %cst_66 : f32 to vector<1x1x8xf32>
    %159 = arith.select %157, %158, %154 : vector<1x1x8xi1>, vector<1x1x8xf32>
    %cst_67 = arith.constant 0.00999999977 : f32
    %160 = vector.broadcast %cst_67 : f32 to vector<1x1x8xf32>
    %161 = arith.mulf %160, %159 : vector<1x1x8xf32>
    %162 = arith.subf %6, %161 : vector<1x1x8xf32>
    %163 = vector.extract_strided_slice %8 {offsets = [0, 0, 0], sizes = [16, 1, 8], strides = [1, 1, 1]} : vector<16x5x8xf32> to vector<16x1x8xf32>
    %164 = vector.broadcast %163 : vector<16x1x8xf32> to vector<16x32x8xf32>
    %165 = vector.broadcast %0 : vector<1x32x8xf32> to vector<16x32x8xf32>
    %166 = arith.mulf %164, %165 : vector<16x32x8xf32>
    %167 = vector.broadcast %4 : vector<1x32x8xf32> to vector<16x32x8xf32>
    %168 = arith.addf %167, %166 : vector<16x32x8xf32>
    %169 = vector.extract_strided_slice %8 {offsets = [0, 1, 0], sizes = [16, 1, 8], strides = [1, 1, 1]} : vector<16x5x8xf32> to vector<16x1x8xf32>
    %170 = vector.broadcast %169 : vector<16x1x8xf32> to vector<16x32x8xf32>
    %171 = vector.broadcast %1 : vector<1x32x8xf32> to vector<16x32x8xf32>
    %172 = arith.mulf %170, %171 : vector<16x32x8xf32>
    %173 = arith.addf %168, %172 : vector<16x32x8xf32>
    %174 = vector.extract_strided_slice %8 {offsets = [0, 2, 0], sizes = [16, 1, 8], strides = [1, 1, 1]} : vector<16x5x8xf32> to vector<16x1x8xf32>
    %175 = vector.broadcast %174 : vector<16x1x8xf32> to vector<16x32x8xf32>
    %176 = vector.broadcast %2 : vector<1x32x8xf32> to vector<16x32x8xf32>
    %177 = arith.mulf %175, %176 : vector<16x32x8xf32>
    %178 = arith.addf %173, %177 : vector<16x32x8xf32>
    %179 = vector.extract_strided_slice %8 {offsets = [0, 3, 0], sizes = [16, 1, 8], strides = [1, 1, 1]} : vector<16x5x8xf32> to vector<16x1x8xf32>
    %180 = vector.broadcast %179 : vector<16x1x8xf32> to vector<16x32x8xf32>
    %181 = vector.broadcast %3 : vector<1x32x8xf32> to vector<16x32x8xf32>
    %182 = arith.mulf %180, %181 : vector<16x32x8xf32>
    %183 = arith.addf %178, %182 : vector<16x32x8xf32>
    %cst_68 = arith.constant 0.000000e+00 : f32
    %184 = vector.broadcast %cst_68 : f32 to vector<16x32x8xf32>
    %185 = arith.maximumf %183, %184 : vector<16x32x8xf32>
    %186 = vector.broadcast %5 : vector<1x32x8xf32> to vector<16x32x8xf32>
    %187 = arith.mulf %185, %186 : vector<16x32x8xf32>
    %cst_69 = arith.constant dense<0.000000e+00> : vector<16x8xf32>
    %188 = vector.multi_reduction <add>, %187, %cst_69 [1] : vector<16x32x8xf32> to vector<16x8xf32>
    %189 = vector.shape_cast %188 : vector<16x8xf32> to vector<16x1x8xf32>
    %190 = vector.broadcast %6 : vector<1x1x8xf32> to vector<16x1x8xf32>
    %191 = arith.addf %189, %190 : vector<16x1x8xf32>
    %192 = vector.extract_strided_slice %8 {offsets = [0, 4, 0], sizes = [16, 1, 8], strides = [1, 1, 1]} : vector<16x5x8xf32> to vector<16x1x8xf32>
    %193 = arith.subf %191, %192 : vector<16x1x8xf32>
    %194 = arith.mulf %193, %193 : vector<16x1x8xf32>
    %cst_70 = arith.constant dense<0.000000e+00> : vector<1x8xf32>
    %195 = vector.multi_reduction <add>, %194, %cst_70 [0] : vector<16x1x8xf32> to vector<1x8xf32>
    %cst_71 = arith.constant 6.250000e-02 : f32
    %196 = vector.broadcast %cst_71 : f32 to vector<1x8xf32>
    %197 = arith.mulf %195, %196 : vector<1x8xf32>
    %c0_72 = arith.constant 0 : index
    %c8 = arith.constant 8 : index
    %c0_73 = arith.constant 0 : index
    %c0_74 = arith.constant 0 : index
    %198 = vector.load %arg1[%c0_72, %c8, %c0_73, %c0_74] : memref<1x40x5x8xf32, #tpu.memory_space<vmem>>, vector<1x8x5x8xf32>
    %199 = vector.shape_cast %198 : vector<1x8x5x8xf32> to vector<8x5x8xf32>
    %200 = vector.extract_strided_slice %199 {offsets = [0, 4, 0], sizes = [8, 1, 8], strides = [1, 1, 1]} : vector<8x5x8xf32> to vector<8x1x8xf32>
    %201 = vector.extract_strided_slice %199 {offsets = [0, 0, 0], sizes = [8, 1, 8], strides = [1, 1, 1]} : vector<8x5x8xf32> to vector<8x1x8xf32>
    %202 = vector.broadcast %201 : vector<8x1x8xf32> to vector<8x32x8xf32>
    %203 = vector.broadcast %75 : vector<1x32x8xf32> to vector<8x32x8xf32>
    %204 = arith.mulf %202, %203 : vector<8x32x8xf32>
    %205 = vector.broadcast %138 : vector<1x32x8xf32> to vector<8x32x8xf32>
    %206 = arith.addf %205, %204 : vector<8x32x8xf32>
    %207 = vector.extract_strided_slice %199 {offsets = [0, 1, 0], sizes = [8, 1, 8], strides = [1, 1, 1]} : vector<8x5x8xf32> to vector<8x1x8xf32>
    %208 = vector.broadcast %207 : vector<8x1x8xf32> to vector<8x32x8xf32>
    %209 = vector.broadcast %92 : vector<1x32x8xf32> to vector<8x32x8xf32>
    %210 = arith.mulf %208, %209 : vector<8x32x8xf32>
    %211 = arith.addf %206, %210 : vector<8x32x8xf32>
    %212 = vector.extract_strided_slice %199 {offsets = [0, 2, 0], sizes = [8, 1, 8], strides = [1, 1, 1]} : vector<8x5x8xf32> to vector<8x1x8xf32>
    %213 = vector.broadcast %212 : vector<8x1x8xf32> to vector<8x32x8xf32>
    %214 = vector.broadcast %109 : vector<1x32x8xf32> to vector<8x32x8xf32>
    %215 = arith.mulf %213, %214 : vector<8x32x8xf32>
    %216 = arith.addf %211, %215 : vector<8x32x8xf32>
    %217 = vector.extract_strided_slice %199 {offsets = [0, 3, 0], sizes = [8, 1, 8], strides = [1, 1, 1]} : vector<8x5x8xf32> to vector<8x1x8xf32>
    %218 = vector.broadcast %217 : vector<8x1x8xf32> to vector<8x32x8xf32>
    %219 = vector.broadcast %126 : vector<1x32x8xf32> to vector<8x32x8xf32>
    %220 = arith.mulf %218, %219 : vector<8x32x8xf32>
    %221 = arith.addf %216, %220 : vector<8x32x8xf32>
    %cst_75 = arith.constant 0.000000e+00 : f32
    %222 = vector.broadcast %cst_75 : f32 to vector<8x32x8xf32>
    %223 = arith.maximumf %221, %222 : vector<8x32x8xf32>
    %224 = vector.broadcast %150 : vector<1x32x8xf32> to vector<8x32x8xf32>
    %225 = arith.mulf %223, %224 : vector<8x32x8xf32>
    %cst_76 = arith.constant dense<0.000000e+00> : vector<8x8xf32>
    %226 = vector.multi_reduction <add>, %225, %cst_76 [1] : vector<8x32x8xf32> to vector<8x8xf32>
    %227 = vector.shape_cast %226 : vector<8x8xf32> to vector<8x1x8xf32>
    %228 = vector.broadcast %162 : vector<1x1x8xf32> to vector<8x1x8xf32>
    %229 = arith.addf %227, %228 : vector<8x1x8xf32>
    %230 = arith.subf %229, %200 : vector<8x1x8xf32>
    %cst_77 = arith.constant 2.500000e-01 : f32
    %231 = vector.broadcast %cst_77 : f32 to vector<8x1x8xf32>
    %232 = arith.mulf %231, %230 : vector<8x1x8xf32>
    %233 = vector.broadcast %232 : vector<8x1x8xf32> to vector<8x32x8xf32>
    %234 = arith.mulf %233, %223 : vector<8x32x8xf32>
    %cst_78 = arith.constant dense<0.000000e+00> : vector<32x8xf32>
    %235 = vector.multi_reduction <add>, %234, %cst_78 [0] : vector<8x32x8xf32> to vector<32x8xf32>
    %236 = vector.shape_cast %235 : vector<32x8xf32> to vector<1x32x8xf32>
    %cst_79 = arith.constant dense<0.000000e+00> : vector<1x8xf32>
    %237 = vector.multi_reduction <add>, %232, %cst_79 [0] : vector<8x1x8xf32> to vector<1x8xf32>
    %238 = vector.shape_cast %237 : vector<1x8xf32> to vector<1x1x8xf32>
    %cst_80 = arith.constant 0.000000e+00 : f32
    %239 = vector.broadcast %cst_80 : f32 to vector<8x32x8xf32>
    %240 = arith.cmpf ogt, %223, %239 : vector<8x32x8xf32>
    %241 = vector.broadcast %232 : vector<8x1x8xf32> to vector<8x32x8xf32>
    %242 = vector.broadcast %150 : vector<1x32x8xf32> to vector<8x32x8xf32>
    %243 = arith.mulf %241, %242 : vector<8x32x8xf32>
    %cst_81 = arith.constant 0.000000e+00 : f32
    %244 = vector.broadcast %cst_81 : f32 to vector<8x32x8xf32>
    %245 = arith.select %240, %243, %244 : vector<8x32x8xi1>, vector<8x32x8xf32>
    %cst_82 = arith.constant dense<0.000000e+00> : vector<32x8xf32>
    %246 = vector.multi_reduction <add>, %245, %cst_82 [0] : vector<8x32x8xf32> to vector<32x8xf32>
    %247 = vector.shape_cast %246 : vector<32x8xf32> to vector<1x32x8xf32>
    %248 = vector.extract_strided_slice %199 {offsets = [0, 0, 0], sizes = [8, 1, 8], strides = [1, 1, 1]} : vector<8x5x8xf32> to vector<8x1x8xf32>
    %249 = vector.broadcast %248 : vector<8x1x8xf32> to vector<8x32x8xf32>
    %250 = arith.mulf %249, %245 : vector<8x32x8xf32>
    %cst_83 = arith.constant dense<0.000000e+00> : vector<32x8xf32>
    %251 = vector.multi_reduction <add>, %250, %cst_83 [0] : vector<8x32x8xf32> to vector<32x8xf32>
    %252 = vector.shape_cast %251 : vector<32x8xf32> to vector<1x32x8xf32>
    %cst_84 = arith.constant -1.000000e+01 : f32
    %cst_85 = arith.constant 1.000000e+01 : f32
    %253 = vector.broadcast %cst_84 : f32 to vector<1x32x8xf32>
    %254 = arith.maximumf %253, %252 : vector<1x32x8xf32>
    %255 = vector.broadcast %cst_85 : f32 to vector<1x32x8xf32>
    %256 = arith.minimumf %255, %254 : vector<1x32x8xf32>
    %257 = math.absf %252 : vector<1x32x8xf32>
    %cst_86 = arith.constant 1.000000e+01 : f32
    %258 = vector.broadcast %cst_86 : f32 to vector<1x32x8xf32>
    %259 = arith.cmpf oeq, %257, %258 : vector<1x32x8xf32>
    %cst_87 = arith.constant 0.000000e+00 : f32
    %260 = vector.broadcast %cst_87 : f32 to vector<1x32x8xf32>
    %261 = arith.select %259, %260, %256 : vector<1x32x8xi1>, vector<1x32x8xf32>
    %cst_88 = arith.constant 0.00999999977 : f32
    %262 = vector.broadcast %cst_88 : f32 to vector<1x32x8xf32>
    %263 = arith.mulf %262, %261 : vector<1x32x8xf32>
    %264 = arith.subf %75, %263 : vector<1x32x8xf32>
    %265 = vector.extract_strided_slice %199 {offsets = [0, 1, 0], sizes = [8, 1, 8], strides = [1, 1, 1]} : vector<8x5x8xf32> to vector<8x1x8xf32>
    %266 = vector.broadcast %265 : vector<8x1x8xf32> to vector<8x32x8xf32>
    %267 = arith.mulf %266, %245 : vector<8x32x8xf32>
    %cst_89 = arith.constant dense<0.000000e+00> : vector<32x8xf32>
    %268 = vector.multi_reduction <add>, %267, %cst_89 [0] : vector<8x32x8xf32> to vector<32x8xf32>
    %269 = vector.shape_cast %268 : vector<32x8xf32> to vector<1x32x8xf32>
    %cst_90 = arith.constant -1.000000e+01 : f32
    %cst_91 = arith.constant 1.000000e+01 : f32
    %270 = vector.broadcast %cst_90 : f32 to vector<1x32x8xf32>
    %271 = arith.maximumf %270, %269 : vector<1x32x8xf32>
    %272 = vector.broadcast %cst_91 : f32 to vector<1x32x8xf32>
    %273 = arith.minimumf %272, %271 : vector<1x32x8xf32>
    %274 = math.absf %269 : vector<1x32x8xf32>
    %cst_92 = arith.constant 1.000000e+01 : f32
    %275 = vector.broadcast %cst_92 : f32 to vector<1x32x8xf32>
    %276 = arith.cmpf oeq, %274, %275 : vector<1x32x8xf32>
    %cst_93 = arith.constant 0.000000e+00 : f32
    %277 = vector.broadcast %cst_93 : f32 to vector<1x32x8xf32>
    %278 = arith.select %276, %277, %273 : vector<1x32x8xi1>, vector<1x32x8xf32>
    %cst_94 = arith.constant 0.00999999977 : f32
    %279 = vector.broadcast %cst_94 : f32 to vector<1x32x8xf32>
    %280 = arith.mulf %279, %278 : vector<1x32x8xf32>
    %281 = arith.subf %92, %280 : vector<1x32x8xf32>
    %282 = vector.extract_strided_slice %199 {offsets = [0, 2, 0], sizes = [8, 1, 8], strides = [1, 1, 1]} : vector<8x5x8xf32> to vector<8x1x8xf32>
    %283 = vector.broadcast %282 : vector<8x1x8xf32> to vector<8x32x8xf32>
    %284 = arith.mulf %283, %245 : vector<8x32x8xf32>
    %cst_95 = arith.constant dense<0.000000e+00> : vector<32x8xf32>
    %285 = vector.multi_reduction <add>, %284, %cst_95 [0] : vector<8x32x8xf32> to vector<32x8xf32>
    %286 = vector.shape_cast %285 : vector<32x8xf32> to vector<1x32x8xf32>
    %cst_96 = arith.constant -1.000000e+01 : f32
    %cst_97 = arith.constant 1.000000e+01 : f32
    %287 = vector.broadcast %cst_96 : f32 to vector<1x32x8xf32>
    %288 = arith.maximumf %287, %286 : vector<1x32x8xf32>
    %289 = vector.broadcast %cst_97 : f32 to vector<1x32x8xf32>
    %290 = arith.minimumf %289, %288 : vector<1x32x8xf32>
    %291 = math.absf %286 : vector<1x32x8xf32>
    %cst_98 = arith.constant 1.000000e+01 : f32
    %292 = vector.broadcast %cst_98 : f32 to vector<1x32x8xf32>
    %293 = arith.cmpf oeq, %291, %292 : vector<1x32x8xf32>
    %cst_99 = arith.constant 0.000000e+00 : f32
    %294 = vector.broadcast %cst_99 : f32 to vector<1x32x8xf32>
    %295 = arith.select %293, %294, %290 : vector<1x32x8xi1>, vector<1x32x8xf32>
    %cst_100 = arith.constant 0.00999999977 : f32
    %296 = vector.broadcast %cst_100 : f32 to vector<1x32x8xf32>
    %297 = arith.mulf %296, %295 : vector<1x32x8xf32>
    %298 = arith.subf %109, %297 : vector<1x32x8xf32>
    %299 = vector.extract_strided_slice %199 {offsets = [0, 3, 0], sizes = [8, 1, 8], strides = [1, 1, 1]} : vector<8x5x8xf32> to vector<8x1x8xf32>
    %300 = vector.broadcast %299 : vector<8x1x8xf32> to vector<8x32x8xf32>
    %301 = arith.mulf %300, %245 : vector<8x32x8xf32>
    %cst_101 = arith.constant dense<0.000000e+00> : vector<32x8xf32>
    %302 = vector.multi_reduction <add>, %301, %cst_101 [0] : vector<8x32x8xf32> to vector<32x8xf32>
    %303 = vector.shape_cast %302 : vector<32x8xf32> to vector<1x32x8xf32>
    %cst_102 = arith.constant -1.000000e+01 : f32
    %cst_103 = arith.constant 1.000000e+01 : f32
    %304 = vector.broadcast %cst_102 : f32 to vector<1x32x8xf32>
    %305 = arith.maximumf %304, %303 : vector<1x32x8xf32>
    %306 = vector.broadcast %cst_103 : f32 to vector<1x32x8xf32>
    %307 = arith.minimumf %306, %305 : vector<1x32x8xf32>
    %308 = math.absf %303 : vector<1x32x8xf32>
    %cst_104 = arith.constant 1.000000e+01 : f32
    %309 = vector.broadcast %cst_104 : f32 to vector<1x32x8xf32>
    %310 = arith.cmpf oeq, %308, %309 : vector<1x32x8xf32>
    %cst_105 = arith.constant 0.000000e+00 : f32
    %311 = vector.broadcast %cst_105 : f32 to vector<1x32x8xf32>
    %312 = arith.select %310, %311, %307 : vector<1x32x8xi1>, vector<1x32x8xf32>
    %cst_106 = arith.constant 0.00999999977 : f32
    %313 = vector.broadcast %cst_106 : f32 to vector<1x32x8xf32>
    %314 = arith.mulf %313, %312 : vector<1x32x8xf32>
    %315 = arith.subf %126, %314 : vector<1x32x8xf32>
    %cst_107 = arith.constant -1.000000e+01 : f32
    %cst_108 = arith.constant 1.000000e+01 : f32
    %316 = vector.broadcast %cst_107 : f32 to vector<1x32x8xf32>
    %317 = arith.maximumf %316, %247 : vector<1x32x8xf32>
    %318 = vector.broadcast %cst_108 : f32 to vector<1x32x8xf32>
    %319 = arith.minimumf %318, %317 : vector<1x32x8xf32>
    %320 = math.absf %247 : vector<1x32x8xf32>
    %cst_109 = arith.constant 1.000000e+01 : f32
    %321 = vector.broadcast %cst_109 : f32 to vector<1x32x8xf32>
    %322 = arith.cmpf oeq, %320, %321 : vector<1x32x8xf32>
    %cst_110 = arith.constant 0.000000e+00 : f32
    %323 = vector.broadcast %cst_110 : f32 to vector<1x32x8xf32>
    %324 = arith.select %322, %323, %319 : vector<1x32x8xi1>, vector<1x32x8xf32>
    %cst_111 = arith.constant 0.00999999977 : f32
    %325 = vector.broadcast %cst_111 : f32 to vector<1x32x8xf32>
    %326 = arith.mulf %325, %324 : vector<1x32x8xf32>
    %327 = arith.subf %138, %326 : vector<1x32x8xf32>
    %cst_112 = arith.constant -1.000000e+01 : f32
    %cst_113 = arith.constant 1.000000e+01 : f32
    %328 = vector.broadcast %cst_112 : f32 to vector<1x32x8xf32>
    %329 = arith.maximumf %328, %236 : vector<1x32x8xf32>
    %330 = vector.broadcast %cst_113 : f32 to vector<1x32x8xf32>
    %331 = arith.minimumf %330, %329 : vector<1x32x8xf32>
    %332 = math.absf %236 : vector<1x32x8xf32>
    %cst_114 = arith.constant 1.000000e+01 : f32
    %333 = vector.broadcast %cst_114 : f32 to vector<1x32x8xf32>
    %334 = arith.cmpf oeq, %332, %333 : vector<1x32x8xf32>
    %cst_115 = arith.constant 0.000000e+00 : f32
    %335 = vector.broadcast %cst_115 : f32 to vector<1x32x8xf32>
    %336 = arith.select %334, %335, %331 : vector<1x32x8xi1>, vector<1x32x8xf32>
    %cst_116 = arith.constant 0.00999999977 : f32
    %337 = vector.broadcast %cst_116 : f32 to vector<1x32x8xf32>
    %338 = arith.mulf %337, %336 : vector<1x32x8xf32>
    %339 = arith.subf %150, %338 : vector<1x32x8xf32>
    %cst_117 = arith.constant -1.000000e+01 : f32
    %cst_118 = arith.constant 1.000000e+01 : f32
    %340 = vector.broadcast %cst_117 : f32 to vector<1x1x8xf32>
    %341 = arith.maximumf %340, %238 : vector<1x1x8xf32>
    %342 = vector.broadcast %cst_118 : f32 to vector<1x1x8xf32>
    %343 = arith.minimumf %342, %341 : vector<1x1x8xf32>
    %344 = math.absf %238 : vector<1x1x8xf32>
    %cst_119 = arith.constant 1.000000e+01 : f32
    %345 = vector.broadcast %cst_119 : f32 to vector<1x1x8xf32>
    %346 = arith.cmpf oeq, %344, %345 : vector<1x1x8xf32>
    %cst_120 = arith.constant 0.000000e+00 : f32
    %347 = vector.broadcast %cst_120 : f32 to vector<1x1x8xf32>
    %348 = arith.select %346, %347, %343 : vector<1x1x8xi1>, vector<1x1x8xf32>
    %cst_121 = arith.constant 0.00999999977 : f32
    %349 = vector.broadcast %cst_121 : f32 to vector<1x1x8xf32>
    %350 = arith.mulf %349, %348 : vector<1x1x8xf32>
    %351 = arith.subf %162, %350 : vector<1x1x8xf32>
    %c0_122 = arith.constant 0 : index
    %c16 = arith.constant 16 : index
    %c0_123 = arith.constant 0 : index
    %c0_124 = arith.constant 0 : index
    %352 = vector.load %arg1[%c0_122, %c16, %c0_123, %c0_124] : memref<1x40x5x8xf32, #tpu.memory_space<vmem>>, vector<1x8x5x8xf32>
    %353 = vector.shape_cast %352 : vector<1x8x5x8xf32> to vector<8x5x8xf32>
    %354 = vector.extract_strided_slice %353 {offsets = [0, 4, 0], sizes = [8, 1, 8], strides = [1, 1, 1]} : vector<8x5x8xf32> to vector<8x1x8xf32>
    %355 = vector.extract_strided_slice %353 {offsets = [0, 0, 0], sizes = [8, 1, 8], strides = [1, 1, 1]} : vector<8x5x8xf32> to vector<8x1x8xf32>
    %356 = vector.broadcast %355 : vector<8x1x8xf32> to vector<8x32x8xf32>
    %357 = vector.broadcast %264 : vector<1x32x8xf32> to vector<8x32x8xf32>
    %358 = arith.mulf %356, %357 : vector<8x32x8xf32>
    %359 = vector.broadcast %327 : vector<1x32x8xf32> to vector<8x32x8xf32>
    %360 = arith.addf %359, %358 : vector<8x32x8xf32>
    %361 = vector.extract_strided_slice %353 {offsets = [0, 1, 0], sizes = [8, 1, 8], strides = [1, 1, 1]} : vector<8x5x8xf32> to vector<8x1x8xf32>
    %362 = vector.broadcast %361 : vector<8x1x8xf32> to vector<8x32x8xf32>
    %363 = vector.broadcast %281 : vector<1x32x8xf32> to vector<8x32x8xf32>
    %364 = arith.mulf %362, %363 : vector<8x32x8xf32>
    %365 = arith.addf %360, %364 : vector<8x32x8xf32>
    %366 = vector.extract_strided_slice %353 {offsets = [0, 2, 0], sizes = [8, 1, 8], strides = [1, 1, 1]} : vector<8x5x8xf32> to vector<8x1x8xf32>
    %367 = vector.broadcast %366 : vector<8x1x8xf32> to vector<8x32x8xf32>
    %368 = vector.broadcast %298 : vector<1x32x8xf32> to vector<8x32x8xf32>
    %369 = arith.mulf %367, %368 : vector<8x32x8xf32>
    %370 = arith.addf %365, %369 : vector<8x32x8xf32>
    %371 = vector.extract_strided_slice %353 {offsets = [0, 3, 0], sizes = [8, 1, 8], strides = [1, 1, 1]} : vector<8x5x8xf32> to vector<8x1x8xf32>
    %372 = vector.broadcast %371 : vector<8x1x8xf32> to vector<8x32x8xf32>
    %373 = vector.broadcast %315 : vector<1x32x8xf32> to vector<8x32x8xf32>
    %374 = arith.mulf %372, %373 : vector<8x32x8xf32>
    %375 = arith.addf %370, %374 : vector<8x32x8xf32>
    %cst_125 = arith.constant 0.000000e+00 : f32
    %376 = vector.broadcast %cst_125 : f32 to vector<8x32x8xf32>
    %377 = arith.maximumf %375, %376 : vector<8x32x8xf32>
    %378 = vector.broadcast %339 : vector<1x32x8xf32> to vector<8x32x8xf32>
    %379 = arith.mulf %377, %378 : vector<8x32x8xf32>
    %cst_126 = arith.constant dense<0.000000e+00> : vector<8x8xf32>
    %380 = vector.multi_reduction <add>, %379, %cst_126 [1] : vector<8x32x8xf32> to vector<8x8xf32>
    %381 = vector.shape_cast %380 : vector<8x8xf32> to vector<8x1x8xf32>
    %382 = vector.broadcast %351 : vector<1x1x8xf32> to vector<8x1x8xf32>
    %383 = arith.addf %381, %382 : vector<8x1x8xf32>
    %384 = arith.subf %383, %354 : vector<8x1x8xf32>
    %cst_127 = arith.constant 2.500000e-01 : f32
    %385 = vector.broadcast %cst_127 : f32 to vector<8x1x8xf32>
    %386 = arith.mulf %385, %384 : vector<8x1x8xf32>
    %387 = vector.broadcast %386 : vector<8x1x8xf32> to vector<8x32x8xf32>
    %388 = arith.mulf %387, %377 : vector<8x32x8xf32>
    %cst_128 = arith.constant dense<0.000000e+00> : vector<32x8xf32>
    %389 = vector.multi_reduction <add>, %388, %cst_128 [0] : vector<8x32x8xf32> to vector<32x8xf32>
    %390 = vector.shape_cast %389 : vector<32x8xf32> to vector<1x32x8xf32>
    %cst_129 = arith.constant dense<0.000000e+00> : vector<1x8xf32>
    %391 = vector.multi_reduction <add>, %386, %cst_129 [0] : vector<8x1x8xf32> to vector<1x8xf32>
    %392 = vector.shape_cast %391 : vector<1x8xf32> to vector<1x1x8xf32>
    %cst_130 = arith.constant 0.000000e+00 : f32
    %393 = vector.broadcast %cst_130 : f32 to vector<8x32x8xf32>
    %394 = arith.cmpf ogt, %377, %393 : vector<8x32x8xf32>
    %395 = vector.broadcast %386 : vector<8x1x8xf32> to vector<8x32x8xf32>
    %396 = vector.broadcast %339 : vector<1x32x8xf32> to vector<8x32x8xf32>
    %397 = arith.mulf %395, %396 : vector<8x32x8xf32>
    %cst_131 = arith.constant 0.000000e+00 : f32
    %398 = vector.broadcast %cst_131 : f32 to vector<8x32x8xf32>
    %399 = arith.select %394, %397, %398 : vector<8x32x8xi1>, vector<8x32x8xf32>
    %cst_132 = arith.constant dense<0.000000e+00> : vector<32x8xf32>
    %400 = vector.multi_reduction <add>, %399, %cst_132 [0] : vector<8x32x8xf32> to vector<32x8xf32>
    %401 = vector.shape_cast %400 : vector<32x8xf32> to vector<1x32x8xf32>
    %402 = vector.extract_strided_slice %353 {offsets = [0, 0, 0], sizes = [8, 1, 8], strides = [1, 1, 1]} : vector<8x5x8xf32> to vector<8x1x8xf32>
    %403 = vector.broadcast %402 : vector<8x1x8xf32> to vector<8x32x8xf32>
    %404 = arith.mulf %403, %399 : vector<8x32x8xf32>
    %cst_133 = arith.constant dense<0.000000e+00> : vector<32x8xf32>
    %405 = vector.multi_reduction <add>, %404, %cst_133 [0] : vector<8x32x8xf32> to vector<32x8xf32>
    %406 = vector.shape_cast %405 : vector<32x8xf32> to vector<1x32x8xf32>
    %cst_134 = arith.constant -1.000000e+01 : f32
    %cst_135 = arith.constant 1.000000e+01 : f32
    %407 = vector.broadcast %cst_134 : f32 to vector<1x32x8xf32>
    %408 = arith.maximumf %407, %406 : vector<1x32x8xf32>
    %409 = vector.broadcast %cst_135 : f32 to vector<1x32x8xf32>
    %410 = arith.minimumf %409, %408 : vector<1x32x8xf32>
    %411 = math.absf %406 : vector<1x32x8xf32>
    %cst_136 = arith.constant 1.000000e+01 : f32
    %412 = vector.broadcast %cst_136 : f32 to vector<1x32x8xf32>
    %413 = arith.cmpf oeq, %411, %412 : vector<1x32x8xf32>
    %cst_137 = arith.constant 0.000000e+00 : f32
    %414 = vector.broadcast %cst_137 : f32 to vector<1x32x8xf32>
    %415 = arith.select %413, %414, %410 : vector<1x32x8xi1>, vector<1x32x8xf32>
    %cst_138 = arith.constant 0.00999999977 : f32
    %416 = vector.broadcast %cst_138 : f32 to vector<1x32x8xf32>
    %417 = arith.mulf %416, %415 : vector<1x32x8xf32>
    %418 = arith.subf %264, %417 : vector<1x32x8xf32>
    %419 = vector.extract_strided_slice %353 {offsets = [0, 1, 0], sizes = [8, 1, 8], strides = [1, 1, 1]} : vector<8x5x8xf32> to vector<8x1x8xf32>
    %420 = vector.broadcast %419 : vector<8x1x8xf32> to vector<8x32x8xf32>
    %421 = arith.mulf %420, %399 : vector<8x32x8xf32>
    %cst_139 = arith.constant dense<0.000000e+00> : vector<32x8xf32>
    %422 = vector.multi_reduction <add>, %421, %cst_139 [0] : vector<8x32x8xf32> to vector<32x8xf32>
    %423 = vector.shape_cast %422 : vector<32x8xf32> to vector<1x32x8xf32>
    %cst_140 = arith.constant -1.000000e+01 : f32
    %cst_141 = arith.constant 1.000000e+01 : f32
    %424 = vector.broadcast %cst_140 : f32 to vector<1x32x8xf32>
    %425 = arith.maximumf %424, %423 : vector<1x32x8xf32>
    %426 = vector.broadcast %cst_141 : f32 to vector<1x32x8xf32>
    %427 = arith.minimumf %426, %425 : vector<1x32x8xf32>
    %428 = math.absf %423 : vector<1x32x8xf32>
    %cst_142 = arith.constant 1.000000e+01 : f32
    %429 = vector.broadcast %cst_142 : f32 to vector<1x32x8xf32>
    %430 = arith.cmpf oeq, %428, %429 : vector<1x32x8xf32>
    %cst_143 = arith.constant 0.000000e+00 : f32
    %431 = vector.broadcast %cst_143 : f32 to vector<1x32x8xf32>
    %432 = arith.select %430, %431, %427 : vector<1x32x8xi1>, vector<1x32x8xf32>
    %cst_144 = arith.constant 0.00999999977 : f32
    %433 = vector.broadcast %cst_144 : f32 to vector<1x32x8xf32>
    %434 = arith.mulf %433, %432 : vector<1x32x8xf32>
    %435 = arith.subf %281, %434 : vector<1x32x8xf32>
    %436 = vector.extract_strided_slice %353 {offsets = [0, 2, 0], sizes = [8, 1, 8], strides = [1, 1, 1]} : vector<8x5x8xf32> to vector<8x1x8xf32>
    %437 = vector.broadcast %436 : vector<8x1x8xf32> to vector<8x32x8xf32>
    %438 = arith.mulf %437, %399 : vector<8x32x8xf32>
    %cst_145 = arith.constant dense<0.000000e+00> : vector<32x8xf32>
    %439 = vector.multi_reduction <add>, %438, %cst_145 [0] : vector<8x32x8xf32> to vector<32x8xf32>
    %440 = vector.shape_cast %439 : vector<32x8xf32> to vector<1x32x8xf32>
    %cst_146 = arith.constant -1.000000e+01 : f32
    %cst_147 = arith.constant 1.000000e+01 : f32
    %441 = vector.broadcast %cst_146 : f32 to vector<1x32x8xf32>
    %442 = arith.maximumf %441, %440 : vector<1x32x8xf32>
    %443 = vector.broadcast %cst_147 : f32 to vector<1x32x8xf32>
    %444 = arith.minimumf %443, %442 : vector<1x32x8xf32>
    %445 = math.absf %440 : vector<1x32x8xf32>
    %cst_148 = arith.constant 1.000000e+01 : f32
    %446 = vector.broadcast %cst_148 : f32 to vector<1x32x8xf32>
    %447 = arith.cmpf oeq, %445, %446 : vector<1x32x8xf32>
    %cst_149 = arith.constant 0.000000e+00 : f32
    %448 = vector.broadcast %cst_149 : f32 to vector<1x32x8xf32>
    %449 = arith.select %447, %448, %444 : vector<1x32x8xi1>, vector<1x32x8xf32>
    %cst_150 = arith.constant 0.00999999977 : f32
    %450 = vector.broadcast %cst_150 : f32 to vector<1x32x8xf32>
    %451 = arith.mulf %450, %449 : vector<1x32x8xf32>
    %452 = arith.subf %298, %451 : vector<1x32x8xf32>
    %453 = vector.extract_strided_slice %353 {offsets = [0, 3, 0], sizes = [8, 1, 8], strides = [1, 1, 1]} : vector<8x5x8xf32> to vector<8x1x8xf32>
    %454 = vector.broadcast %453 : vector<8x1x8xf32> to vector<8x32x8xf32>
    %455 = arith.mulf %454, %399 : vector<8x32x8xf32>
    %cst_151 = arith.constant dense<0.000000e+00> : vector<32x8xf32>
    %456 = vector.multi_reduction <add>, %455, %cst_151 [0] : vector<8x32x8xf32> to vector<32x8xf32>
    %457 = vector.shape_cast %456 : vector<32x8xf32> to vector<1x32x8xf32>
    %cst_152 = arith.constant -1.000000e+01 : f32
    %cst_153 = arith.constant 1.000000e+01 : f32
    %458 = vector.broadcast %cst_152 : f32 to vector<1x32x8xf32>
    %459 = arith.maximumf %458, %457 : vector<1x32x8xf32>
    %460 = vector.broadcast %cst_153 : f32 to vector<1x32x8xf32>
    %461 = arith.minimumf %460, %459 : vector<1x32x8xf32>
    %462 = math.absf %457 : vector<1x32x8xf32>
    %cst_154 = arith.constant 1.000000e+01 : f32
    %463 = vector.broadcast %cst_154 : f32 to vector<1x32x8xf32>
    %464 = arith.cmpf oeq, %462, %463 : vector<1x32x8xf32>
    %cst_155 = arith.constant 0.000000e+00 : f32
    %465 = vector.broadcast %cst_155 : f32 to vector<1x32x8xf32>
    %466 = arith.select %464, %465, %461 : vector<1x32x8xi1>, vector<1x32x8xf32>
    %cst_156 = arith.constant 0.00999999977 : f32
    %467 = vector.broadcast %cst_156 : f32 to vector<1x32x8xf32>
    %468 = arith.mulf %467, %466 : vector<1x32x8xf32>
    %469 = arith.subf %315, %468 : vector<1x32x8xf32>
    %cst_157 = arith.constant -1.000000e+01 : f32
    %cst_158 = arith.constant 1.000000e+01 : f32
    %470 = vector.broadcast %cst_157 : f32 to vector<1x32x8xf32>
    %471 = arith.maximumf %470, %401 : vector<1x32x8xf32>
    %472 = vector.broadcast %cst_158 : f32 to vector<1x32x8xf32>
    %473 = arith.minimumf %472, %471 : vector<1x32x8xf32>
    %474 = math.absf %401 : vector<1x32x8xf32>
    %cst_159 = arith.constant 1.000000e+01 : f32
    %475 = vector.broadcast %cst_159 : f32 to vector<1x32x8xf32>
    %476 = arith.cmpf oeq, %474, %475 : vector<1x32x8xf32>
    %cst_160 = arith.constant 0.000000e+00 : f32
    %477 = vector.broadcast %cst_160 : f32 to vector<1x32x8xf32>
    %478 = arith.select %476, %477, %473 : vector<1x32x8xi1>, vector<1x32x8xf32>
    %cst_161 = arith.constant 0.00999999977 : f32
    %479 = vector.broadcast %cst_161 : f32 to vector<1x32x8xf32>
    %480 = arith.mulf %479, %478 : vector<1x32x8xf32>
    %481 = arith.subf %327, %480 : vector<1x32x8xf32>
    %cst_162 = arith.constant -1.000000e+01 : f32
    %cst_163 = arith.constant 1.000000e+01 : f32
    %482 = vector.broadcast %cst_162 : f32 to vector<1x32x8xf32>
    %483 = arith.maximumf %482, %390 : vector<1x32x8xf32>
    %484 = vector.broadcast %cst_163 : f32 to vector<1x32x8xf32>
    %485 = arith.minimumf %484, %483 : vector<1x32x8xf32>
    %486 = math.absf %390 : vector<1x32x8xf32>
    %cst_164 = arith.constant 1.000000e+01 : f32
    %487 = vector.broadcast %cst_164 : f32 to vector<1x32x8xf32>
    %488 = arith.cmpf oeq, %486, %487 : vector<1x32x8xf32>
    %cst_165 = arith.constant 0.000000e+00 : f32
    %489 = vector.broadcast %cst_165 : f32 to vector<1x32x8xf32>
    %490 = arith.select %488, %489, %485 : vector<1x32x8xi1>, vector<1x32x8xf32>
    %cst_166 = arith.constant 0.00999999977 : f32
    %491 = vector.broadcast %cst_166 : f32 to vector<1x32x8xf32>
    %492 = arith.mulf %491, %490 : vector<1x32x8xf32>
    %493 = arith.subf %339, %492 : vector<1x32x8xf32>
    %cst_167 = arith.constant -1.000000e+01 : f32
    %cst_168 = arith.constant 1.000000e+01 : f32
    %494 = vector.broadcast %cst_167 : f32 to vector<1x1x8xf32>
    %495 = arith.maximumf %494, %392 : vector<1x1x8xf32>
    %496 = vector.broadcast %cst_168 : f32 to vector<1x1x8xf32>
    %497 = arith.minimumf %496, %495 : vector<1x1x8xf32>
    %498 = math.absf %392 : vector<1x1x8xf32>
    %cst_169 = arith.constant 1.000000e+01 : f32
    %499 = vector.broadcast %cst_169 : f32 to vector<1x1x8xf32>
    %500 = arith.cmpf oeq, %498, %499 : vector<1x1x8xf32>
    %cst_170 = arith.constant 0.000000e+00 : f32
    %501 = vector.broadcast %cst_170 : f32 to vector<1x1x8xf32>
    %502 = arith.select %500, %501, %497 : vector<1x1x8xi1>, vector<1x1x8xf32>
    %cst_171 = arith.constant 0.00999999977 : f32
    %503 = vector.broadcast %cst_171 : f32 to vector<1x1x8xf32>
    %504 = arith.mulf %503, %502 : vector<1x1x8xf32>
    %505 = arith.subf %351, %504 : vector<1x1x8xf32>
    %c0_172 = arith.constant 0 : index
    %c24 = arith.constant 24 : index
    %c0_173 = arith.constant 0 : index
    %c0_174 = arith.constant 0 : index
    %506 = vector.load %arg1[%c0_172, %c24, %c0_173, %c0_174] : memref<1x40x5x8xf32, #tpu.memory_space<vmem>>, vector<1x8x5x8xf32>
    %507 = vector.shape_cast %506 : vector<1x8x5x8xf32> to vector<8x5x8xf32>
    %508 = vector.extract_strided_slice %507 {offsets = [0, 4, 0], sizes = [8, 1, 8], strides = [1, 1, 1]} : vector<8x5x8xf32> to vector<8x1x8xf32>
    %509 = vector.extract_strided_slice %507 {offsets = [0, 0, 0], sizes = [8, 1, 8], strides = [1, 1, 1]} : vector<8x5x8xf32> to vector<8x1x8xf32>
    %510 = vector.broadcast %509 : vector<8x1x8xf32> to vector<8x32x8xf32>
    %511 = vector.broadcast %418 : vector<1x32x8xf32> to vector<8x32x8xf32>
    %512 = arith.mulf %510, %511 : vector<8x32x8xf32>
    %513 = vector.broadcast %481 : vector<1x32x8xf32> to vector<8x32x8xf32>
    %514 = arith.addf %513, %512 : vector<8x32x8xf32>
    %515 = vector.extract_strided_slice %507 {offsets = [0, 1, 0], sizes = [8, 1, 8], strides = [1, 1, 1]} : vector<8x5x8xf32> to vector<8x1x8xf32>
    %516 = vector.broadcast %515 : vector<8x1x8xf32> to vector<8x32x8xf32>
    %517 = vector.broadcast %435 : vector<1x32x8xf32> to vector<8x32x8xf32>
    %518 = arith.mulf %516, %517 : vector<8x32x8xf32>
    %519 = arith.addf %514, %518 : vector<8x32x8xf32>
    %520 = vector.extract_strided_slice %507 {offsets = [0, 2, 0], sizes = [8, 1, 8], strides = [1, 1, 1]} : vector<8x5x8xf32> to vector<8x1x8xf32>
    %521 = vector.broadcast %520 : vector<8x1x8xf32> to vector<8x32x8xf32>
    %522 = vector.broadcast %452 : vector<1x32x8xf32> to vector<8x32x8xf32>
    %523 = arith.mulf %521, %522 : vector<8x32x8xf32>
    %524 = arith.addf %519, %523 : vector<8x32x8xf32>
    %525 = vector.extract_strided_slice %507 {offsets = [0, 3, 0], sizes = [8, 1, 8], strides = [1, 1, 1]} : vector<8x5x8xf32> to vector<8x1x8xf32>
    %526 = vector.broadcast %525 : vector<8x1x8xf32> to vector<8x32x8xf32>
    %527 = vector.broadcast %469 : vector<1x32x8xf32> to vector<8x32x8xf32>
    %528 = arith.mulf %526, %527 : vector<8x32x8xf32>
    %529 = arith.addf %524, %528 : vector<8x32x8xf32>
    %cst_175 = arith.constant 0.000000e+00 : f32
    %530 = vector.broadcast %cst_175 : f32 to vector<8x32x8xf32>
    %531 = arith.maximumf %529, %530 : vector<8x32x8xf32>
    %532 = vector.broadcast %493 : vector<1x32x8xf32> to vector<8x32x8xf32>
    %533 = arith.mulf %531, %532 : vector<8x32x8xf32>
    %cst_176 = arith.constant dense<0.000000e+00> : vector<8x8xf32>
    %534 = vector.multi_reduction <add>, %533, %cst_176 [1] : vector<8x32x8xf32> to vector<8x8xf32>
    %535 = vector.shape_cast %534 : vector<8x8xf32> to vector<8x1x8xf32>
    %536 = vector.broadcast %505 : vector<1x1x8xf32> to vector<8x1x8xf32>
    %537 = arith.addf %535, %536 : vector<8x1x8xf32>
    %538 = arith.subf %537, %508 : vector<8x1x8xf32>
    %cst_177 = arith.constant 2.500000e-01 : f32
    %539 = vector.broadcast %cst_177 : f32 to vector<8x1x8xf32>
    %540 = arith.mulf %539, %538 : vector<8x1x8xf32>
    %541 = vector.broadcast %540 : vector<8x1x8xf32> to vector<8x32x8xf32>
    %542 = arith.mulf %541, %531 : vector<8x32x8xf32>
    %cst_178 = arith.constant dense<0.000000e+00> : vector<32x8xf32>
    %543 = vector.multi_reduction <add>, %542, %cst_178 [0] : vector<8x32x8xf32> to vector<32x8xf32>
    %544 = vector.shape_cast %543 : vector<32x8xf32> to vector<1x32x8xf32>
    %cst_179 = arith.constant dense<0.000000e+00> : vector<1x8xf32>
    %545 = vector.multi_reduction <add>, %540, %cst_179 [0] : vector<8x1x8xf32> to vector<1x8xf32>
    %546 = vector.shape_cast %545 : vector<1x8xf32> to vector<1x1x8xf32>
    %cst_180 = arith.constant 0.000000e+00 : f32
    %547 = vector.broadcast %cst_180 : f32 to vector<8x32x8xf32>
    %548 = arith.cmpf ogt, %531, %547 : vector<8x32x8xf32>
    %549 = vector.broadcast %540 : vector<8x1x8xf32> to vector<8x32x8xf32>
    %550 = vector.broadcast %493 : vector<1x32x8xf32> to vector<8x32x8xf32>
    %551 = arith.mulf %549, %550 : vector<8x32x8xf32>
    %cst_181 = arith.constant 0.000000e+00 : f32
    %552 = vector.broadcast %cst_181 : f32 to vector<8x32x8xf32>
    %553 = arith.select %548, %551, %552 : vector<8x32x8xi1>, vector<8x32x8xf32>
    %cst_182 = arith.constant dense<0.000000e+00> : vector<32x8xf32>
    %554 = vector.multi_reduction <add>, %553, %cst_182 [0] : vector<8x32x8xf32> to vector<32x8xf32>
    %555 = vector.shape_cast %554 : vector<32x8xf32> to vector<1x32x8xf32>
    %556 = vector.extract_strided_slice %507 {offsets = [0, 0, 0], sizes = [8, 1, 8], strides = [1, 1, 1]} : vector<8x5x8xf32> to vector<8x1x8xf32>
    %557 = vector.broadcast %556 : vector<8x1x8xf32> to vector<8x32x8xf32>
    %558 = arith.mulf %557, %553 : vector<8x32x8xf32>
    %cst_183 = arith.constant dense<0.000000e+00> : vector<32x8xf32>
    %559 = vector.multi_reduction <add>, %558, %cst_183 [0] : vector<8x32x8xf32> to vector<32x8xf32>
    %560 = vector.shape_cast %559 : vector<32x8xf32> to vector<1x32x8xf32>
    %cst_184 = arith.constant -1.000000e+01 : f32
    %cst_185 = arith.constant 1.000000e+01 : f32
    %561 = vector.broadcast %cst_184 : f32 to vector<1x32x8xf32>
    %562 = arith.maximumf %561, %560 : vector<1x32x8xf32>
    %563 = vector.broadcast %cst_185 : f32 to vector<1x32x8xf32>
    %564 = arith.minimumf %563, %562 : vector<1x32x8xf32>
    %565 = math.absf %560 : vector<1x32x8xf32>
    %cst_186 = arith.constant 1.000000e+01 : f32
    %566 = vector.broadcast %cst_186 : f32 to vector<1x32x8xf32>
    %567 = arith.cmpf oeq, %565, %566 : vector<1x32x8xf32>
    %cst_187 = arith.constant 0.000000e+00 : f32
    %568 = vector.broadcast %cst_187 : f32 to vector<1x32x8xf32>
    %569 = arith.select %567, %568, %564 : vector<1x32x8xi1>, vector<1x32x8xf32>
    %cst_188 = arith.constant 0.00999999977 : f32
    %570 = vector.broadcast %cst_188 : f32 to vector<1x32x8xf32>
    %571 = arith.mulf %570, %569 : vector<1x32x8xf32>
    %572 = arith.subf %418, %571 : vector<1x32x8xf32>
    %573 = vector.extract_strided_slice %507 {offsets = [0, 1, 0], sizes = [8, 1, 8], strides = [1, 1, 1]} : vector<8x5x8xf32> to vector<8x1x8xf32>
    %574 = vector.broadcast %573 : vector<8x1x8xf32> to vector<8x32x8xf32>
    %575 = arith.mulf %574, %553 : vector<8x32x8xf32>
    %cst_189 = arith.constant dense<0.000000e+00> : vector<32x8xf32>
    %576 = vector.multi_reduction <add>, %575, %cst_189 [0] : vector<8x32x8xf32> to vector<32x8xf32>
    %577 = vector.shape_cast %576 : vector<32x8xf32> to vector<1x32x8xf32>
    %cst_190 = arith.constant -1.000000e+01 : f32
    %cst_191 = arith.constant 1.000000e+01 : f32
    %578 = vector.broadcast %cst_190 : f32 to vector<1x32x8xf32>
    %579 = arith.maximumf %578, %577 : vector<1x32x8xf32>
    %580 = vector.broadcast %cst_191 : f32 to vector<1x32x8xf32>
    %581 = arith.minimumf %580, %579 : vector<1x32x8xf32>
    %582 = math.absf %577 : vector<1x32x8xf32>
    %cst_192 = arith.constant 1.000000e+01 : f32
    %583 = vector.broadcast %cst_192 : f32 to vector<1x32x8xf32>
    %584 = arith.cmpf oeq, %582, %583 : vector<1x32x8xf32>
    %cst_193 = arith.constant 0.000000e+00 : f32
    %585 = vector.broadcast %cst_193 : f32 to vector<1x32x8xf32>
    %586 = arith.select %584, %585, %581 : vector<1x32x8xi1>, vector<1x32x8xf32>
    %cst_194 = arith.constant 0.00999999977 : f32
    %587 = vector.broadcast %cst_194 : f32 to vector<1x32x8xf32>
    %588 = arith.mulf %587, %586 : vector<1x32x8xf32>
    %589 = arith.subf %435, %588 : vector<1x32x8xf32>
    %590 = vector.extract_strided_slice %507 {offsets = [0, 2, 0], sizes = [8, 1, 8], strides = [1, 1, 1]} : vector<8x5x8xf32> to vector<8x1x8xf32>
    %591 = vector.broadcast %590 : vector<8x1x8xf32> to vector<8x32x8xf32>
    %592 = arith.mulf %591, %553 : vector<8x32x8xf32>
    %cst_195 = arith.constant dense<0.000000e+00> : vector<32x8xf32>
    %593 = vector.multi_reduction <add>, %592, %cst_195 [0] : vector<8x32x8xf32> to vector<32x8xf32>
    %594 = vector.shape_cast %593 : vector<32x8xf32> to vector<1x32x8xf32>
    %cst_196 = arith.constant -1.000000e+01 : f32
    %cst_197 = arith.constant 1.000000e+01 : f32
    %595 = vector.broadcast %cst_196 : f32 to vector<1x32x8xf32>
    %596 = arith.maximumf %595, %594 : vector<1x32x8xf32>
    %597 = vector.broadcast %cst_197 : f32 to vector<1x32x8xf32>
    %598 = arith.minimumf %597, %596 : vector<1x32x8xf32>
    %599 = math.absf %594 : vector<1x32x8xf32>
    %cst_198 = arith.constant 1.000000e+01 : f32
    %600 = vector.broadcast %cst_198 : f32 to vector<1x32x8xf32>
    %601 = arith.cmpf oeq, %599, %600 : vector<1x32x8xf32>
    %cst_199 = arith.constant 0.000000e+00 : f32
    %602 = vector.broadcast %cst_199 : f32 to vector<1x32x8xf32>
    %603 = arith.select %601, %602, %598 : vector<1x32x8xi1>, vector<1x32x8xf32>
    %cst_200 = arith.constant 0.00999999977 : f32
    %604 = vector.broadcast %cst_200 : f32 to vector<1x32x8xf32>
    %605 = arith.mulf %604, %603 : vector<1x32x8xf32>
    %606 = arith.subf %452, %605 : vector<1x32x8xf32>
    %607 = vector.extract_strided_slice %507 {offsets = [0, 3, 0], sizes = [8, 1, 8], strides = [1, 1, 1]} : vector<8x5x8xf32> to vector<8x1x8xf32>
    %608 = vector.broadcast %607 : vector<8x1x8xf32> to vector<8x32x8xf32>
    %609 = arith.mulf %608, %553 : vector<8x32x8xf32>
    %cst_201 = arith.constant dense<0.000000e+00> : vector<32x8xf32>
    %610 = vector.multi_reduction <add>, %609, %cst_201 [0] : vector<8x32x8xf32> to vector<32x8xf32>
    %611 = vector.shape_cast %610 : vector<32x8xf32> to vector<1x32x8xf32>
    %cst_202 = arith.constant -1.000000e+01 : f32
    %cst_203 = arith.constant 1.000000e+01 : f32
    %612 = vector.broadcast %cst_202 : f32 to vector<1x32x8xf32>
    %613 = arith.maximumf %612, %611 : vector<1x32x8xf32>
    %614 = vector.broadcast %cst_203 : f32 to vector<1x32x8xf32>
    %615 = arith.minimumf %614, %613 : vector<1x32x8xf32>
    %616 = math.absf %611 : vector<1x32x8xf32>
    %cst_204 = arith.constant 1.000000e+01 : f32
    %617 = vector.broadcast %cst_204 : f32 to vector<1x32x8xf32>
    %618 = arith.cmpf oeq, %616, %617 : vector<1x32x8xf32>
    %cst_205 = arith.constant 0.000000e+00 : f32
    %619 = vector.broadcast %cst_205 : f32 to vector<1x32x8xf32>
    %620 = arith.select %618, %619, %615 : vector<1x32x8xi1>, vector<1x32x8xf32>
    %cst_206 = arith.constant 0.00999999977 : f32
    %621 = vector.broadcast %cst_206 : f32 to vector<1x32x8xf32>
    %622 = arith.mulf %621, %620 : vector<1x32x8xf32>
    %623 = arith.subf %469, %622 : vector<1x32x8xf32>
    %cst_207 = arith.constant -1.000000e+01 : f32
    %cst_208 = arith.constant 1.000000e+01 : f32
    %624 = vector.broadcast %cst_207 : f32 to vector<1x32x8xf32>
    %625 = arith.maximumf %624, %555 : vector<1x32x8xf32>
    %626 = vector.broadcast %cst_208 : f32 to vector<1x32x8xf32>
    %627 = arith.minimumf %626, %625 : vector<1x32x8xf32>
    %628 = math.absf %555 : vector<1x32x8xf32>
    %cst_209 = arith.constant 1.000000e+01 : f32
    %629 = vector.broadcast %cst_209 : f32 to vector<1x32x8xf32>
    %630 = arith.cmpf oeq, %628, %629 : vector<1x32x8xf32>
    %cst_210 = arith.constant 0.000000e+00 : f32
    %631 = vector.broadcast %cst_210 : f32 to vector<1x32x8xf32>
    %632 = arith.select %630, %631, %627 : vector<1x32x8xi1>, vector<1x32x8xf32>
    %cst_211 = arith.constant 0.00999999977 : f32
    %633 = vector.broadcast %cst_211 : f32 to vector<1x32x8xf32>
    %634 = arith.mulf %633, %632 : vector<1x32x8xf32>
    %635 = arith.subf %481, %634 : vector<1x32x8xf32>
    %cst_212 = arith.constant -1.000000e+01 : f32
    %cst_213 = arith.constant 1.000000e+01 : f32
    %636 = vector.broadcast %cst_212 : f32 to vector<1x32x8xf32>
    %637 = arith.maximumf %636, %544 : vector<1x32x8xf32>
    %638 = vector.broadcast %cst_213 : f32 to vector<1x32x8xf32>
    %639 = arith.minimumf %638, %637 : vector<1x32x8xf32>
    %640 = math.absf %544 : vector<1x32x8xf32>
    %cst_214 = arith.constant 1.000000e+01 : f32
    %641 = vector.broadcast %cst_214 : f32 to vector<1x32x8xf32>
    %642 = arith.cmpf oeq, %640, %641 : vector<1x32x8xf32>
    %cst_215 = arith.constant 0.000000e+00 : f32
    %643 = vector.broadcast %cst_215 : f32 to vector<1x32x8xf32>
    %644 = arith.select %642, %643, %639 : vector<1x32x8xi1>, vector<1x32x8xf32>
    %cst_216 = arith.constant 0.00999999977 : f32
    %645 = vector.broadcast %cst_216 : f32 to vector<1x32x8xf32>
    %646 = arith.mulf %645, %644 : vector<1x32x8xf32>
    %647 = arith.subf %493, %646 : vector<1x32x8xf32>
    %cst_217 = arith.constant -1.000000e+01 : f32
    %cst_218 = arith.constant 1.000000e+01 : f32
    %648 = vector.broadcast %cst_217 : f32 to vector<1x1x8xf32>
    %649 = arith.maximumf %648, %546 : vector<1x1x8xf32>
    %650 = vector.broadcast %cst_218 : f32 to vector<1x1x8xf32>
    %651 = arith.minimumf %650, %649 : vector<1x1x8xf32>
    %652 = math.absf %546 : vector<1x1x8xf32>
    %cst_219 = arith.constant 1.000000e+01 : f32
    %653 = vector.broadcast %cst_219 : f32 to vector<1x1x8xf32>
    %654 = arith.cmpf oeq, %652, %653 : vector<1x1x8xf32>
    %cst_220 = arith.constant 0.000000e+00 : f32
    %655 = vector.broadcast %cst_220 : f32 to vector<1x1x8xf32>
    %656 = arith.select %654, %655, %651 : vector<1x1x8xi1>, vector<1x1x8xf32>
    %cst_221 = arith.constant 0.00999999977 : f32
    %657 = vector.broadcast %cst_221 : f32 to vector<1x1x8xf32>
    %658 = arith.mulf %657, %656 : vector<1x1x8xf32>
    %659 = arith.subf %505, %658 : vector<1x1x8xf32>
    %c0_222 = arith.constant 0 : index
    %c32 = arith.constant 32 : index
    %c0_223 = arith.constant 0 : index
    %c0_224 = arith.constant 0 : index
    %660 = vector.load %arg1[%c0_222, %c32, %c0_223, %c0_224] : memref<1x40x5x8xf32, #tpu.memory_space<vmem>>, vector<1x8x5x8xf32>
    %661 = vector.shape_cast %660 : vector<1x8x5x8xf32> to vector<8x5x8xf32>
    %662 = vector.extract_strided_slice %661 {offsets = [0, 4, 0], sizes = [8, 1, 8], strides = [1, 1, 1]} : vector<8x5x8xf32> to vector<8x1x8xf32>
    %663 = vector.extract_strided_slice %661 {offsets = [0, 0, 0], sizes = [8, 1, 8], strides = [1, 1, 1]} : vector<8x5x8xf32> to vector<8x1x8xf32>
    %664 = vector.broadcast %663 : vector<8x1x8xf32> to vector<8x32x8xf32>
    %665 = vector.broadcast %572 : vector<1x32x8xf32> to vector<8x32x8xf32>
    %666 = arith.mulf %664, %665 : vector<8x32x8xf32>
    %667 = vector.broadcast %635 : vector<1x32x8xf32> to vector<8x32x8xf32>
    %668 = arith.addf %667, %666 : vector<8x32x8xf32>
    %669 = vector.extract_strided_slice %661 {offsets = [0, 1, 0], sizes = [8, 1, 8], strides = [1, 1, 1]} : vector<8x5x8xf32> to vector<8x1x8xf32>
    %670 = vector.broadcast %669 : vector<8x1x8xf32> to vector<8x32x8xf32>
    %671 = vector.broadcast %589 : vector<1x32x8xf32> to vector<8x32x8xf32>
    %672 = arith.mulf %670, %671 : vector<8x32x8xf32>
    %673 = arith.addf %668, %672 : vector<8x32x8xf32>
    %674 = vector.extract_strided_slice %661 {offsets = [0, 2, 0], sizes = [8, 1, 8], strides = [1, 1, 1]} : vector<8x5x8xf32> to vector<8x1x8xf32>
    %675 = vector.broadcast %674 : vector<8x1x8xf32> to vector<8x32x8xf32>
    %676 = vector.broadcast %606 : vector<1x32x8xf32> to vector<8x32x8xf32>
    %677 = arith.mulf %675, %676 : vector<8x32x8xf32>
    %678 = arith.addf %673, %677 : vector<8x32x8xf32>
    %679 = vector.extract_strided_slice %661 {offsets = [0, 3, 0], sizes = [8, 1, 8], strides = [1, 1, 1]} : vector<8x5x8xf32> to vector<8x1x8xf32>
    %680 = vector.broadcast %679 : vector<8x1x8xf32> to vector<8x32x8xf32>
    %681 = vector.broadcast %623 : vector<1x32x8xf32> to vector<8x32x8xf32>
    %682 = arith.mulf %680, %681 : vector<8x32x8xf32>
    %683 = arith.addf %678, %682 : vector<8x32x8xf32>
    %cst_225 = arith.constant 0.000000e+00 : f32
    %684 = vector.broadcast %cst_225 : f32 to vector<8x32x8xf32>
    %685 = arith.maximumf %683, %684 : vector<8x32x8xf32>
    %686 = vector.broadcast %647 : vector<1x32x8xf32> to vector<8x32x8xf32>
    %687 = arith.mulf %685, %686 : vector<8x32x8xf32>
    %cst_226 = arith.constant dense<0.000000e+00> : vector<8x8xf32>
    %688 = vector.multi_reduction <add>, %687, %cst_226 [1] : vector<8x32x8xf32> to vector<8x8xf32>
    %689 = vector.shape_cast %688 : vector<8x8xf32> to vector<8x1x8xf32>
    %690 = vector.broadcast %659 : vector<1x1x8xf32> to vector<8x1x8xf32>
    %691 = arith.addf %689, %690 : vector<8x1x8xf32>
    %692 = arith.subf %691, %662 : vector<8x1x8xf32>
    %cst_227 = arith.constant 2.500000e-01 : f32
    %693 = vector.broadcast %cst_227 : f32 to vector<8x1x8xf32>
    %694 = arith.mulf %693, %692 : vector<8x1x8xf32>
    %695 = vector.broadcast %694 : vector<8x1x8xf32> to vector<8x32x8xf32>
    %696 = arith.mulf %695, %685 : vector<8x32x8xf32>
    %cst_228 = arith.constant dense<0.000000e+00> : vector<32x8xf32>
    %697 = vector.multi_reduction <add>, %696, %cst_228 [0] : vector<8x32x8xf32> to vector<32x8xf32>
    %698 = vector.shape_cast %697 : vector<32x8xf32> to vector<1x32x8xf32>
    %cst_229 = arith.constant dense<0.000000e+00> : vector<1x8xf32>
    %699 = vector.multi_reduction <add>, %694, %cst_229 [0] : vector<8x1x8xf32> to vector<1x8xf32>
    %700 = vector.shape_cast %699 : vector<1x8xf32> to vector<1x1x8xf32>
    %cst_230 = arith.constant 0.000000e+00 : f32
    %701 = vector.broadcast %cst_230 : f32 to vector<8x32x8xf32>
    %702 = arith.cmpf ogt, %685, %701 : vector<8x32x8xf32>
    %703 = vector.broadcast %694 : vector<8x1x8xf32> to vector<8x32x8xf32>
    %704 = vector.broadcast %647 : vector<1x32x8xf32> to vector<8x32x8xf32>
    %705 = arith.mulf %703, %704 : vector<8x32x8xf32>
    %cst_231 = arith.constant 0.000000e+00 : f32
    %706 = vector.broadcast %cst_231 : f32 to vector<8x32x8xf32>
    %707 = arith.select %702, %705, %706 : vector<8x32x8xi1>, vector<8x32x8xf32>
    %cst_232 = arith.constant dense<0.000000e+00> : vector<32x8xf32>
    %708 = vector.multi_reduction <add>, %707, %cst_232 [0] : vector<8x32x8xf32> to vector<32x8xf32>
    %709 = vector.shape_cast %708 : vector<32x8xf32> to vector<1x32x8xf32>
    %710 = vector.extract_strided_slice %661 {offsets = [0, 0, 0], sizes = [8, 1, 8], strides = [1, 1, 1]} : vector<8x5x8xf32> to vector<8x1x8xf32>
    %711 = vector.broadcast %710 : vector<8x1x8xf32> to vector<8x32x8xf32>
    %712 = arith.mulf %711, %707 : vector<8x32x8xf32>
    %cst_233 = arith.constant dense<0.000000e+00> : vector<32x8xf32>
    %713 = vector.multi_reduction <add>, %712, %cst_233 [0] : vector<8x32x8xf32> to vector<32x8xf32>
    %714 = vector.shape_cast %713 : vector<32x8xf32> to vector<1x32x8xf32>
    %cst_234 = arith.constant -1.000000e+01 : f32
    %cst_235 = arith.constant 1.000000e+01 : f32
    %715 = vector.broadcast %cst_234 : f32 to vector<1x32x8xf32>
    %716 = arith.maximumf %715, %714 : vector<1x32x8xf32>
    %717 = vector.broadcast %cst_235 : f32 to vector<1x32x8xf32>
    %718 = arith.minimumf %717, %716 : vector<1x32x8xf32>
    %719 = math.absf %714 : vector<1x32x8xf32>
    %cst_236 = arith.constant 1.000000e+01 : f32
    %720 = vector.broadcast %cst_236 : f32 to vector<1x32x8xf32>
    %721 = arith.cmpf oeq, %719, %720 : vector<1x32x8xf32>
    %cst_237 = arith.constant 0.000000e+00 : f32
    %722 = vector.broadcast %cst_237 : f32 to vector<1x32x8xf32>
    %723 = arith.select %721, %722, %718 : vector<1x32x8xi1>, vector<1x32x8xf32>
    %cst_238 = arith.constant 0.00999999977 : f32
    %724 = vector.broadcast %cst_238 : f32 to vector<1x32x8xf32>
    %725 = arith.mulf %724, %723 : vector<1x32x8xf32>
    %726 = arith.subf %572, %725 : vector<1x32x8xf32>
    %727 = vector.extract_strided_slice %661 {offsets = [0, 1, 0], sizes = [8, 1, 8], strides = [1, 1, 1]} : vector<8x5x8xf32> to vector<8x1x8xf32>
    %728 = vector.broadcast %727 : vector<8x1x8xf32> to vector<8x32x8xf32>
    %729 = arith.mulf %728, %707 : vector<8x32x8xf32>
    %cst_239 = arith.constant dense<0.000000e+00> : vector<32x8xf32>
    %730 = vector.multi_reduction <add>, %729, %cst_239 [0] : vector<8x32x8xf32> to vector<32x8xf32>
    %731 = vector.shape_cast %730 : vector<32x8xf32> to vector<1x32x8xf32>
    %cst_240 = arith.constant -1.000000e+01 : f32
    %cst_241 = arith.constant 1.000000e+01 : f32
    %732 = vector.broadcast %cst_240 : f32 to vector<1x32x8xf32>
    %733 = arith.maximumf %732, %731 : vector<1x32x8xf32>
    %734 = vector.broadcast %cst_241 : f32 to vector<1x32x8xf32>
    %735 = arith.minimumf %734, %733 : vector<1x32x8xf32>
    %736 = math.absf %731 : vector<1x32x8xf32>
    %cst_242 = arith.constant 1.000000e+01 : f32
    %737 = vector.broadcast %cst_242 : f32 to vector<1x32x8xf32>
    %738 = arith.cmpf oeq, %736, %737 : vector<1x32x8xf32>
    %cst_243 = arith.constant 0.000000e+00 : f32
    %739 = vector.broadcast %cst_243 : f32 to vector<1x32x8xf32>
    %740 = arith.select %738, %739, %735 : vector<1x32x8xi1>, vector<1x32x8xf32>
    %cst_244 = arith.constant 0.00999999977 : f32
    %741 = vector.broadcast %cst_244 : f32 to vector<1x32x8xf32>
    %742 = arith.mulf %741, %740 : vector<1x32x8xf32>
    %743 = arith.subf %589, %742 : vector<1x32x8xf32>
    %744 = vector.extract_strided_slice %661 {offsets = [0, 2, 0], sizes = [8, 1, 8], strides = [1, 1, 1]} : vector<8x5x8xf32> to vector<8x1x8xf32>
    %745 = vector.broadcast %744 : vector<8x1x8xf32> to vector<8x32x8xf32>
    %746 = arith.mulf %745, %707 : vector<8x32x8xf32>
    %cst_245 = arith.constant dense<0.000000e+00> : vector<32x8xf32>
    %747 = vector.multi_reduction <add>, %746, %cst_245 [0] : vector<8x32x8xf32> to vector<32x8xf32>
    %748 = vector.shape_cast %747 : vector<32x8xf32> to vector<1x32x8xf32>
    %cst_246 = arith.constant -1.000000e+01 : f32
    %cst_247 = arith.constant 1.000000e+01 : f32
    %749 = vector.broadcast %cst_246 : f32 to vector<1x32x8xf32>
    %750 = arith.maximumf %749, %748 : vector<1x32x8xf32>
    %751 = vector.broadcast %cst_247 : f32 to vector<1x32x8xf32>
    %752 = arith.minimumf %751, %750 : vector<1x32x8xf32>
    %753 = math.absf %748 : vector<1x32x8xf32>
    %cst_248 = arith.constant 1.000000e+01 : f32
    %754 = vector.broadcast %cst_248 : f32 to vector<1x32x8xf32>
    %755 = arith.cmpf oeq, %753, %754 : vector<1x32x8xf32>
    %cst_249 = arith.constant 0.000000e+00 : f32
    %756 = vector.broadcast %cst_249 : f32 to vector<1x32x8xf32>
    %757 = arith.select %755, %756, %752 : vector<1x32x8xi1>, vector<1x32x8xf32>
    %cst_250 = arith.constant 0.00999999977 : f32
    %758 = vector.broadcast %cst_250 : f32 to vector<1x32x8xf32>
    %759 = arith.mulf %758, %757 : vector<1x32x8xf32>
    %760 = arith.subf %606, %759 : vector<1x32x8xf32>
    %761 = vector.extract_strided_slice %661 {offsets = [0, 3, 0], sizes = [8, 1, 8], strides = [1, 1, 1]} : vector<8x5x8xf32> to vector<8x1x8xf32>
    %762 = vector.broadcast %761 : vector<8x1x8xf32> to vector<8x32x8xf32>
    %763 = arith.mulf %762, %707 : vector<8x32x8xf32>
    %cst_251 = arith.constant dense<0.000000e+00> : vector<32x8xf32>
    %764 = vector.multi_reduction <add>, %763, %cst_251 [0] : vector<8x32x8xf32> to vector<32x8xf32>
    %765 = vector.shape_cast %764 : vector<32x8xf32> to vector<1x32x8xf32>
    %cst_252 = arith.constant -1.000000e+01 : f32
    %cst_253 = arith.constant 1.000000e+01 : f32
    %766 = vector.broadcast %cst_252 : f32 to vector<1x32x8xf32>
    %767 = arith.maximumf %766, %765 : vector<1x32x8xf32>
    %768 = vector.broadcast %cst_253 : f32 to vector<1x32x8xf32>
    %769 = arith.minimumf %768, %767 : vector<1x32x8xf32>
    %770 = math.absf %765 : vector<1x32x8xf32>
    %cst_254 = arith.constant 1.000000e+01 : f32
    %771 = vector.broadcast %cst_254 : f32 to vector<1x32x8xf32>
    %772 = arith.cmpf oeq, %770, %771 : vector<1x32x8xf32>
    %cst_255 = arith.constant 0.000000e+00 : f32
    %773 = vector.broadcast %cst_255 : f32 to vector<1x32x8xf32>
    %774 = arith.select %772, %773, %769 : vector<1x32x8xi1>, vector<1x32x8xf32>
    %cst_256 = arith.constant 0.00999999977 : f32
    %775 = vector.broadcast %cst_256 : f32 to vector<1x32x8xf32>
    %776 = arith.mulf %775, %774 : vector<1x32x8xf32>
    %777 = arith.subf %623, %776 : vector<1x32x8xf32>
    %cst_257 = arith.constant -1.000000e+01 : f32
    %cst_258 = arith.constant 1.000000e+01 : f32
    %778 = vector.broadcast %cst_257 : f32 to vector<1x32x8xf32>
    %779 = arith.maximumf %778, %709 : vector<1x32x8xf32>
    %780 = vector.broadcast %cst_258 : f32 to vector<1x32x8xf32>
    %781 = arith.minimumf %780, %779 : vector<1x32x8xf32>
    %782 = math.absf %709 : vector<1x32x8xf32>
    %cst_259 = arith.constant 1.000000e+01 : f32
    %783 = vector.broadcast %cst_259 : f32 to vector<1x32x8xf32>
    %784 = arith.cmpf oeq, %782, %783 : vector<1x32x8xf32>
    %cst_260 = arith.constant 0.000000e+00 : f32
    %785 = vector.broadcast %cst_260 : f32 to vector<1x32x8xf32>
    %786 = arith.select %784, %785, %781 : vector<1x32x8xi1>, vector<1x32x8xf32>
    %cst_261 = arith.constant 0.00999999977 : f32
    %787 = vector.broadcast %cst_261 : f32 to vector<1x32x8xf32>
    %788 = arith.mulf %787, %786 : vector<1x32x8xf32>
    %789 = arith.subf %635, %788 : vector<1x32x8xf32>
    %cst_262 = arith.constant -1.000000e+01 : f32
    %cst_263 = arith.constant 1.000000e+01 : f32
    %790 = vector.broadcast %cst_262 : f32 to vector<1x32x8xf32>
    %791 = arith.maximumf %790, %698 : vector<1x32x8xf32>
    %792 = vector.broadcast %cst_263 : f32 to vector<1x32x8xf32>
    %793 = arith.minimumf %792, %791 : vector<1x32x8xf32>
    %794 = math.absf %698 : vector<1x32x8xf32>
    %cst_264 = arith.constant 1.000000e+01 : f32
    %795 = vector.broadcast %cst_264 : f32 to vector<1x32x8xf32>
    %796 = arith.cmpf oeq, %794, %795 : vector<1x32x8xf32>
    %cst_265 = arith.constant 0.000000e+00 : f32
    %797 = vector.broadcast %cst_265 : f32 to vector<1x32x8xf32>
    %798 = arith.select %796, %797, %793 : vector<1x32x8xi1>, vector<1x32x8xf32>
    %cst_266 = arith.constant 0.00999999977 : f32
    %799 = vector.broadcast %cst_266 : f32 to vector<1x32x8xf32>
    %800 = arith.mulf %799, %798 : vector<1x32x8xf32>
    %801 = arith.subf %647, %800 : vector<1x32x8xf32>
    %cst_267 = arith.constant -1.000000e+01 : f32
    %cst_268 = arith.constant 1.000000e+01 : f32
    %802 = vector.broadcast %cst_267 : f32 to vector<1x1x8xf32>
    %803 = arith.maximumf %802, %700 : vector<1x1x8xf32>
    %804 = vector.broadcast %cst_268 : f32 to vector<1x1x8xf32>
    %805 = arith.minimumf %804, %803 : vector<1x1x8xf32>
    %806 = math.absf %700 : vector<1x1x8xf32>
    %cst_269 = arith.constant 1.000000e+01 : f32
    %807 = vector.broadcast %cst_269 : f32 to vector<1x1x8xf32>
    %808 = arith.cmpf oeq, %806, %807 : vector<1x1x8xf32>
    %cst_270 = arith.constant 0.000000e+00 : f32
    %809 = vector.broadcast %cst_270 : f32 to vector<1x1x8xf32>
    %810 = arith.select %808, %809, %805 : vector<1x1x8xi1>, vector<1x1x8xf32>
    %cst_271 = arith.constant 0.00999999977 : f32
    %811 = vector.broadcast %cst_271 : f32 to vector<1x1x8xf32>
    %812 = arith.mulf %811, %810 : vector<1x1x8xf32>
    %813 = arith.subf %659, %812 : vector<1x1x8xf32>
    %814 = vector.extract_strided_slice %8 {offsets = [0, 0, 0], sizes = [16, 1, 8], strides = [1, 1, 1]} : vector<16x5x8xf32> to vector<16x1x8xf32>
    %815 = vector.broadcast %814 : vector<16x1x8xf32> to vector<16x32x8xf32>
    %816 = vector.broadcast %726 : vector<1x32x8xf32> to vector<16x32x8xf32>
    %817 = arith.mulf %815, %816 : vector<16x32x8xf32>
    %818 = vector.broadcast %789 : vector<1x32x8xf32> to vector<16x32x8xf32>
    %819 = arith.addf %818, %817 : vector<16x32x8xf32>
    %820 = vector.extract_strided_slice %8 {offsets = [0, 1, 0], sizes = [16, 1, 8], strides = [1, 1, 1]} : vector<16x5x8xf32> to vector<16x1x8xf32>
    %821 = vector.broadcast %820 : vector<16x1x8xf32> to vector<16x32x8xf32>
    %822 = vector.broadcast %743 : vector<1x32x8xf32> to vector<16x32x8xf32>
    %823 = arith.mulf %821, %822 : vector<16x32x8xf32>
    %824 = arith.addf %819, %823 : vector<16x32x8xf32>
    %825 = vector.extract_strided_slice %8 {offsets = [0, 2, 0], sizes = [16, 1, 8], strides = [1, 1, 1]} : vector<16x5x8xf32> to vector<16x1x8xf32>
    %826 = vector.broadcast %825 : vector<16x1x8xf32> to vector<16x32x8xf32>
    %827 = vector.broadcast %760 : vector<1x32x8xf32> to vector<16x32x8xf32>
    %828 = arith.mulf %826, %827 : vector<16x32x8xf32>
    %829 = arith.addf %824, %828 : vector<16x32x8xf32>
    %830 = vector.extract_strided_slice %8 {offsets = [0, 3, 0], sizes = [16, 1, 8], strides = [1, 1, 1]} : vector<16x5x8xf32> to vector<16x1x8xf32>
    %831 = vector.broadcast %830 : vector<16x1x8xf32> to vector<16x32x8xf32>
    %832 = vector.broadcast %777 : vector<1x32x8xf32> to vector<16x32x8xf32>
    %833 = arith.mulf %831, %832 : vector<16x32x8xf32>
    %834 = arith.addf %829, %833 : vector<16x32x8xf32>
    %cst_272 = arith.constant 0.000000e+00 : f32
    %835 = vector.broadcast %cst_272 : f32 to vector<16x32x8xf32>
    %836 = arith.maximumf %834, %835 : vector<16x32x8xf32>
    %837 = vector.broadcast %801 : vector<1x32x8xf32> to vector<16x32x8xf32>
    %838 = arith.mulf %836, %837 : vector<16x32x8xf32>
    %cst_273 = arith.constant dense<0.000000e+00> : vector<16x8xf32>
    %839 = vector.multi_reduction <add>, %838, %cst_273 [1] : vector<16x32x8xf32> to vector<16x8xf32>
    %840 = vector.shape_cast %839 : vector<16x8xf32> to vector<16x1x8xf32>
    %841 = vector.broadcast %813 : vector<1x1x8xf32> to vector<16x1x8xf32>
    %842 = arith.addf %840, %841 : vector<16x1x8xf32>
    %843 = vector.extract_strided_slice %8 {offsets = [0, 4, 0], sizes = [16, 1, 8], strides = [1, 1, 1]} : vector<16x5x8xf32> to vector<16x1x8xf32>
    %844 = arith.subf %842, %843 : vector<16x1x8xf32>
    %845 = arith.mulf %844, %844 : vector<16x1x8xf32>
    %cst_274 = arith.constant dense<0.000000e+00> : vector<1x8xf32>
    %846 = vector.multi_reduction <add>, %845, %cst_274 [0] : vector<16x1x8xf32> to vector<1x8xf32>
    %cst_275 = arith.constant 6.250000e-02 : f32
    %847 = vector.broadcast %cst_275 : f32 to vector<1x8xf32>
    %848 = arith.mulf %846, %847 : vector<1x8xf32>
    %849 = tpu.concatenate %197, %848 in 0 : vector<1x8xf32>, vector<1x8xf32> -> vector<2x8xf32>
    %c0_276 = arith.constant 0 : index
    %c0_277 = arith.constant 0 : index
    %c0_278 = arith.constant 0 : index
    %850 = vector.load %arg4[%c0_276, %c0_277, %c0_278] : memref<1x2x8xf32, #tpu.memory_space<vmem>>, vector<1x2x8xf32>
    %851 = vector.shape_cast %850 : vector<1x2x8xf32> to vector<2x8xf32>
    %852 = vector.shape_cast %849 : vector<2x8xf32> to vector<1x2x8xf32>
    tpu.vector_store %arg4[%c0_276, %c0_277, %c0_278], %852 {strides = array<i32>} : memref<1x2x8xf32, #tpu.memory_space<vmem>>, vector<1x2x8xf32>,
    return
  }
  func.func @transform_0(%arg0: i32) -> (i32, i32, i32, i32) {
    %c0_i32 = arith.constant 0 : i32
    %c0_i32_0 = arith.constant 0 : i32
    %c0_i32_1 = arith.constant 0 : i32
    %c0_i32_2 = arith.constant 0 : i32
    return %arg0, %c0_i32, %c0_i32_0, %c0_i32_1 : i32, i32, i32, i32
  }
  func.func @transform_1(%arg0: i32) -> (i32, i32, i32, i32) {
    %c0_i32 = arith.constant 0 : i32
    %c0_i32_0 = arith.constant 0 : i32
    %c0_i32_1 = arith.constant 0 : i32
    %c0_i32_2 = arith.constant 0 : i32
    return %arg0, %c0_i32, %c0_i32_0, %c0_i32_1 : i32, i32, i32, i32
  }
  func.func @transform_2(%arg0: i32) -> (i32, i32, i32) {
    %c0_i32 = arith.constant 0 : i32
    %c0_i32_0 = arith.constant 0 : i32
    %c0_i32_1 = arith.constant 0 : i32
    %c0_i32_2 = arith.constant 0 : i32
    return %c0_i32, %c0_i32_0, %c0_i32_1 : i32, i32, i32
  }
  func.func @transform_3(%arg0: i32) -> (i32, i32, i32) {
    %c0_i32 = arith.constant 0 : i32
    %c0_i32_0 = arith.constant 0 : i32
    %c0_i32_1 = arith.constant 0 : i32
    return %arg0, %c0_i32, %c0_i32_0 : i32, i32, i32
  }
}

</mosaic_0001>

<llo_original>
// kernel: meta_learner_forward.1
$region0: #{meta_learner_forward.1}
  #allocation0 [shape = 'u32[]', space=smem, size = 0x4, offset = 0x4, fixed_abs, tag = 'smem constant byte address 0x4 - core index']
  #allocation1 [shape = 'u32[144,128]{1,0:T(1,128)}', space=vmem, size = 0x12000, scoped, tag = 'internal scratch']
  %s0 = inlined_call_operand.vmem [shape: f32[1,40,5,8], index: 0, kind: input, shape index: {}]
  %s1 = inlined_call_operand.vmem [shape: f32[1,16,5,8], index: 1, kind: input, shape index: {}]
  %s2 = inlined_call_operand.vmem [shape: f32[7,32,8], index: 2, kind: input, shape index: {}]
  %s3 = inlined_call_operand.vmem [shape: f32[1,2,8], index: 3, kind: output, shape index: {}]
  %s4 = sld [smem:[#allocation0]]
  $region22: #{meta_learner_forward.1} parent=0
    _
  %s6 = ssub.s32 1, %s4
  %s7 = scalar_select 0, %s6, %s4
  // Predicated region
  $region2: #{meta_learner_forward.1} parent=0 // pred_check
    _
  $region3: #{meta_learner_forward.1} parent=0 // pred_check_branch
    %9 = sbr.rel (0) target = $region5
  $region4: #{meta_learner_forward.1} parent=0 // pred_region
    _
  $region5: #{meta_learner_forward.1} parent=0 // pred_fallthru
    _
  // Predicated region
  $region6: #{meta_learner_forward.1} parent=0 // pred_check
    _
  $region7: #{meta_learner_forward.1} parent=0 // pred_check_branch
    %11 = sbr.rel (0) target = $region9
  $region8: #{meta_learner_forward.1} parent=0 // pred_region
    _
  $region9: #{meta_learner_forward.1} parent=0 // pred_fallthru
    _
  // Predicated region
  $region10: #{meta_learner_forward.1} parent=0 // pred_check
    _
  $region11: #{meta_learner_forward.1} parent=0 // pred_check_branch
    %13 = sbr.rel (0) target = $region13
  $region12: #{meta_learner_forward.1} parent=0 // pred_region
    _
  $region13: #{meta_learner_forward.1} parent=0 // pred_fallthru
    _
  %v14 = vld [vmem:[%s2] sm:$0xff]
  %v15 = vld [vmem:[%s2 + $0x8] sm:$0xff]
  %v16 = vld [vmem:[%s2 + $0x10] sm:$0xff]
  %v17 = vld [vmem:[%s2 + $0x18] sm:$0xff]
  %s18 = scalar_lea.vmem %s2, 32
  %v19 = vld [vmem:[%s18] sm:$0xff]
  %v20 = vld [vmem:[%s18 + $0x8] sm:$0xff]
  %v21 = vld [vmem:[%s18 + $0x10] sm:$0xff]
  %v22 = vld [vmem:[%s18 + $0x18] sm:$0xff]
  %s23 = scalar_lea.vmem %s2, 64
  %v24 = vld [vmem:[%s23] sm:$0xff]
  %v25 = vld [vmem:[%s23 + $0x8] sm:$0xff]
  %v26 = vld [vmem:[%s23 + $0x10] sm:$0xff]
  %v27 = vld [vmem:[%s23 + $0x18] sm:$0xff]
  %s28 = scalar_lea.vmem %s2, 96
  %v29 = vld [vmem:[%s28] sm:$0xff]
  %v30 = vld [vmem:[%s28 + $0x8] sm:$0xff]
  %v31 = vld [vmem:[%s28 + $0x10] sm:$0xff]
  %v32 = vld [vmem:[%s28 + $0x18] sm:$0xff]
  %s33 = scalar_lea.vmem %s2, 128
  %v34 = vld [vmem:[%s33] sm:$0xff]
  %v35 = vld [vmem:[%s33 + $0x8] sm:$0xff]
  %v36 = vld [vmem:[%s33 + $0x10] sm:$0xff]
  %v37 = vld [vmem:[%s33 + $0x18] sm:$0xff]
  %s38 = scalar_lea.vmem %s2, 160
  %v39 = vld [vmem:[%s38] sm:$0xff]
  %v40 = vld [vmem:[%s38 + $0x8] sm:$0xff]
  %v41 = vld [vmem:[%s38 + $0x10] sm:$0xff]
  %v42 = vld [vmem:[%s38 + $0x18] sm:$0xff]
  %s43 = scalar_lea.vmem %s2, 192
  %v44 = vld [vmem:[%s43] sm:$0x1]
  %v45 = vld [vmem:[%s1] sm:$0x1f]
  %v46 = vld [vmem:[%s1 + $0x8] sm:$0x1f]
  %v47 = vld [vmem:[%s1 + $0x10] sm:$0x1f]
  %v48 = vld [vmem:[%s1 + $0x18] sm:$0x1f]
  %v49 = vld [vmem:[%s1 + $0x20] sm:$0x1f]
  %v50 = vld [vmem:[%s1 + $0x28] sm:$0x1f]
  %v51 = vld [vmem:[%s1 + $0x30] sm:$0x1f]
  %v52 = vld [vmem:[%s1 + $0x38] sm:$0x1f]
  %v53 = vld [vmem:[%s1 + $0x40] sm:$0x1f]
  %v54 = vld [vmem:[%s1 + $0x48] sm:$0x1f]
  %v55 = vld [vmem:[%s1 + $0x50] sm:$0x1f]
  %v56 = vld [vmem:[%s1 + $0x58] sm:$0x1f]
  %v57 = vld [vmem:[%s1 + $0x60] sm:$0x1f]
  %v58 = vld [vmem:[%s1 + $0x68] sm:$0x1f]
  %v59 = vld [vmem:[%s1 + $0x70] sm:$0x1f]
  %v60 = vld [vmem:[%s1 + $0x78] sm:$0x1f]
  %v61 = vld [vmem:[%s0] sm:$0x1f]
  %v62 = vld [vmem:[%s0 + $0x8] sm:$0x1f]
  %v63 = vld [vmem:[%s0 + $0x10] sm:$0x1f]
  %v64 = vld [vmem:[%s0 + $0x18] sm:$0x1f]
  %v65 = vld [vmem:[%s0 + $0x20] sm:$0x1f]
  %v66 = vld [vmem:[%s0 + $0x28] sm:$0x1f]
  %v67 = vld [vmem:[%s0 + $0x30] sm:$0x1f]
  %v68 = vld [vmem:[%s0 + $0x38] sm:$0x1f]
  %v69 = vlaneseq
  %v70 = vshrl.u32 %v69, 7
  %v71 = vsub.s32 0, %v70
  %v72 = vrot.slane %v61, %v71
  %v73 = vlaneseq
  %v74 = vshrl.u32 %v73, 7
  %v75 = vsub.s32 0, %v74
  %v76 = vrot.slane %v62, %v75
  %v77 = vlaneseq
  %v78 = vshrl.u32 %v77, 7
  %v79 = vsub.s32 0, %v78
  %v80 = vrot.slane %v63, %v79
  %v81 = vlaneseq
  %v82 = vshrl.u32 %v81, 7
  %v83 = vsub.s32 0, %v82
  %v84 = vrot.slane %v64, %v83
  %v85 = vlaneseq
  %v86 = vshrl.u32 %v85, 7
  %v87 = vsub.s32 0, %v86
  %v88 = vrot.slane %v65, %v87
  %v89 = vlaneseq
  %v90 = vshrl.u32 %v89, 7
  %v91 = vsub.s32 0, %v90
  %v92 = vrot.slane %v66, %v91
  %v93 = vlaneseq
  %v94 = vshrl.u32 %v93, 7
  %v95 = vsub.s32 0, %v94
  %v96 = vrot.slane %v67, %v95
  %v97 = vlaneseq
  %v98 = vshrl.u32 %v97, 7
  %v99 = vsub.s32 0, %v98
  %v100 = vrot.slane %v68, %v99
  %v101 = vmul.f32 %v72, %v14
  %v102 = vmul.f32 %v72, %v15
  %v103 = vmul.f32 %v72, %v16
  %v104 = vmul.f32 %v72, %v17
  %v105 = vmul.f32 %v76, %v14
  %v106 = vmul.f32 %v76, %v15
  %v107 = vmul.f32 %v76, %v16
  %v108 = vmul.f32 %v76, %v17
  %v109 = vmul.f32 %v80, %v14
  %v110 = vmul.f32 %v80, %v15
  %v111 = vmul.f32 %v80, %v16
  %v112 = vmul.f32 %v80, %v17
  %v113 = vmul.f32 %v84, %v14
  %v114 = vmul.f32 %v84, %v15
  %v115 = vmul.f32 %v84, %v16
  %v116 = vmul.f32 %v84, %v17
  %v117 = vmul.f32 %v88, %v14
  %v118 = vmul.f32 %v88, %v15
  %v119 = vmul.f32 %v88, %v16
  %v120 = vmul.f32 %v88, %v17
  %v121 = vmul.f32 %v92, %v14
  %v122 = vmul.f32 %v92, %v15
  %v123 = vmul.f32 %v92, %v16
  %v124 = vmul.f32 %v92, %v17
  %v125 = vmul.f32 %v96, %v14
  %v126 = vmul.f32 %v96, %v15
  %v127 = vmul.f32 %v96, %v16
  %v128 = vmul.f32 %v96, %v17
  %v129 = vmul.f32 %v100, %v14
  %v130 = vmul.f32 %v100, %v15
  %v131 = vmul.f32 %v100, %v16
  %v132 = vmul.f32 %v100, %v17
  %v133 = vadd.f32 %v34, %v101
  %v134 = vadd.f32 %v35, %v102
  %v135 = vadd.f32 %v36, %v103
  %v136 = vadd.f32 %v37, %v104
  %v137 = vadd.f32 %v34, %v105
  %v138 = vadd.f32 %v35, %v106
  %v139 = vadd.f32 %v36, %v107
  %v140 = vadd.f32 %v37, %v108
  %v141 = vadd.f32 %v34, %v109
  %v142 = vadd.f32 %v35, %v110
  %v143 = vadd.f32 %v36, %v111
  %v144 = vadd.f32 %v37, %v112
  %v145 = vadd.f32 %v34, %v113
  %v146 = vadd.f32 %v35, %v114
  %v147 = vadd.f32 %v36, %v115
  %v148 = vadd.f32 %v37, %v116
  %v149 = vadd.f32 %v34, %v117
  %v150 = vadd.f32 %v35, %v118
  %v151 = vadd.f32 %v36, %v119
  %v152 = vadd.f32 %v37, %v120
  %v153 = vadd.f32 %v34, %v121
  %v154 = vadd.f32 %v35, %v122
  %v155 = vadd.f32 %v36, %v123
  %v156 = vadd.f32 %v37, %v124
  %v157 = vadd.f32 %v34, %v125
  %v158 = vadd.f32 %v35, %v126
  %v159 = vadd.f32 %v36, %v127
  %v160 = vadd.f32 %v37, %v128
  %v161 = vadd.f32 %v34, %v129
  %v162 = vadd.f32 %v35, %v130
  %v163 = vadd.f32 %v36, %v131
  %v164 = vadd.f32 %v37, %v132
  %v165 = vlaneseq
  %v166 = vshrl.u32 %v165, 7
  %v167 = vsub.s32 1, %v166
  %v168 = vrot.slane %v61, %v167
  %v169 = vlaneseq
  %v170 = vshrl.u32 %v169, 7
  %v171 = vsub.s32 1, %v170
  %v172 = vrot.slane %v62, %v171
  %v173 = vlaneseq
  %v174 = vshrl.u32 %v173, 7
  %v175 = vsub.s32 1, %v174
  %v176 = vrot.slane %v63, %v175
  %v177 = vlaneseq
  %v178 = vshrl.u32 %v177, 7
  %v179 = vsub.s32 1, %v178
  %v180 = vrot.slane %v64, %v179
  %v181 = vlaneseq
  %v182 = vshrl.u32 %v181, 7
  %v183 = vsub.s32 1, %v182
  %v184 = vrot.slane %v65, %v183
  %v185 = vlaneseq
  %v186 = vshrl.u32 %v185, 7
  %v187 = vsub.s32 1, %v186
  %v188 = vrot.slane %v66, %v187
  %v189 = vlaneseq
  %v190 = vshrl.u32 %v189, 7
  %v191 = vsub.s32 1, %v190
  %v192 = vrot.slane %v67, %v191
  %v193 = vlaneseq
  %v194 = vshrl.u32 %v193, 7
  %v195 = vsub.s32 1, %v194
  %v196 = vrot.slane %v68, %v195
  %v197 = vmul.f32 %v168, %v19
  %v198 = vmul.f32 %v168, %v20
  %v199 = vmul.f32 %v168, %v21
  %v200 = vmul.f32 %v168, %v22
  %v201 = vmul.f32 %v172, %v19
  %v202 = vmul.f32 %v172, %v20
  %v203 = vmul.f32 %v172, %v21
  %v204 = vmul.f32 %v172, %v22
  %v205 = vmul.f32 %v176, %v19
  %v206 = vmul.f32 %v176, %v20
  %v207 = vmul.f32 %v176, %v21
  %v208 = vmul.f32 %v176, %v22
  %v209 = vmul.f32 %v180, %v19
  %v210 = vmul.f32 %v180, %v20
  %v211 = vmul.f32 %v180, %v21
  %v212 = vmul.f32 %v180, %v22
  %v213 = vmul.f32 %v184, %v19
  %v214 = vmul.f32 %v184, %v20
  %v215 = vmul.f32 %v184, %v21
  %v216 = vmul.f32 %v184, %v22
  %v217 = vmul.f32 %v188, %v19
  %v218 = vmul.f32 %v188, %v20
  %v219 = vmul.f32 %v188, %v21
  %v220 = vmul.f32 %v188, %v22
  %v221 = vmul.f32 %v192, %v19
  %v222 = vmul.f32 %v192, %v20
  %v223 = vmul.f32 %v192, %v21
  %v224 = vmul.f32 %v192, %v22
  %v225 = vmul.f32 %v196, %v19
  %v226 = vmul.f32 %v196, %v20
  %v227 = vmul.f32 %v196, %v21
  %v228 = vmul.f32 %v196, %v22
  %v229 = vadd.f32 %v133, %v197
  %v230 = vadd.f32 %v134, %v198
  %v231 = vadd.f32 %v135, %v199
  %v232 = vadd.f32 %v136, %v200
  %v233 = vadd.f32 %v137, %v201
  %v234 = vadd.f32 %v138, %v202
  %v235 = vadd.f32 %v139, %v203
  %v236 = vadd.f32 %v140, %v204
  %v237 = vadd.f32 %v141, %v205
  %v238 = vadd.f32 %v142, %v206
  %v239 = vadd.f32 %v143, %v207
  %v240 = vadd.f32 %v144, %v208
  %v241 = vadd.f32 %v145, %v209
  %v242 = vadd.f32 %v146, %v210
  %v243 = vadd.f32 %v147, %v211
  %v244 = vadd.f32 %v148, %v212
  %v245 = vadd.f32 %v149, %v213
  %v246 = vadd.f32 %v150, %v214
  %v247 = vadd.f32 %v151, %v215
  %v248 = vadd.f32 %v152, %v216
  %v249 = vadd.f32 %v153, %v217
  %v250 = vadd.f32 %v154, %v218
  %v251 = vadd.f32 %v155, %v219
  %v252 = vadd.f32 %v156, %v220
  %v253 = vadd.f32 %v157, %v221
  %v254 = vadd.f32 %v158, %v222
  %v255 = vadd.f32 %v159, %v223
  %v256 = vadd.f32 %v160, %v224
  %v257 = vadd.f32 %v161, %v225
  %v258 = vadd.f32 %v162, %v226
  %v259 = vadd.f32 %v163, %v227
  %v260 = vadd.f32 %v164, %v228
  %v261 = vlaneseq
  %v262 = vshrl.u32 %v261, 7
  %v263 = vsub.s32 2, %v262
  %v264 = vrot.slane %v61, %v263
  %v265 = vlaneseq
  %v266 = vshrl.u32 %v265, 7
  %v267 = vsub.s32 2, %v266
  %v268 = vrot.slane %v62, %v267
  %v269 = vlaneseq
  %v270 = vshrl.u32 %v269, 7
  %v271 = vsub.s32 2, %v270
  %v272 = vrot.slane %v63, %v271
  %v273 = vlaneseq
  %v274 = vshrl.u32 %v273, 7
  %v275 = vsub.s32 2, %v274
  %v276 = vrot.slane %v64, %v275
  %v277 = vlaneseq
  %v278 = vshrl.u32 %v277, 7
  %v279 = vsub.s32 2, %v278
  %v280 = vrot.slane %v65, %v279
  %v281 = vlaneseq
  %v282 = vshrl.u32 %v281, 7
  %v283 = vsub.s32 2, %v282
  %v284 = vrot.slane %v66, %v283
  %v285 = vlaneseq
  %v286 = vshrl.u32 %v285, 7
  %v287 = vsub.s32 2, %v286
  %v288 = vrot.slane %v67, %v287
  %v289 = vlaneseq
  %v290 = vshrl.u32 %v289, 7
  %v291 = vsub.s32 2, %v290
  %v292 = vrot.slane %v68, %v291
  %v293 = vmul.f32 %v264, %v24
  %v294 = vmul.f32 %v264, %v25
  %v295 = vmul.f32 %v264, %v26
  %v296 = vmul.f32 %v264, %v27
  %v297 = vmul.f32 %v268, %v24
  %v298 = vmul.f32 %v268, %v25
  %v299 = vmul.f32 %v268, %v26
  %v300 = vmul.f32 %v268, %v27
  %v301 = vmul.f32 %v272, %v24
  %v302 = vmul.f32 %v272, %v25
  %v303 = vmul.f32 %v272, %v26
  %v304 = vmul.f32 %v272, %v27
  %v305 = vmul.f32 %v276, %v24
  %v306 = vmul.f32 %v276, %v25
  %v307 = vmul.f32 %v276, %v26
  %v308 = vmul.f32 %v276, %v27
  %v309 = vmul.f32 %v280, %v24
  %v310 = vmul.f32 %v280, %v25
  %v311 = vmul.f32 %v280, %v26
  %v312 = vmul.f32 %v280, %v27
  %v313 = vmul.f32 %v284, %v24
  %v314 = vmul.f32 %v284, %v25
  %v315 = vmul.f32 %v284, %v26
  %v316 = vmul.f32 %v284, %v27
  %v317 = vmul.f32 %v288, %v24
  %v318 = vmul.f32 %v288, %v25
  %v319 = vmul.f32 %v288, %v26
  %v320 = vmul.f32 %v288, %v27
  %v321 = vmul.f32 %v292, %v24
  %v322 = vmul.f32 %v292, %v25
  %v323 = vmul.f32 %v292, %v26
  %v324 = vmul.f32 %v292, %v27
  %v325 = vadd.f32 %v229, %v293
  %v326 = vadd.f32 %v230, %v294
  %v327 = vadd.f32 %v231, %v295
  %v328 = vadd.f32 %v232, %v296
  %v329 = vadd.f32 %v233, %v297
  %v330 = vadd.f32 %v234, %v298
  %v331 = vadd.f32 %v235, %v299
  %v332 = vadd.f32 %v236, %v300
  %v333 = vadd.f32 %v237, %v301
  %v334 = vadd.f32 %v238, %v302
  %v335 = vadd.f32 %v239, %v303
  %v336 = vadd.f32 %v240, %v304
  %v337 = vadd.f32 %v241, %v305
  %v338 = vadd.f32 %v242, %v306
  %v339 = vadd.f32 %v243, %v307
  %v340 = vadd.f32 %v244, %v308
  %v341 = vadd.f32 %v245, %v309
  %v342 = vadd.f32 %v246, %v310
  %v343 = vadd.f32 %v247, %v311
  %v344 = vadd.f32 %v248, %v312
  %v345 = vadd.f32 %v249, %v313
  %v346 = vadd.f32 %v250, %v314
  %v347 = vadd.f32 %v251, %v315
  %v348 = vadd.f32 %v252, %v316
  %v349 = vadd.f32 %v253, %v317
  %v350 = vadd.f32 %v254, %v318
  %v351 = vadd.f32 %v255, %v319
  %v352 = vadd.f32 %v256, %v320
  %v353 = vadd.f32 %v257, %v321
  %v354 = vadd.f32 %v258, %v322
  %v355 = vadd.f32 %v259, %v323
  %v356 = vadd.f32 %v260, %v324
  %v357 = vlaneseq
  %v358 = vshrl.u32 %v357, 7
  %v359 = vsub.s32 3, %v358
  %v360 = vrot.slane %v61, %v359
  %v361 = vlaneseq
  %v362 = vshrl.u32 %v361, 7
  %v363 = vsub.s32 3, %v362
  %v364 = vrot.slane %v62, %v363
  %v365 = vlaneseq
  %v366 = vshrl.u32 %v365, 7
  %v367 = vsub.s32 3, %v366
  %v368 = vrot.slane %v63, %v367
  %v369 = vlaneseq
  %v370 = vshrl.u32 %v369, 7
  %v371 = vsub.s32 3, %v370
  %v372 = vrot.slane %v64, %v371
  %v373 = vlaneseq
  %v374 = vshrl.u32 %v373, 7
  %v375 = vsub.s32 3, %v374
  %v376 = vrot.slane %v65, %v375
  %v377 = vlaneseq
  %v378 = vshrl.u32 %v377, 7
  %v379 = vsub.s32 3, %v378
  %v380 = vrot.slane %v66, %v379
  %v381 = vlaneseq
  %v382 = vshrl.u32 %v381, 7
  %v383 = vsub.s32 3, %v382
  %v384 = vrot.slane %v67, %v383
  %v385 = vlaneseq
  %v386 = vshrl.u32 %v385, 7
  %v387 = vsub.s32 3, %v386
  %v388 = vrot.slane %v68, %v387
  %v389 = vmul.f32 %v360, %v29
  %v390 = vmul.f32 %v360, %v30
  %v391 = vmul.f32 %v360, %v31
  %v392 = vmul.f32 %v360, %v32
  %v393 = vmul.f32 %v364, %v29
  %v394 = vmul.f32 %v364, %v30
  %v395 = vmul.f32 %v364, %v31
  %v396 = vmul.f32 %v364, %v32
  %v397 = vmul.f32 %v368, %v29
  %v398 = vmul.f32 %v368, %v30
  %v399 = vmul.f32 %v368, %v31
  %v400 = vmul.f32 %v368, %v32
  %v401 = vmul.f32 %v372, %v29
  %v402 = vmul.f32 %v372, %v30
  %v403 = vmul.f32 %v372, %v31
  %v404 = vmul.f32 %v372, %v32
  %v405 = vmul.f32 %v376, %v29
  %v406 = vmul.f32 %v376, %v30
  %v407 = vmul.f32 %v376, %v31
  %v408 = vmul.f32 %v376, %v32
  %v409 = vmul.f32 %v380, %v29
  %v410 = vmul.f32 %v380, %v30
  %v411 = vmul.f32 %v380, %v31
  %v412 = vmul.f32 %v380, %v32
  %v413 = vmul.f32 %v384, %v29
  %v414 = vmul.f32 %v384, %v30
  %v415 = vmul.f32 %v384, %v31
  %v416 = vmul.f32 %v384, %v32
  %v417 = vmul.f32 %v388, %v29
  %v418 = vmul.f32 %v388, %v30
  %v419 = vmul.f32 %v388, %v31
  %v420 = vmul.f32 %v388, %v32
  %v421 = vadd.f32 %v325, %v389
  %v422 = vadd.f32 %v326, %v390
  %v423 = vadd.f32 %v327, %v391
  %v424 = vadd.f32 %v328, %v392
  %v425 = vadd.f32 %v329, %v393
  %v426 = vadd.f32 %v330, %v394
  %v427 = vadd.f32 %v331, %v395
  %v428 = vadd.f32 %v332, %v396
  %v429 = vadd.f32 %v333, %v397
  %v430 = vadd.f32 %v334, %v398
  %v431 = vadd.f32 %v335, %v399
  %v432 = vadd.f32 %v336, %v400
  %v433 = vadd.f32 %v337, %v401
  %v434 = vadd.f32 %v338, %v402
  %v435 = vadd.f32 %v339, %v403
  %v436 = vadd.f32 %v340, %v404
  %v437 = vadd.f32 %v341, %v405
  %v438 = vadd.f32 %v342, %v406
  %v439 = vadd.f32 %v343, %v407
  %v440 = vadd.f32 %v344, %v408
  %v441 = vadd.f32 %v345, %v409
  %v442 = vadd.f32 %v346, %v410
  %v443 = vadd.f32 %v347, %v411
  %v444 = vadd.f32 %v348, %v412
  %v445 = vadd.f32 %v349, %v413
  %v446 = vadd.f32 %v350, %v414
  %v447 = vadd.f32 %v351, %v415
  %v448 = vadd.f32 %v352, %v416
  %v449 = vadd.f32 %v353, %v417
  %v450 = vadd.f32 %v354, %v418
  %v451 = vadd.f32 %v355, %v419
  %v452 = vadd.f32 %v356, %v420
  %v453 = vmax.f32 %v421, 0.0
  %v454 = vmax.f32 %v422, 0.0
  %v455 = vmax.f32 %v423, 0.0
  %v456 = vmax.f32 %v424, 0.0
  %v457 = vmax.f32 %v425, 0.0
  %v458 = vmax.f32 %v426, 0.0
  %v459 = vmax.f32 %v427, 0.0
  %v460 = vmax.f32 %v428, 0.0
  %v461 = vmax.f32 %v429, 0.0
  %v462 = vmax.f32 %v430, 0.0
  %v463 = vmax.f32 %v431, 0.0
  %v464 = vmax.f32 %v432, 0.0
  %v465 = vmax.f32 %v433, 0.0
  %v466 = vmax.f32 %v434, 0.0
  %v467 = vmax.f32 %v435, 0.0
  %v468 = vmax.f32 %v436, 0.0
  %v469 = vmax.f32 %v437, 0.0
  %v470 = vmax.f32 %v438, 0.0
  %v471 = vmax.f32 %v439, 0.0
  %v472 = vmax.f32 %v440, 0.0
  %v473 = vmax.f32 %v441, 0.0
  %v474 = vmax.f32 %v442, 0.0
  %v475 = vmax.f32 %v443, 0.0
  %v476 = vmax.f32 %v444, 0.0
  %v477 = vmax.f32 %v445, 0.0
  %v478 = vmax.f32 %v446, 0.0
  %v479 = vmax.f32 %v447, 0.0
  %v480 = vmax.f32 %v448, 0.0
  %v481 = vmax.f32 %v449, 0.0
  %v482 = vmax.f32 %v450, 0.0
  %v483 = vmax.f32 %v451, 0.0
  %v484 = vmax.f32 %v452, 0.0
  %v485 = vmul.f32 %v453, %v39
  %v486 = vmul.f32 %v454, %v40
  %v487 = vmul.f32 %v455, %v41
  %v488 = vmul.f32 %v456, %v42
  %v489 = vmul.f32 %v457, %v39
  %v490 = vmul.f32 %v458, %v40
  %v491 = vmul.f32 %v459, %v41
  %v492 = vmul.f32 %v460, %v42
  %v493 = vmul.f32 %v461, %v39
  %v494 = vmul.f32 %v462, %v40
  %v495 = vmul.f32 %v463, %v41
  %v496 = vmul.f32 %v464, %v42
  %v497 = vmul.f32 %v465, %v39
  %v498 = vmul.f32 %v466, %v40
  %v499 = vmul.f32 %v467, %v41
  %v500 = vmul.f32 %v468, %v42
  %v501 = vmul.f32 %v469, %v39
  %v502 = vmul.f32 %v470, %v40
  %v503 = vmul.f32 %v471, %v41
  %v504 = vmul.f32 %v472, %v42
  %v505 = vmul.f32 %v473, %v39
  %v506 = vmul.f32 %v474, %v40
  %v507 = vmul.f32 %v475, %v41
  %v508 = vmul.f32 %v476, %v42
  %v509 = vmul.f32 %v477, %v39
  %v510 = vmul.f32 %v478, %v40
  %v511 = vmul.f32 %v479, %v41
  %v512 = vmul.f32 %v480, %v42
  %v513 = vmul.f32 %v481, %v39
  %v514 = vmul.f32 %v482, %v40
  %v515 = vmul.f32 %v483, %v41
  %v516 = vmul.f32 %v484, %v42
  %vm517 = vcmask 64512
  %v518 = vsel %vm517, %v485, 0.0
  %v519 = vsel %vm517, %v486, 0.0
  %v520 = vadd.f32 %v518, %v519
  %v521 = vsel %vm517, %v487, 0.0
  %v522 = vadd.f32 %v520, %v521
  %v523 = vsel %vm517, %v488, 0.0
  %v524 = vadd.f32 %v522, %v523
  %v525 = vrot.slane %v524, 4
  %v526 = vadd.f32 %v524, %v525
  %v527 = vrot.slane %v526, 2
  %v528 = vadd.f32 %v526, %v527
  %v529 = vrot.slane %v528, 1
  %v530 = vadd.f32 %v528, %v529
  %v531 = vsel %vm517, %v489, 0.0
  %v532 = vsel %vm517, %v490, 0.0
  %v533 = vadd.f32 %v531, %v532
  %v534 = vsel %vm517, %v491, 0.0
  %v535 = vadd.f32 %v533, %v534
  %v536 = vsel %vm517, %v492, 0.0
  %v537 = vadd.f32 %v535, %v536
  %v538 = vrot.slane %v537, 4
  %v539 = vadd.f32 %v537, %v538
  %v540 = vrot.slane %v539, 2
  %v541 = vadd.f32 %v539, %v540
  %v542 = vrot.slane %v541, 1
  %v543 = vadd.f32 %v541, %v542
  %v544 = vsel %vm517, %v493, 0.0
  %v545 = vsel %vm517, %v494, 0.0
  %v546 = vadd.f32 %v544, %v545
  %v547 = vsel %vm517, %v495, 0.0
  %v548 = vadd.f32 %v546, %v547
  %v549 = vsel %vm517, %v496, 0.0
  %v550 = vadd.f32 %v548, %v549
  %v551 = vrot.slane %v550, 4
  %v552 = vadd.f32 %v550, %v551
  %v553 = vrot.slane %v552, 2
  %v554 = vadd.f32 %v552, %v553
  %v555 = vrot.slane %v554, 1
  %v556 = vadd.f32 %v554, %v555
  %v557 = vsel %vm517, %v497, 0.0
  %v558 = vsel %vm517, %v498, 0.0
  %v559 = vadd.f32 %v557, %v558
  %v560 = vsel %vm517, %v499, 0.0
  %v561 = vadd.f32 %v559, %v560
  %v562 = vsel %vm517, %v500, 0.0
  %v563 = vadd.f32 %v561, %v562
  %v564 = vrot.slane %v563, 4
  %v565 = vadd.f32 %v563, %v564
  %v566 = vrot.slane %v565, 2
  %v567 = vadd.f32 %v565, %v566
  %v568 = vrot.slane %v567, 1
  %v569 = vadd.f32 %v567, %v568
  %v570 = vsel %vm517, %v501, 0.0
  %v571 = vsel %vm517, %v502, 0.0
  %v572 = vadd.f32 %v570, %v571
  %v573 = vsel %vm517, %v503, 0.0
  %v574 = vadd.f32 %v572, %v573
  %v575 = vsel %vm517, %v504, 0.0
  %v576 = vadd.f32 %v574, %v575
  %v577 = vrot.slane %v576, 4
  %v578 = vadd.f32 %v576, %v577
  %v579 = vrot.slane %v578, 2
  %v580 = vadd.f32 %v578, %v579
  %v581 = vrot.slane %v580, 1
  %v582 = vadd.f32 %v580, %v581
  %v583 = vsel %vm517, %v505, 0.0
  %v584 = vsel %vm517, %v506, 0.0
  %v585 = vadd.f32 %v583, %v584
  %v586 = vsel %vm517, %v507, 0.0
  %v587 = vadd.f32 %v585, %v586
  %v588 = vsel %vm517, %v508, 0.0
  %v589 = vadd.f32 %v587, %v588
  %v590 = vrot.slane %v589, 4
  %v591 = vadd.f32 %v589, %v590
  %v592 = vrot.slane %v591, 2
  %v593 = vadd.f32 %v591, %v592
  %v594 = vrot.slane %v593, 1
  %v595 = vadd.f32 %v593, %v594
  %v596 = vsel %vm517, %v509, 0.0
  %v597 = vsel %vm517, %v510, 0.0
  %v598 = vadd.f32 %v596, %v597
  %v599 = vsel %vm517, %v511, 0.0
  %v600 = vadd.f32 %v598, %v599
  %v601 = vsel %vm517, %v512, 0.0
  %v602 = vadd.f32 %v600, %v601
  %v603 = vrot.slane %v602, 4
  %v604 = vadd.f32 %v602, %v603
  %v605 = vrot.slane %v604, 2
  %v606 = vadd.f32 %v604, %v605
  %v607 = vrot.slane %v606, 1
  %v608 = vadd.f32 %v606, %v607
  %v609 = vsel %vm517, %v513, 0.0
  %v610 = vsel %vm517, %v514, 0.0
  %v611 = vadd.f32 %v609, %v610
  %v612 = vsel %vm517, %v515, 0.0
  %v613 = vadd.f32 %v611, %v612
  %v614 = vsel %vm517, %v516, 0.0
  %v615 = vadd.f32 %v613, %v614
  %v616 = vrot.slane %v615, 4
  %v617 = vadd.f32 %v615, %v616
  %v618 = vrot.slane %v617, 2
  %v619 = vadd.f32 %v617, %v618
  %v620 = vrot.slane %v619, 1
  %v621 = vadd.f32 %v619, %v620
  %v622 = vadd.f32 %v530, %v44
  %v623 = vadd.f32 %v543, %v44
  %v624 = vadd.f32 %v556, %v44
  %v625 = vadd.f32 %v569, %v44
  %v626 = vadd.f32 %v582, %v44
  %v627 = vadd.f32 %v595, %v44
  %v628 = vadd.f32 %v608, %v44
  %v629 = vadd.f32 %v621, %v44
  %v638 = vrot.slane %v61, 4
  %v639 = vrot.slane %v62, 4
  %v640 = vrot.slane %v63, 4
  %v641 = vrot.slane %v64, 4
  %v642 = vrot.slane %v65, 4
  %v643 = vrot.slane %v66, 4
  %v644 = vrot.slane %v67, 4
  %v645 = vrot.slane %v68, 4
  %v654 = vsub.f32 %v622, %v638
  %v655 = vsub.f32 %v623, %v639
  %v656 = vsub.f32 %v624, %v640
  %v657 = vsub.f32 %v625, %v641
  %v658 = vsub.f32 %v626, %v642
  %v659 = vsub.f32 %v627, %v643
  %v660 = vsub.f32 %v628, %v644
  %v661 = vsub.f32 %v629, %v645
  %v662 = vmul.f32 %v654, 0.25
  %v663 = vmul.f32 %v655, 0.25
  %v664 = vmul.f32 %v656, 0.25
  %v665 = vmul.f32 %v657, 0.25
  %v666 = vmul.f32 %v658, 0.25
  %v667 = vmul.f32 %v659, 0.25
  %v668 = vmul.f32 %v660, 0.25
  %v669 = vmul.f32 %v661, 0.25
  %v670 = vlaneseq
  %v671 = vshrl.u32 %v670, 7
  %v672 = vsub.s32 0, %v671
  %v673 = vrot.slane %v662, %v672
  %v674 = vlaneseq
  %v675 = vshrl.u32 %v674, 7
  %v676 = vsub.s32 0, %v675
  %v677 = vrot.slane %v663, %v676
  %v678 = vlaneseq
  %v679 = vshrl.u32 %v678, 7
  %v680 = vsub.s32 0, %v679
  %v681 = vrot.slane %v664, %v680
  %v682 = vlaneseq
  %v683 = vshrl.u32 %v682, 7
  %v684 = vsub.s32 0, %v683
  %v685 = vrot.slane %v665, %v684
  %v686 = vlaneseq
  %v687 = vshrl.u32 %v686, 7
  %v688 = vsub.s32 0, %v687
  %v689 = vrot.slane %v666, %v688
  %v690 = vlaneseq
  %v691 = vshrl.u32 %v690, 7
  %v692 = vsub.s32 0, %v691
  %v693 = vrot.slane %v667, %v692
  %v694 = vlaneseq
  %v695 = vshrl.u32 %v694, 7
  %v696 = vsub.s32 0, %v695
  %v697 = vrot.slane %v668, %v696
  %v698 = vlaneseq
  %v699 = vshrl.u32 %v698, 7
  %v700 = vsub.s32 0, %v699
  %v701 = vrot.slane %v669, %v700
  %v702 = vmul.f32 %v673, %v453
  %v703 = vmul.f32 %v673, %v454
  %v704 = vmul.f32 %v673, %v455
  %v705 = vmul.f32 %v673, %v456
  %v706 = vmul.f32 %v677, %v457
  %v707 = vmul.f32 %v677, %v458
  %v708 = vmul.f32 %v677, %v459
  %v709 = vmul.f32 %v677, %v460
  %v710 = vmul.f32 %v681, %v461
  %v711 = vmul.f32 %v681, %v462
  %v712 = vmul.f32 %v681, %v463
  %v713 = vmul.f32 %v681, %v464
  %v714 = vmul.f32 %v685, %v465
  %v715 = vmul.f32 %v685, %v466
  %v716 = vmul.f32 %v685, %v467
  %v717 = vmul.f32 %v685, %v468
  %v718 = vmul.f32 %v689, %v469
  %v719 = vmul.f32 %v689, %v470
  %v720 = vmul.f32 %v689, %v471
  %v721 = vmul.f32 %v689, %v472
  %v722 = vmul.f32 %v693, %v473
  %v723 = vmul.f32 %v693, %v474
  %v724 = vmul.f32 %v693, %v475
  %v725 = vmul.f32 %v693, %v476
  %v726 = vmul.f32 %v697, %v477
  %v727 = vmul.f32 %v697, %v478
  %v728 = vmul.f32 %v697, %v479
  %v729 = vmul.f32 %v697, %v480
  %v730 = vmul.f32 %v701, %v481
  %v731 = vmul.f32 %v701, %v482
  %v732 = vmul.f32 %v701, %v483
  %v733 = vmul.f32 %v701, %v484
  %v734 = vsel %vm517, %v702, 0.0
  %v735 = vsel %vm517, %v706, 0.0
  %v736 = vadd.f32 %v734, %v735
  %v737 = vsel %vm517, %v710, 0.0
  %v738 = vadd.f32 %v736, %v737
  %v739 = vsel %vm517, %v714, 0.0
  %v740 = vadd.f32 %v738, %v739
  %v741 = vsel %vm517, %v718, 0.0
  %v742 = vadd.f32 %v740, %v741
  %v743 = vsel %vm517, %v722, 0.0
  %v744 = vadd.f32 %v742, %v743
  %v745 = vsel %vm517, %v726, 0.0
  %v746 = vadd.f32 %v744, %v745
  %v747 = vsel %vm517, %v730, 0.0
  %v748 = vadd.f32 %v746, %v747
  %v749 = vsel %vm517, %v703, 0.0
  %v750 = vsel %vm517, %v707, 0.0
  %v751 = vadd.f32 %v749, %v750
  %v752 = vsel %vm517, %v711, 0.0
  %v753 = vadd.f32 %v751, %v752
  %v754 = vsel %vm517, %v715, 0.0
  %v755 = vadd.f32 %v753, %v754
  %v756 = vsel %vm517, %v719, 0.0
  %v757 = vadd.f32 %v755, %v756
  %v758 = vsel %vm517, %v723, 0.0
  %v759 = vadd.f32 %v757, %v758
  %v760 = vsel %vm517, %v727, 0.0
  %v761 = vadd.f32 %v759, %v760
  %v762 = vsel %vm517, %v731, 0.0
  %v763 = vadd.f32 %v761, %v762
  %v764 = vsel %vm517, %v704, 0.0
  %v765 = vsel %vm517, %v708, 0.0
  %v766 = vadd.f32 %v764, %v765
  %v767 = vsel %vm517, %v712, 0.0
  %v768 = vadd.f32 %v766, %v767
  %v769 = vsel %vm517, %v716, 0.0
  %v770 = vadd.f32 %v768, %v769
  %v771 = vsel %vm517, %v720, 0.0
  %v772 = vadd.f32 %v770, %v771
  %v773 = vsel %vm517, %v724, 0.0
  %v774 = vadd.f32 %v772, %v773
  %v775 = vsel %vm517, %v728, 0.0
  %v776 = vadd.f32 %v774, %v775
  %v777 = vsel %vm517, %v732, 0.0
  %v778 = vadd.f32 %v776, %v777
  %v779 = vsel %vm517, %v705, 0.0
  %v780 = vsel %vm517, %v709, 0.0
  %v781 = vadd.f32 %v779, %v780
  %v782 = vsel %vm517, %v713, 0.0
  %v783 = vadd.f32 %v781, %v782
  %v784 = vsel %vm517, %v717, 0.0
  %v785 = vadd.f32 %v783, %v784
  %v786 = vsel %vm517, %v721, 0.0
  %v787 = vadd.f32 %v785, %v786
  %v788 = vsel %vm517, %v725, 0.0
  %v789 = vadd.f32 %v787, %v788
  %v790 = vsel %vm517, %v729, 0.0
  %v791 = vadd.f32 %v789, %v790
  %v792 = vsel %vm517, %v733, 0.0
  %v793 = vadd.f32 %v791, %v792
  %vm794 = vcmask 57344
  %v795 = vsel %vm794, %v662, 0.0
  %v796 = vsel %vm794, %v663, 0.0
  %v797 = vadd.f32 %v795, %v796
  %v798 = vsel %vm794, %v664, 0.0
  %v799 = vadd.f32 %v797, %v798
  %v800 = vsel %vm794, %v665, 0.0
  %v801 = vadd.f32 %v799, %v800
  %v802 = vsel %vm794, %v666, 0.0
  %v803 = vadd.f32 %v801, %v802
  %v804 = vsel %vm794, %v667, 0.0
  %v805 = vadd.f32 %v803, %v804
  %v806 = vsel %vm794, %v668, 0.0
  %v807 = vadd.f32 %v805, %v806
  %v808 = vsel %vm794, %v669, 0.0
  %v809 = vadd.f32 %v807, %v808
  %vm810 = vcmp.gt.f32.partialorder %v453, 0.0
  %vm811 = vcmp.gt.f32.partialorder %v454, 0.0
  %vm812 = vcmp.gt.f32.partialorder %v455, 0.0
  %vm813 = vcmp.gt.f32.partialorder %v456, 0.0
  %vm814 = vcmp.gt.f32.partialorder %v457, 0.0
  %vm815 = vcmp.gt.f32.partialorder %v458, 0.0
  %vm816 = vcmp.gt.f32.partialorder %v459, 0.0
  %vm817 = vcmp.gt.f32.partialorder %v460, 0.0
  %vm818 = vcmp.gt.f32.partialorder %v461, 0.0
  %vm819 = vcmp.gt.f32.partialorder %v462, 0.0
  %vm820 = vcmp.gt.f32.partialorder %v463, 0.0
  %vm821 = vcmp.gt.f32.partialorder %v464, 0.0
  %vm822 = vcmp.gt.f32.partialorder %v465, 0.0
  %vm823 = vcmp.gt.f32.partialorder %v466, 0.0
  %vm824 = vcmp.gt.f32.partialorder %v467, 0.0
  %vm825 = vcmp.gt.f32.partialorder %v468, 0.0
  %vm826 = vcmp.gt.f32.partialorder %v469, 0.0
  %vm827 = vcmp.gt.f32.partialorder %v470, 0.0
  %vm828 = vcmp.gt.f32.partialorder %v471, 0.0
  %vm829 = vcmp.gt.f32.partialorder %v472, 0.0
  %vm830 = vcmp.gt.f32.partialorder %v473, 0.0
  %vm831 = vcmp.gt.f32.partialorder %v474, 0.0
  %vm832 = vcmp.gt.f32.partialorder %v475, 0.0
  %vm833 = vcmp.gt.f32.partialorder %v476, 0.0
  %vm834 = vcmp.gt.f32.partialorder %v477, 0.0
  %vm835 = vcmp.gt.f32.partialorder %v478, 0.0
  %vm836 = vcmp.gt.f32.partialorder %v479, 0.0
  %vm837 = vcmp.gt.f32.partialorder %v480, 0.0
  %vm838 = vcmp.gt.f32.partialorder %v481, 0.0
  %vm839 = vcmp.gt.f32.partialorder %v482, 0.0
  %vm840 = vcmp.gt.f32.partialorder %v483, 0.0
  %vm841 = vcmp.gt.f32.partialorder %v484, 0.0
  %v842 = vmul.f32 %v673, %v39
  %v843 = vmul.f32 %v673, %v40
  %v844 = vmul.f32 %v673, %v41
  %v845 = vmul.f32 %v673, %v42
  %v846 = vmul.f32 %v677, %v39
  %v847 = vmul.f32 %v677, %v40
  %v848 = vmul.f32 %v677, %v41
  %v849 = vmul.f32 %v677, %v42
  %v850 = vmul.f32 %v681, %v39
  %v851 = vmul.f32 %v681, %v40
  %v852 = vmul.f32 %v681, %v41
  %v853 = vmul.f32 %v681, %v42
  %v854 = vmul.f32 %v685, %v39
  %v855 = vmul.f32 %v685, %v40
  %v856 = vmul.f32 %v685, %v41
  %v857 = vmul.f32 %v685, %v42
  %v858 = vmul.f32 %v689, %v39
  %v859 = vmul.f32 %v689, %v40
  %v860 = vmul.f32 %v689, %v41
  %v861 = vmul.f32 %v689, %v42
  %v862 = vmul.f32 %v693, %v39
  %v863 = vmul.f32 %v693, %v40
  %v864 = vmul.f32 %v693, %v41
  %v865 = vmul.f32 %v693, %v42
  %v866 = vmul.f32 %v697, %v39
  %v867 = vmul.f32 %v697, %v40
  %v868 = vmul.f32 %v697, %v41
  %v869 = vmul.f32 %v697, %v42
  %v870 = vmul.f32 %v701, %v39
  %v871 = vmul.f32 %v701, %v40
  %v872 = vmul.f32 %v701, %v41
  %v873 = vmul.f32 %v701, %v42
  %v874 = vsel %vm810, %v842, 0.0
  %v875 = vsel %vm811, %v843, 0.0
  %v876 = vsel %vm812, %v844, 0.0
  %v877 = vsel %vm813, %v845, 0.0
  %v878 = vsel %vm814, %v846, 0.0
  %v879 = vsel %vm815, %v847, 0.0
  %v880 = vsel %vm816, %v848, 0.0
  %v881 = vsel %vm817, %v849, 0.0
  %v882 = vsel %vm818, %v850, 0.0
  %v883 = vsel %vm819, %v851, 0.0
  %v884 = vsel %vm820, %v852, 0.0
  %v885 = vsel %vm821, %v853, 0.0
  %v886 = vsel %vm822, %v854, 0.0
  %v887 = vsel %vm823, %v855, 0.0
  %v888 = vsel %vm824, %v856, 0.0
  %v889 = vsel %vm825, %v857, 0.0
  %v890 = vsel %vm826, %v858, 0.0
  %v891 = vsel %vm827, %v859, 0.0
  %v892 = vsel %vm828, %v860, 0.0
  %v893 = vsel %vm829, %v861, 0.0
  %v894 = vsel %vm830, %v862, 0.0
  %v895 = vsel %vm831, %v863, 0.0
  %v896 = vsel %vm832, %v864, 0.0
  %v897 = vsel %vm833, %v865, 0.0
  %v898 = vsel %vm834, %v866, 0.0
  %v899 = vsel %vm835, %v867, 0.0
  %v900 = vsel %vm836, %v868, 0.0
  %v901 = vsel %vm837, %v869, 0.0
  %v902 = vsel %vm838, %v870, 0.0
  %v903 = vsel %vm839, %v871, 0.0
  %v904 = vsel %vm840, %v872, 0.0
  %v905 = vsel %vm841, %v873, 0.0
  %v906 = vsel %vm517, %v874, 0.0
  %v907 = vsel %vm517, %v878, 0.0
  %v908 = vadd.f32 %v906, %v907
  %v909 = vsel %vm517, %v882, 0.0
  %v910 = vadd.f32 %v908, %v909
  %v911 = vsel %vm517, %v886, 0.0
  %v912 = vadd.f32 %v910, %v911
  %v913 = vsel %vm517, %v890, 0.0
  %v914 = vadd.f32 %v912, %v913
  %v915 = vsel %vm517, %v894, 0.0
  %v916 = vadd.f32 %v914, %v915
  %v917 = vsel %vm517, %v898, 0.0
  %v918 = vadd.f32 %v916, %v917
  %v919 = vsel %vm517, %v902, 0.0
  %v920 = vadd.f32 %v918, %v919
  %v921 = vsel %vm517, %v875, 0.0
  %v922 = vsel %vm517, %v879, 0.0
  %v923 = vadd.f32 %v921, %v922
  %v924 = vsel %vm517, %v883, 0.0
  %v925 = vadd.f32 %v923, %v924
  %v926 = vsel %vm517, %v887, 0.0
  %v927 = vadd.f32 %v925, %v926
  %v928 = vsel %vm517, %v891, 0.0
  %v929 = vadd.f32 %v927, %v928
  %v930 = vsel %vm517, %v895, 0.0
  %v931 = vadd.f32 %v929, %v930
  %v932 = vsel %vm517, %v899, 0.0
  %v933 = vadd.f32 %v931, %v932
  %v934 = vsel %vm517, %v903, 0.0
  %v935 = vadd.f32 %v933, %v934
  %v936 = vsel %vm517, %v876, 0.0
  %v937 = vsel %vm517, %v880, 0.0
  %v938 = vadd.f32 %v936, %v937
  %v939 = vsel %vm517, %v884, 0.0
  %v940 = vadd.f32 %v938, %v939
  %v941 = vsel %vm517, %v888, 0.0
  %v942 = vadd.f32 %v940, %v941
  %v943 = vsel %vm517, %v892, 0.0
  %v944 = vadd.f32 %v942, %v943
  %v945 = vsel %vm517, %v896, 0.0
  %v946 = vadd.f32 %v944, %v945
  %v947 = vsel %vm517, %v900, 0.0
  %v948 = vadd.f32 %v946, %v947
  %v949 = vsel %vm517, %v904, 0.0
  %v950 = vadd.f32 %v948, %v949
  %v951 = vsel %vm517, %v877, 0.0
  %v952 = vsel %vm517, %v881, 0.0
  %v953 = vadd.f32 %v951, %v952
  %v954 = vsel %vm517, %v885, 0.0
  %v955 = vadd.f32 %v953, %v954
  %v956 = vsel %vm517, %v889, 0.0
  %v957 = vadd.f32 %v955, %v956
  %v958 = vsel %vm517, %v893, 0.0
  %v959 = vadd.f32 %v957, %v958
  %v960 = vsel %vm517, %v897, 0.0
  %v961 = vadd.f32 %v959, %v960
  %v962 = vsel %vm517, %v901, 0.0
  %v963 = vadd.f32 %v961, %v962
  %v964 = vsel %vm517, %v905, 0.0
  %v965 = vadd.f32 %v963, %v964
  %v966 = vmul.f32 %v72, %v874
  %v967 = vmul.f32 %v72, %v875
  %v968 = vmul.f32 %v72, %v876
  %v969 = vmul.f32 %v72, %v877
  %v970 = vmul.f32 %v76, %v878
  %v971 = vmul.f32 %v76, %v879
  %v972 = vmul.f32 %v76, %v880
  %v973 = vmul.f32 %v76, %v881
  %v974 = vmul.f32 %v80, %v882
  %v975 = vmul.f32 %v80, %v883
  %v976 = vmul.f32 %v80, %v884
  %v977 = vmul.f32 %v80, %v885
  %v978 = vmul.f32 %v84, %v886
  %v979 = vmul.f32 %v84, %v887
  %v980 = vmul.f32 %v84, %v888
  %v981 = vmul.f32 %v84, %v889
  %v982 = vmul.f32 %v88, %v890
  %v983 = vmul.f32 %v88, %v891
  %v984 = vmul.f32 %v88, %v892
  %v985 = vmul.f32 %v88, %v893
  %v986 = vmul.f32 %v92, %v894
  %v987 = vmul.f32 %v92, %v895
  %v988 = vmul.f32 %v92, %v896
  %v989 = vmul.f32 %v92, %v897
  %v990 = vmul.f32 %v96, %v898
  %v991 = vmul.f32 %v96, %v899
  %v992 = vmul.f32 %v96, %v900
  %v993 = vmul.f32 %v96, %v901
  %v994 = vmul.f32 %v100, %v902
  %v995 = vmul.f32 %v100, %v903
  %v996 = vmul.f32 %v100, %v904
  %v997 = vmul.f32 %v100, %v905
  %v998 = vsel %vm517, %v966, 0.0
  %v999 = vsel %vm517, %v970, 0.0
  %v1000 = vadd.f32 %v998, %v999
  %v1001 = vsel %vm517, %v974, 0.0
  %v1002 = vadd.f32 %v1000, %v1001
  %v1003 = vsel %vm517, %v978, 0.0
  %v1004 = vadd.f32 %v1002, %v1003
  %v1005 = vsel %vm517, %v982, 0.0
  %v1006 = vadd.f32 %v1004, %v1005
  %v1007 = vsel %vm517, %v986, 0.0
  %v1008 = vadd.f32 %v1006, %v1007
  %v1009 = vsel %vm517, %v990, 0.0
  %v1010 = vadd.f32 %v1008, %v1009
  %v1011 = vsel %vm517, %v994, 0.0
  %v1012 = vadd.f32 %v1010, %v1011
  %v1013 = vsel %vm517, %v967, 0.0
  %v1014 = vsel %vm517, %v971, 0.0
  %v1015 = vadd.f32 %v1013, %v1014
  %v1016 = vsel %vm517, %v975, 0.0
  %v1017 = vadd.f32 %v1015, %v1016
  %v1018 = vsel %vm517, %v979, 0.0
  %v1019 = vadd.f32 %v1017, %v1018
  %v1020 = vsel %vm517, %v983, 0.0
  %v1021 = vadd.f32 %v1019, %v1020
  %v1022 = vsel %vm517, %v987, 0.0
  %v1023 = vadd.f32 %v1021, %v1022
  %v1024 = vsel %vm517, %v991, 0.0
  %v1025 = vadd.f32 %v1023, %v1024
  %v1026 = vsel %vm517, %v995, 0.0
  %v1027 = vadd.f32 %v1025, %v1026
  %v1028 = vsel %vm517, %v968, 0.0
  %v1029 = vsel %vm517, %v972, 0.0
  %v1030 = vadd.f32 %v1028, %v1029
  %v1031 = vsel %vm517, %v976, 0.0
  %v1032 = vadd.f32 %v1030, %v1031
  %v1033 = vsel %vm517, %v980, 0.0
  %v1034 = vadd.f32 %v1032, %v1033
  %v1035 = vsel %vm517, %v984, 0.0
  %v1036 = vadd.f32 %v1034, %v1035
  %v1037 = vsel %vm517, %v988, 0.0
  %v1038 = vadd.f32 %v1036, %v1037
  %v1039 = vsel %vm517, %v992, 0.0
  %v1040 = vadd.f32 %v1038, %v1039
  %v1041 = vsel %vm517, %v996, 0.0
  %v1042 = vadd.f32 %v1040, %v1041
  %v1043 = vsel %vm517, %v969, 0.0
  %v1044 = vsel %vm517, %v973, 0.0
  %v1045 = vadd.f32 %v1043, %v1044
  %v1046 = vsel %vm517, %v977, 0.0
  %v1047 = vadd.f32 %v1045, %v1046
  %v1048 = vsel %vm517, %v981, 0.0
  %v1049 = vadd.f32 %v1047, %v1048
  %v1050 = vsel %vm517, %v985, 0.0
  %v1051 = vadd.f32 %v1049, %v1050
  %v1052 = vsel %vm517, %v989, 0.0
  %v1053 = vadd.f32 %v1051, %v1052
  %v1054 = vsel %vm517, %v993, 0.0
  %v1055 = vadd.f32 %v1053, %v1054
  %v1056 = vsel %vm517, %v997, 0.0
  %v1057 = vadd.f32 %v1055, %v1056
  %v1058 = vmax.f32 %v1012, -10.0
  %v1059 = vmax.f32 %v1027, -10.0
  %v1060 = vmax.f32 %v1042, -10.0
  %v1061 = vmax.f32 %v1057, -10.0
  %v1062 = vmin.f32 %v1058, 10.0
  %v1063 = vmin.f32 %v1059, 10.0
  %v1064 = vmin.f32 %v1060, 10.0
  %v1065 = vmin.f32 %v1061, 10.0
  %v1066 = vand.u32 2147483647, %v1012
  %v1067 = vand.u32 2147483647, %v1027
  %v1068 = vand.u32 2147483647, %v1042
  %v1069 = vand.u32 2147483647, %v1057
  %vm1070 = vcmp.eq.f32.partialorder %v1066, 10.0
  %vm1071 = vcmp.eq.f32.partialorder %v1067, 10.0
  %vm1072 = vcmp.eq.f32.partialorder %v1068, 10.0
  %vm1073 = vcmp.eq.f32.partialorder %v1069, 10.0
  %v1074 = vsel %vm1070, 0.0, %v1062
  %v1075 = vsel %vm1071, 0.0, %v1063
  %v1076 = vsel %vm1072, 0.0, %v1064
  %v1077 = vsel %vm1073, 0.0, %v1065
  %v1078 = vmul.f32 %v1074, 0.01
  %v1079 = vmul.f32 %v1075, 0.01
  %v1080 = vmul.f32 %v1076, 0.01
  %v1081 = vmul.f32 %v1077, 0.01
  %v1082 = vsub.f32 %v14, %v1078
  %v1083 = vsub.f32 %v15, %v1079
  %v1084 = vsub.f32 %v16, %v1080
  %v1085 = vsub.f32 %v17, %v1081
  %v1086 = vmul.f32 %v168, %v874
  %v1087 = vmul.f32 %v168, %v875
  %v1088 = vmul.f32 %v168, %v876
  %v1089 = vmul.f32 %v168, %v877
  %v1090 = vmul.f32 %v172, %v878
  %v1091 = vmul.f32 %v172, %v879
  %v1092 = vmul.f32 %v172, %v880
  %v1093 = vmul.f32 %v172, %v881
  %v1094 = vmul.f32 %v176, %v882
  %v1095 = vmul.f32 %v176, %v883
  %v1096 = vmul.f32 %v176, %v884
  %v1097 = vmul.f32 %v176, %v885
  %v1098 = vmul.f32 %v180, %v886
  %v1099 = vmul.f32 %v180, %v887
  %v1100 = vmul.f32 %v180, %v888
  %v1101 = vmul.f32 %v180, %v889
  %v1102 = vmul.f32 %v184, %v890
  %v1103 = vmul.f32 %v184, %v891
  %v1104 = vmul.f32 %v184, %v892
  %v1105 = vmul.f32 %v184, %v893
  %v1106 = vmul.f32 %v188, %v894
  %v1107 = vmul.f32 %v188, %v895
  %v1108 = vmul.f32 %v188, %v896
  %v1109 = vmul.f32 %v188, %v897
  %v1110 = vmul.f32 %v192, %v898
  %v1111 = vmul.f32 %v192, %v899
  %v1112 = vmul.f32 %v192, %v900
  %v1113 = vmul.f32 %v192, %v901
  %v1114 = vmul.f32 %v196, %v902
  %v1115 = vmul.f32 %v196, %v903
  %v1116 = vmul.f32 %v196, %v904
  %v1117 = vmul.f32 %v196, %v905
  %v1118 = vsel %vm517, %v1086, 0.0
  %v1119 = vsel %vm517, %v1090, 0.0
  %v1120 = vadd.f32 %v1118, %v1119
  %v1121 = vsel %vm517, %v1094, 0.0
  %v1122 = vadd.f32 %v1120, %v1121
  %v1123 = vsel %vm517, %v1098, 0.0
  %v1124 = vadd.f32 %v1122, %v1123
  %v1125 = vsel %vm517, %v1102, 0.0
  %v1126 = vadd.f32 %v1124, %v1125
  %v1127 = vsel %vm517, %v1106, 0.0
  %v1128 = vadd.f32 %v1126, %v1127
  %v1129 = vsel %vm517, %v1110, 0.0
  %v1130 = vadd.f32 %v1128, %v1129
  %v1131 = vsel %vm517, %v1114, 0.0
  %v1132 = vadd.f32 %v1130, %v1131
  %v1133 = vsel %vm517, %v1087, 0.0
  %v1134 = vsel %vm517, %v1091, 0.0
  %v1135 = vadd.f32 %v1133, %v1134
  %v1136 = vsel %vm517, %v1095, 0.0
  %v1137 = vadd.f32 %v1135, %v1136
  %v1138 = vsel %vm517, %v1099, 0.0
  %v1139 = vadd.f32 %v1137, %v1138
  %v1140 = vsel %vm517, %v1103, 0.0
  %v1141 = vadd.f32 %v1139, %v1140
  %v1142 = vsel %vm517, %v1107, 0.0
  %v1143 = vadd.f32 %v1141, %v1142
  %v1144 = vsel %vm517, %v1111, 0.0
  %v1145 = vadd.f32 %v1143, %v1144
  %v1146 = vsel %vm517, %v1115, 0.0
  %v1147 = vadd.f32 %v1145, %v1146
  %v1148 = vsel %vm517, %v1088, 0.0
  %v1149 = vsel %vm517, %v1092, 0.0
  %v1150 = vadd.f32 %v1148, %v1149
  %v1151 = vsel %vm517, %v1096, 0.0
  %v1152 = vadd.f32 %v1150, %v1151
  %v1153 = vsel %vm517, %v1100, 0.0
  %v1154 = vadd.f32 %v1152, %v1153
  %v1155 = vsel %vm517, %v1104, 0.0
  %v1156 = vadd.f32 %v1154, %v1155
  %v1157 = vsel %vm517, %v1108, 0.0
  %v1158 = vadd.f32 %v1156, %v1157
  %v1159 = vsel %vm517, %v1112, 0.0
  %v1160 = vadd.f32 %v1158, %v1159
  %v1161 = vsel %vm517, %v1116, 0.0
  %v1162 = vadd.f32 %v1160, %v1161
  %v1163 = vsel %vm517, %v1089, 0.0
  %v1164 = vsel %vm517, %v1093, 0.0
  %v1165 = vadd.f32 %v1163, %v1164
  %v1166 = vsel %vm517, %v1097, 0.0
  %v1167 = vadd.f32 %v1165, %v1166
  %v1168 = vsel %vm517, %v1101, 0.0
  %v1169 = vadd.f32 %v1167, %v1168
  %v1170 = vsel %vm517, %v1105, 0.0
  %v1171 = vadd.f32 %v1169, %v1170
  %v1172 = vsel %vm517, %v1109, 0.0
  %v1173 = vadd.f32 %v1171, %v1172
  %v1174 = vsel %vm517, %v1113, 0.0
  %v1175 = vadd.f32 %v1173, %v1174
  %v1176 = vsel %vm517, %v1117, 0.0
  %v1177 = vadd.f32 %v1175, %v1176
  %v1178 = vmax.f32 %v1132, -10.0
  %v1179 = vmax.f32 %v1147, -10.0
  %v1180 = vmax.f32 %v1162, -10.0
  %v1181 = vmax.f32 %v1177, -10.0
  %v1182 = vmin.f32 %v1178, 10.0
  %v1183 = vmin.f32 %v1179, 10.0
  %v1184 = vmin.f32 %v1180, 10.0
  %v1185 = vmin.f32 %v1181, 10.0
  %v1186 = vand.u32 2147483647, %v1132
  %v1187 = vand.u32 2147483647, %v1147
  %v1188 = vand.u32 2147483647, %v1162
  %v1189 = vand.u32 2147483647, %v1177
  %vm1190 = vcmp.eq.f32.partialorder %v1186, 10.0
  %vm1191 = vcmp.eq.f32.partialorder %v1187, 10.0
  %vm1192 = vcmp.eq.f32.partialorder %v1188, 10.0
  %vm1193 = vcmp.eq.f32.partialorder %v1189, 10.0
  %v1194 = vsel %vm1190, 0.0, %v1182
  %v1195 = vsel %vm1191, 0.0, %v1183
  %v1196 = vsel %vm1192, 0.0, %v1184
  %v1197 = vsel %vm1193, 0.0, %v1185
  %v1198 = vmul.f32 %v1194, 0.01
  %v1199 = vmul.f32 %v1195, 0.01
  %v1200 = vmul.f32 %v1196, 0.01
  %v1201 = vmul.f32 %v1197, 0.01
  %v1202 = vsub.f32 %v19, %v1198
  %v1203 = vsub.f32 %v20, %v1199
  %v1204 = vsub.f32 %v21, %v1200
  %v1205 = vsub.f32 %v22, %v1201
  %v1206 = vmul.f32 %v264, %v874
  %v1207 = vmul.f32 %v264, %v875
  %v1208 = vmul.f32 %v264, %v876
  %v1209 = vmul.f32 %v264, %v877
  %v1210 = vmul.f32 %v268, %v878
  %v1211 = vmul.f32 %v268, %v879
  %v1212 = vmul.f32 %v268, %v880
  %v1213 = vmul.f32 %v268, %v881
  %v1214 = vmul.f32 %v272, %v882
  %v1215 = vmul.f32 %v272, %v883
  %v1216 = vmul.f32 %v272, %v884
  %v1217 = vmul.f32 %v272, %v885
  %v1218 = vmul.f32 %v276, %v886
  %v1219 = vmul.f32 %v276, %v887
  %v1220 = vmul.f32 %v276, %v888
  %v1221 = vmul.f32 %v276, %v889
  %v1222 = vmul.f32 %v280, %v890
  %v1223 = vmul.f32 %v280, %v891
  %v1224 = vmul.f32 %v280, %v892
  %v1225 = vmul.f32 %v280, %v893
  %v1226 = vmul.f32 %v284, %v894
  %v1227 = vmul.f32 %v284, %v895
  %v1228 = vmul.f32 %v284, %v896
  %v1229 = vmul.f32 %v284, %v897
  %v1230 = vmul.f32 %v288, %v898
  %v1231 = vmul.f32 %v288, %v899
  %v1232 = vmul.f32 %v288, %v900
  %v1233 = vmul.f32 %v288, %v901
  %v1234 = vmul.f32 %v292, %v902
  %v1235 = vmul.f32 %v292, %v903
  %v1236 = vmul.f32 %v292, %v904
  %v1237 = vmul.f32 %v292, %v905
  %v1238 = vsel %vm517, %v1206, 0.0
  %v1239 = vsel %vm517, %v1210, 0.0
  %v1240 = vadd.f32 %v1238, %v1239
  %v1241 = vsel %vm517, %v1214, 0.0
  %v1242 = vadd.f32 %v1240, %v1241
  %v1243 = vsel %vm517, %v1218, 0.0
  %v1244 = vadd.f32 %v1242, %v1243
  %v1245 = vsel %vm517, %v1222, 0.0
  %v1246 = vadd.f32 %v1244, %v1245
  %v1247 = vsel %vm517, %v1226, 0.0
  %v1248 = vadd.f32 %v1246, %v1247
  %v1249 = vsel %vm517, %v1230, 0.0
  %v1250 = vadd.f32 %v1248, %v1249
  %v1251 = vsel %vm517, %v1234, 0.0
  %v1252 = vadd.f32 %v1250, %v1251
  %v1253 = vsel %vm517, %v1207, 0.0
  %v1254 = vsel %vm517, %v1211, 0.0
  %v1255 = vadd.f32 %v1253, %v1254
  %v1256 = vsel %vm517, %v1215, 0.0
  %v1257 = vadd.f32 %v1255, %v1256
  %v1258 = vsel %vm517, %v1219, 0.0
  %v1259 = vadd.f32 %v1257, %v1258
  %v1260 = vsel %vm517, %v1223, 0.0
  %v1261 = vadd.f32 %v1259, %v1260
  %v1262 = vsel %vm517, %v1227, 0.0
  %v1263 = vadd.f32 %v1261, %v1262
  %v1264 = vsel %vm517, %v1231, 0.0
  %v1265 = vadd.f32 %v1263, %v1264
  %v1266 = vsel %vm517, %v1235, 0.0
  %v1267 = vadd.f32 %v1265, %v1266
  %v1268 = vsel %vm517, %v1208, 0.0
  %v1269 = vsel %vm517, %v1212, 0.0
  %v1270 = vadd.f32 %v1268, %v1269
  %v1271 = vsel %vm517, %v1216, 0.0
  %v1272 = vadd.f32 %v1270, %v1271
  %v1273 = vsel %vm517, %v1220, 0.0
  %v1274 = vadd.f32 %v1272, %v1273
  %v1275 = vsel %vm517, %v1224, 0.0
  %v1276 = vadd.f32 %v1274, %v1275
  %v1277 = vsel %vm517, %v1228, 0.0
  %v1278 = vadd.f32 %v1276, %v1277
  %v1279 = vsel %vm517, %v1232, 0.0
  %v1280 = vadd.f32 %v1278, %v1279
  %v1281 = vsel %vm517, %v1236, 0.0
  %v1282 = vadd.f32 %v1280, %v1281
  %v1283 = vsel %vm517, %v1209, 0.0
  %v1284 = vsel %vm517, %v1213, 0.0
  %v1285 = vadd.f32 %v1283, %v1284
  %v1286 = vsel %vm517, %v1217, 0.0
  %v1287 = vadd.f32 %v1285, %v1286
  %v1288 = vsel %vm517, %v1221, 0.0
  %v1289 = vadd.f32 %v1287, %v1288
  %v1290 = vsel %vm517, %v1225, 0.0
  %v1291 = vadd.f32 %v1289, %v1290
  %v1292 = vsel %vm517, %v1229, 0.0
  %v1293 = vadd.f32 %v1291, %v1292
  %v1294 = vsel %vm517, %v1233, 0.0
  %v1295 = vadd.f32 %v1293, %v1294
  %v1296 = vsel %vm517, %v1237, 0.0
  %v1297 = vadd.f32 %v1295, %v1296
  %v1298 = vmax.f32 %v1252, -10.0
  %v1299 = vmax.f32 %v1267, -10.0
  %v1300 = vmax.f32 %v1282, -10.0
  %v1301 = vmax.f32 %v1297, -10.0
  %v1302 = vmin.f32 %v1298, 10.0
  %v1303 = vmin.f32 %v1299, 10.0
  %v1304 = vmin.f32 %v1300, 10.0
  %v1305 = vmin.f32 %v1301, 10.0
  %v1306 = vand.u32 2147483647, %v1252
  %v1307 = vand.u32 2147483647, %v1267
  %v1308 = vand.u32 2147483647, %v1282
  %v1309 = vand.u32 2147483647, %v1297
  %vm1310 = vcmp.eq.f32.partialorder %v1306, 10.0
  %vm1311 = vcmp.eq.f32.partialorder %v1307, 10.0
  %vm1312 = vcmp.eq.f32.partialorder %v1308, 10.0
  %vm1313 = vcmp.eq.f32.partialorder %v1309, 10.0
  %v1314 = vsel %vm1310, 0.0, %v1302
  %v1315 = vsel %vm1311, 0.0, %v1303
  %v1316 = vsel %vm1312, 0.0, %v1304
  %v1317 = vsel %vm1313, 0.0, %v1305
  %v1318 = vmul.f32 %v1314, 0.01
  %v1319 = vmul.f32 %v1315, 0.01
  %v1320 = vmul.f32 %v1316, 0.01
  %v1321 = vmul.f32 %v1317, 0.01
  %v1322 = vsub.f32 %v24, %v1318
  %v1323 = vsub.f32 %v25, %v1319
  %v1324 = vsub.f32 %v26, %v1320
  %v1325 = vsub.f32 %v27, %v1321
  %v1326 = vmul.f32 %v360, %v874
  %v1327 = vmul.f32 %v360, %v875
  %v1328 = vmul.f32 %v360, %v876
  %v1329 = vmul.f32 %v360, %v877
  %v1330 = vmul.f32 %v364, %v878
  %v1331 = vmul.f32 %v364, %v879
  %v1332 = vmul.f32 %v364, %v880
  %v1333 = vmul.f32 %v364, %v881
  %v1334 = vmul.f32 %v368, %v882
  %v1335 = vmul.f32 %v368, %v883
  %v1336 = vmul.f32 %v368, %v884
  %v1337 = vmul.f32 %v368, %v885
  %v1338 = vmul.f32 %v372, %v886
  %v1339 = vmul.f32 %v372, %v887
  %v1340 = vmul.f32 %v372, %v888
  %v1341 = vmul.f32 %v372, %v889
  %v1342 = vmul.f32 %v376, %v890
  %v1343 = vmul.f32 %v376, %v891
  %v1344 = vmul.f32 %v376, %v892
  %v1345 = vmul.f32 %v376, %v893
  %v1346 = vmul.f32 %v380, %v894
  %v1347 = vmul.f32 %v380, %v895
  %v1348 = vmul.f32 %v380, %v896
  %v1349 = vmul.f32 %v380, %v897
  %v1350 = vmul.f32 %v384, %v898
  %v1351 = vmul.f32 %v384, %v899
  %v1352 = vmul.f32 %v384, %v900
  %v1353 = vmul.f32 %v384, %v901
  %v1354 = vmul.f32 %v388, %v902
  %v1355 = vmul.f32 %v388, %v903
  %v1356 = vmul.f32 %v388, %v904
  %v1357 = vmul.f32 %v388, %v905
  %v1358 = vsel %vm517, %v1326, 0.0
  %v1359 = vsel %vm517, %v1330, 0.0
  %v1360 = vadd.f32 %v1358, %v1359
  %v1361 = vsel %vm517, %v1334, 0.0
  %v1362 = vadd.f32 %v1360, %v1361
  %v1363 = vsel %vm517, %v1338, 0.0
  %v1364 = vadd.f32 %v1362, %v1363
  %v1365 = vsel %vm517, %v1342, 0.0
  %v1366 = vadd.f32 %v1364, %v1365
  %v1367 = vsel %vm517, %v1346, 0.0
  %v1368 = vadd.f32 %v1366, %v1367
  %v1369 = vsel %vm517, %v1350, 0.0
  %v1370 = vadd.f32 %v1368, %v1369
  %v1371 = vsel %vm517, %v1354, 0.0
  %v1372 = vadd.f32 %v1370, %v1371
  %v1373 = vsel %vm517, %v1327, 0.0
  %v1374 = vsel %vm517, %v1331, 0.0
  %v1375 = vadd.f32 %v1373, %v1374
  %v1376 = vsel %vm517, %v1335, 0.0
  %v1377 = vadd.f32 %v1375, %v1376
  %v1378 = vsel %vm517, %v1339, 0.0
  %v1379 = vadd.f32 %v1377, %v1378
  %v1380 = vsel %vm517, %v1343, 0.0
  %v1381 = vadd.f32 %v1379, %v1380
  %v1382 = vsel %vm517, %v1347, 0.0
  %v1383 = vadd.f32 %v1381, %v1382
  %v1384 = vsel %vm517, %v1351, 0.0
  %v1385 = vadd.f32 %v1383, %v1384
  %v1386 = vsel %vm517, %v1355, 0.0
  %v1387 = vadd.f32 %v1385, %v1386
  %v1388 = vsel %vm517, %v1328, 0.0
  %v1389 = vsel %vm517, %v1332, 0.0
  %v1390 = vadd.f32 %v1388, %v1389
  %v1391 = vsel %vm517, %v1336, 0.0
  %v1392 = vadd.f32 %v1390, %v1391
  %v1393 = vsel %vm517, %v1340, 0.0
  %v1394 = vadd.f32 %v1392, %v1393
  %v1395 = vsel %vm517, %v1344, 0.0
  %v1396 = vadd.f32 %v1394, %v1395
  %v1397 = vsel %vm517, %v1348, 0.0
  %v1398 = vadd.f32 %v1396, %v1397
  %v1399 = vsel %vm517, %v1352, 0.0
  %v1400 = vadd.f32 %v1398, %v1399
  %v1401 = vsel %vm517, %v1356, 0.0
  %v1402 = vadd.f32 %v1400, %v1401
  %v1403 = vsel %vm517, %v1329, 0.0
  %v1404 = vsel %vm517, %v1333, 0.0
  %v1405 = vadd.f32 %v1403, %v1404
  %v1406 = vsel %vm517, %v1337, 0.0
  %v1407 = vadd.f32 %v1405, %v1406
  %v1408 = vsel %vm517, %v1341, 0.0
  %v1409 = vadd.f32 %v1407, %v1408
  %v1410 = vsel %vm517, %v1345, 0.0
  %v1411 = vadd.f32 %v1409, %v1410
  %v1412 = vsel %vm517, %v1349, 0.0
  %v1413 = vadd.f32 %v1411, %v1412
  %v1414 = vsel %vm517, %v1353, 0.0
  %v1415 = vadd.f32 %v1413, %v1414
  %v1416 = vsel %vm517, %v1357, 0.0
  %v1417 = vadd.f32 %v1415, %v1416
  %v1418 = vmax.f32 %v1372, -10.0
  %v1419 = vmax.f32 %v1387, -10.0
  %v1420 = vmax.f32 %v1402, -10.0
  %v1421 = vmax.f32 %v1417, -10.0
  %v1422 = vmin.f32 %v1418, 10.0
  %v1423 = vmin.f32 %v1419, 10.0
  %v1424 = vmin.f32 %v1420, 10.0
  %v1425 = vmin.f32 %v1421, 10.0
  %v1426 = vand.u32 2147483647, %v1372
  %v1427 = vand.u32 2147483647, %v1387
  %v1428 = vand.u32 2147483647, %v1402
  %v1429 = vand.u32 2147483647, %v1417
  %vm1430 = vcmp.eq.f32.partialorder %v1426, 10.0
  %vm1431 = vcmp.eq.f32.partialorder %v1427, 10.0
  %vm1432 = vcmp.eq.f32.partialorder %v1428, 10.0
  %vm1433 = vcmp.eq.f32.partialorder %v1429, 10.0
  %v1434 = vsel %vm1430, 0.0, %v1422
  %v1435 = vsel %vm1431, 0.0, %v1423
  %v1436 = vsel %vm1432, 0.0, %v1424
  %v1437 = vsel %vm1433, 0.0, %v1425
  %v1438 = vmul.f32 %v1434, 0.01
  %v1439 = vmul.f32 %v1435, 0.01
  %v1440 = vmul.f32 %v1436, 0.01
  %v1441 = vmul.f32 %v1437, 0.01
  %v1442 = vsub.f32 %v29, %v1438
  %v1443 = vsub.f32 %v30, %v1439
  %v1444 = vsub.f32 %v31, %v1440
  %v1445 = vsub.f32 %v32, %v1441
  %v1446 = vmax.f32 %v920, -10.0
  %v1447 = vmax.f32 %v935, -10.0
  %v1448 = vmax.f32 %v950, -10.0
  %v1449 = vmax.f32 %v965, -10.0
  %v1450 = vmin.f32 %v1446, 10.0
  %v1451 = vmin.f32 %v1447, 10.0
  %v1452 = vmin.f32 %v1448, 10.0
  %v1453 = vmin.f32 %v1449, 10.0
  %v1454 = vand.u32 2147483647, %v920
  %v1455 = vand.u32 2147483647, %v935
  %v1456 = vand.u32 2147483647, %v950
  %v1457 = vand.u32 2147483647, %v965
  %vm1458 = vcmp.eq.f32.partialorder %v1454, 10.0
  %vm1459 = vcmp.eq.f32.partialorder %v1455, 10.0
  %vm1460 = vcmp.eq.f32.partialorder %v1456, 10.0
  %vm1461 = vcmp.eq.f32.partialorder %v1457, 10.0
  %v1462 = vsel %vm1458, 0.0, %v1450
  %v1463 = vsel %vm1459, 0.0, %v1451
  %v1464 = vsel %vm1460, 0.0, %v1452
  %v1465 = vsel %vm1461, 0.0, %v1453
  %v1466 = vmul.f32 %v1462, 0.01
  %v1467 = vmul.f32 %v1463, 0.01
  %v1468 = vmul.f32 %v1464, 0.01
  %v1469 = vmul.f32 %v1465, 0.01
  %v1470 = vsub.f32 %v34, %v1466
  %v1471 = vsub.f32 %v35, %v1467
  %v1472 = vsub.f32 %v36, %v1468
  %v1473 = vsub.f32 %v37, %v1469
  %v1474 = vmax.f32 %v748, -10.0
  %v1475 = vmax.f32 %v763, -10.0
  %v1476 = vmax.f32 %v778, -10.0
  %v1477 = vmax.f32 %v793, -10.0
  %v1478 = vmin.f32 %v1474, 10.0
  %v1479 = vmin.f32 %v1475, 10.0
  %v1480 = vmin.f32 %v1476, 10.0
  %v1481 = vmin.f32 %v1477, 10.0
  %v1482 = vand.u32 2147483647, %v748
  %v1483 = vand.u32 2147483647, %v763
  %v1484 = vand.u32 2147483647, %v778
  %v1485 = vand.u32 2147483647, %v793
  %vm1486 = vcmp.eq.f32.partialorder %v1482, 10.0
  %vm1487 = vcmp.eq.f32.partialorder %v1483, 10.0
  %vm1488 = vcmp.eq.f32.partialorder %v1484, 10.0
  %vm1489 = vcmp.eq.f32.partialorder %v1485, 10.0
  %v1490 = vsel %vm1486, 0.0, %v1478
  %v1491 = vsel %vm1487, 0.0, %v1479
  %v1492 = vsel %vm1488, 0.0, %v1480
  %v1493 = vsel %vm1489, 0.0, %v1481
  %v1494 = vmul.f32 %v1490, 0.01
  %v1495 = vmul.f32 %v1491, 0.01
  %v1496 = vmul.f32 %v1492, 0.01
  %v1497 = vmul.f32 %v1493, 0.01
  %v1498 = vsub.f32 %v39, %v1494
  %v1499 = vsub.f32 %v40, %v1495
  %v1500 = vsub.f32 %v41, %v1496
  %v1501 = vsub.f32 %v42, %v1497
  %v1502 = vmax.f32 %v809, -10.0
  %v1503 = vmin.f32 %v1502, 10.0
  %v1504 = vand.u32 2147483647, %v809
  %vm1505 = vcmp.eq.f32.partialorder %v1504, 10.0
  %v1506 = vsel %vm1505, 0.0, %v1503
  %v1507 = vmul.f32 %v1506, 0.01
  %v1508 = vsub.f32 %v44, %v1507
  %v1509 = vlaneseq
  %v1510 = vshrl.u32 %v1509, 7
  %v1511 = vsub.s32 0, %v1510
  %v1512 = vrot.slane %v45, %v1511
  %v1513 = vlaneseq
  %v1514 = vshrl.u32 %v1513, 7
  %v1515 = vsub.s32 0, %v1514
  %v1516 = vrot.slane %v46, %v1515
  %v1517 = vlaneseq
  %v1518 = vshrl.u32 %v1517, 7
  %v1519 = vsub.s32 0, %v1518
  %v1520 = vrot.slane %v47, %v1519
  %v1521 = vlaneseq
  %v1522 = vshrl.u32 %v1521, 7
  %v1523 = vsub.s32 0, %v1522
  %v1524 = vrot.slane %v48, %v1523
  %v1525 = vlaneseq
  %v1526 = vshrl.u32 %v1525, 7
  %v1527 = vsub.s32 0, %v1526
  %v1528 = vrot.slane %v49, %v1527
  %v1529 = vlaneseq
  %v1530 = vshrl.u32 %v1529, 7
  %v1531 = vsub.s32 0, %v1530
  %v1532 = vrot.slane %v50, %v1531
  %v1533 = vlaneseq
  %v1534 = vshrl.u32 %v1533, 7
  %v1535 = vsub.s32 0, %v1534
  %v1536 = vrot.slane %v51, %v1535
  %v1537 = vlaneseq
  %v1538 = vshrl.u32 %v1537, 7
  %v1539 = vsub.s32 0, %v1538
  %v1540 = vrot.slane %v52, %v1539
  %v1541 = vlaneseq
  %v1542 = vshrl.u32 %v1541, 7
  %v1543 = vsub.s32 0, %v1542
  %v1544 = vrot.slane %v53, %v1543
  %v1545 = vlaneseq
  %v1546 = vshrl.u32 %v1545, 7
  %v1547 = vsub.s32 0, %v1546
  %v1548 = vrot.slane %v54, %v1547
  %v1549 = vlaneseq
  %v1550 = vshrl.u32 %v1549, 7
  %v1551 = vsub.s32 0, %v1550
  %v1552 = vrot.slane %v55, %v1551
  %v1553 = vlaneseq
  %v1554 = vshrl.u32 %v1553, 7
  %v1555 = vsub.s32 0, %v1554
  %v1556 = vrot.slane %v56, %v1555
  %v1557 = vlaneseq
  %v1558 = vshrl.u32 %v1557, 7
  %v1559 = vsub.s32 0, %v1558
  %v1560 = vrot.slane %v57, %v1559
  %v1561 = vlaneseq
  %v1562 = vshrl.u32 %v1561, 7
  %v1563 = vsub.s32 0, %v1562
  %v1564 = vrot.slane %v58, %v1563
  %v1565 = vlaneseq
  %v1566 = vshrl.u32 %v1565, 7
  %v1567 = vsub.s32 0, %v1566
  %v1568 = vrot.slane %v59, %v1567
  %v1569 = vlaneseq
  %v1570 = vshrl.u32 %v1569, 7
  %v1571 = vsub.s32 0, %v1570
  %v1572 = vrot.slane %v60, %v1571
  %v1573 = vmul.f32 %v1512, %v14
  %v1574 = vmul.f32 %v1512, %v15
  %v1575 = vmul.f32 %v1512, %v16
  %v1576 = vmul.f32 %v1512, %v17
  %v1577 = vmul.f32 %v1516, %v14
  %v1578 = vmul.f32 %v1516, %v15
  %v1579 = vmul.f32 %v1516, %v16
  %v1580 = vmul.f32 %v1516, %v17
  %v1581 = vmul.f32 %v1520, %v14
  %v1582 = vmul.f32 %v1520, %v15
  %v1583 = vmul.f32 %v1520, %v16
  %v1584 = vmul.f32 %v1520, %v17
  %v1585 = vmul.f32 %v1524, %v14
  %v1586 = vmul.f32 %v1524, %v15
  %v1587 = vmul.f32 %v1524, %v16
  %v1588 = vmul.f32 %v1524, %v17
  %v1589 = vmul.f32 %v1528, %v14
  %v1590 = vmul.f32 %v1528, %v15
  %v1591 = vmul.f32 %v1528, %v16
  %v1592 = vmul.f32 %v1528, %v17
  %v1593 = vmul.f32 %v1532, %v14
  %v1594 = vmul.f32 %v1532, %v15
  %v1595 = vmul.f32 %v1532, %v16
  %v1596 = vmul.f32 %v1532, %v17
  %v1597 = vmul.f32 %v1536, %v14
  %v1598 = vmul.f32 %v1536, %v15
  %v1599 = vmul.f32 %v1536, %v16
  %v1600 = vmul.f32 %v1536, %v17
  %v1601 = vmul.f32 %v1540, %v14
  %v1602 = vmul.f32 %v1540, %v15
  %v1603 = vmul.f32 %v1540, %v16
  %v1604 = vmul.f32 %v1540, %v17
  %v1605 = vmul.f32 %v1544, %v14
  %v1606 = vmul.f32 %v1544, %v15
  %v1607 = vmul.f32 %v1544, %v16
  %v1608 = vmul.f32 %v1544, %v17
  %v1609 = vmul.f32 %v1548, %v14
  %v1610 = vmul.f32 %v1548, %v15
  %v1611 = vmul.f32 %v1548, %v16
  %v1612 = vmul.f32 %v1548, %v17
  %v1613 = vmul.f32 %v1552, %v14
  %v1614 = vmul.f32 %v1552, %v15
  %v1615 = vmul.f32 %v1552, %v16
  %v1616 = vmul.f32 %v1552, %v17
  %v1617 = vmul.f32 %v1556, %v14
  %v1618 = vmul.f32 %v1556, %v15
  %v1619 = vmul.f32 %v1556, %v16
  %v1620 = vmul.f32 %v1556, %v17
  %v1621 = vmul.f32 %v1560, %v14
  %v1622 = vmul.f32 %v1560, %v15
  %v1623 = vmul.f32 %v1560, %v16
  %v1624 = vmul.f32 %v1560, %v17
  %v1625 = vmul.f32 %v1564, %v14
  %v1626 = vmul.f32 %v1564, %v15
  %v1627 = vmul.f32 %v1564, %v16
  %v1628 = vmul.f32 %v1564, %v17
  %v1629 = vmul.f32 %v1568, %v14
  %v1630 = vmul.f32 %v1568, %v15
  %v1631 = vmul.f32 %v1568, %v16
  %v1632 = vmul.f32 %v1568, %v17
  %v1633 = vmul.f32 %v1572, %v14
  %v1634 = vmul.f32 %v1572, %v15
  %v1635 = vmul.f32 %v1572, %v16
  %v1636 = vmul.f32 %v1572, %v17
  %v1637 = vadd.f32 %v34, %v1573
  %v1638 = vadd.f32 %v35, %v1574
  %v1639 = vadd.f32 %v36, %v1575
  %v1640 = vadd.f32 %v37, %v1576
  %v1641 = vadd.f32 %v34, %v1577
  %v1642 = vadd.f32 %v35, %v1578
  %v1643 = vadd.f32 %v36, %v1579
  %v1644 = vadd.f32 %v37, %v1580
  %v1645 = vadd.f32 %v34, %v1581
  %v1646 = vadd.f32 %v35, %v1582
  %v1647 = vadd.f32 %v36, %v1583
  %v1648 = vadd.f32 %v37, %v1584
  %v1649 = vadd.f32 %v34, %v1585
  %v1650 = vadd.f32 %v35, %v1586
  %v1651 = vadd.f32 %v36, %v1587
  %v1652 = vadd.f32 %v37, %v1588
  %v1653 = vadd.f32 %v34, %v1589
  %v1654 = vadd.f32 %v35, %v1590
  %v1655 = vadd.f32 %v36, %v1591
  %v1656 = vadd.f32 %v37, %v1592
  %v1657 = vadd.f32 %v34, %v1593
  %v1658 = vadd.f32 %v35, %v1594
  %v1659 = vadd.f32 %v36, %v1595
  %v1660 = vadd.f32 %v37, %v1596
  %v1661 = vadd.f32 %v34, %v1597
  %v1662 = vadd.f32 %v35, %v1598
  %v1663 = vadd.f32 %v36, %v1599
  %v1664 = vadd.f32 %v37, %v1600
  %v1665 = vadd.f32 %v34, %v1601
  %v1666 = vadd.f32 %v35, %v1602
  %v1667 = vadd.f32 %v36, %v1603
  %v1668 = vadd.f32 %v37, %v1604
  %v1669 = vadd.f32 %v34, %v1605
  %v1670 = vadd.f32 %v35, %v1606
  %v1671 = vadd.f32 %v36, %v1607
  %v1672 = vadd.f32 %v37, %v1608
  %v1673 = vadd.f32 %v34, %v1609
  %v1674 = vadd.f32 %v35, %v1610
  %v1675 = vadd.f32 %v36, %v1611
  %v1676 = vadd.f32 %v37, %v1612
  %v1677 = vadd.f32 %v34, %v1613
  %v1678 = vadd.f32 %v35, %v1614
  %v1679 = vadd.f32 %v36, %v1615
  %v1680 = vadd.f32 %v37, %v1616
  %v1681 = vadd.f32 %v34, %v1617
  %v1682 = vadd.f32 %v35, %v1618
  %v1683 = vadd.f32 %v36, %v1619
  %v1684 = vadd.f32 %v37, %v1620
  %v1685 = vadd.f32 %v34, %v1621
  %v1686 = vadd.f32 %v35, %v1622
  %v1687 = vadd.f32 %v36, %v1623
  %v1688 = vadd.f32 %v37, %v1624
  %v1689 = vadd.f32 %v34, %v1625
  %v1690 = vadd.f32 %v35, %v1626
  %v1691 = vadd.f32 %v36, %v1627
  %v1692 = vadd.f32 %v37, %v1628
  %v1693 = vadd.f32 %v34, %v1629
  %v1694 = vadd.f32 %v35, %v1630
  %v1695 = vadd.f32 %v36, %v1631
  %v1696 = vadd.f32 %v37, %v1632
  %v1697 = vadd.f32 %v34, %v1633
  %v1698 = vadd.f32 %v35, %v1634
  %v1699 = vadd.f32 %v36, %v1635
  %v1700 = vadd.f32 %v37, %v1636
  %v1701 = vlaneseq
  %v1702 = vshrl.u32 %v1701, 7
  %v1703 = vsub.s32 1, %v1702
  %v1704 = vrot.slane %v45, %v1703
  %v1705 = vlaneseq
  %v1706 = vshrl.u32 %v1705, 7
  %v1707 = vsub.s32 1, %v1706
  %v1708 = vrot.slane %v46, %v1707
  %v1709 = vlaneseq
  %v1710 = vshrl.u32 %v1709, 7
  %v1711 = vsub.s32 1, %v1710
  %v1712 = vrot.slane %v47, %v1711
  %v1713 = vlaneseq
  %v1714 = vshrl.u32 %v1713, 7
  %v1715 = vsub.s32 1, %v1714
  %v1716 = vrot.slane %v48, %v1715
  %v1717 = vlaneseq
  %v1718 = vshrl.u32 %v1717, 7
  %v1719 = vsub.s32 1, %v1718
  %v1720 = vrot.slane %v49, %v1719
  %v1721 = vlaneseq
  %v1722 = vshrl.u32 %v1721, 7
  %v1723 = vsub.s32 1, %v1722
  %v1724 = vrot.slane %v50, %v1723
  %v1725 = vlaneseq
  %v1726 = vshrl.u32 %v1725, 7
  %v1727 = vsub.s32 1, %v1726
  %v1728 = vrot.slane %v51, %v1727
  %v1729 = vlaneseq
  %v1730 = vshrl.u32 %v1729, 7
  %v1731 = vsub.s32 1, %v1730
  %v1732 = vrot.slane %v52, %v1731
  %v1733 = vlaneseq
  %v1734 = vshrl.u32 %v1733, 7
  %v1735 = vsub.s32 1, %v1734
  %v1736 = vrot.slane %v53, %v1735
  %v1737 = vlaneseq
  %v1738 = vshrl.u32 %v1737, 7
  %v1739 = vsub.s32 1, %v1738
  %v1740 = vrot.slane %v54, %v1739
  %v1741 = vlaneseq
  %v1742 = vshrl.u32 %v1741, 7
  %v1743 = vsub.s32 1, %v1742
  %v1744 = vrot.slane %v55, %v1743
  %v1745 = vlaneseq
  %v1746 = vshrl.u32 %v1745, 7
  %v1747 = vsub.s32 1, %v1746
  %v1748 = vrot.slane %v56, %v1747
  %v1749 = vlaneseq
  %v1750 = vshrl.u32 %v1749, 7
  %v1751 = vsub.s32 1, %v1750
  %v1752 = vrot.slane %v57, %v1751
  %v1753 = vlaneseq
  %v1754 = vshrl.u32 %v1753, 7
  %v1755 = vsub.s32 1, %v1754
  %v1756 = vrot.slane %v58, %v1755
  %v1757 = vlaneseq
  %v1758 = vshrl.u32 %v1757, 7
  %v1759 = vsub.s32 1, %v1758
  %v1760 = vrot.slane %v59, %v1759
  %v1761 = vlaneseq
  %v1762 = vshrl.u32 %v1761, 7
  %v1763 = vsub.s32 1, %v1762
  %v1764 = vrot.slane %v60, %v1763
  %v1765 = vmul.f32 %v1704, %v19
  %v1766 = vmul.f32 %v1704, %v20
  %v1767 = vmul.f32 %v1704, %v21
  %v1768 = vmul.f32 %v1704, %v22
  %v1769 = vmul.f32 %v1708, %v19
  %v1770 = vmul.f32 %v1708, %v20
  %v1771 = vmul.f32 %v1708, %v21
  %v1772 = vmul.f32 %v1708, %v22
  %v1773 = vmul.f32 %v1712, %v19
  %v1774 = vmul.f32 %v1712, %v20
  %v1775 = vmul.f32 %v1712, %v21
  %v1776 = vmul.f32 %v1712, %v22
  %v1777 = vmul.f32 %v1716, %v19
  %v1778 = vmul.f32 %v1716, %v20
  %v1779 = vmul.f32 %v1716, %v21
  %v1780 = vmul.f32 %v1716, %v22
  %v1781 = vmul.f32 %v1720, %v19
  %v1782 = vmul.f32 %v1720, %v20
  %v1783 = vmul.f32 %v1720, %v21
  %v1784 = vmul.f32 %v1720, %v22
  %v1785 = vmul.f32 %v1724, %v19
  %v1786 = vmul.f32 %v1724, %v20
  %v1787 = vmul.f32 %v1724, %v21
  %v1788 = vmul.f32 %v1724, %v22
  %v1789 = vmul.f32 %v1728, %v19
  %v1790 = vmul.f32 %v1728, %v20
  %v1791 = vmul.f32 %v1728, %v21
  %v1792 = vmul.f32 %v1728, %v22
  %v1793 = vmul.f32 %v1732, %v19
  %v1794 = vmul.f32 %v1732, %v20
  %v1795 = vmul.f32 %v1732, %v21
  %v1796 = vmul.f32 %v1732, %v22
  %v1797 = vmul.f32 %v1736, %v19
  %v1798 = vmul.f32 %v1736, %v20
  %v1799 = vmul.f32 %v1736, %v21
  %v1800 = vmul.f32 %v1736, %v22
  %v1801 = vmul.f32 %v1740, %v19
  %v1802 = vmul.f32 %v1740, %v20
  %v1803 = vmul.f32 %v1740, %v21
  %v1804 = vmul.f32 %v1740, %v22
  %v1805 = vmul.f32 %v1744, %v19
  %v1806 = vmul.f32 %v1744, %v20
  %v1807 = vmul.f32 %v1744, %v21
  %v1808 = vmul.f32 %v1744, %v22
  %v1809 = vmul.f32 %v1748, %v19
  %v1810 = vmul.f32 %v1748, %v20
  %v1811 = vmul.f32 %v1748, %v21
  %v1812 = vmul.f32 %v1748, %v22
  %v1813 = vmul.f32 %v1752, %v19
  %v1814 = vmul.f32 %v1752, %v20
  %v1815 = vmul.f32 %v1752, %v21
  %v1816 = vmul.f32 %v1752, %v22
  %v1817 = vmul.f32 %v1756, %v19
  %v1818 = vmul.f32 %v1756, %v20
  %v1819 = vmul.f32 %v1756, %v21
  %v1820 = vmul.f32 %v1756, %v22
  %v1821 = vmul.f32 %v1760, %v19
  %v1822 = vmul.f32 %v1760, %v20
  %v1823 = vmul.f32 %v1760, %v21
  %v1824 = vmul.f32 %v1760, %v22
  %v1825 = vmul.f32 %v1764, %v19
  %v1826 = vmul.f32 %v1764, %v20
  %v1827 = vmul.f32 %v1764, %v21
  %v1828 = vmul.f32 %v1764, %v22
  %v1829 = vadd.f32 %v1637, %v1765
  %v1830 = vadd.f32 %v1638, %v1766
  %v1831 = vadd.f32 %v1639, %v1767
  %v1832 = vadd.f32 %v1640, %v1768
  %v1833 = vadd.f32 %v1641, %v1769
  %v1834 = vadd.f32 %v1642, %v1770
  %v1835 = vadd.f32 %v1643, %v1771
  %v1836 = vadd.f32 %v1644, %v1772
  %v1837 = vadd.f32 %v1645, %v1773
  %v1838 = vadd.f32 %v1646, %v1774
  %v1839 = vadd.f32 %v1647, %v1775
  %v1840 = vadd.f32 %v1648, %v1776
  %v1841 = vadd.f32 %v1649, %v1777
  %v1842 = vadd.f32 %v1650, %v1778
  %v1843 = vadd.f32 %v1651, %v1779
  %v1844 = vadd.f32 %v1652, %v1780
  %v1845 = vadd.f32 %v1653, %v1781
  %v1846 = vadd.f32 %v1654, %v1782
  %v1847 = vadd.f32 %v1655, %v1783
  %v1848 = vadd.f32 %v1656, %v1784
  %v1849 = vadd.f32 %v1657, %v1785
  %v1850 = vadd.f32 %v1658, %v1786
  %v1851 = vadd.f32 %v1659, %v1787
  %v1852 = vadd.f32 %v1660, %v1788
  %v1853 = vadd.f32 %v1661, %v1789
  %v1854 = vadd.f32 %v1662, %v1790
  %v1855 = vadd.f32 %v1663, %v1791
  %v1856 = vadd.f32 %v1664, %v1792
  %v1857 = vadd.f32 %v1665, %v1793
  %v1858 = vadd.f32 %v1666, %v1794
  %v1859 = vadd.f32 %v1667, %v1795
  %v1860 = vadd.f32 %v1668, %v1796
  %v1861 = vadd.f32 %v1669, %v1797
  %v1862 = vadd.f32 %v1670, %v1798
  %v1863 = vadd.f32 %v1671, %v1799
  %v1864 = vadd.f32 %v1672, %v1800
  %v1865 = vadd.f32 %v1673, %v1801
  %v1866 = vadd.f32 %v1674, %v1802
  %v1867 = vadd.f32 %v1675, %v1803
  %v1868 = vadd.f32 %v1676, %v1804
  %v1869 = vadd.f32 %v1677, %v1805
  %v1870 = vadd.f32 %v1678, %v1806
  %v1871 = vadd.f32 %v1679, %v1807
  %v1872 = vadd.f32 %v1680, %v1808
  %v1873 = vadd.f32 %v1681, %v1809
  %v1874 = vadd.f32 %v1682, %v1810
  %v1875 = vadd.f32 %v1683, %v1811
  %v1876 = vadd.f32 %v1684, %v1812
  %v1877 = vadd.f32 %v1685, %v1813
  %v1878 = vadd.f32 %v1686, %v1814
  %v1879 = vadd.f32 %v1687, %v1815
  %v1880 = vadd.f32 %v1688, %v1816
  %v1881 = vadd.f32 %v1689, %v1817
  %v1882 = vadd.f32 %v1690, %v1818
  %v1883 = vadd.f32 %v1691, %v1819
  %v1884 = vadd.f32 %v1692, %v1820
  %v1885 = vadd.f32 %v1693, %v1821
  %v1886 = vadd.f32 %v1694, %v1822
  %v1887 = vadd.f32 %v1695, %v1823
  %v1888 = vadd.f32 %v1696, %v1824
  %v1889 = vadd.f32 %v1697, %v1825
  %v1890 = vadd.f32 %v1698, %v1826
  %v1891 = vadd.f32 %v1699, %v1827
  %v1892 = vadd.f32 %v1700, %v1828
  %v1893 = vlaneseq
  %v1894 = vshrl.u32 %v1893, 7
  %v1895 = vsub.s32 2, %v1894
  %v1896 = vrot.slane %v45, %v1895
  %v1897 = vlaneseq
  %v1898 = vshrl.u32 %v1897, 7
  %v1899 = vsub.s32 2, %v1898
  %v1900 = vrot.slane %v46, %v1899
  %v1901 = vlaneseq
  %v1902 = vshrl.u32 %v1901, 7
  %v1903 = vsub.s32 2, %v1902
  %v1904 = vrot.slane %v47, %v1903
  %v1905 = vlaneseq
  %v1906 = vshrl.u32 %v1905, 7
  %v1907 = vsub.s32 2, %v1906
  %v1908 = vrot.slane %v48, %v1907
  %v1909 = vlaneseq
  %v1910 = vshrl.u32 %v1909, 7
  %v1911 = vsub.s32 2, %v1910
  %v1912 = vrot.slane %v49, %v1911
  %v1913 = vlaneseq
  %v1914 = vshrl.u32 %v1913, 7
  %v1915 = vsub.s32 2, %v1914
  %v1916 = vrot.slane %v50, %v1915
  %v1917 = vlaneseq
  %v1918 = vshrl.u32 %v1917, 7
  %v1919 = vsub.s32 2, %v1918
  %v1920 = vrot.slane %v51, %v1919
  %v1921 = vlaneseq
  %v1922 = vshrl.u32 %v1921, 7
  %v1923 = vsub.s32 2, %v1922
  %v1924 = vrot.slane %v52, %v1923
  %v1925 = vlaneseq
  %v1926 = vshrl.u32 %v1925, 7
  %v1927 = vsub.s32 2, %v1926
  %v1928 = vrot.slane %v53, %v1927
  %v1929 = vlaneseq
  %v1930 = vshrl.u32 %v1929, 7
  %v1931 = vsub.s32 2, %v1930
  %v1932 = vrot.slane %v54, %v1931
  %v1933 = vlaneseq
  %v1934 = vshrl.u32 %v1933, 7
  %v1935 = vsub.s32 2, %v1934
  %v1936 = vrot.slane %v55, %v1935
  %v1937 = vlaneseq
  %v1938 = vshrl.u32 %v1937, 7
  %v1939 = vsub.s32 2, %v1938
  %v1940 = vrot.slane %v56, %v1939
  %v1941 = vlaneseq
  %v1942 = vshrl.u32 %v1941, 7
  %v1943 = vsub.s32 2, %v1942
  %v1944 = vrot.slane %v57, %v1943
  %v1945 = vlaneseq
  %v1946 = vshrl.u32 %v1945, 7
  %v1947 = vsub.s32 2, %v1946
  %v1948 = vrot.slane %v58, %v1947
  %v1949 = vlaneseq
  %v1950 = vshrl.u32 %v1949, 7
  %v1951 = vsub.s32 2, %v1950
  %v1952 = vrot.slane %v59, %v1951
  %v1953 = vlaneseq
  %v1954 = vshrl.u32 %v1953, 7
  %v1955 = vsub.s32 2, %v1954
  %v1956 = vrot.slane %v60, %v1955
  %v1957 = vmul.f32 %v1896, %v24
  %v1958 = vmul.f32 %v1896, %v25
  %v1959 = vmul.f32 %v1896, %v26
  %v1960 = vmul.f32 %v1896, %v27
  %v1961 = vmul.f32 %v1900, %v24
  %v1962 = vmul.f32 %v1900, %v25
  %v1963 = vmul.f32 %v1900, %v26
  %v1964 = vmul.f32 %v1900, %v27
  %v1965 = vmul.f32 %v1904, %v24
  %v1966 = vmul.f32 %v1904, %v25
  %v1967 = vmul.f32 %v1904, %v26
  %v1968 = vmul.f32 %v1904, %v27
  %v1969 = vmul.f32 %v1908, %v24
  %v1970 = vmul.f32 %v1908, %v25
  %v1971 = vmul.f32 %v1908, %v26
  %v1972 = vmul.f32 %v1908, %v27
  %v1973 = vmul.f32 %v1912, %v24
  %v1974 = vmul.f32 %v1912, %v25
  %v1975 = vmul.f32 %v1912, %v26
  %v1976 = vmul.f32 %v1912, %v27
  %v1977 = vmul.f32 %v1916, %v24
  %v1978 = vmul.f32 %v1916, %v25
  %v1979 = vmul.f32 %v1916, %v26
  %v1980 = vmul.f32 %v1916, %v27
  %v1981 = vmul.f32 %v1920, %v24
  %v1982 = vmul.f32 %v1920, %v25
  %v1983 = vmul.f32 %v1920, %v26
  %v1984 = vmul.f32 %v1920, %v27
  %v1985 = vmul.f32 %v1924, %v24
  %v1986 = vmul.f32 %v1924, %v25
  %v1987 = vmul.f32 %v1924, %v26
  %v1988 = vmul.f32 %v1924, %v27
  %v1989 = vmul.f32 %v1928, %v24
  %v1990 = vmul.f32 %v1928, %v25
  %v1991 = vmul.f32 %v1928, %v26
  %v1992 = vmul.f32 %v1928, %v27
  %v1993 = vmul.f32 %v1932, %v24
  %v1994 = vmul.f32 %v1932, %v25
  %v1995 = vmul.f32 %v1932, %v26
  %v1996 = vmul.f32 %v1932, %v27
  %v1997 = vmul.f32 %v1936, %v24
  %v1998 = vmul.f32 %v1936, %v25
  %v1999 = vmul.f32 %v1936, %v26
  %v2000 = vmul.f32 %v1936, %v27
  %v2001 = vmul.f32 %v1940, %v24
  %v2002 = vmul.f32 %v1940, %v25
  %v2003 = vmul.f32 %v1940, %v26
  %v2004 = vmul.f32 %v1940, %v27
  %v2005 = vmul.f32 %v1944, %v24
  %v2006 = vmul.f32 %v1944, %v25
  %v2007 = vmul.f32 %v1944, %v26
  %v2008 = vmul.f32 %v1944, %v27
  %v2009 = vmul.f32 %v1948, %v24
  %v2010 = vmul.f32 %v1948, %v25
  %v2011 = vmul.f32 %v1948, %v26
  %v2012 = vmul.f32 %v1948, %v27
  %v2013 = vmul.f32 %v1952, %v24
  %v2014 = vmul.f32 %v1952, %v25
  %v2015 = vmul.f32 %v1952, %v26
  %v2016 = vmul.f32 %v1952, %v27
  %v2017 = vmul.f32 %v1956, %v24
  %v2018 = vmul.f32 %v1956, %v25
  %v2019 = vmul.f32 %v1956, %v26
  %v2020 = vmul.f32 %v1956, %v27
  %v2021 = vadd.f32 %v1829, %v1957
  %v2022 = vadd.f32 %v1830, %v1958
  %v2023 = vadd.f32 %v1831, %v1959
  %v2024 = vadd.f32 %v1832, %v1960
  %v2025 = vadd.f32 %v1833, %v1961
  %v2026 = vadd.f32 %v1834, %v1962
  %v2027 = vadd.f32 %v1835, %v1963
  %v2028 = vadd.f32 %v1836, %v1964
  %v2029 = vadd.f32 %v1837, %v1965
  %v2030 = vadd.f32 %v1838, %v1966
  %v2031 = vadd.f32 %v1839, %v1967
  %v2032 = vadd.f32 %v1840, %v1968
  %v2033 = vadd.f32 %v1841, %v1969
  %v2034 = vadd.f32 %v1842, %v1970
  %v2035 = vadd.f32 %v1843, %v1971
  %v2036 = vadd.f32 %v1844, %v1972
  %v2037 = vadd.f32 %v1845, %v1973
  %v2038 = vadd.f32 %v1846, %v1974
  %v2039 = vadd.f32 %v1847, %v1975
  %v2040 = vadd.f32 %v1848, %v1976
  %v2041 = vadd.f32 %v1849, %v1977
  %v2042 = vadd.f32 %v1850, %v1978
  %v2043 = vadd.f32 %v1851, %v1979
  %v2044 = vadd.f32 %v1852, %v1980
  %v2045 = vadd.f32 %v1853, %v1981
  %v2046 = vadd.f32 %v1854, %v1982
  %v2047 = vadd.f32 %v1855, %v1983
  %v2048 = vadd.f32 %v1856, %v1984
  %v2049 = vadd.f32 %v1857, %v1985
  %v2050 = vadd.f32 %v1858, %v1986
  %v2051 = vadd.f32 %v1859, %v1987
  %v2052 = vadd.f32 %v1860, %v1988
  %v2053 = vadd.f32 %v1861, %v1989
  %v2054 = vadd.f32 %v1862, %v1990
  %v2055 = vadd.f32 %v1863, %v1991
  %v2056 = vadd.f32 %v1864, %v1992
  %v2057 = vadd.f32 %v1865, %v1993
  %v2058 = vadd.f32 %v1866, %v1994
  %v2059 = vadd.f32 %v1867, %v1995
  %v2060 = vadd.f32 %v1868, %v1996
  %v2061 = vadd.f32 %v1869, %v1997
  %v2062 = vadd.f32 %v1870, %v1998
  %v2063 = vadd.f32 %v1871, %v1999
  %v2064 = vadd.f32 %v1872, %v2000
  %v2065 = vadd.f32 %v1873, %v2001
  %v2066 = vadd.f32 %v1874, %v2002
  %v2067 = vadd.f32 %v1875, %v2003
  %v2068 = vadd.f32 %v1876, %v2004
  %v2069 = vadd.f32 %v1877, %v2005
  %v2070 = vadd.f32 %v1878, %v2006
  %v2071 = vadd.f32 %v1879, %v2007
  %v2072 = vadd.f32 %v1880, %v2008
  %v2073 = vadd.f32 %v1881, %v2009
  %v2074 = vadd.f32 %v1882, %v2010
  %v2075 = vadd.f32 %v1883, %v2011
  %v2076 = vadd.f32 %v1884, %v2012
  %v2077 = vadd.f32 %v1885, %v2013
  %v2078 = vadd.f32 %v1886, %v2014
  %v2079 = vadd.f32 %v1887, %v2015
  %v2080 = vadd.f32 %v1888, %v2016
  %v2081 = vadd.f32 %v1889, %v2017
  %v2082 = vadd.f32 %v1890, %v2018
  %v2083 = vadd.f32 %v1891, %v2019
  %v2084 = vadd.f32 %v1892, %v2020
  %v2085 = vlaneseq
  %v2086 = vshrl.u32 %v2085, 7
  %v2087 = vsub.s32 3, %v2086
  %v2088 = vrot.slane %v45, %v2087
  %v2089 = vlaneseq
  %v2090 = vshrl.u32 %v2089, 7
  %v2091 = vsub.s32 3, %v2090
  %v2092 = vrot.slane %v46, %v2091
  %v2093 = vlaneseq
  %v2094 = vshrl.u32 %v2093, 7
  %v2095 = vsub.s32 3, %v2094
  %v2096 = vrot.slane %v47, %v2095
  %v2097 = vlaneseq
  %v2098 = vshrl.u32 %v2097, 7
  %v2099 = vsub.s32 3, %v2098
  %v2100 = vrot.slane %v48, %v2099
  %v2101 = vlaneseq
  %v2102 = vshrl.u32 %v2101, 7
  %v2103 = vsub.s32 3, %v2102
  %v2104 = vrot.slane %v49, %v2103
  %v2105 = vlaneseq
  %v2106 = vshrl.u32 %v2105, 7
  %v2107 = vsub.s32 3, %v2106
  %v2108 = vrot.slane %v50, %v2107
  %v2109 = vlaneseq
  %v2110 = vshrl.u32 %v2109, 7
  %v2111 = vsub.s32 3, %v2110
  %v2112 = vrot.slane %v51, %v2111
  %v2113 = vlaneseq
  %v2114 = vshrl.u32 %v2113, 7
  %v2115 = vsub.s32 3, %v2114
  %v2116 = vrot.slane %v52, %v2115
  %v2117 = vlaneseq
  %v2118 = vshrl.u32 %v2117, 7
  %v2119 = vsub.s32 3, %v2118
  %v2120 = vrot.slane %v53, %v2119
  %v2121 = vlaneseq
  %v2122 = vshrl.u32 %v2121, 7
  %v2123 = vsub.s32 3, %v2122
  %v2124 = vrot.slane %v54, %v2123
  %v2125 = vlaneseq
  %v2126 = vshrl.u32 %v2125, 7
  %v2127 = vsub.s32 3, %v2126
  %v2128 = vrot.slane %v55, %v2127
  %v2129 = vlaneseq
  %v2130 = vshrl.u32 %v2129, 7
  %v2131 = vsub.s32 3, %v2130
  %v2132 = vrot.slane %v56, %v2131
  %v2133 = vlaneseq
  %v2134 = vshrl.u32 %v2133, 7
  %v2135 = vsub.s32 3, %v2134
  %v2136 = vrot.slane %v57, %v2135
  %v2137 = vlaneseq
  %v2138 = vshrl.u32 %v2137, 7
  %v2139 = vsub.s32 3, %v2138
  %v2140 = vrot.slane %v58, %v2139
  %v2141 = vlaneseq
  %v2142 = vshrl.u32 %v2141, 7
  %v2143 = vsub.s32 3, %v2142
  %v2144 = vrot.slane %v59, %v2143
  %v2145 = vlaneseq
  %v2146 = vshrl.u32 %v2145, 7
  %v2147 = vsub.s32 3, %v2146
  %v2148 = vrot.slane %v60, %v2147
  %v2149 = vmul.f32 %v2088, %v29
  %v2150 = vmul.f32 %v2088, %v30
  %v2151 = vmul.f32 %v2088, %v31
  %v2152 = vmul.f32 %v2088, %v32
  %v2153 = vmul.f32 %v2092, %v29
  %v2154 = vmul.f32 %v2092, %v30
  %v2155 = vmul.f32 %v2092, %v31
  %v2156 = vmul.f32 %v2092, %v32
  %v2157 = vmul.f32 %v2096, %v29
  %v2158 = vmul.f32 %v2096, %v30
  %v2159 = vmul.f32 %v2096, %v31
  %v2160 = vmul.f32 %v2096, %v32
  %v2161 = vmul.f32 %v2100, %v29
  %v2162 = vmul.f32 %v2100, %v30
  %v2163 = vmul.f32 %v2100, %v31
  %v2164 = vmul.f32 %v2100, %v32
  %v2165 = vmul.f32 %v2104, %v29
  %v2166 = vmul.f32 %v2104, %v30
  %v2167 = vmul.f32 %v2104, %v31
  %v2168 = vmul.f32 %v2104, %v32
  %v2169 = vmul.f32 %v2108, %v29
  %v2170 = vmul.f32 %v2108, %v30
  %v2171 = vmul.f32 %v2108, %v31
  %v2172 = vmul.f32 %v2108, %v32
  %v2173 = vmul.f32 %v2112, %v29
  %v2174 = vmul.f32 %v2112, %v30
  %v2175 = vmul.f32 %v2112, %v31
  %v2176 = vmul.f32 %v2112, %v32
  %v2177 = vmul.f32 %v2116, %v29
  %v2178 = vmul.f32 %v2116, %v30
  %v2179 = vmul.f32 %v2116, %v31
  %v2180 = vmul.f32 %v2116, %v32
  %v2181 = vmul.f32 %v2120, %v29
  %v2182 = vmul.f32 %v2120, %v30
  %v2183 = vmul.f32 %v2120, %v31
  %v2184 = vmul.f32 %v2120, %v32
  %v2185 = vmul.f32 %v2124, %v29
  %v2186 = vmul.f32 %v2124, %v30
  %v2187 = vmul.f32 %v2124, %v31
  %v2188 = vmul.f32 %v2124, %v32
  %v2189 = vmul.f32 %v2128, %v29
  %v2190 = vmul.f32 %v2128, %v30
  %v2191 = vmul.f32 %v2128, %v31
  %v2192 = vmul.f32 %v2128, %v32
  %v2193 = vmul.f32 %v2132, %v29
  %v2194 = vmul.f32 %v2132, %v30
  %v2195 = vmul.f32 %v2132, %v31
  %v2196 = vmul.f32 %v2132, %v32
  %v2197 = vmul.f32 %v2136, %v29
  %v2198 = vmul.f32 %v2136, %v30
  %v2199 = vmul.f32 %v2136, %v31
  %v2200 = vmul.f32 %v2136, %v32
  %v2201 = vmul.f32 %v2140, %v29
  %v2202 = vmul.f32 %v2140, %v30
  %v2203 = vmul.f32 %v2140, %v31
  %v2204 = vmul.f32 %v2140, %v32
  %v2205 = vmul.f32 %v2144, %v29
  %v2206 = vmul.f32 %v2144, %v30
  %v2207 = vmul.f32 %v2144, %v31
  %v2208 = vmul.f32 %v2144, %v32
  %v2209 = vmul.f32 %v2148, %v29
  %v2210 = vmul.f32 %v2148, %v30
  %v2211 = vmul.f32 %v2148, %v31
  %v2212 = vmul.f32 %v2148, %v32
  %v2213 = vadd.f32 %v2021, %v2149
  %v2214 = vadd.f32 %v2022, %v2150
  %v2215 = vadd.f32 %v2023, %v2151
  %v2216 = vadd.f32 %v2024, %v2152
  %v2217 = vadd.f32 %v2025, %v2153
  %v2218 = vadd.f32 %v2026, %v2154
  %v2219 = vadd.f32 %v2027, %v2155
  %v2220 = vadd.f32 %v2028, %v2156
  %v2221 = vadd.f32 %v2029, %v2157
  %v2222 = vadd.f32 %v2030, %v2158
  %v2223 = vadd.f32 %v2031, %v2159
  %v2224 = vadd.f32 %v2032, %v2160
  %v2225 = vadd.f32 %v2033, %v2161
  %v2226 = vadd.f32 %v2034, %v2162
  %v2227 = vadd.f32 %v2035, %v2163
  %v2228 = vadd.f32 %v2036, %v2164
  %v2229 = vadd.f32 %v2037, %v2165
  %v2230 = vadd.f32 %v2038, %v2166
  %v2231 = vadd.f32 %v2039, %v2167
  %v2232 = vadd.f32 %v2040, %v2168
  %v2233 = vadd.f32 %v2041, %v2169
  %v2234 = vadd.f32 %v2042, %v2170
  %v2235 = vadd.f32 %v2043, %v2171
  %v2236 = vadd.f32 %v2044, %v2172
  %v2237 = vadd.f32 %v2045, %v2173
  %v2238 = vadd.f32 %v2046, %v2174
  %v2239 = vadd.f32 %v2047, %v2175
  %v2240 = vadd.f32 %v2048, %v2176
  %v2241 = vadd.f32 %v2049, %v2177
  %v2242 = vadd.f32 %v2050, %v2178
  %v2243 = vadd.f32 %v2051, %v2179
  %v2244 = vadd.f32 %v2052, %v2180
  %v2245 = vadd.f32 %v2053, %v2181
  %v2246 = vadd.f32 %v2054, %v2182
  %v2247 = vadd.f32 %v2055, %v2183
  %v2248 = vadd.f32 %v2056, %v2184
  %v2249 = vadd.f32 %v2057, %v2185
  %v2250 = vadd.f32 %v2058, %v2186
  %v2251 = vadd.f32 %v2059, %v2187
  %v2252 = vadd.f32 %v2060, %v2188
  %v2253 = vadd.f32 %v2061, %v2189
  %v2254 = vadd.f32 %v2062, %v2190
  %v2255 = vadd.f32 %v2063, %v2191
  %v2256 = vadd.f32 %v2064, %v2192
  %v2257 = vadd.f32 %v2065, %v2193
  %v2258 = vadd.f32 %v2066, %v2194
  %v2259 = vadd.f32 %v2067, %v2195
  %v2260 = vadd.f32 %v2068, %v2196
  %v2261 = vadd.f32 %v2069, %v2197
  %v2262 = vadd.f32 %v2070, %v2198
  %v2263 = vadd.f32 %v2071, %v2199
  %v2264 = vadd.f32 %v2072, %v2200
  %v2265 = vadd.f32 %v2073, %v2201
  %v2266 = vadd.f32 %v2074, %v2202
  %v2267 = vadd.f32 %v2075, %v2203
  %v2268 = vadd.f32 %v2076, %v2204
  %v2269 = vadd.f32 %v2077, %v2205
  %v2270 = vadd.f32 %v2078, %v2206
  %v2271 = vadd.f32 %v2079, %v2207
  %v2272 = vadd.f32 %v2080, %v2208
  %v2273 = vadd.f32 %v2081, %v2209
  %v2274 = vadd.f32 %v2082, %v2210
  %v2275 = vadd.f32 %v2083, %v2211
  %v2276 = vadd.f32 %v2084, %v2212
  %v2277 = vmax.f32 %v2213, 0.0
  %v2278 = vmax.f32 %v2214, 0.0
  %v2279 = vmax.f32 %v2215, 0.0
  %v2280 = vmax.f32 %v2216, 0.0
  %v2281 = vmax.f32 %v2217, 0.0
  %v2282 = vmax.f32 %v2218, 0.0
  %v2283 = vmax.f32 %v2219, 0.0
  %v2284 = vmax.f32 %v2220, 0.0
  %v2285 = vmax.f32 %v2221, 0.0
  %v2286 = vmax.f32 %v2222, 0.0
  %v2287 = vmax.f32 %v2223, 0.0
  %v2288 = vmax.f32 %v2224, 0.0
  %v2289 = vmax.f32 %v2225, 0.0
  %v2290 = vmax.f32 %v2226, 0.0
  %v2291 = vmax.f32 %v2227, 0.0
  %v2292 = vmax.f32 %v2228, 0.0
  %v2293 = vmax.f32 %v2229, 0.0
  %v2294 = vmax.f32 %v2230, 0.0
  %v2295 = vmax.f32 %v2231, 0.0
  %v2296 = vmax.f32 %v2232, 0.0
  %v2297 = vmax.f32 %v2233, 0.0
  %v2298 = vmax.f32 %v2234, 0.0
  %v2299 = vmax.f32 %v2235, 0.0
  %v2300 = vmax.f32 %v2236, 0.0
  %v2301 = vmax.f32 %v2237, 0.0
  %v2302 = vmax.f32 %v2238, 0.0
  %v2303 = vmax.f32 %v2239, 0.0
  %v2304 = vmax.f32 %v2240, 0.0
  %v2305 = vmax.f32 %v2241, 0.0
  %v2306 = vmax.f32 %v2242, 0.0
  %v2307 = vmax.f32 %v2243, 0.0
  %v2308 = vmax.f32 %v2244, 0.0
  %v2309 = vmax.f32 %v2245, 0.0
  %v2310 = vmax.f32 %v2246, 0.0
  %v2311 = vmax.f32 %v2247, 0.0
  %v2312 = vmax.f32 %v2248, 0.0
  %v2313 = vmax.f32 %v2249, 0.0
  %v2314 = vmax.f32 %v2250, 0.0
  %v2315 = vmax.f32 %v2251, 0.0
  %v2316 = vmax.f32 %v2252, 0.0
  %v2317 = vmax.f32 %v2253, 0.0
  %v2318 = vmax.f32 %v2254, 0.0
  %v2319 = vmax.f32 %v2255, 0.0
  %v2320 = vmax.f32 %v2256, 0.0
  %v2321 = vmax.f32 %v2257, 0.0
  %v2322 = vmax.f32 %v2258, 0.0
  %v2323 = vmax.f32 %v2259, 0.0
  %v2324 = vmax.f32 %v2260, 0.0
  %v2325 = vmax.f32 %v2261, 0.0
  %v2326 = vmax.f32 %v2262, 0.0
  %v2327 = vmax.f32 %v2263, 0.0
  %v2328 = vmax.f32 %v2264, 0.0
  %v2329 = vmax.f32 %v2265, 0.0
  %v2330 = vmax.f32 %v2266, 0.0
  %v2331 = vmax.f32 %v2267, 0.0
  %v2332 = vmax.f32 %v2268, 0.0
  %v2333 = vmax.f32 %v2269, 0.0
  %v2334 = vmax.f32 %v2270, 0.0
  %v2335 = vmax.f32 %v2271, 0.0
  %v2336 = vmax.f32 %v2272, 0.0
  %v2337 = vmax.f32 %v2273, 0.0
  %v2338 = vmax.f32 %v2274, 0.0
  %v2339 = vmax.f32 %v2275, 0.0
  %v2340 = vmax.f32 %v2276, 0.0
  %v2341 = vmul.f32 %v2277, %v39
  %v2342 = vmul.f32 %v2278, %v40
  %v2343 = vmul.f32 %v2279, %v41
  %v2344 = vmul.f32 %v2280, %v42
  %v2345 = vmul.f32 %v2281, %v39
  %v2346 = vmul.f32 %v2282, %v40
  %v2347 = vmul.f32 %v2283, %v41
  %v2348 = vmul.f32 %v2284, %v42
  %v2349 = vmul.f32 %v2285, %v39
  %v2350 = vmul.f32 %v2286, %v40
  %v2351 = vmul.f32 %v2287, %v41
  %v2352 = vmul.f32 %v2288, %v42
  %v2353 = vmul.f32 %v2289, %v39
  %v2354 = vmul.f32 %v2290, %v40
  %v2355 = vmul.f32 %v2291, %v41
  %v2356 = vmul.f32 %v2292, %v42
  %v2357 = vmul.f32 %v2293, %v39
  %v2358 = vmul.f32 %v2294, %v40
  %v2359 = vmul.f32 %v2295, %v41
  %v2360 = vmul.f32 %v2296, %v42
  %v2361 = vmul.f32 %v2297, %v39
  %v2362 = vmul.f32 %v2298, %v40
  %v2363 = vmul.f32 %v2299, %v41
  %v2364 = vmul.f32 %v2300, %v42
  %v2365 = vmul.f32 %v2301, %v39
  %v2366 = vmul.f32 %v2302, %v40
  %v2367 = vmul.f32 %v2303, %v41
  %v2368 = vmul.f32 %v2304, %v42
  %v2369 = vmul.f32 %v2305, %v39
  %v2370 = vmul.f32 %v2306, %v40
  %v2371 = vmul.f32 %v2307, %v41
  %v2372 = vmul.f32 %v2308, %v42
  %v2373 = vmul.f32 %v2309, %v39
  %v2374 = vmul.f32 %v2310, %v40
  %v2375 = vmul.f32 %v2311, %v41
  %v2376 = vmul.f32 %v2312, %v42
  %v2377 = vmul.f32 %v2313, %v39
  %v2378 = vmul.f32 %v2314, %v40
  %v2379 = vmul.f32 %v2315, %v41
  %v2380 = vmul.f32 %v2316, %v42
  %v2381 = vmul.f32 %v2317, %v39
  %v2382 = vmul.f32 %v2318, %v40
  %v2383 = vmul.f32 %v2319, %v41
  %v2384 = vmul.f32 %v2320, %v42
  %v2385 = vmul.f32 %v2321, %v39
  %v2386 = vmul.f32 %v2322, %v40
  %v2387 = vmul.f32 %v2323, %v41
  %v2388 = vmul.f32 %v2324, %v42
  %v2389 = vmul.f32 %v2325, %v39
  %v2390 = vmul.f32 %v2326, %v40
  %v2391 = vmul.f32 %v2327, %v41
  %v2392 = vmul.f32 %v2328, %v42
  %v2393 = vmul.f32 %v2329, %v39
  %v2394 = vmul.f32 %v2330, %v40
  %v2395 = vmul.f32 %v2331, %v41
  %v2396 = vmul.f32 %v2332, %v42
  %v2397 = vmul.f32 %v2333, %v39
  %v2398 = vmul.f32 %v2334, %v40
  %v2399 = vmul.f32 %v2335, %v41
  %v2400 = vmul.f32 %v2336, %v42
  %v2401 = vmul.f32 %v2337, %v39
  %v2402 = vmul.f32 %v2338, %v40
  %v2403 = vmul.f32 %v2339, %v41
  %v2404 = vmul.f32 %v2340, %v42
  %v2405 = vsel %vm517, %v2341, 0.0
  %v2406 = vsel %vm517, %v2342, 0.0
  %v2407 = vadd.f32 %v2405, %v2406
  %v2408 = vsel %vm517, %v2343, 0.0
  %v2409 = vadd.f32 %v2407, %v2408
  %v2410 = vsel %vm517, %v2344, 0.0
  %v2411 = vadd.f32 %v2409, %v2410
  %v2412 = vrot.slane %v2411, 4
  %v2413 = vadd.f32 %v2411, %v2412
  %v2414 = vrot.slane %v2413, 2
  %v2415 = vadd.f32 %v2413, %v2414
  %v2416 = vrot.slane %v2415, 1
  %v2417 = vadd.f32 %v2415, %v2416
  %v2418 = vsel %vm517, %v2345, 0.0
  %v2419 = vsel %vm517, %v2346, 0.0
  %v2420 = vadd.f32 %v2418, %v2419
  %v2421 = vsel %vm517, %v2347, 0.0
  %v2422 = vadd.f32 %v2420, %v2421
  %v2423 = vsel %vm517, %v2348, 0.0
  %v2424 = vadd.f32 %v2422, %v2423
  %v2425 = vrot.slane %v2424, 4
  %v2426 = vadd.f32 %v2424, %v2425
  %v2427 = vrot.slane %v2426, 2
  %v2428 = vadd.f32 %v2426, %v2427
  %v2429 = vrot.slane %v2428, 1
  %v2430 = vadd.f32 %v2428, %v2429
  %v2431 = vsel %vm517, %v2349, 0.0
  %v2432 = vsel %vm517, %v2350, 0.0
  %v2433 = vadd.f32 %v2431, %v2432
  %v2434 = vsel %vm517, %v2351, 0.0
  %v2435 = vadd.f32 %v2433, %v2434
  %v2436 = vsel %vm517, %v2352, 0.0
  %v2437 = vadd.f32 %v2435, %v2436
  %v2438 = vrot.slane %v2437, 4
  %v2439 = vadd.f32 %v2437, %v2438
  %v2440 = vrot.slane %v2439, 2
  %v2441 = vadd.f32 %v2439, %v2440
  %v2442 = vrot.slane %v2441, 1
  %v2443 = vadd.f32 %v2441, %v2442
  %v2444 = vsel %vm517, %v2353, 0.0
  %v2445 = vsel %vm517, %v2354, 0.0
  %v2446 = vadd.f32 %v2444, %v2445
  %v2447 = vsel %vm517, %v2355, 0.0
  %v2448 = vadd.f32 %v2446, %v2447
  %v2449 = vsel %vm517, %v2356, 0.0
  %v2450 = vadd.f32 %v2448, %v2449
  %v2451 = vrot.slane %v2450, 4
  %v2452 = vadd.f32 %v2450, %v2451
  %v2453 = vrot.slane %v2452, 2
  %v2454 = vadd.f32 %v2452, %v2453
  %v2455 = vrot.slane %v2454, 1
  %v2456 = vadd.f32 %v2454, %v2455
  %v2457 = vsel %vm517, %v2357, 0.0
  %v2458 = vsel %vm517, %v2358, 0.0
  %v2459 = vadd.f32 %v2457, %v2458
  %v2460 = vsel %vm517, %v2359, 0.0
  %v2461 = vadd.f32 %v2459, %v2460
  %v2462 = vsel %vm517, %v2360, 0.0
  %v2463 = vadd.f32 %v2461, %v2462
  %v2464 = vrot.slane %v2463, 4
  %v2465 = vadd.f32 %v2463, %v2464
  %v2466 = vrot.slane %v2465, 2
  %v2467 = vadd.f32 %v2465, %v2466
  %v2468 = vrot.slane %v2467, 1
  %v2469 = vadd.f32 %v2467, %v2468
  %v2470 = vsel %vm517, %v2361, 0.0
  %v2471 = vsel %vm517, %v2362, 0.0
  %v2472 = vadd.f32 %v2470, %v2471
  %v2473 = vsel %vm517, %v2363, 0.0
  %v2474 = vadd.f32 %v2472, %v2473
  %v2475 = vsel %vm517, %v2364, 0.0
  %v2476 = vadd.f32 %v2474, %v2475
  %v2477 = vrot.slane %v2476, 4
  %v2478 = vadd.f32 %v2476, %v2477
  %v2479 = vrot.slane %v2478, 2
  %v2480 = vadd.f32 %v2478, %v2479
  %v2481 = vrot.slane %v2480, 1
  %v2482 = vadd.f32 %v2480, %v2481
  %v2483 = vsel %vm517, %v2365, 0.0
  %v2484 = vsel %vm517, %v2366, 0.0
  %v2485 = vadd.f32 %v2483, %v2484
  %v2486 = vsel %vm517, %v2367, 0.0
  %v2487 = vadd.f32 %v2485, %v2486
  %v2488 = vsel %vm517, %v2368, 0.0
  %v2489 = vadd.f32 %v2487, %v2488
  %v2490 = vrot.slane %v2489, 4
  %v2491 = vadd.f32 %v2489, %v2490
  %v2492 = vrot.slane %v2491, 2
  %v2493 = vadd.f32 %v2491, %v2492
  %v2494 = vrot.slane %v2493, 1
  %v2495 = vadd.f32 %v2493, %v2494
  %v2496 = vsel %vm517, %v2369, 0.0
  %v2497 = vsel %vm517, %v2370, 0.0
  %v2498 = vadd.f32 %v2496, %v2497
  %v2499 = vsel %vm517, %v2371, 0.0
  %v2500 = vadd.f32 %v2498, %v2499
  %v2501 = vsel %vm517, %v2372, 0.0
  %v2502 = vadd.f32 %v2500, %v2501
  %v2503 = vrot.slane %v2502, 4
  %v2504 = vadd.f32 %v2502, %v2503
  %v2505 = vrot.slane %v2504, 2
  %v2506 = vadd.f32 %v2504, %v2505
  %v2507 = vrot.slane %v2506, 1
  %v2508 = vadd.f32 %v2506, %v2507
  %v2509 = vsel %vm517, %v2373, 0.0
  %v2510 = vsel %vm517, %v2374, 0.0
  %v2511 = vadd.f32 %v2509, %v2510
  %v2512 = vsel %vm517, %v2375, 0.0
  %v2513 = vadd.f32 %v2511, %v2512
  %v2514 = vsel %vm517, %v2376, 0.0
  %v2515 = vadd.f32 %v2513, %v2514
  %v2516 = vrot.slane %v2515, 4
  %v2517 = vadd.f32 %v2515, %v2516
  %v2518 = vrot.slane %v2517, 2
  %v2519 = vadd.f32 %v2517, %v2518
  %v2520 = vrot.slane %v2519, 1
  %v2521 = vadd.f32 %v2519, %v2520
  %v2522 = vsel %vm517, %v2377, 0.0
  %v2523 = vsel %vm517, %v2378, 0.0
  %v2524 = vadd.f32 %v2522, %v2523
  %v2525 = vsel %vm517, %v2379, 0.0
  %v2526 = vadd.f32 %v2524, %v2525
  %v2527 = vsel %vm517, %v2380, 0.0
  %v2528 = vadd.f32 %v2526, %v2527
  %v2529 = vrot.slane %v2528, 4
  %v2530 = vadd.f32 %v2528, %v2529
  %v2531 = vrot.slane %v2530, 2
  %v2532 = vadd.f32 %v2530, %v2531
  %v2533 = vrot.slane %v2532, 1
  %v2534 = vadd.f32 %v2532, %v2533
  %v2535 = vsel %vm517, %v2381, 0.0
  %v2536 = vsel %vm517, %v2382, 0.0
  %v2537 = vadd.f32 %v2535, %v2536
  %v2538 = vsel %vm517, %v2383, 0.0
  %v2539 = vadd.f32 %v2537, %v2538
  %v2540 = vsel %vm517, %v2384, 0.0
  %v2541 = vadd.f32 %v2539, %v2540
  %v2542 = vrot.slane %v2541, 4
  %v2543 = vadd.f32 %v2541, %v2542
  %v2544 = vrot.slane %v2543, 2
  %v2545 = vadd.f32 %v2543, %v2544
  %v2546 = vrot.slane %v2545, 1
  %v2547 = vadd.f32 %v2545, %v2546
  %v2548 = vsel %vm517, %v2385, 0.0
  %v2549 = vsel %vm517, %v2386, 0.0
  %v2550 = vadd.f32 %v2548, %v2549
  %v2551 = vsel %vm517, %v2387, 0.0
  %v2552 = vadd.f32 %v2550, %v2551
  %v2553 = vsel %vm517, %v2388, 0.0
  %v2554 = vadd.f32 %v2552, %v2553
  %v2555 = vrot.slane %v2554, 4
  %v2556 = vadd.f32 %v2554, %v2555
  %v2557 = vrot.slane %v2556, 2
  %v2558 = vadd.f32 %v2556, %v2557
  %v2559 = vrot.slane %v2558, 1
  %v2560 = vadd.f32 %v2558, %v2559
  %v2561 = vsel %vm517, %v2389, 0.0
  %v2562 = vsel %vm517, %v2390, 0.0
  %v2563 = vadd.f32 %v2561, %v2562
  %v2564 = vsel %vm517, %v2391, 0.0
  %v2565 = vadd.f32 %v2563, %v2564
  %v2566 = vsel %vm517, %v2392, 0.0
  %v2567 = vadd.f32 %v2565, %v2566
  %v2568 = vrot.slane %v2567, 4
  %v2569 = vadd.f32 %v2567, %v2568
  %v2570 = vrot.slane %v2569, 2
  %v2571 = vadd.f32 %v2569, %v2570
  %v2572 = vrot.slane %v2571, 1
  %v2573 = vadd.f32 %v2571, %v2572
  %v2574 = vsel %vm517, %v2393, 0.0
  %v2575 = vsel %vm517, %v2394, 0.0
  %v2576 = vadd.f32 %v2574, %v2575
  %v2577 = vsel %vm517, %v2395, 0.0
  %v2578 = vadd.f32 %v2576, %v2577
  %v2579 = vsel %vm517, %v2396, 0.0
  %v2580 = vadd.f32 %v2578, %v2579
  %v2581 = vrot.slane %v2580, 4
  %v2582 = vadd.f32 %v2580, %v2581
  %v2583 = vrot.slane %v2582, 2
  %v2584 = vadd.f32 %v2582, %v2583
  %v2585 = vrot.slane %v2584, 1
  %v2586 = vadd.f32 %v2584, %v2585
  %v2587 = vsel %vm517, %v2397, 0.0
  %v2588 = vsel %vm517, %v2398, 0.0
  %v2589 = vadd.f32 %v2587, %v2588
  %v2590 = vsel %vm517, %v2399, 0.0
  %v2591 = vadd.f32 %v2589, %v2590
  %v2592 = vsel %vm517, %v2400, 0.0
  %v2593 = vadd.f32 %v2591, %v2592
  %v2594 = vrot.slane %v2593, 4
  %v2595 = vadd.f32 %v2593, %v2594
  %v2596 = vrot.slane %v2595, 2
  %v2597 = vadd.f32 %v2595, %v2596
  %v2598 = vrot.slane %v2597, 1
  %v2599 = vadd.f32 %v2597, %v2598
  %v2600 = vsel %vm517, %v2401, 0.0
  %v2601 = vsel %vm517, %v2402, 0.0
  %v2602 = vadd.f32 %v2600, %v2601
  %v2603 = vsel %vm517, %v2403, 0.0
  %v2604 = vadd.f32 %v2602, %v2603
  %v2605 = vsel %vm517, %v2404, 0.0
  %v2606 = vadd.f32 %v2604, %v2605
  %v2607 = vrot.slane %v2606, 4
  %v2608 = vadd.f32 %v2606, %v2607
  %v2609 = vrot.slane %v2608, 2
  %v2610 = vadd.f32 %v2608, %v2609
  %v2611 = vrot.slane %v2610, 1
  %v2612 = vadd.f32 %v2610, %v2611
  %v2613 = vadd.f32 %v2417, %v44
  %v2614 = vadd.f32 %v2430, %v44
  %v2615 = vadd.f32 %v2443, %v44
  %v2616 = vadd.f32 %v2456, %v44
  %v2617 = vadd.f32 %v2469, %v44
  %v2618 = vadd.f32 %v2482, %v44
  %v2619 = vadd.f32 %v2495, %v44
  %v2620 = vadd.f32 %v2508, %v44
  %v2621 = vadd.f32 %v2521, %v44
  %v2622 = vadd.f32 %v2534, %v44
  %v2623 = vadd.f32 %v2547, %v44
  %v2624 = vadd.f32 %v2560, %v44
  %v2625 = vadd.f32 %v2573, %v44
  %v2626 = vadd.f32 %v2586, %v44
  %v2627 = vadd.f32 %v2599, %v44
  %v2628 = vadd.f32 %v2612, %v44
  %v2645 = vrot.slane %v45, 4
  %v2646 = vrot.slane %v46, 4
  %v2647 = vrot.slane %v47, 4
  %v2648 = vrot.slane %v48, 4
  %v2649 = vrot.slane %v49, 4
  %v2650 = vrot.slane %v50, 4
  %v2651 = vrot.slane %v51, 4
  %v2652 = vrot.slane %v52, 4
  %v2653 = vrot.slane %v53, 4
  %v2654 = vrot.slane %v54, 4
  %v2655 = vrot.slane %v55, 4
  %v2656 = vrot.slane %v56, 4
  %v2657 = vrot.slane %v57, 4
  %v2658 = vrot.slane %v58, 4
  %v2659 = vrot.slane %v59, 4
  %v2660 = vrot.slane %v60, 4
  %v2677 = vsub.f32 %v2613, %v2645
  %v2678 = vsub.f32 %v2614, %v2646
  %v2679 = vsub.f32 %v2615, %v2647
  %v2680 = vsub.f32 %v2616, %v2648
  %v2681 = vsub.f32 %v2617, %v2649
  %v2682 = vsub.f32 %v2618, %v2650
  %v2683 = vsub.f32 %v2619, %v2651
  %v2684 = vsub.f32 %v2620, %v2652
  %v2685 = vsub.f32 %v2621, %v2653
  %v2686 = vsub.f32 %v2622, %v2654
  %v2687 = vsub.f32 %v2623, %v2655
  %v2688 = vsub.f32 %v2624, %v2656
  %v2689 = vsub.f32 %v2625, %v2657
  %v2690 = vsub.f32 %v2626, %v2658
  %v2691 = vsub.f32 %v2627, %v2659
  %v2692 = vsub.f32 %v2628, %v2660
  %v2693 = vmul.f32 %v2677, %v2677
  %v2694 = vmul.f32 %v2678, %v2678
  %v2695 = vmul.f32 %v2679, %v2679
  %v2696 = vmul.f32 %v2680, %v2680
  %v2697 = vmul.f32 %v2681, %v2681
  %v2698 = vmul.f32 %v2682, %v2682
  %v2699 = vmul.f32 %v2683, %v2683
  %v2700 = vmul.f32 %v2684, %v2684
  %v2701 = vmul.f32 %v2685, %v2685
  %v2702 = vmul.f32 %v2686, %v2686
  %v2703 = vmul.f32 %v2687, %v2687
  %v2704 = vmul.f32 %v2688, %v2688
  %v2705 = vmul.f32 %v2689, %v2689
  %v2706 = vmul.f32 %v2690, %v2690
  %v2707 = vmul.f32 %v2691, %v2691
  %v2708 = vmul.f32 %v2692, %v2692
  %v2709 = vsel %vm794, %v2693, 0.0
  %v2710 = vsel %vm794, %v2694, 0.0
  %v2711 = vadd.f32 %v2709, %v2710
  %v2712 = vsel %vm794, %v2695, 0.0
  %v2713 = vadd.f32 %v2711, %v2712
  %v2714 = vsel %vm794, %v2696, 0.0
  %v2715 = vadd.f32 %v2713, %v2714
  %v2716 = vsel %vm794, %v2697, 0.0
  %v2717 = vadd.f32 %v2715, %v2716
  %v2718 = vsel %vm794, %v2698, 0.0
  %v2719 = vadd.f32 %v2717, %v2718
  %v2720 = vsel %vm794, %v2699, 0.0
  %v2721 = vadd.f32 %v2719, %v2720
  %v2722 = vsel %vm794, %v2700, 0.0
  %v2723 = vadd.f32 %v2721, %v2722
  %v2724 = vsel %vm794, %v2701, 0.0
  %v2725 = vadd.f32 %v2723, %v2724
  %v2726 = vsel %vm794, %v2702, 0.0
  %v2727 = vadd.f32 %v2725, %v2726
  %v2728 = vsel %vm794, %v2703, 0.0
  %v2729 = vadd.f32 %v2727, %v2728
  %v2730 = vsel %vm794, %v2704, 0.0
  %v2731 = vadd.f32 %v2729, %v2730
  %v2732 = vsel %vm794, %v2705, 0.0
  %v2733 = vadd.f32 %v2731, %v2732
  %v2734 = vsel %vm794, %v2706, 0.0
  %v2735 = vadd.f32 %v2733, %v2734
  %v2736 = vsel %vm794, %v2707, 0.0
  %v2737 = vadd.f32 %v2735, %v2736
  %v2738 = vsel %vm794, %v2708, 0.0
  %v2739 = vadd.f32 %v2737, %v2738
  %v2740 = vmul.f32 %v2739, 0.0625
  %s2741 = scalar_lea.vmem %s0, 64
  %v2742 = vld [vmem:[%s2741] sm:$0x1f]
  %v2743 = vld [vmem:[%s2741 + $0x8] sm:$0x1f]
  %v2744 = vld [vmem:[%s2741 + $0x10] sm:$0x1f]
  %v2745 = vld [vmem:[%s2741 + $0x18] sm:$0x1f]
  %v2746 = vld [vmem:[%s2741 + $0x20] sm:$0x1f]
  %v2747 = vld [vmem:[%s2741 + $0x28] sm:$0x1f]
  %v2748 = vld [vmem:[%s2741 + $0x30] sm:$0x1f]
  %v2749 = vld [vmem:[%s2741 + $0x38] sm:$0x1f]
  %v2750 = vlaneseq
  %v2751 = vshrl.u32 %v2750, 7
  %v2752 = vsub.s32 0, %v2751
  %v2753 = vrot.slane %v2742, %v2752
  %v2754 = vlaneseq
  %v2755 = vshrl.u32 %v2754, 7
  %v2756 = vsub.s32 0, %v2755
  %v2757 = vrot.slane %v2743, %v2756
  %v2758 = vlaneseq
  %v2759 = vshrl.u32 %v2758, 7
  %v2760 = vsub.s32 0, %v2759
  %v2761 = vrot.slane %v2744, %v2760
  %v2762 = vlaneseq
  %v2763 = vshrl.u32 %v2762, 7
  %v2764 = vsub.s32 0, %v2763
  %v2765 = vrot.slane %v2745, %v2764
  %v2766 = vlaneseq
  %v2767 = vshrl.u32 %v2766, 7
  %v2768 = vsub.s32 0, %v2767
  %v2769 = vrot.slane %v2746, %v2768
  %v2770 = vlaneseq
  %v2771 = vshrl.u32 %v2770, 7
  %v2772 = vsub.s32 0, %v2771
  %v2773 = vrot.slane %v2747, %v2772
  %v2774 = vlaneseq
  %v2775 = vshrl.u32 %v2774, 7
  %v2776 = vsub.s32 0, %v2775
  %v2777 = vrot.slane %v2748, %v2776
  %v2778 = vlaneseq
  %v2779 = vshrl.u32 %v2778, 7
  %v2780 = vsub.s32 0, %v2779
  %v2781 = vrot.slane %v2749, %v2780
  %v2782 = vmul.f32 %v2753, %v1082
  %v2783 = vmul.f32 %v2753, %v1083
  %v2784 = vmul.f32 %v2753, %v1084
  %v2785 = vmul.f32 %v2753, %v1085
  %v2786 = vmul.f32 %v2757, %v1082
  %v2787 = vmul.f32 %v2757, %v1083
  %v2788 = vmul.f32 %v2757, %v1084
  %v2789 = vmul.f32 %v2757, %v1085
  %v2790 = vmul.f32 %v2761, %v1082
  %v2791 = vmul.f32 %v2761, %v1083
  %v2792 = vmul.f32 %v2761, %v1084
  %v2793 = vmul.f32 %v2761, %v1085
  %v2794 = vmul.f32 %v2765, %v1082
  %v2795 = vmul.f32 %v2765, %v1083
  %v2796 = vmul.f32 %v2765, %v1084
  %v2797 = vmul.f32 %v2765, %v1085
  %v2798 = vmul.f32 %v2769, %v1082
  %v2799 = vmul.f32 %v2769, %v1083
  %v2800 = vmul.f32 %v2769, %v1084
  %v2801 = vmul.f32 %v2769, %v1085
  %v2802 = vmul.f32 %v2773, %v1082
  %v2803 = vmul.f32 %v2773, %v1083
  %v2804 = vmul.f32 %v2773, %v1084
  %v2805 = vmul.f32 %v2773, %v1085
  %v2806 = vmul.f32 %v2777, %v1082
  %v2807 = vmul.f32 %v2777, %v1083
  %v2808 = vmul.f32 %v2777, %v1084
  %v2809 = vmul.f32 %v2777, %v1085
  %v2810 = vmul.f32 %v2781, %v1082
  %v2811 = vmul.f32 %v2781, %v1083
  %v2812 = vmul.f32 %v2781, %v1084
  %v2813 = vmul.f32 %v2781, %v1085
  %v2814 = vadd.f32 %v1470, %v2782
  %v2815 = vadd.f32 %v1471, %v2783
  %v2816 = vadd.f32 %v1472, %v2784
  %v2817 = vadd.f32 %v1473, %v2785
  %v2818 = vadd.f32 %v1470, %v2786
  %v2819 = vadd.f32 %v1471, %v2787
  %v2820 = vadd.f32 %v1472, %v2788
  %v2821 = vadd.f32 %v1473, %v2789
  %v2822 = vadd.f32 %v1470, %v2790
  %v2823 = vadd.f32 %v1471, %v2791
  %v2824 = vadd.f32 %v1472, %v2792
  %v2825 = vadd.f32 %v1473, %v2793
  %v2826 = vadd.f32 %v1470, %v2794
  %v2827 = vadd.f32 %v1471, %v2795
  %v2828 = vadd.f32 %v1472, %v2796
  %v2829 = vadd.f32 %v1473, %v2797
  %v2830 = vadd.f32 %v1470, %v2798
  %v2831 = vadd.f32 %v1471, %v2799
  %v2832 = vadd.f32 %v1472, %v2800
  %v2833 = vadd.f32 %v1473, %v2801
  %v2834 = vadd.f32 %v1470, %v2802
  %v2835 = vadd.f32 %v1471, %v2803
  %v2836 = vadd.f32 %v1472, %v2804
  %v2837 = vadd.f32 %v1473, %v2805
  %v2838 = vadd.f32 %v1470, %v2806
  %v2839 = vadd.f32 %v1471, %v2807
  %v2840 = vadd.f32 %v1472, %v2808
  %v2841 = vadd.f32 %v1473, %v2809
  %v2842 = vadd.f32 %v1470, %v2810
  %v2843 = vadd.f32 %v1471, %v2811
  %v2844 = vadd.f32 %v1472, %v2812
  %v2845 = vadd.f32 %v1473, %v2813
  %v2846 = vlaneseq
  %v2847 = vshrl.u32 %v2846, 7
  %v2848 = vsub.s32 1, %v2847
  %v2849 = vrot.slane %v2742, %v2848
  %v2850 = vlaneseq
  %v2851 = vshrl.u32 %v2850, 7
  %v2852 = vsub.s32 1, %v2851
  %v2853 = vrot.slane %v2743, %v2852
  %v2854 = vlaneseq
  %v2855 = vshrl.u32 %v2854, 7
  %v2856 = vsub.s32 1, %v2855
  %v2857 = vrot.slane %v2744, %v2856
  %v2858 = vlaneseq
  %v2859 = vshrl.u32 %v2858, 7
  %v2860 = vsub.s32 1, %v2859
  %v2861 = vrot.slane %v2745, %v2860
  %v2862 = vlaneseq
  %v2863 = vshrl.u32 %v2862, 7
  %v2864 = vsub.s32 1, %v2863
  %v2865 = vrot.slane %v2746, %v2864
  %v2866 = vlaneseq
  %v2867 = vshrl.u32 %v2866, 7
  %v2868 = vsub.s32 1, %v2867
  %v2869 = vrot.slane %v2747, %v2868
  %v2870 = vlaneseq
  %v2871 = vshrl.u32 %v2870, 7
  %v2872 = vsub.s32 1, %v2871
  %v2873 = vrot.slane %v2748, %v2872
  %v2874 = vlaneseq
  %v2875 = vshrl.u32 %v2874, 7
  %v2876 = vsub.s32 1, %v2875
  %v2877 = vrot.slane %v2749, %v2876
  %v2878 = vmul.f32 %v2849, %v1202
  %v2879 = vmul.f32 %v2849, %v1203
  %v2880 = vmul.f32 %v2849, %v1204
  %v2881 = vmul.f32 %v2849, %v1205
  %v2882 = vmul.f32 %v2853, %v1202
  %v2883 = vmul.f32 %v2853, %v1203
  %v2884 = vmul.f32 %v2853, %v1204
  %v2885 = vmul.f32 %v2853, %v1205
  %v2886 = vmul.f32 %v2857, %v1202
  %v2887 = vmul.f32 %v2857, %v1203
  %v2888 = vmul.f32 %v2857, %v1204
  %v2889 = vmul.f32 %v2857, %v1205
  %v2890 = vmul.f32 %v2861, %v1202
  %v2891 = vmul.f32 %v2861, %v1203
  %v2892 = vmul.f32 %v2861, %v1204
  %v2893 = vmul.f32 %v2861, %v1205
  %v2894 = vmul.f32 %v2865, %v1202
  %v2895 = vmul.f32 %v2865, %v1203
  %v2896 = vmul.f32 %v2865, %v1204
  %v2897 = vmul.f32 %v2865, %v1205
  %v2898 = vmul.f32 %v2869, %v1202
  %v2899 = vmul.f32 %v2869, %v1203
  %v2900 = vmul.f32 %v2869, %v1204
  %v2901 = vmul.f32 %v2869, %v1205
  %v2902 = vmul.f32 %v2873, %v1202
  %v2903 = vmul.f32 %v2873, %v1203
  %v2904 = vmul.f32 %v2873, %v1204
  %v2905 = vmul.f32 %v2873, %v1205
  %v2906 = vmul.f32 %v2877, %v1202
  %v2907 = vmul.f32 %v2877, %v1203
  %v2908 = vmul.f32 %v2877, %v1204
  %v2909 = vmul.f32 %v2877, %v1205
  %v2910 = vadd.f32 %v2814, %v2878
  %v2911 = vadd.f32 %v2815, %v2879
  %v2912 = vadd.f32 %v2816, %v2880
  %v2913 = vadd.f32 %v2817, %v2881
  %v2914 = vadd.f32 %v2818, %v2882
  %v2915 = vadd.f32 %v2819, %v2883
  %v2916 = vadd.f32 %v2820, %v2884
  %v2917 = vadd.f32 %v2821, %v2885
  %v2918 = vadd.f32 %v2822, %v2886
  %v2919 = vadd.f32 %v2823, %v2887
  %v2920 = vadd.f32 %v2824, %v2888
  %v2921 = vadd.f32 %v2825, %v2889
  %v2922 = vadd.f32 %v2826, %v2890
  %v2923 = vadd.f32 %v2827, %v2891
  %v2924 = vadd.f32 %v2828, %v2892
  %v2925 = vadd.f32 %v2829, %v2893
  %v2926 = vadd.f32 %v2830, %v2894
  %v2927 = vadd.f32 %v2831, %v2895
  %v2928 = vadd.f32 %v2832, %v2896
  %v2929 = vadd.f32 %v2833, %v2897
  %v2930 = vadd.f32 %v2834, %v2898
  %v2931 = vadd.f32 %v2835, %v2899
  %v2932 = vadd.f32 %v2836, %v2900
  %v2933 = vadd.f32 %v2837, %v2901
  %v2934 = vadd.f32 %v2838, %v2902
  %v2935 = vadd.f32 %v2839, %v2903
  %v2936 = vadd.f32 %v2840, %v2904
  %v2937 = vadd.f32 %v2841, %v2905
  %v2938 = vadd.f32 %v2842, %v2906
  %v2939 = vadd.f32 %v2843, %v2907
  %v2940 = vadd.f32 %v2844, %v2908
  %v2941 = vadd.f32 %v2845, %v2909
  %v2942 = vlaneseq
  %v2943 = vshrl.u32 %v2942, 7
  %v2944 = vsub.s32 2, %v2943
  %v2945 = vrot.slane %v2742, %v2944
  %v2946 = vlaneseq
  %v2947 = vshrl.u32 %v2946, 7
  %v2948 = vsub.s32 2, %v2947
  %v2949 = vrot.slane %v2743, %v2948
  %v2950 = vlaneseq
  %v2951 = vshrl.u32 %v2950, 7
  %v2952 = vsub.s32 2, %v2951
  %v2953 = vrot.slane %v2744, %v2952
  %v2954 = vlaneseq
  %v2955 = vshrl.u32 %v2954, 7
  %v2956 = vsub.s32 2, %v2955
  %v2957 = vrot.slane %v2745, %v2956
  %v2958 = vlaneseq
  %v2959 = vshrl.u32 %v2958, 7
  %v2960 = vsub.s32 2, %v2959
  %v2961 = vrot.slane %v2746, %v2960
  %v2962 = vlaneseq
  %v2963 = vshrl.u32 %v2962, 7
  %v2964 = vsub.s32 2, %v2963
  %v2965 = vrot.slane %v2747, %v2964
  %v2966 = vlaneseq
  %v2967 = vshrl.u32 %v2966, 7
  %v2968 = vsub.s32 2, %v2967
  %v2969 = vrot.slane %v2748, %v2968
  %v2970 = vlaneseq
  %v2971 = vshrl.u32 %v2970, 7
  %v2972 = vsub.s32 2, %v2971
  %v2973 = vrot.slane %v2749, %v2972
  %v2974 = vmul.f32 %v2945, %v1322
  %v2975 = vmul.f32 %v2945, %v1323
  %v2976 = vmul.f32 %v2945, %v1324
  %v2977 = vmul.f32 %v2945, %v1325
  %v2978 = vmul.f32 %v2949, %v1322
  %v2979 = vmul.f32 %v2949, %v1323
  %v2980 = vmul.f32 %v2949, %v1324
  %v2981 = vmul.f32 %v2949, %v1325
  %v2982 = vmul.f32 %v2953, %v1322
  %v2983 = vmul.f32 %v2953, %v1323
  %v2984 = vmul.f32 %v2953, %v1324
  %v2985 = vmul.f32 %v2953, %v1325
  %v2986 = vmul.f32 %v2957, %v1322
  %v2987 = vmul.f32 %v2957, %v1323
  %v2988 = vmul.f32 %v2957, %v1324
  %v2989 = vmul.f32 %v2957, %v1325
  %v2990 = vmul.f32 %v2961, %v1322
  %v2991 = vmul.f32 %v2961, %v1323
  %v2992 = vmul.f32 %v2961, %v1324
  %v2993 = vmul.f32 %v2961, %v1325
  %v2994 = vmul.f32 %v2965, %v1322
  %v2995 = vmul.f32 %v2965, %v1323
  %v2996 = vmul.f32 %v2965, %v1324
  %v2997 = vmul.f32 %v2965, %v1325
  %v2998 = vmul.f32 %v2969, %v1322
  %v2999 = vmul.f32 %v2969, %v1323
  %v3000 = vmul.f32 %v2969, %v1324
  %v3001 = vmul.f32 %v2969, %v1325
  %v3002 = vmul.f32 %v2973, %v1322
  %v3003 = vmul.f32 %v2973, %v1323
  %v3004 = vmul.f32 %v2973, %v1324
  %v3005 = vmul.f32 %v2973, %v1325
  %v3006 = vadd.f32 %v2910, %v2974
  %v3007 = vadd.f32 %v2911, %v2975
  %v3008 = vadd.f32 %v2912, %v2976
  %v3009 = vadd.f32 %v2913, %v2977
  %v3010 = vadd.f32 %v2914, %v2978
  %v3011 = vadd.f32 %v2915, %v2979
  %v3012 = vadd.f32 %v2916, %v2980
  %v3013 = vadd.f32 %v2917, %v2981
  %v3014 = vadd.f32 %v2918, %v2982
  %v3015 = vadd.f32 %v2919, %v2983
  %v3016 = vadd.f32 %v2920, %v2984
  %v3017 = vadd.f32 %v2921, %v2985
  %v3018 = vadd.f32 %v2922, %v2986
  %v3019 = vadd.f32 %v2923, %v2987
  %v3020 = vadd.f32 %v2924, %v2988
  %v3021 = vadd.f32 %v2925, %v2989
  %v3022 = vadd.f32 %v2926, %v2990
  %v3023 = vadd.f32 %v2927, %v2991
  %v3024 = vadd.f32 %v2928, %v2992
  %v3025 = vadd.f32 %v2929, %v2993
  %v3026 = vadd.f32 %v2930, %v2994
  %v3027 = vadd.f32 %v2931, %v2995
  %v3028 = vadd.f32 %v2932, %v2996
  %v3029 = vadd.f32 %v2933, %v2997
  %v3030 = vadd.f32 %v2934, %v2998
  %v3031 = vadd.f32 %v2935, %v2999
  %v3032 = vadd.f32 %v2936, %v3000
  %v3033 = vadd.f32 %v2937, %v3001
  %v3034 = vadd.f32 %v2938, %v3002
  %v3035 = vadd.f32 %v2939, %v3003
  %v3036 = vadd.f32 %v2940, %v3004
  %v3037 = vadd.f32 %v2941, %v3005
  %v3038 = vlaneseq
  %v3039 = vshrl.u32 %v3038, 7
  %v3040 = vsub.s32 3, %v3039
  %v3041 = vrot.slane %v2742, %v3040
  %v3042 = vlaneseq
  %v3043 = vshrl.u32 %v3042, 7
  %v3044 = vsub.s32 3, %v3043
  %v3045 = vrot.slane %v2743, %v3044
  %v3046 = vlaneseq
  %v3047 = vshrl.u32 %v3046, 7
  %v3048 = vsub.s32 3, %v3047
  %v3049 = vrot.slane %v2744, %v3048
  %v3050 = vlaneseq
  %v3051 = vshrl.u32 %v3050, 7
  %v3052 = vsub.s32 3, %v3051
  %v3053 = vrot.slane %v2745, %v3052
  %v3054 = vlaneseq
  %v3055 = vshrl.u32 %v3054, 7
  %v3056 = vsub.s32 3, %v3055
  %v3057 = vrot.slane %v2746, %v3056
  %v3058 = vlaneseq
  %v3059 = vshrl.u32 %v3058, 7
  %v3060 = vsub.s32 3, %v3059
  %v3061 = vrot.slane %v2747, %v3060
  %v3062 = vlaneseq
  %v3063 = vshrl.u32 %v3062, 7
  %v3064 = vsub.s32 3, %v3063
  %v3065 = vrot.slane %v2748, %v3064
  %v3066 = vlaneseq
  %v3067 = vshrl.u32 %v3066, 7
  %v3068 = vsub.s32 3, %v3067
  %v3069 = vrot.slane %v2749, %v3068
  %v3070 = vmul.f32 %v3041, %v1442
  %v3071 = vmul.f32 %v3041, %v1443
  %v3072 = vmul.f32 %v3041, %v1444
  %v3073 = vmul.f32 %v3041, %v1445
  %v3074 = vmul.f32 %v3045, %v1442
  %v3075 = vmul.f32 %v3045, %v1443
  %v3076 = vmul.f32 %v3045, %v1444
  %v3077 = vmul.f32 %v3045, %v1445
  %v3078 = vmul.f32 %v3049, %v1442
  %v3079 = vmul.f32 %v3049, %v1443
  %v3080 = vmul.f32 %v3049, %v1444
  %v3081 = vmul.f32 %v3049, %v1445
  %v3082 = vmul.f32 %v3053, %v1442
  %v3083 = vmul.f32 %v3053, %v1443
  %v3084 = vmul.f32 %v3053, %v1444
  %v3085 = vmul.f32 %v3053, %v1445
  %v3086 = vmul.f32 %v3057, %v1442
  %v3087 = vmul.f32 %v3057, %v1443
  %v3088 = vmul.f32 %v3057, %v1444
  %v3089 = vmul.f32 %v3057, %v1445
  %v3090 = vmul.f32 %v3061, %v1442
  %v3091 = vmul.f32 %v3061, %v1443
  %v3092 = vmul.f32 %v3061, %v1444
  %v3093 = vmul.f32 %v3061, %v1445
  %v3094 = vmul.f32 %v3065, %v1442
  %v3095 = vmul.f32 %v3065, %v1443
  %v3096 = vmul.f32 %v3065, %v1444
  %v3097 = vmul.f32 %v3065, %v1445
  %v3098 = vmul.f32 %v3069, %v1442
  %v3099 = vmul.f32 %v3069, %v1443
  %v3100 = vmul.f32 %v3069, %v1444
  %v3101 = vmul.f32 %v3069, %v1445
  %v3102 = vadd.f32 %v3006, %v3070
  %v3103 = vadd.f32 %v3007, %v3071
  %v3104 = vadd.f32 %v3008, %v3072
  %v3105 = vadd.f32 %v3009, %v3073
  %v3106 = vadd.f32 %v3010, %v3074
  %v3107 = vadd.f32 %v3011, %v3075
  %v3108 = vadd.f32 %v3012, %v3076
  %v3109 = vadd.f32 %v3013, %v3077
  %v3110 = vadd.f32 %v3014, %v3078
  %v3111 = vadd.f32 %v3015, %v3079
  %v3112 = vadd.f32 %v3016, %v3080
  %v3113 = vadd.f32 %v3017, %v3081
  %v3114 = vadd.f32 %v3018, %v3082
  %v3115 = vadd.f32 %v3019, %v3083
  %v3116 = vadd.f32 %v3020, %v3084
  %v3117 = vadd.f32 %v3021, %v3085
  %v3118 = vadd.f32 %v3022, %v3086
  %v3119 = vadd.f32 %v3023, %v3087
  %v3120 = vadd.f32 %v3024, %v3088
  %v3121 = vadd.f32 %v3025, %v3089
  %v3122 = vadd.f32 %v3026, %v3090
  %v3123 = vadd.f32 %v3027, %v3091
  %v3124 = vadd.f32 %v3028, %v3092
  %v3125 = vadd.f32 %v3029, %v3093
  %v3126 = vadd.f32 %v3030, %v3094
  %v3127 = vadd.f32 %v3031, %v3095
  %v3128 = vadd.f32 %v3032, %v3096
  %v3129 = vadd.f32 %v3033, %v3097
  %v3130 = vadd.f32 %v3034, %v3098
  %v3131 = vadd.f32 %v3035, %v3099
  %v3132 = vadd.f32 %v3036, %v3100
  %v3133 = vadd.f32 %v3037, %v3101
  %v3134 = vmax.f32 %v3102, 0.0
  %v3135 = vmax.f32 %v3103, 0.0
  %v3136 = vmax.f32 %v3104, 0.0
  %v3137 = vmax.f32 %v3105, 0.0
  %v3138 = vmax.f32 %v3106, 0.0
  %v3139 = vmax.f32 %v3107, 0.0
  %v3140 = vmax.f32 %v3108, 0.0
  %v3141 = vmax.f32 %v3109, 0.0
  %v3142 = vmax.f32 %v3110, 0.0
  %v3143 = vmax.f32 %v3111, 0.0
  %v3144 = vmax.f32 %v3112, 0.0
  %v3145 = vmax.f32 %v3113, 0.0
  %v3146 = vmax.f32 %v3114, 0.0
  %v3147 = vmax.f32 %v3115, 0.0
  %v3148 = vmax.f32 %v3116, 0.0
  %v3149 = vmax.f32 %v3117, 0.0
  %v3150 = vmax.f32 %v3118, 0.0
  %v3151 = vmax.f32 %v3119, 0.0
  %v3152 = vmax.f32 %v3120, 0.0
  %v3153 = vmax.f32 %v3121, 0.0
  %v3154 = vmax.f32 %v3122, 0.0
  %v3155 = vmax.f32 %v3123, 0.0
  %v3156 = vmax.f32 %v3124, 0.0
  %v3157 = vmax.f32 %v3125, 0.0
  %v3158 = vmax.f32 %v3126, 0.0
  %v3159 = vmax.f32 %v3127, 0.0
  %v3160 = vmax.f32 %v3128, 0.0
  %v3161 = vmax.f32 %v3129, 0.0
  %v3162 = vmax.f32 %v3130, 0.0
  %v3163 = vmax.f32 %v3131, 0.0
  %v3164 = vmax.f32 %v3132, 0.0
  %v3165 = vmax.f32 %v3133, 0.0
  %v3166 = vmul.f32 %v3134, %v1498
  %v3167 = vmul.f32 %v3135, %v1499
  %v3168 = vmul.f32 %v3136, %v1500
  %v3169 = vmul.f32 %v3137, %v1501
  %v3170 = vmul.f32 %v3138, %v1498
  %v3171 = vmul.f32 %v3139, %v1499
  %v3172 = vmul.f32 %v3140, %v1500
  %v3173 = vmul.f32 %v3141, %v1501
  %v3174 = vmul.f32 %v3142, %v1498
  %v3175 = vmul.f32 %v3143, %v1499
  %v3176 = vmul.f32 %v3144, %v1500
  %v3177 = vmul.f32 %v3145, %v1501
  %v3178 = vmul.f32 %v3146, %v1498
  %v3179 = vmul.f32 %v3147, %v1499
  %v3180 = vmul.f32 %v3148, %v1500
  %v3181 = vmul.f32 %v3149, %v1501
  %v3182 = vmul.f32 %v3150, %v1498
  %v3183 = vmul.f32 %v3151, %v1499
  %v3184 = vmul.f32 %v3152, %v1500
  %v3185 = vmul.f32 %v3153, %v1501
  %v3186 = vmul.f32 %v3154, %v1498
  %v3187 = vmul.f32 %v3155, %v1499
  %v3188 = vmul.f32 %v3156, %v1500
  %v3189 = vmul.f32 %v3157, %v1501
  %v3190 = vmul.f32 %v3158, %v1498
  %v3191 = vmul.f32 %v3159, %v1499
  %v3192 = vmul.f32 %v3160, %v1500
  %v3193 = vmul.f32 %v3161, %v1501
  %v3194 = vmul.f32 %v3162, %v1498
  %v3195 = vmul.f32 %v3163, %v1499
  %v3196 = vmul.f32 %v3164, %v1500
  %v3197 = vmul.f32 %v3165, %v1501
  %v3198 = vsel %vm517, %v3166, 0.0
  %v3199 = vsel %vm517, %v3167, 0.0
  %v3200 = vadd.f32 %v3198, %v3199
  %v3201 = vsel %vm517, %v3168, 0.0
  %v3202 = vadd.f32 %v3200, %v3201
  %v3203 = vsel %vm517, %v3169, 0.0
  %v3204 = vadd.f32 %v3202, %v3203
  %v3205 = vrot.slane %v3204, 4
  %v3206 = vadd.f32 %v3204, %v3205
  %v3207 = vrot.slane %v3206, 2
  %v3208 = vadd.f32 %v3206, %v3207
  %v3209 = vrot.slane %v3208, 1
  %v3210 = vadd.f32 %v3208, %v3209
  %v3211 = vsel %vm517, %v3170, 0.0
  %v3212 = vsel %vm517, %v3171, 0.0
  %v3213 = vadd.f32 %v3211, %v3212
  %v3214 = vsel %vm517, %v3172, 0.0
  %v3215 = vadd.f32 %v3213, %v3214
  %v3216 = vsel %vm517, %v3173, 0.0
  %v3217 = vadd.f32 %v3215, %v3216
  %v3218 = vrot.slane %v3217, 4
  %v3219 = vadd.f32 %v3217, %v3218
  %v3220 = vrot.slane %v3219, 2
  %v3221 = vadd.f32 %v3219, %v3220
  %v3222 = vrot.slane %v3221, 1
  %v3223 = vadd.f32 %v3221, %v3222
  %v3224 = vsel %vm517, %v3174, 0.0
  %v3225 = vsel %vm517, %v3175, 0.0
  %v3226 = vadd.f32 %v3224, %v3225
  %v3227 = vsel %vm517, %v3176, 0.0
  %v3228 = vadd.f32 %v3226, %v3227
  %v3229 = vsel %vm517, %v3177, 0.0
  %v3230 = vadd.f32 %v3228, %v3229
  %v3231 = vrot.slane %v3230, 4
  %v3232 = vadd.f32 %v3230, %v3231
  %v3233 = vrot.slane %v3232, 2
  %v3234 = vadd.f32 %v3232, %v3233
  %v3235 = vrot.slane %v3234, 1
  %v3236 = vadd.f32 %v3234, %v3235
  %v3237 = vsel %vm517, %v3178, 0.0
  %v3238 = vsel %vm517, %v3179, 0.0
  %v3239 = vadd.f32 %v3237, %v3238
  %v3240 = vsel %vm517, %v3180, 0.0
  %v3241 = vadd.f32 %v3239, %v3240
  %v3242 = vsel %vm517, %v3181, 0.0
  %v3243 = vadd.f32 %v3241, %v3242
  %v3244 = vrot.slane %v3243, 4
  %v3245 = vadd.f32 %v3243, %v3244
  %v3246 = vrot.slane %v3245, 2
  %v3247 = vadd.f32 %v3245, %v3246
  %v3248 = vrot.slane %v3247, 1
  %v3249 = vadd.f32 %v3247, %v3248
  %v3250 = vsel %vm517, %v3182, 0.0
  %v3251 = vsel %vm517, %v3183, 0.0
  %v3252 = vadd.f32 %v3250, %v3251
  %v3253 = vsel %vm517, %v3184, 0.0
  %v3254 = vadd.f32 %v3252, %v3253
  %v3255 = vsel %vm517, %v3185, 0.0
  %v3256 = vadd.f32 %v3254, %v3255
  %v3257 = vrot.slane %v3256, 4
  %v3258 = vadd.f32 %v3256, %v3257
  %v3259 = vrot.slane %v3258, 2
  %v3260 = vadd.f32 %v3258, %v3259
  %v3261 = vrot.slane %v3260, 1
  %v3262 = vadd.f32 %v3260, %v3261
  %v3263 = vsel %vm517, %v3186, 0.0
  %v3264 = vsel %vm517, %v3187, 0.0
  %v3265 = vadd.f32 %v3263, %v3264
  %v3266 = vsel %vm517, %v3188, 0.0
  %v3267 = vadd.f32 %v3265, %v3266
  %v3268 = vsel %vm517, %v3189, 0.0
  %v3269 = vadd.f32 %v3267, %v3268
  %v3270 = vrot.slane %v3269, 4
  %v3271 = vadd.f32 %v3269, %v3270
  %v3272 = vrot.slane %v3271, 2
  %v3273 = vadd.f32 %v3271, %v3272
  %v3274 = vrot.slane %v3273, 1
  %v3275 = vadd.f32 %v3273, %v3274
  %v3276 = vsel %vm517, %v3190, 0.0
  %v3277 = vsel %vm517, %v3191, 0.0
  %v3278 = vadd.f32 %v3276, %v3277
  %v3279 = vsel %vm517, %v3192, 0.0
  %v3280 = vadd.f32 %v3278, %v3279
  %v3281 = vsel %vm517, %v3193, 0.0
  %v3282 = vadd.f32 %v3280, %v3281
  %v3283 = vrot.slane %v3282, 4
  %v3284 = vadd.f32 %v3282, %v3283
  %v3285 = vrot.slane %v3284, 2
  %v3286 = vadd.f32 %v3284, %v3285
  %v3287 = vrot.slane %v3286, 1
  %v3288 = vadd.f32 %v3286, %v3287
  %v3289 = vsel %vm517, %v3194, 0.0
  %v3290 = vsel %vm517, %v3195, 0.0
  %v3291 = vadd.f32 %v3289, %v3290
  %v3292 = vsel %vm517, %v3196, 0.0
  %v3293 = vadd.f32 %v3291, %v3292
  %v3294 = vsel %vm517, %v3197, 0.0
  %v3295 = vadd.f32 %v3293, %v3294
  %v3296 = vrot.slane %v3295, 4
  %v3297 = vadd.f32 %v3295, %v3296
  %v3298 = vrot.slane %v3297, 2
  %v3299 = vadd.f32 %v3297, %v3298
  %v3300 = vrot.slane %v3299, 1
  %v3301 = vadd.f32 %v3299, %v3300
  %v3302 = vadd.f32 %v3210, %v1508
  %v3303 = vadd.f32 %v3223, %v1508
  %v3304 = vadd.f32 %v3236, %v1508
  %v3305 = vadd.f32 %v3249, %v1508
  %v3306 = vadd.f32 %v3262, %v1508
  %v3307 = vadd.f32 %v3275, %v1508
  %v3308 = vadd.f32 %v3288, %v1508
  %v3309 = vadd.f32 %v3301, %v1508
  %v3318 = vrot.slane %v2742, 4
  %v3319 = vrot.slane %v2743, 4
  %v3320 = vrot.slane %v2744, 4
  %v3321 = vrot.slane %v2745, 4
  %v3322 = vrot.slane %v2746, 4
  %v3323 = vrot.slane %v2747, 4
  %v3324 = vrot.slane %v2748, 4
  %v3325 = vrot.slane %v2749, 4
  %v3334 = vsub.f32 %v3302, %v3318
  %v3335 = vsub.f32 %v3303, %v3319
  %v3336 = vsub.f32 %v3304, %v3320
  %v3337 = vsub.f32 %v3305, %v3321
  %v3338 = vsub.f32 %v3306, %v3322
  %v3339 = vsub.f32 %v3307, %v3323
  %v3340 = vsub.f32 %v3308, %v3324
  %v3341 = vsub.f32 %v3309, %v3325
  %v3342 = vmul.f32 %v3334, 0.25
  %v3343 = vmul.f32 %v3335, 0.25
  %v3344 = vmul.f32 %v3336, 0.25
  %v3345 = vmul.f32 %v3337, 0.25
  %v3346 = vmul.f32 %v3338, 0.25
  %v3347 = vmul.f32 %v3339, 0.25
  %v3348 = vmul.f32 %v3340, 0.25
  %v3349 = vmul.f32 %v3341, 0.25
  %v3350 = vlaneseq
  %v3351 = vshrl.u32 %v3350, 7
  %v3352 = vsub.s32 0, %v3351
  %v3353 = vrot.slane %v3342, %v3352
  %v3354 = vlaneseq
  %v3355 = vshrl.u32 %v3354, 7
  %v3356 = vsub.s32 0, %v3355
  %v3357 = vrot.slane %v3343, %v3356
  %v3358 = vlaneseq
  %v3359 = vshrl.u32 %v3358, 7
  %v3360 = vsub.s32 0, %v3359
  %v3361 = vrot.slane %v3344, %v3360
  %v3362 = vlaneseq
  %v3363 = vshrl.u32 %v3362, 7
  %v3364 = vsub.s32 0, %v3363
  %v3365 = vrot.slane %v3345, %v3364
  %v3366 = vlaneseq
  %v3367 = vshrl.u32 %v3366, 7
  %v3368 = vsub.s32 0, %v3367
  %v3369 = vrot.slane %v3346, %v3368
  %v3370 = vlaneseq
  %v3371 = vshrl.u32 %v3370, 7
  %v3372 = vsub.s32 0, %v3371
  %v3373 = vrot.slane %v3347, %v3372
  %v3374 = vlaneseq
  %v3375 = vshrl.u32 %v3374, 7
  %v3376 = vsub.s32 0, %v3375
  %v3377 = vrot.slane %v3348, %v3376
  %v3378 = vlaneseq
  %v3379 = vshrl.u32 %v3378, 7
  %v3380 = vsub.s32 0, %v3379
  %v3381 = vrot.slane %v3349, %v3380
  %v3382 = vmul.f32 %v3353, %v3134
  %v3383 = vmul.f32 %v3353, %v3135
  %v3384 = vmul.f32 %v3353, %v3136
  %v3385 = vmul.f32 %v3353, %v3137
  %v3386 = vmul.f32 %v3357, %v3138
  %v3387 = vmul.f32 %v3357, %v3139
  %v3388 = vmul.f32 %v3357, %v3140
  %v3389 = vmul.f32 %v3357, %v3141
  %v3390 = vmul.f32 %v3361, %v3142
  %v3391 = vmul.f32 %v3361, %v3143
  %v3392 = vmul.f32 %v3361, %v3144
  %v3393 = vmul.f32 %v3361, %v3145
  %v3394 = vmul.f32 %v3365, %v3146
  %v3395 = vmul.f32 %v3365, %v3147
  %v3396 = vmul.f32 %v3365, %v3148
  %v3397 = vmul.f32 %v3365, %v3149
  %v3398 = vmul.f32 %v3369, %v3150
  %v3399 = vmul.f32 %v3369, %v3151
  %v3400 = vmul.f32 %v3369, %v3152
  %v3401 = vmul.f32 %v3369, %v3153
  %v3402 = vmul.f32 %v3373, %v3154
  %v3403 = vmul.f32 %v3373, %v3155
  %v3404 = vmul.f32 %v3373, %v3156
  %v3405 = vmul.f32 %v3373, %v3157
  %v3406 = vmul.f32 %v3377, %v3158
  %v3407 = vmul.f32 %v3377, %v3159
  %v3408 = vmul.f32 %v3377, %v3160
  %v3409 = vmul.f32 %v3377, %v3161
  %v3410 = vmul.f32 %v3381, %v3162
  %v3411 = vmul.f32 %v3381, %v3163
  %v3412 = vmul.f32 %v3381, %v3164
  %v3413 = vmul.f32 %v3381, %v3165
  %v3414 = vsel %vm517, %v3382, 0.0
  %v3415 = vsel %vm517, %v3386, 0.0
  %v3416 = vadd.f32 %v3414, %v3415
  %v3417 = vsel %vm517, %v3390, 0.0
  %v3418 = vadd.f32 %v3416, %v3417
  %v3419 = vsel %vm517, %v3394, 0.0
  %v3420 = vadd.f32 %v3418, %v3419
  %v3421 = vsel %vm517, %v3398, 0.0
  %v3422 = vadd.f32 %v3420, %v3421
  %v3423 = vsel %vm517, %v3402, 0.0
  %v3424 = vadd.f32 %v3422, %v3423
  %v3425 = vsel %vm517, %v3406, 0.0
  %v3426 = vadd.f32 %v3424, %v3425
  %v3427 = vsel %vm517, %v3410, 0.0
  %v3428 = vadd.f32 %v3426, %v3427
  %v3429 = vsel %vm517, %v3383, 0.0
  %v3430 = vsel %vm517, %v3387, 0.0
  %v3431 = vadd.f32 %v3429, %v3430
  %v3432 = vsel %vm517, %v3391, 0.0
  %v3433 = vadd.f32 %v3431, %v3432
  %v3434 = vsel %vm517, %v3395, 0.0
  %v3435 = vadd.f32 %v3433, %v3434
  %v3436 = vsel %vm517, %v3399, 0.0
  %v3437 = vadd.f32 %v3435, %v3436
  %v3438 = vsel %vm517, %v3403, 0.0
  %v3439 = vadd.f32 %v3437, %v3438
  %v3440 = vsel %vm517, %v3407, 0.0
  %v3441 = vadd.f32 %v3439, %v3440
  %v3442 = vsel %vm517, %v3411, 0.0
  %v3443 = vadd.f32 %v3441, %v3442
  %v3444 = vsel %vm517, %v3384, 0.0
  %v3445 = vsel %vm517, %v3388, 0.0
  %v3446 = vadd.f32 %v3444, %v3445
  %v3447 = vsel %vm517, %v3392, 0.0
  %v3448 = vadd.f32 %v3446, %v3447
  %v3449 = vsel %vm517, %v3396, 0.0
  %v3450 = vadd.f32 %v3448, %v3449
  %v3451 = vsel %vm517, %v3400, 0.0
  %v3452 = vadd.f32 %v3450, %v3451
  %v3453 = vsel %vm517, %v3404, 0.0
  %v3454 = vadd.f32 %v3452, %v3453
  %v3455 = vsel %vm517, %v3408, 0.0
  %v3456 = vadd.f32 %v3454, %v3455
  %v3457 = vsel %vm517, %v3412, 0.0
  %v3458 = vadd.f32 %v3456, %v3457
  %v3459 = vsel %vm517, %v3385, 0.0
  %v3460 = vsel %vm517, %v3389, 0.0
  %v3461 = vadd.f32 %v3459, %v3460
  %v3462 = vsel %vm517, %v3393, 0.0
  %v3463 = vadd.f32 %v3461, %v3462
  %v3464 = vsel %vm517, %v3397, 0.0
  %v3465 = vadd.f32 %v3463, %v3464
  %v3466 = vsel %vm517, %v3401, 0.0
  %v3467 = vadd.f32 %v3465, %v3466
  %v3468 = vsel %vm517, %v3405, 0.0
  %v3469 = vadd.f32 %v3467, %v3468
  %v3470 = vsel %vm517, %v3409, 0.0
  %v3471 = vadd.f32 %v3469, %v3470
  %v3472 = vsel %vm517, %v3413, 0.0
  %v3473 = vadd.f32 %v3471, %v3472
  %v3474 = vsel %vm794, %v3342, 0.0
  %v3475 = vsel %vm794, %v3343, 0.0
  %v3476 = vadd.f32 %v3474, %v3475
  %v3477 = vsel %vm794, %v3344, 0.0
  %v3478 = vadd.f32 %v3476, %v3477
  %v3479 = vsel %vm794, %v3345, 0.0
  %v3480 = vadd.f32 %v3478, %v3479
  %v3481 = vsel %vm794, %v3346, 0.0
  %v3482 = vadd.f32 %v3480, %v3481
  %v3483 = vsel %vm794, %v3347, 0.0
  %v3484 = vadd.f32 %v3482, %v3483
  %v3485 = vsel %vm794, %v3348, 0.0
  %v3486 = vadd.f32 %v3484, %v3485
  %v3487 = vsel %vm794, %v3349, 0.0
  %v3488 = vadd.f32 %v3486, %v3487
  %vm3489 = vcmp.gt.f32.partialorder %v3134, 0.0
  %vm3490 = vcmp.gt.f32.partialorder %v3135, 0.0
  %vm3491 = vcmp.gt.f32.partialorder %v3136, 0.0
  %vm3492 = vcmp.gt.f32.partialorder %v3137, 0.0
  %vm3493 = vcmp.gt.f32.partialorder %v3138, 0.0
  %vm3494 = vcmp.gt.f32.partialorder %v3139, 0.0
  %vm3495 = vcmp.gt.f32.partialorder %v3140, 0.0
  %vm3496 = vcmp.gt.f32.partialorder %v3141, 0.0
  %vm3497 = vcmp.gt.f32.partialorder %v3142, 0.0
  %vm3498 = vcmp.gt.f32.partialorder %v3143, 0.0
  %vm3499 = vcmp.gt.f32.partialorder %v3144, 0.0
  %vm3500 = vcmp.gt.f32.partialorder %v3145, 0.0
  %vm3501 = vcmp.gt.f32.partialorder %v3146, 0.0
  %vm3502 = vcmp.gt.f32.partialorder %v3147, 0.0
  %vm3503 = vcmp.gt.f32.partialorder %v3148, 0.0
  %vm3504 = vcmp.gt.f32.partialorder %v3149, 0.0
  %vm3505 = vcmp.gt.f32.partialorder %v3150, 0.0
  %vm3506 = vcmp.gt.f32.partialorder %v3151, 0.0
  %vm3507 = vcmp.gt.f32.partialorder %v3152, 0.0
  %vm3508 = vcmp.gt.f32.partialorder %v3153, 0.0
  %vm3509 = vcmp.gt.f32.partialorder %v3154, 0.0
  %vm3510 = vcmp.gt.f32.partialorder %v3155, 0.0
  %vm3511 = vcmp.gt.f32.partialorder %v3156, 0.0
  %vm3512 = vcmp.gt.f32.partialorder %v3157, 0.0
  %vm3513 = vcmp.gt.f32.partialorder %v3158, 0.0
  %vm3514 = vcmp.gt.f32.partialorder %v3159, 0.0
  %vm3515 = vcmp.gt.f32.partialorder %v3160, 0.0
  %vm3516 = vcmp.gt.f32.partialorder %v3161, 0.0
  %vm3517 = vcmp.gt.f32.partialorder %v3162, 0.0
  %vm3518 = vcmp.gt.f32.partialorder %v3163, 0.0
  %vm3519 = vcmp.gt.f32.partialorder %v3164, 0.0
  %vm3520 = vcmp.gt.f32.partialorder %v3165, 0.0
  %v3521 = vmul.f32 %v3353, %v1498
  %v3522 = vmul.f32 %v3353, %v1499
  %v3523 = vmul.f32 %v3353, %v1500
  %v3524 = vmul.f32 %v3353, %v1501
  %v3525 = vmul.f32 %v3357, %v1498
  %v3526 = vmul.f32 %v3357, %v1499
  %v3527 = vmul.f32 %v3357, %v1500
  %v3528 = vmul.f32 %v3357, %v1501
  %v3529 = vmul.f32 %v3361, %v1498
  %v3530 = vmul.f32 %v3361, %v1499
  %v3531 = vmul.f32 %v3361, %v1500
  %v3532 = vmul.f32 %v3361, %v1501
  %v3533 = vmul.f32 %v3365, %v1498
  %v3534 = vmul.f32 %v3365, %v1499
  %v3535 = vmul.f32 %v3365, %v1500
  %v3536 = vmul.f32 %v3365, %v1501
  %v3537 = vmul.f32 %v3369, %v1498
  %v3538 = vmul.f32 %v3369, %v1499
  %v3539 = vmul.f32 %v3369, %v1500
  %v3540 = vmul.f32 %v3369, %v1501
  %v3541 = vmul.f32 %v3373, %v1498
  %v3542 = vmul.f32 %v3373, %v1499
  %v3543 = vmul.f32 %v3373, %v1500
  %v3544 = vmul.f32 %v3373, %v1501
  %v3545 = vmul.f32 %v3377, %v1498
  %v3546 = vmul.f32 %v3377, %v1499
  %v3547 = vmul.f32 %v3377, %v1500
  %v3548 = vmul.f32 %v3377, %v1501
  %v3549 = vmul.f32 %v3381, %v1498
  %v3550 = vmul.f32 %v3381, %v1499
  %v3551 = vmul.f32 %v3381, %v1500
  %v3552 = vmul.f32 %v3381, %v1501
  %v3553 = vsel %vm3489, %v3521, 0.0
  %v3554 = vsel %vm3490, %v3522, 0.0
  %v3555 = vsel %vm3491, %v3523, 0.0
  %v3556 = vsel %vm3492, %v3524, 0.0
  %v3557 = vsel %vm3493, %v3525, 0.0
  %v3558 = vsel %vm3494, %v3526, 0.0
  %v3559 = vsel %vm3495, %v3527, 0.0
  %v3560 = vsel %vm3496, %v3528, 0.0
  %v3561 = vsel %vm3497, %v3529, 0.0
  %v3562 = vsel %vm3498, %v3530, 0.0
  %v3563 = vsel %vm3499, %v3531, 0.0
  %v3564 = vsel %vm3500, %v3532, 0.0
  %v3565 = vsel %vm3501, %v3533, 0.0
  %v3566 = vsel %vm3502, %v3534, 0.0
  %v3567 = vsel %vm3503, %v3535, 0.0
  %v3568 = vsel %vm3504, %v3536, 0.0
  %v3569 = vsel %vm3505, %v3537, 0.0
  %v3570 = vsel %vm3506, %v3538, 0.0
  %v3571 = vsel %vm3507, %v3539, 0.0
  %v3572 = vsel %vm3508, %v3540, 0.0
  %v3573 = vsel %vm3509, %v3541, 0.0
  %v3574 = vsel %vm3510, %v3542, 0.0
  %v3575 = vsel %vm3511, %v3543, 0.0
  %v3576 = vsel %vm3512, %v3544, 0.0
  %v3577 = vsel %vm3513, %v3545, 0.0
  %v3578 = vsel %vm3514, %v3546, 0.0
  %v3579 = vsel %vm3515, %v3547, 0.0
  %v3580 = vsel %vm3516, %v3548, 0.0
  %v3581 = vsel %vm3517, %v3549, 0.0
  %v3582 = vsel %vm3518, %v3550, 0.0
  %v3583 = vsel %vm3519, %v3551, 0.0
  %v3584 = vsel %vm3520, %v3552, 0.0
  %v3585 = vsel %vm517, %v3553, 0.0
  %v3586 = vsel %vm517, %v3557, 0.0
  %v3587 = vadd.f32 %v3585, %v3586
  %v3588 = vsel %vm517, %v3561, 0.0
  %v3589 = vadd.f32 %v3587, %v3588
  %v3590 = vsel %vm517, %v3565, 0.0
  %v3591 = vadd.f32 %v3589, %v3590
  %v3592 = vsel %vm517, %v3569, 0.0
  %v3593 = vadd.f32 %v3591, %v3592
  %v3594 = vsel %vm517, %v3573, 0.0
  %v3595 = vadd.f32 %v3593, %v3594
  %v3596 = vsel %vm517, %v3577, 0.0
  %v3597 = vadd.f32 %v3595, %v3596
  %v3598 = vsel %vm517, %v3581, 0.0
  %v3599 = vadd.f32 %v3597, %v3598
  %v3600 = vsel %vm517, %v3554, 0.0
  %v3601 = vsel %vm517, %v3558, 0.0
  %v3602 = vadd.f32 %v3600, %v3601
  %v3603 = vsel %vm517, %v3562, 0.0
  %v3604 = vadd.f32 %v3602, %v3603
  %v3605 = vsel %vm517, %v3566, 0.0
  %v3606 = vadd.f32 %v3604, %v3605
  %v3607 = vsel %vm517, %v3570, 0.0
  %v3608 = vadd.f32 %v3606, %v3607
  %v3609 = vsel %vm517, %v3574, 0.0
  %v3610 = vadd.f32 %v3608, %v3609
  %v3611 = vsel %vm517, %v3578, 0.0
  %v3612 = vadd.f32 %v3610, %v3611
  %v3613 = vsel %vm517, %v3582, 0.0
  %v3614 = vadd.f32 %v3612, %v3613
  %v3615 = vsel %vm517, %v3555, 0.0
  %v3616 = vsel %vm517, %v3559, 0.0
  %v3617 = vadd.f32 %v3615, %v3616
  %v3618 = vsel %vm517, %v3563, 0.0
  %v3619 = vadd.f32 %v3617, %v3618
  %v3620 = vsel %vm517, %v3567, 0.0
  %v3621 = vadd.f32 %v3619, %v3620
  %v3622 = vsel %vm517, %v3571, 0.0
  %v3623 = vadd.f32 %v3621, %v3622
  %v3624 = vsel %vm517, %v3575, 0.0
  %v3625 = vadd.f32 %v3623, %v3624
  %v3626 = vsel %vm517, %v3579, 0.0
  %v3627 = vadd.f32 %v3625, %v3626
  %v3628 = vsel %vm517, %v3583, 0.0
  %v3629 = vadd.f32 %v3627, %v3628
  %v3630 = vsel %vm517, %v3556, 0.0
  %v3631 = vsel %vm517, %v3560, 0.0
  %v3632 = vadd.f32 %v3630, %v3631
  %v3633 = vsel %vm517, %v3564, 0.0
  %v3634 = vadd.f32 %v3632, %v3633
  %v3635 = vsel %vm517, %v3568, 0.0
  %v3636 = vadd.f32 %v3634, %v3635
  %v3637 = vsel %vm517, %v3572, 0.0
  %v3638 = vadd.f32 %v3636, %v3637
  %v3639 = vsel %vm517, %v3576, 0.0
  %v3640 = vadd.f32 %v3638, %v3639
  %v3641 = vsel %vm517, %v3580, 0.0
  %v3642 = vadd.f32 %v3640, %v3641
  %v3643 = vsel %vm517, %v3584, 0.0
  %v3644 = vadd.f32 %v3642, %v3643
  %v3645 = vmul.f32 %v2753, %v3553
  %v3646 = vmul.f32 %v2753, %v3554
  %v3647 = vmul.f32 %v2753, %v3555
  %v3648 = vmul.f32 %v2753, %v3556
  %v3649 = vmul.f32 %v2757, %v3557
  %v3650 = vmul.f32 %v2757, %v3558
  %v3651 = vmul.f32 %v2757, %v3559
  %v3652 = vmul.f32 %v2757, %v3560
  %v3653 = vmul.f32 %v2761, %v3561
  %v3654 = vmul.f32 %v2761, %v3562
  %v3655 = vmul.f32 %v2761, %v3563
  %v3656 = vmul.f32 %v2761, %v3564
  %v3657 = vmul.f32 %v2765, %v3565
  %v3658 = vmul.f32 %v2765, %v3566
  %v3659 = vmul.f32 %v2765, %v3567
  %v3660 = vmul.f32 %v2765, %v3568
  %v3661 = vmul.f32 %v2769, %v3569
  %v3662 = vmul.f32 %v2769, %v3570
  %v3663 = vmul.f32 %v2769, %v3571
  %v3664 = vmul.f32 %v2769, %v3572
  %v3665 = vmul.f32 %v2773, %v3573
  %v3666 = vmul.f32 %v2773, %v3574
  %v3667 = vmul.f32 %v2773, %v3575
  %v3668 = vmul.f32 %v2773, %v3576
  %v3669 = vmul.f32 %v2777, %v3577
  %v3670 = vmul.f32 %v2777, %v3578
  %v3671 = vmul.f32 %v2777, %v3579
  %v3672 = vmul.f32 %v2777, %v3580
  %v3673 = vmul.f32 %v2781, %v3581
  %v3674 = vmul.f32 %v2781, %v3582
  %v3675 = vmul.f32 %v2781, %v3583
  %v3676 = vmul.f32 %v2781, %v3584
  %v3677 = vsel %vm517, %v3645, 0.0
  %v3678 = vsel %vm517, %v3649, 0.0
  %v3679 = vadd.f32 %v3677, %v3678
  %v3680 = vsel %vm517, %v3653, 0.0
  %v3681 = vadd.f32 %v3679, %v3680
  %v3682 = vsel %vm517, %v3657, 0.0
  %v3683 = vadd.f32 %v3681, %v3682
  %v3684 = vsel %vm517, %v3661, 0.0
  %v3685 = vadd.f32 %v3683, %v3684
  %v3686 = vsel %vm517, %v3665, 0.0
  %v3687 = vadd.f32 %v3685, %v3686
  %v3688 = vsel %vm517, %v3669, 0.0
  %v3689 = vadd.f32 %v3687, %v3688
  %v3690 = vsel %vm517, %v3673, 0.0
  %v3691 = vadd.f32 %v3689, %v3690
  %v3692 = vsel %vm517, %v3646, 0.0
  %v3693 = vsel %vm517, %v3650, 0.0
  %v3694 = vadd.f32 %v3692, %v3693
  %v3695 = vsel %vm517, %v3654, 0.0
  %v3696 = vadd.f32 %v3694, %v3695
  %v3697 = vsel %vm517, %v3658, 0.0
  %v3698 = vadd.f32 %v3696, %v3697
  %v3699 = vsel %vm517, %v3662, 0.0
  %v3700 = vadd.f32 %v3698, %v3699
  %v3701 = vsel %vm517, %v3666, 0.0
  %v3702 = vadd.f32 %v3700, %v3701
  %v3703 = vsel %vm517, %v3670, 0.0
  %v3704 = vadd.f32 %v3702, %v3703
  %v3705 = vsel %vm517, %v3674, 0.0
  %v3706 = vadd.f32 %v3704, %v3705
  %v3707 = vsel %vm517, %v3647, 0.0
  %v3708 = vsel %vm517, %v3651, 0.0
  %v3709 = vadd.f32 %v3707, %v3708
  %v3710 = vsel %vm517, %v3655, 0.0
  %v3711 = vadd.f32 %v3709, %v3710
  %v3712 = vsel %vm517, %v3659, 0.0
  %v3713 = vadd.f32 %v3711, %v3712
  %v3714 = vsel %vm517, %v3663, 0.0
  %v3715 = vadd.f32 %v3713, %v3714
  %v3716 = vsel %vm517, %v3667, 0.0
  %v3717 = vadd.f32 %v3715, %v3716
  %v3718 = vsel %vm517, %v3671, 0.0
  %v3719 = vadd.f32 %v3717, %v3718
  %v3720 = vsel %vm517, %v3675, 0.0
  %v3721 = vadd.f32 %v3719, %v3720
  %v3722 = vsel %vm517, %v3648, 0.0
  %v3723 = vsel %vm517, %v3652, 0.0
  %v3724 = vadd.f32 %v3722, %v3723
  %v3725 = vsel %vm517, %v3656, 0.0
  %v3726 = vadd.f32 %v3724, %v3725
  %v3727 = vsel %vm517, %v3660, 0.0
  %v3728 = vadd.f32 %v3726, %v3727
  %v3729 = vsel %vm517, %v3664, 0.0
  %v3730 = vadd.f32 %v3728, %v3729
  %v3731 = vsel %vm517, %v3668, 0.0
  %v3732 = vadd.f32 %v3730, %v3731
  %v3733 = vsel %vm517, %v3672, 0.0
  %v3734 = vadd.f32 %v3732, %v3733
  %v3735 = vsel %vm517, %v3676, 0.0
  %v3736 = vadd.f32 %v3734, %v3735
  %v3737 = vmax.f32 %v3691, -10.0
  %v3738 = vmax.f32 %v3706, -10.0
  %v3739 = vmax.f32 %v3721, -10.0
  %v3740 = vmax.f32 %v3736, -10.0
  %v3741 = vmin.f32 %v3737, 10.0
  %v3742 = vmin.f32 %v3738, 10.0
  %v3743 = vmin.f32 %v3739, 10.0
  %v3744 = vmin.f32 %v3740, 10.0
  %v3745 = vand.u32 2147483647, %v3691
  %v3746 = vand.u32 2147483647, %v3706
  %v3747 = vand.u32 2147483647, %v3721
  %v3748 = vand.u32 2147483647, %v3736
  %vm3749 = vcmp.eq.f32.partialorder %v3745, 10.0
  %vm3750 = vcmp.eq.f32.partialorder %v3746, 10.0
  %vm3751 = vcmp.eq.f32.partialorder %v3747, 10.0
  %vm3752 = vcmp.eq.f32.partialorder %v3748, 10.0
  %v3753 = vsel %vm3749, 0.0, %v3741
  %v3754 = vsel %vm3750, 0.0, %v3742
  %v3755 = vsel %vm3751, 0.0, %v3743
  %v3756 = vsel %vm3752, 0.0, %v3744
  %v3757 = vmul.f32 %v3753, 0.01
  %v3758 = vmul.f32 %v3754, 0.01
  %v3759 = vmul.f32 %v3755, 0.01
  %v3760 = vmul.f32 %v3756, 0.01
  %v3761 = vsub.f32 %v1082, %v3757
  %v3762 = vsub.f32 %v1083, %v3758
  %v3763 = vsub.f32 %v1084, %v3759
  %v3764 = vsub.f32 %v1085, %v3760
  %v3765 = vmul.f32 %v2849, %v3553
  %v3766 = vmul.f32 %v2849, %v3554
  %v3767 = vmul.f32 %v2849, %v3555
  %v3768 = vmul.f32 %v2849, %v3556
  %v3769 = vmul.f32 %v2853, %v3557
  %v3770 = vmul.f32 %v2853, %v3558
  %v3771 = vmul.f32 %v2853, %v3559
  %v3772 = vmul.f32 %v2853, %v3560
  %v3773 = vmul.f32 %v2857, %v3561
  %v3774 = vmul.f32 %v2857, %v3562
  %v3775 = vmul.f32 %v2857, %v3563
  %v3776 = vmul.f32 %v2857, %v3564
  %v3777 = vmul.f32 %v2861, %v3565
  %v3778 = vmul.f32 %v2861, %v3566
  %v3779 = vmul.f32 %v2861, %v3567
  %v3780 = vmul.f32 %v2861, %v3568
  %v3781 = vmul.f32 %v2865, %v3569
  %v3782 = vmul.f32 %v2865, %v3570
  %v3783 = vmul.f32 %v2865, %v3571
  %v3784 = vmul.f32 %v2865, %v3572
  %v3785 = vmul.f32 %v2869, %v3573
  %v3786 = vmul.f32 %v2869, %v3574
  %v3787 = vmul.f32 %v2869, %v3575
  %v3788 = vmul.f32 %v2869, %v3576
  %v3789 = vmul.f32 %v2873, %v3577
  %v3790 = vmul.f32 %v2873, %v3578
  %v3791 = vmul.f32 %v2873, %v3579
  %v3792 = vmul.f32 %v2873, %v3580
  %v3793 = vmul.f32 %v2877, %v3581
  %v3794 = vmul.f32 %v2877, %v3582
  %v3795 = vmul.f32 %v2877, %v3583
  %v3796 = vmul.f32 %v2877, %v3584
  %v3797 = vsel %vm517, %v3765, 0.0
  %v3798 = vsel %vm517, %v3769, 0.0
  %v3799 = vadd.f32 %v3797, %v3798
  %v3800 = vsel %vm517, %v3773, 0.0
  %v3801 = vadd.f32 %v3799, %v3800
  %v3802 = vsel %vm517, %v3777, 0.0
  %v3803 = vadd.f32 %v3801, %v3802
  %v3804 = vsel %vm517, %v3781, 0.0
  %v3805 = vadd.f32 %v3803, %v3804
  %v3806 = vsel %vm517, %v3785, 0.0
  %v3807 = vadd.f32 %v3805, %v3806
  %v3808 = vsel %vm517, %v3789, 0.0
  %v3809 = vadd.f32 %v3807, %v3808
  %v3810 = vsel %vm517, %v3793, 0.0
  %v3811 = vadd.f32 %v3809, %v3810
  %v3812 = vsel %vm517, %v3766, 0.0
  %v3813 = vsel %vm517, %v3770, 0.0
  %v3814 = vadd.f32 %v3812, %v3813
  %v3815 = vsel %vm517, %v3774, 0.0
  %v3816 = vadd.f32 %v3814, %v3815
  %v3817 = vsel %vm517, %v3778, 0.0
  %v3818 = vadd.f32 %v3816, %v3817
  %v3819 = vsel %vm517, %v3782, 0.0
  %v3820 = vadd.f32 %v3818, %v3819
  %v3821 = vsel %vm517, %v3786, 0.0
  %v3822 = vadd.f32 %v3820, %v3821
  %v3823 = vsel %vm517, %v3790, 0.0
  %v3824 = vadd.f32 %v3822, %v3823
  %v3825 = vsel %vm517, %v3794, 0.0
  %v3826 = vadd.f32 %v3824, %v3825
  %v3827 = vsel %vm517, %v3767, 0.0
  %v3828 = vsel %vm517, %v3771, 0.0
  %v3829 = vadd.f32 %v3827, %v3828
  %v3830 = vsel %vm517, %v3775, 0.0
  %v3831 = vadd.f32 %v3829, %v3830
  %v3832 = vsel %vm517, %v3779, 0.0
  %v3833 = vadd.f32 %v3831, %v3832
  %v3834 = vsel %vm517, %v3783, 0.0
  %v3835 = vadd.f32 %v3833, %v3834
  %v3836 = vsel %vm517, %v3787, 0.0
  %v3837 = vadd.f32 %v3835, %v3836
  %v3838 = vsel %vm517, %v3791, 0.0
  %v3839 = vadd.f32 %v3837, %v3838
  %v3840 = vsel %vm517, %v3795, 0.0
  %v3841 = vadd.f32 %v3839, %v3840
  %v3842 = vsel %vm517, %v3768, 0.0
  %v3843 = vsel %vm517, %v3772, 0.0
  %v3844 = vadd.f32 %v3842, %v3843
  %v3845 = vsel %vm517, %v3776, 0.0
  %v3846 = vadd.f32 %v3844, %v3845
  %v3847 = vsel %vm517, %v3780, 0.0
  %v3848 = vadd.f32 %v3846, %v3847
  %v3849 = vsel %vm517, %v3784, 0.0
  %v3850 = vadd.f32 %v3848, %v3849
  %v3851 = vsel %vm517, %v3788, 0.0
  %v3852 = vadd.f32 %v3850, %v3851
  %v3853 = vsel %vm517, %v3792, 0.0
  %v3854 = vadd.f32 %v3852, %v3853
  %v3855 = vsel %vm517, %v3796, 0.0
  %v3856 = vadd.f32 %v3854, %v3855
  %v3857 = vmax.f32 %v3811, -10.0
  %v3858 = vmax.f32 %v3826, -10.0
  %v3859 = vmax.f32 %v3841, -10.0
  %v3860 = vmax.f32 %v3856, -10.0
  %v3861 = vmin.f32 %v3857, 10.0
  %v3862 = vmin.f32 %v3858, 10.0
  %v3863 = vmin.f32 %v3859, 10.0
  %v3864 = vmin.f32 %v3860, 10.0
  %v3865 = vand.u32 2147483647, %v3811
  %v3866 = vand.u32 2147483647, %v3826
  %v3867 = vand.u32 2147483647, %v3841
  %v3868 = vand.u32 2147483647, %v3856
  %vm3869 = vcmp.eq.f32.partialorder %v3865, 10.0
  %vm3870 = vcmp.eq.f32.partialorder %v3866, 10.0
  %vm3871 = vcmp.eq.f32.partialorder %v3867, 10.0
  %vm3872 = vcmp.eq.f32.partialorder %v3868, 10.0
  %v3873 = vsel %vm3869, 0.0, %v3861
  %v3874 = vsel %vm3870, 0.0, %v3862
  %v3875 = vsel %vm3871, 0.0, %v3863
  %v3876 = vsel %vm3872, 0.0, %v3864
  %v3877 = vmul.f32 %v3873, 0.01
  %v3878 = vmul.f32 %v3874, 0.01
  %v3879 = vmul.f32 %v3875, 0.01
  %v3880 = vmul.f32 %v3876, 0.01
  %v3881 = vsub.f32 %v1202, %v3877
  %v3882 = vsub.f32 %v1203, %v3878
  %v3883 = vsub.f32 %v1204, %v3879
  %v3884 = vsub.f32 %v1205, %v3880
  %v3885 = vmul.f32 %v2945, %v3553
  %v3886 = vmul.f32 %v2945, %v3554
  %v3887 = vmul.f32 %v2945, %v3555
  %v3888 = vmul.f32 %v2945, %v3556
  %v3889 = vmul.f32 %v2949, %v3557
  %v3890 = vmul.f32 %v2949, %v3558
  %v3891 = vmul.f32 %v2949, %v3559
  %v3892 = vmul.f32 %v2949, %v3560
  %v3893 = vmul.f32 %v2953, %v3561
  %v3894 = vmul.f32 %v2953, %v3562
  %v3895 = vmul.f32 %v2953, %v3563
  %v3896 = vmul.f32 %v2953, %v3564
  %v3897 = vmul.f32 %v2957, %v3565
  %v3898 = vmul.f32 %v2957, %v3566
  %v3899 = vmul.f32 %v2957, %v3567
  %v3900 = vmul.f32 %v2957, %v3568
  %v3901 = vmul.f32 %v2961, %v3569
  %v3902 = vmul.f32 %v2961, %v3570
  %v3903 = vmul.f32 %v2961, %v3571
  %v3904 = vmul.f32 %v2961, %v3572
  %v3905 = vmul.f32 %v2965, %v3573
  %v3906 = vmul.f32 %v2965, %v3574
  %v3907 = vmul.f32 %v2965, %v3575
  %v3908 = vmul.f32 %v2965, %v3576
  %v3909 = vmul.f32 %v2969, %v3577
  %v3910 = vmul.f32 %v2969, %v3578
  %v3911 = vmul.f32 %v2969, %v3579
  %v3912 = vmul.f32 %v2969, %v3580
  %v3913 = vmul.f32 %v2973, %v3581
  %v3914 = vmul.f32 %v2973, %v3582
  %v3915 = vmul.f32 %v2973, %v3583
  %v3916 = vmul.f32 %v2973, %v3584
  %v3917 = vsel %vm517, %v3885, 0.0
  %v3918 = vsel %vm517, %v3889, 0.0
  %v3919 = vadd.f32 %v3917, %v3918
  %v3920 = vsel %vm517, %v3893, 0.0
  %v3921 = vadd.f32 %v3919, %v3920
  %v3922 = vsel %vm517, %v3897, 0.0
  %v3923 = vadd.f32 %v3921, %v3922
  %v3924 = vsel %vm517, %v3901, 0.0
  %v3925 = vadd.f32 %v3923, %v3924
  %v3926 = vsel %vm517, %v3905, 0.0
  %v3927 = vadd.f32 %v3925, %v3926
  %v3928 = vsel %vm517, %v3909, 0.0
  %v3929 = vadd.f32 %v3927, %v3928
  %v3930 = vsel %vm517, %v3913, 0.0
  %v3931 = vadd.f32 %v3929, %v3930
  %v3932 = vsel %vm517, %v3886, 0.0
  %v3933 = vsel %vm517, %v3890, 0.0
  %v3934 = vadd.f32 %v3932, %v3933
  %v3935 = vsel %vm517, %v3894, 0.0
  %v3936 = vadd.f32 %v3934, %v3935
  %v3937 = vsel %vm517, %v3898, 0.0
  %v3938 = vadd.f32 %v3936, %v3937
  %v3939 = vsel %vm517, %v3902, 0.0
  %v3940 = vadd.f32 %v3938, %v3939
  %v3941 = vsel %vm517, %v3906, 0.0
  %v3942 = vadd.f32 %v3940, %v3941
  %v3943 = vsel %vm517, %v3910, 0.0
  %v3944 = vadd.f32 %v3942, %v3943
  %v3945 = vsel %vm517, %v3914, 0.0
  %v3946 = vadd.f32 %v3944, %v3945
  %v3947 = vsel %vm517, %v3887, 0.0
  %v3948 = vsel %vm517, %v3891, 0.0
  %v3949 = vadd.f32 %v3947, %v3948
  %v3950 = vsel %vm517, %v3895, 0.0
  %v3951 = vadd.f32 %v3949, %v3950
  %v3952 = vsel %vm517, %v3899, 0.0
  %v3953 = vadd.f32 %v3951, %v3952
  %v3954 = vsel %vm517, %v3903, 0.0
  %v3955 = vadd.f32 %v3953, %v3954
  %v3956 = vsel %vm517, %v3907, 0.0
  %v3957 = vadd.f32 %v3955, %v3956
  %v3958 = vsel %vm517, %v3911, 0.0
  %v3959 = vadd.f32 %v3957, %v3958
  %v3960 = vsel %vm517, %v3915, 0.0
  %v3961 = vadd.f32 %v3959, %v3960
  %v3962 = vsel %vm517, %v3888, 0.0
  %v3963 = vsel %vm517, %v3892, 0.0
  %v3964 = vadd.f32 %v3962, %v3963
  %v3965 = vsel %vm517, %v3896, 0.0
  %v3966 = vadd.f32 %v3964, %v3965
  %v3967 = vsel %vm517, %v3900, 0.0
  %v3968 = vadd.f32 %v3966, %v3967
  %v3969 = vsel %vm517, %v3904, 0.0
  %v3970 = vadd.f32 %v3968, %v3969
  %v3971 = vsel %vm517, %v3908, 0.0
  %v3972 = vadd.f32 %v3970, %v3971
  %v3973 = vsel %vm517, %v3912, 0.0
  %v3974 = vadd.f32 %v3972, %v3973
  %v3975 = vsel %vm517, %v3916, 0.0
  %v3976 = vadd.f32 %v3974, %v3975
  %v3977 = vmax.f32 %v3931, -10.0
  %v3978 = vmax.f32 %v3946, -10.0
  %v3979 = vmax.f32 %v3961, -10.0
  %v3980 = vmax.f32 %v3976, -10.0
  %v3981 = vmin.f32 %v3977, 10.0
  %v3982 = vmin.f32 %v3978, 10.0
  %v3983 = vmin.f32 %v3979, 10.0
  %v3984 = vmin.f32 %v3980, 10.0
  %v3985 = vand.u32 2147483647, %v3931
  %v3986 = vand.u32 2147483647, %v3946
  %v3987 = vand.u32 2147483647, %v3961
  %v3988 = vand.u32 2147483647, %v3976
  %vm3989 = vcmp.eq.f32.partialorder %v3985, 10.0
  %vm3990 = vcmp.eq.f32.partialorder %v3986, 10.0
  %vm3991 = vcmp.eq.f32.partialorder %v3987, 10.0
  %vm3992 = vcmp.eq.f32.partialorder %v3988, 10.0
  %v3993 = vsel %vm3989, 0.0, %v3981
  %v3994 = vsel %vm3990, 0.0, %v3982
  %v3995 = vsel %vm3991, 0.0, %v3983
  %v3996 = vsel %vm3992, 0.0, %v3984
  %v3997 = vmul.f32 %v3993, 0.01
  %v3998 = vmul.f32 %v3994, 0.01
  %v3999 = vmul.f32 %v3995, 0.01
  %v4000 = vmul.f32 %v3996, 0.01
  %v4001 = vsub.f32 %v1322, %v3997
  %v4002 = vsub.f32 %v1323, %v3998
  %v4003 = vsub.f32 %v1324, %v3999
  %v4004 = vsub.f32 %v1325, %v4000
  %v4005 = vmul.f32 %v3041, %v3553
  %v4006 = vmul.f32 %v3041, %v3554
  %v4007 = vmul.f32 %v3041, %v3555
  %v4008 = vmul.f32 %v3041, %v3556
  %v4009 = vmul.f32 %v3045, %v3557
  %v4010 = vmul.f32 %v3045, %v3558
  %v4011 = vmul.f32 %v3045, %v3559
  %v4012 = vmul.f32 %v3045, %v3560
  %v4013 = vmul.f32 %v3049, %v3561
  %v4014 = vmul.f32 %v3049, %v3562
  %v4015 = vmul.f32 %v3049, %v3563
  %v4016 = vmul.f32 %v3049, %v3564
  %v4017 = vmul.f32 %v3053, %v3565
  %v4018 = vmul.f32 %v3053, %v3566
  %v4019 = vmul.f32 %v3053, %v3567
  %v4020 = vmul.f32 %v3053, %v3568
  %v4021 = vmul.f32 %v3057, %v3569
  %v4022 = vmul.f32 %v3057, %v3570
  %v4023 = vmul.f32 %v3057, %v3571
  %v4024 = vmul.f32 %v3057, %v3572
  %v4025 = vmul.f32 %v3061, %v3573
  %v4026 = vmul.f32 %v3061, %v3574
  %v4027 = vmul.f32 %v3061, %v3575
  %v4028 = vmul.f32 %v3061, %v3576
  %v4029 = vmul.f32 %v3065, %v3577
  %v4030 = vmul.f32 %v3065, %v3578
  %v4031 = vmul.f32 %v3065, %v3579
  %v4032 = vmul.f32 %v3065, %v3580
  %v4033 = vmul.f32 %v3069, %v3581
  %v4034 = vmul.f32 %v3069, %v3582
  %v4035 = vmul.f32 %v3069, %v3583
  %v4036 = vmul.f32 %v3069, %v3584
  %v4037 = vsel %vm517, %v4005, 0.0
  %v4038 = vsel %vm517, %v4009, 0.0
  %v4039 = vadd.f32 %v4037, %v4038
  %v4040 = vsel %vm517, %v4013, 0.0
  %v4041 = vadd.f32 %v4039, %v4040
  %v4042 = vsel %vm517, %v4017, 0.0
  %v4043 = vadd.f32 %v4041, %v4042
  %v4044 = vsel %vm517, %v4021, 0.0
  %v4045 = vadd.f32 %v4043, %v4044
  %v4046 = vsel %vm517, %v4025, 0.0
  %v4047 = vadd.f32 %v4045, %v4046
  %v4048 = vsel %vm517, %v4029, 0.0
  %v4049 = vadd.f32 %v4047, %v4048
  %v4050 = vsel %vm517, %v4033, 0.0
  %v4051 = vadd.f32 %v4049, %v4050
  %v4052 = vsel %vm517, %v4006, 0.0
  %v4053 = vsel %vm517, %v4010, 0.0
  %v4054 = vadd.f32 %v4052, %v4053
  %v4055 = vsel %vm517, %v4014, 0.0
  %v4056 = vadd.f32 %v4054, %v4055
  %v4057 = vsel %vm517, %v4018, 0.0
  %v4058 = vadd.f32 %v4056, %v4057
  %v4059 = vsel %vm517, %v4022, 0.0
  %v4060 = vadd.f32 %v4058, %v4059
  %v4061 = vsel %vm517, %v4026, 0.0
  %v4062 = vadd.f32 %v4060, %v4061
  %v4063 = vsel %vm517, %v4030, 0.0
  %v4064 = vadd.f32 %v4062, %v4063
  %v4065 = vsel %vm517, %v4034, 0.0
  %v4066 = vadd.f32 %v4064, %v4065
  %v4067 = vsel %vm517, %v4007, 0.0
  %v4068 = vsel %vm517, %v4011, 0.0
  %v4069 = vadd.f32 %v4067, %v4068
  %v4070 = vsel %vm517, %v4015, 0.0
  %v4071 = vadd.f32 %v4069, %v4070
  %v4072 = vsel %vm517, %v4019, 0.0
  %v4073 = vadd.f32 %v4071, %v4072
  %v4074 = vsel %vm517, %v4023, 0.0
  %v4075 = vadd.f32 %v4073, %v4074
  %v4076 = vsel %vm517, %v4027, 0.0
  %v4077 = vadd.f32 %v4075, %v4076
  %v4078 = vsel %vm517, %v4031, 0.0
  %v4079 = vadd.f32 %v4077, %v4078
  %v4080 = vsel %vm517, %v4035, 0.0
  %v4081 = vadd.f32 %v4079, %v4080
  %v4082 = vsel %vm517, %v4008, 0.0
  %v4083 = vsel %vm517, %v4012, 0.0
  %v4084 = vadd.f32 %v4082, %v4083
  %v4085 = vsel %vm517, %v4016, 0.0
  %v4086 = vadd.f32 %v4084, %v4085
  %v4087 = vsel %vm517, %v4020, 0.0
  %v4088 = vadd.f32 %v4086, %v4087
  %v4089 = vsel %vm517, %v4024, 0.0
  %v4090 = vadd.f32 %v4088, %v4089
  %v4091 = vsel %vm517, %v4028, 0.0
  %v4092 = vadd.f32 %v4090, %v4091
  %v4093 = vsel %vm517, %v4032, 0.0
  %v4094 = vadd.f32 %v4092, %v4093
  %v4095 = vsel %vm517, %v4036, 0.0
  %v4096 = vadd.f32 %v4094, %v4095
  %v4097 = vmax.f32 %v4051, -10.0
  %v4098 = vmax.f32 %v4066, -10.0
  %v4099 = vmax.f32 %v4081, -10.0
  %v4100 = vmax.f32 %v4096, -10.0
  %v4101 = vmin.f32 %v4097, 10.0
  %v4102 = vmin.f32 %v4098, 10.0
  %v4103 = vmin.f32 %v4099, 10.0
  %v4104 = vmin.f32 %v4100, 10.0
  %v4105 = vand.u32 2147483647, %v4051
  %v4106 = vand.u32 2147483647, %v4066
  %v4107 = vand.u32 2147483647, %v4081
  %v4108 = vand.u32 2147483647, %v4096
  %vm4109 = vcmp.eq.f32.partialorder %v4105, 10.0
  %vm4110 = vcmp.eq.f32.partialorder %v4106, 10.0
  %vm4111 = vcmp.eq.f32.partialorder %v4107, 10.0
  %vm4112 = vcmp.eq.f32.partialorder %v4108, 10.0
  %v4113 = vsel %vm4109, 0.0, %v4101
  %v4114 = vsel %vm4110, 0.0, %v4102
  %v4115 = vsel %vm4111, 0.0, %v4103
  %v4116 = vsel %vm4112, 0.0, %v4104
  %v4117 = vmul.f32 %v4113, 0.01
  %v4118 = vmul.f32 %v4114, 0.01
  %v4119 = vmul.f32 %v4115, 0.01
  %v4120 = vmul.f32 %v4116, 0.01
  %v4121 = vsub.f32 %v1442, %v4117
  %v4122 = vsub.f32 %v1443, %v4118
  %v4123 = vsub.f32 %v1444, %v4119
  %v4124 = vsub.f32 %v1445, %v4120
  %v4125 = vmax.f32 %v3599, -10.0
  %v4126 = vmax.f32 %v3614, -10.0
  %v4127 = vmax.f32 %v3629, -10.0
  %v4128 = vmax.f32 %v3644, -10.0
  %v4129 = vmin.f32 %v4125, 10.0
  %v4130 = vmin.f32 %v4126, 10.0
  %v4131 = vmin.f32 %v4127, 10.0
  %v4132 = vmin.f32 %v4128, 10.0
  %v4133 = vand.u32 2147483647, %v3599
  %v4134 = vand.u32 2147483647, %v3614
  %v4135 = vand.u32 2147483647, %v3629
  %v4136 = vand.u32 2147483647, %v3644
  %vm4137 = vcmp.eq.f32.partialorder %v4133, 10.0
  %vm4138 = vcmp.eq.f32.partialorder %v4134, 10.0
  %vm4139 = vcmp.eq.f32.partialorder %v4135, 10.0
  %vm4140 = vcmp.eq.f32.partialorder %v4136, 10.0
  %v4141 = vsel %vm4137, 0.0, %v4129
  %v4142 = vsel %vm4138, 0.0, %v4130
  %v4143 = vsel %vm4139, 0.0, %v4131
  %v4144 = vsel %vm4140, 0.0, %v4132
  %v4145 = vmul.f32 %v4141, 0.01
  %v4146 = vmul.f32 %v4142, 0.01
  %v4147 = vmul.f32 %v4143, 0.01
  %v4148 = vmul.f32 %v4144, 0.01
  %v4149 = vsub.f32 %v1470, %v4145
  %v4150 = vsub.f32 %v1471, %v4146
  %v4151 = vsub.f32 %v1472, %v4147
  %v4152 = vsub.f32 %v1473, %v4148
  %v4153 = vmax.f32 %v3428, -10.0
  %v4154 = vmax.f32 %v3443, -10.0
  %v4155 = vmax.f32 %v3458, -10.0
  %v4156 = vmax.f32 %v3473, -10.0
  %v4157 = vmin.f32 %v4153, 10.0
  %v4158 = vmin.f32 %v4154, 10.0
  %v4159 = vmin.f32 %v4155, 10.0
  %v4160 = vmin.f32 %v4156, 10.0
  %v4161 = vand.u32 2147483647, %v3428
  %v4162 = vand.u32 2147483647, %v3443
  %v4163 = vand.u32 2147483647, %v3458
  %v4164 = vand.u32 2147483647, %v3473
  %vm4165 = vcmp.eq.f32.partialorder %v4161, 10.0
  %vm4166 = vcmp.eq.f32.partialorder %v4162, 10.0
  %vm4167 = vcmp.eq.f32.partialorder %v4163, 10.0
  %vm4168 = vcmp.eq.f32.partialorder %v4164, 10.0
  %v4169 = vsel %vm4165, 0.0, %v4157
  %v4170 = vsel %vm4166, 0.0, %v4158
  %v4171 = vsel %vm4167, 0.0, %v4159
  %v4172 = vsel %vm4168, 0.0, %v4160
  %v4173 = vmul.f32 %v4169, 0.01
  %v4174 = vmul.f32 %v4170, 0.01
  %v4175 = vmul.f32 %v4171, 0.01
  %v4176 = vmul.f32 %v4172, 0.01
  %v4177 = vsub.f32 %v1498, %v4173
  %v4178 = vsub.f32 %v1499, %v4174
  %v4179 = vsub.f32 %v1500, %v4175
  %v4180 = vsub.f32 %v1501, %v4176
  %v4181 = vmax.f32 %v3488, -10.0
  %v4182 = vmin.f32 %v4181, 10.0
  %v4183 = vand.u32 2147483647, %v3488
  %vm4184 = vcmp.eq.f32.partialorder %v4183, 10.0
  %v4185 = vsel %vm4184, 0.0, %v4182
  %v4186 = vmul.f32 %v4185, 0.01
  %v4187 = vsub.f32 %v1508, %v4186
  %s4188 = scalar_lea.vmem %s0, 128
  %v4189 = vld [vmem:[%s4188] sm:$0x1f]
  %v4190 = vld [vmem:[%s4188 + $0x8] sm:$0x1f]
  %v4191 = vld [vmem:[%s4188 + $0x10] sm:$0x1f]
  %v4192 = vld [vmem:[%s4188 + $0x18] sm:$0x1f]
  %v4193 = vld [vmem:[%s4188 + $0x20] sm:$0x1f]
  %v4194 = vld [vmem:[%s4188 + $0x28] sm:$0x1f]
  %v4195 = vld [vmem:[%s4188 + $0x30] sm:$0x1f]
  %v4196 = vld [vmem:[%s4188 + $0x38] sm:$0x1f]
  %v4197 = vlaneseq
  %v4198 = vshrl.u32 %v4197, 7
  %v4199 = vsub.s32 0, %v4198
  %v4200 = vrot.slane %v4189, %v4199
  %v4201 = vlaneseq
  %v4202 = vshrl.u32 %v4201, 7
  %v4203 = vsub.s32 0, %v4202
  %v4204 = vrot.slane %v4190, %v4203
  %v4205 = vlaneseq
  %v4206 = vshrl.u32 %v4205, 7
  %v4207 = vsub.s32 0, %v4206
  %v4208 = vrot.slane %v4191, %v4207
  %v4209 = vlaneseq
  %v4210 = vshrl.u32 %v4209, 7
  %v4211 = vsub.s32 0, %v4210
  %v4212 = vrot.slane %v4192, %v4211
  %v4213 = vlaneseq
  %v4214 = vshrl.u32 %v4213, 7
  %v4215 = vsub.s32 0, %v4214
  %v4216 = vrot.slane %v4193, %v4215
  %v4217 = vlaneseq
  %v4218 = vshrl.u32 %v4217, 7
  %v4219 = vsub.s32 0, %v4218
  %v4220 = vrot.slane %v4194, %v4219
  %v4221 = vlaneseq
  %v4222 = vshrl.u32 %v4221, 7
  %v4223 = vsub.s32 0, %v4222
  %v4224 = vrot.slane %v4195, %v4223
  %v4225 = vlaneseq
  %v4226 = vshrl.u32 %v4225, 7
  %v4227 = vsub.s32 0, %v4226
  %v4228 = vrot.slane %v4196, %v4227
  %v4229 = vmul.f32 %v4200, %v3761
  %v4230 = vmul.f32 %v4200, %v3762
  %v4231 = vmul.f32 %v4200, %v3763
  %v4232 = vmul.f32 %v4200, %v3764
  %v4233 = vmul.f32 %v4204, %v3761
  %v4234 = vmul.f32 %v4204, %v3762
  %v4235 = vmul.f32 %v4204, %v3763
  %v4236 = vmul.f32 %v4204, %v3764
  %v4237 = vmul.f32 %v4208, %v3761
  %v4238 = vmul.f32 %v4208, %v3762
  %v4239 = vmul.f32 %v4208, %v3763
  %v4240 = vmul.f32 %v4208, %v3764
  %v4241 = vmul.f32 %v4212, %v3761
  %v4242 = vmul.f32 %v4212, %v3762
  %v4243 = vmul.f32 %v4212, %v3763
  %v4244 = vmul.f32 %v4212, %v3764
  %v4245 = vmul.f32 %v4216, %v3761
  %v4246 = vmul.f32 %v4216, %v3762
  %v4247 = vmul.f32 %v4216, %v3763
  %v4248 = vmul.f32 %v4216, %v3764
  %v4249 = vmul.f32 %v4220, %v3761
  %v4250 = vmul.f32 %v4220, %v3762
  %v4251 = vmul.f32 %v4220, %v3763
  %v4252 = vmul.f32 %v4220, %v3764
  %v4253 = vmul.f32 %v4224, %v3761
  %v4254 = vmul.f32 %v4224, %v3762
  %v4255 = vmul.f32 %v4224, %v3763
  %v4256 = vmul.f32 %v4224, %v3764
  %v4257 = vmul.f32 %v4228, %v3761
  %v4258 = vmul.f32 %v4228, %v3762
  %v4259 = vmul.f32 %v4228, %v3763
  %v4260 = vmul.f32 %v4228, %v3764
  %v4261 = vadd.f32 %v4149, %v4229
  %v4262 = vadd.f32 %v4150, %v4230
  %v4263 = vadd.f32 %v4151, %v4231
  %v4264 = vadd.f32 %v4152, %v4232
  %v4265 = vadd.f32 %v4149, %v4233
  %v4266 = vadd.f32 %v4150, %v4234
  %v4267 = vadd.f32 %v4151, %v4235
  %v4268 = vadd.f32 %v4152, %v4236
  %v4269 = vadd.f32 %v4149, %v4237
  %v4270 = vadd.f32 %v4150, %v4238
  %v4271 = vadd.f32 %v4151, %v4239
  %v4272 = vadd.f32 %v4152, %v4240
  %v4273 = vadd.f32 %v4149, %v4241
  %v4274 = vadd.f32 %v4150, %v4242
  %v4275 = vadd.f32 %v4151, %v4243
  %v4276 = vadd.f32 %v4152, %v4244
  %v4277 = vadd.f32 %v4149, %v4245
  %v4278 = vadd.f32 %v4150, %v4246
  %v4279 = vadd.f32 %v4151, %v4247
  %v4280 = vadd.f32 %v4152, %v4248
  %v4281 = vadd.f32 %v4149, %v4249
  %v4282 = vadd.f32 %v4150, %v4250
  %v4283 = vadd.f32 %v4151, %v4251
  %v4284 = vadd.f32 %v4152, %v4252
  %v4285 = vadd.f32 %v4149, %v4253
  %v4286 = vadd.f32 %v4150, %v4254
  %v4287 = vadd.f32 %v4151, %v4255
  %v4288 = vadd.f32 %v4152, %v4256
  %v4289 = vadd.f32 %v4149, %v4257
  %v4290 = vadd.f32 %v4150, %v4258
  %v4291 = vadd.f32 %v4151, %v4259
  %v4292 = vadd.f32 %v4152, %v4260
  %v4293 = vlaneseq
  %v4294 = vshrl.u32 %v4293, 7
  %v4295 = vsub.s32 1, %v4294
  %v4296 = vrot.slane %v4189, %v4295
  %v4297 = vlaneseq
  %v4298 = vshrl.u32 %v4297, 7
  %v4299 = vsub.s32 1, %v4298
  %v4300 = vrot.slane %v4190, %v4299
  %v4301 = vlaneseq
  %v4302 = vshrl.u32 %v4301, 7
  %v4303 = vsub.s32 1, %v4302
  %v4304 = vrot.slane %v4191, %v4303
  %v4305 = vlaneseq
  %v4306 = vshrl.u32 %v4305, 7
  %v4307 = vsub.s32 1, %v4306
  %v4308 = vrot.slane %v4192, %v4307
  %v4309 = vlaneseq
  %v4310 = vshrl.u32 %v4309, 7
  %v4311 = vsub.s32 1, %v4310
  %v4312 = vrot.slane %v4193, %v4311
  %v4313 = vlaneseq
  %v4314 = vshrl.u32 %v4313, 7
  %v4315 = vsub.s32 1, %v4314
  %v4316 = vrot.slane %v4194, %v4315
  %v4317 = vlaneseq
  %v4318 = vshrl.u32 %v4317, 7
  %v4319 = vsub.s32 1, %v4318
  %v4320 = vrot.slane %v4195, %v4319
  %v4321 = vlaneseq
  %v4322 = vshrl.u32 %v4321, 7
  %v4323 = vsub.s32 1, %v4322
  %v4324 = vrot.slane %v4196, %v4323
  %v4325 = vmul.f32 %v4296, %v3881
  %v4326 = vmul.f32 %v4296, %v3882
  %v4327 = vmul.f32 %v4296, %v3883
  %v4328 = vmul.f32 %v4296, %v3884
  %v4329 = vmul.f32 %v4300, %v3881
  %v4330 = vmul.f32 %v4300, %v3882
  %v4331 = vmul.f32 %v4300, %v3883
  %v4332 = vmul.f32 %v4300, %v3884
  %v4333 = vmul.f32 %v4304, %v3881
  %v4334 = vmul.f32 %v4304, %v3882
  %v4335 = vmul.f32 %v4304, %v3883
  %v4336 = vmul.f32 %v4304, %v3884
  %v4337 = vmul.f32 %v4308, %v3881
  %v4338 = vmul.f32 %v4308, %v3882
  %v4339 = vmul.f32 %v4308, %v3883
  %v4340 = vmul.f32 %v4308, %v3884
  %v4341 = vmul.f32 %v4312, %v3881
  %v4342 = vmul.f32 %v4312, %v3882
  %v4343 = vmul.f32 %v4312, %v3883
  %v4344 = vmul.f32 %v4312, %v3884
  %v4345 = vmul.f32 %v4316, %v3881
  %v4346 = vmul.f32 %v4316, %v3882
  %v4347 = vmul.f32 %v4316, %v3883
  %v4348 = vmul.f32 %v4316, %v3884
  %v4349 = vmul.f32 %v4320, %v3881
  %v4350 = vmul.f32 %v4320, %v3882
  %v4351 = vmul.f32 %v4320, %v3883
  %v4352 = vmul.f32 %v4320, %v3884
  %v4353 = vmul.f32 %v4324, %v3881
  %v4354 = vmul.f32 %v4324, %v3882
  %v4355 = vmul.f32 %v4324, %v3883
  %v4356 = vmul.f32 %v4324, %v3884
  %v4357 = vadd.f32 %v4261, %v4325
  %v4358 = vadd.f32 %v4262, %v4326
  %v4359 = vadd.f32 %v4263, %v4327
  %v4360 = vadd.f32 %v4264, %v4328
  %v4361 = vadd.f32 %v4265, %v4329
  %v4362 = vadd.f32 %v4266, %v4330
  %v4363 = vadd.f32 %v4267, %v4331
  %v4364 = vadd.f32 %v4268, %v4332
  %v4365 = vadd.f32 %v4269, %v4333
  %v4366 = vadd.f32 %v4270, %v4334
  %v4367 = vadd.f32 %v4271, %v4335
  %v4368 = vadd.f32 %v4272, %v4336
  %v4369 = vadd.f32 %v4273, %v4337
  %v4370 = vadd.f32 %v4274, %v4338
  %v4371 = vadd.f32 %v4275, %v4339
  %v4372 = vadd.f32 %v4276, %v4340
  %v4373 = vadd.f32 %v4277, %v4341
  %v4374 = vadd.f32 %v4278, %v4342
  %v4375 = vadd.f32 %v4279, %v4343
  %v4376 = vadd.f32 %v4280, %v4344
  %v4377 = vadd.f32 %v4281, %v4345
  %v4378 = vadd.f32 %v4282, %v4346
  %v4379 = vadd.f32 %v4283, %v4347
  %v4380 = vadd.f32 %v4284, %v4348
  %v4381 = vadd.f32 %v4285, %v4349
  %v4382 = vadd.f32 %v4286, %v4350
  %v4383 = vadd.f32 %v4287, %v4351
  %v4384 = vadd.f32 %v4288, %v4352
  %v4385 = vadd.f32 %v4289, %v4353
  %v4386 = vadd.f32 %v4290, %v4354
  %v4387 = vadd.f32 %v4291, %v4355
  %v4388 = vadd.f32 %v4292, %v4356
  %v4389 = vlaneseq
  %v4390 = vshrl.u32 %v4389, 7
  %v4391 = vsub.s32 2, %v4390
  %v4392 = vrot.slane %v4189, %v4391
  %v4393 = vlaneseq
  %v4394 = vshrl.u32 %v4393, 7
  %v4395 = vsub.s32 2, %v4394
  %v4396 = vrot.slane %v4190, %v4395
  %v4397 = vlaneseq
  %v4398 = vshrl.u32 %v4397, 7
  %v4399 = vsub.s32 2, %v4398
  %v4400 = vrot.slane %v4191, %v4399
  %v4401 = vlaneseq
  %v4402 = vshrl.u32 %v4401, 7
  %v4403 = vsub.s32 2, %v4402
  %v4404 = vrot.slane %v4192, %v4403
  %v4405 = vlaneseq
  %v4406 = vshrl.u32 %v4405, 7
  %v4407 = vsub.s32 2, %v4406
  %v4408 = vrot.slane %v4193, %v4407
  %v4409 = vlaneseq
  %v4410 = vshrl.u32 %v4409, 7
  %v4411 = vsub.s32 2, %v4410
  %v4412 = vrot.slane %v4194, %v4411
  %v4413 = vlaneseq
  %v4414 = vshrl.u32 %v4413, 7
  %v4415 = vsub.s32 2, %v4414
  %v4416 = vrot.slane %v4195, %v4415
  %v4417 = vlaneseq
  %v4418 = vshrl.u32 %v4417, 7
  %v4419 = vsub.s32 2, %v4418
  %v4420 = vrot.slane %v4196, %v4419
  %v4421 = vmul.f32 %v4392, %v4001
  %v4422 = vmul.f32 %v4392, %v4002
  %v4423 = vmul.f32 %v4392, %v4003
  %v4424 = vmul.f32 %v4392, %v4004
  %v4425 = vmul.f32 %v4396, %v4001
  %v4426 = vmul.f32 %v4396, %v4002
  %v4427 = vmul.f32 %v4396, %v4003
  %v4428 = vmul.f32 %v4396, %v4004
  %v4429 = vmul.f32 %v4400, %v4001
  %v4430 = vmul.f32 %v4400, %v4002
  %v4431 = vmul.f32 %v4400, %v4003
  %v4432 = vmul.f32 %v4400, %v4004
  %v4433 = vmul.f32 %v4404, %v4001
  %v4434 = vmul.f32 %v4404, %v4002
  %v4435 = vmul.f32 %v4404, %v4003
  %v4436 = vmul.f32 %v4404, %v4004
  %v4437 = vmul.f32 %v4408, %v4001
  %v4438 = vmul.f32 %v4408, %v4002
  %v4439 = vmul.f32 %v4408, %v4003
  %v4440 = vmul.f32 %v4408, %v4004
  %v4441 = vmul.f32 %v4412, %v4001
  %v4442 = vmul.f32 %v4412, %v4002
  %v4443 = vmul.f32 %v4412, %v4003
  %v4444 = vmul.f32 %v4412, %v4004
  %v4445 = vmul.f32 %v4416, %v4001
  %v4446 = vmul.f32 %v4416, %v4002
  %v4447 = vmul.f32 %v4416, %v4003
  %v4448 = vmul.f32 %v4416, %v4004
  %v4449 = vmul.f32 %v4420, %v4001
  %v4450 = vmul.f32 %v4420, %v4002
  %v4451 = vmul.f32 %v4420, %v4003
  %v4452 = vmul.f32 %v4420, %v4004
  %v4453 = vadd.f32 %v4357, %v4421
  %v4454 = vadd.f32 %v4358, %v4422
  %v4455 = vadd.f32 %v4359, %v4423
  %v4456 = vadd.f32 %v4360, %v4424
  %v4457 = vadd.f32 %v4361, %v4425
  %v4458 = vadd.f32 %v4362, %v4426
  %v4459 = vadd.f32 %v4363, %v4427
  %v4460 = vadd.f32 %v4364, %v4428
  %v4461 = vadd.f32 %v4365, %v4429
  %v4462 = vadd.f32 %v4366, %v4430
  %v4463 = vadd.f32 %v4367, %v4431
  %v4464 = vadd.f32 %v4368, %v4432
  %v4465 = vadd.f32 %v4369, %v4433
  %v4466 = vadd.f32 %v4370, %v4434
  %v4467 = vadd.f32 %v4371, %v4435
  %v4468 = vadd.f32 %v4372, %v4436
  %v4469 = vadd.f32 %v4373, %v4437
  %v4470 = vadd.f32 %v4374, %v4438
  %v4471 = vadd.f32 %v4375, %v4439
  %v4472 = vadd.f32 %v4376, %v4440
  %v4473 = vadd.f32 %v4377, %v4441
  %v4474 = vadd.f32 %v4378, %v4442
  %v4475 = vadd.f32 %v4379, %v4443
  %v4476 = vadd.f32 %v4380, %v4444
  %v4477 = vadd.f32 %v4381, %v4445
  %v4478 = vadd.f32 %v4382, %v4446
  %v4479 = vadd.f32 %v4383, %v4447
  %v4480 = vadd.f32 %v4384, %v4448
  %v4481 = vadd.f32 %v4385, %v4449
  %v4482 = vadd.f32 %v4386, %v4450
  %v4483 = vadd.f32 %v4387, %v4451
  %v4484 = vadd.f32 %v4388, %v4452
  %v4485 = vlaneseq
  %v4486 = vshrl.u32 %v4485, 7
  %v4487 = vsub.s32 3, %v4486
  %v4488 = vrot.slane %v4189, %v4487
  %v4489 = vlaneseq
  %v4490 = vshrl.u32 %v4489, 7
  %v4491 = vsub.s32 3, %v4490
  %v4492 = vrot.slane %v4190, %v4491
  %v4493 = vlaneseq
  %v4494 = vshrl.u32 %v4493, 7
  %v4495 = vsub.s32 3, %v4494
  %v4496 = vrot.slane %v4191, %v4495
  %v4497 = vlaneseq
  %v4498 = vshrl.u32 %v4497, 7
  %v4499 = vsub.s32 3, %v4498
  %v4500 = vrot.slane %v4192, %v4499
  %v4501 = vlaneseq
  %v4502 = vshrl.u32 %v4501, 7
  %v4503 = vsub.s32 3, %v4502
  %v4504 = vrot.slane %v4193, %v4503
  %v4505 = vlaneseq
  %v4506 = vshrl.u32 %v4505, 7
  %v4507 = vsub.s32 3, %v4506
  %v4508 = vrot.slane %v4194, %v4507
  %v4509 = vlaneseq
  %v4510 = vshrl.u32 %v4509, 7
  %v4511 = vsub.s32 3, %v4510
  %v4512 = vrot.slane %v4195, %v4511
  %v4513 = vlaneseq
  %v4514 = vshrl.u32 %v4513, 7
  %v4515 = vsub.s32 3, %v4514
  %v4516 = vrot.slane %v4196, %v4515
  %v4517 = vmul.f32 %v4488, %v4121
  %v4518 = vmul.f32 %v4488, %v4122
  %v4519 = vmul.f32 %v4488, %v4123
  %v4520 = vmul.f32 %v4488, %v4124
  %v4521 = vmul.f32 %v4492, %v4121
  %v4522 = vmul.f32 %v4492, %v4122
  %v4523 = vmul.f32 %v4492, %v4123
  %v4524 = vmul.f32 %v4492, %v4124
  %v4525 = vmul.f32 %v4496, %v4121
  %v4526 = vmul.f32 %v4496, %v4122
  %v4527 = vmul.f32 %v4496, %v4123
  %v4528 = vmul.f32 %v4496, %v4124
  %v4529 = vmul.f32 %v4500, %v4121
  %v4530 = vmul.f32 %v4500, %v4122
  %v4531 = vmul.f32 %v4500, %v4123
  %v4532 = vmul.f32 %v4500, %v4124
  %v4533 = vmul.f32 %v4504, %v4121
  %v4534 = vmul.f32 %v4504, %v4122
  %v4535 = vmul.f32 %v4504, %v4123
  %v4536 = vmul.f32 %v4504, %v4124
  %v4537 = vmul.f32 %v4508, %v4121
  %v4538 = vmul.f32 %v4508, %v4122
  %v4539 = vmul.f32 %v4508, %v4123
  %v4540 = vmul.f32 %v4508, %v4124
  %v4541 = vmul.f32 %v4512, %v4121
  %v4542 = vmul.f32 %v4512, %v4122
  %v4543 = vmul.f32 %v4512, %v4123
  %v4544 = vmul.f32 %v4512, %v4124
  %v4545 = vmul.f32 %v4516, %v4121
  %v4546 = vmul.f32 %v4516, %v4122
  %v4547 = vmul.f32 %v4516, %v4123
  %v4548 = vmul.f32 %v4516, %v4124
  %v4549 = vadd.f32 %v4453, %v4517
  %v4550 = vadd.f32 %v4454, %v4518
  %v4551 = vadd.f32 %v4455, %v4519
  %v4552 = vadd.f32 %v4456, %v4520
  %v4553 = vadd.f32 %v4457, %v4521
  %v4554 = vadd.f32 %v4458, %v4522
  %v4555 = vadd.f32 %v4459, %v4523
  %v4556 = vadd.f32 %v4460, %v4524
  %v4557 = vadd.f32 %v4461, %v4525
  %v4558 = vadd.f32 %v4462, %v4526
  %v4559 = vadd.f32 %v4463, %v4527
  %v4560 = vadd.f32 %v4464, %v4528
  %v4561 = vadd.f32 %v4465, %v4529
  %v4562 = vadd.f32 %v4466, %v4530
  %v4563 = vadd.f32 %v4467, %v4531
  %v4564 = vadd.f32 %v4468, %v4532
  %v4565 = vadd.f32 %v4469, %v4533
  %v4566 = vadd.f32 %v4470, %v4534
  %v4567 = vadd.f32 %v4471, %v4535
  %v4568 = vadd.f32 %v4472, %v4536
  %v4569 = vadd.f32 %v4473, %v4537
  %v4570 = vadd.f32 %v4474, %v4538
  %v4571 = vadd.f32 %v4475, %v4539
  %v4572 = vadd.f32 %v4476, %v4540
  %v4573 = vadd.f32 %v4477, %v4541
  %v4574 = vadd.f32 %v4478, %v4542
  %v4575 = vadd.f32 %v4479, %v4543
  %v4576 = vadd.f32 %v4480, %v4544
  %v4577 = vadd.f32 %v4481, %v4545
  %v4578 = vadd.f32 %v4482, %v4546
  %v4579 = vadd.f32 %v4483, %v4547
  %v4580 = vadd.f32 %v4484, %v4548
  %v4581 = vmax.f32 %v4549, 0.0
  %v4582 = vmax.f32 %v4550, 0.0
  %v4583 = vmax.f32 %v4551, 0.0
  %v4584 = vmax.f32 %v4552, 0.0
  %v4585 = vmax.f32 %v4553, 0.0
  %v4586 = vmax.f32 %v4554, 0.0
  %v4587 = vmax.f32 %v4555, 0.0
  %v4588 = vmax.f32 %v4556, 0.0
  %v4589 = vmax.f32 %v4557, 0.0
  %v4590 = vmax.f32 %v4558, 0.0
  %v4591 = vmax.f32 %v4559, 0.0
  %v4592 = vmax.f32 %v4560, 0.0
  %v4593 = vmax.f32 %v4561, 0.0
  %v4594 = vmax.f32 %v4562, 0.0
  %v4595 = vmax.f32 %v4563, 0.0
  %v4596 = vmax.f32 %v4564, 0.0
  %v4597 = vmax.f32 %v4565, 0.0
  %v4598 = vmax.f32 %v4566, 0.0
  %v4599 = vmax.f32 %v4567, 0.0
  %v4600 = vmax.f32 %v4568, 0.0
  %v4601 = vmax.f32 %v4569, 0.0
  %v4602 = vmax.f32 %v4570, 0.0
  %v4603 = vmax.f32 %v4571, 0.0
  %v4604 = vmax.f32 %v4572, 0.0
  %v4605 = vmax.f32 %v4573, 0.0
  %v4606 = vmax.f32 %v4574, 0.0
  %v4607 = vmax.f32 %v4575, 0.0
  %v4608 = vmax.f32 %v4576, 0.0
  %v4609 = vmax.f32 %v4577, 0.0
  %v4610 = vmax.f32 %v4578, 0.0
  %v4611 = vmax.f32 %v4579, 0.0
  %v4612 = vmax.f32 %v4580, 0.0
  %v4613 = vmul.f32 %v4581, %v4177
  %v4614 = vmul.f32 %v4582, %v4178
  %v4615 = vmul.f32 %v4583, %v4179
  %v4616 = vmul.f32 %v4584, %v4180
  %v4617 = vmul.f32 %v4585, %v4177
  %v4618 = vmul.f32 %v4586, %v4178
  %v4619 = vmul.f32 %v4587, %v4179
  %v4620 = vmul.f32 %v4588, %v4180
  %v4621 = vmul.f32 %v4589, %v4177
  %v4622 = vmul.f32 %v4590, %v4178
  %v4623 = vmul.f32 %v4591, %v4179
  %v4624 = vmul.f32 %v4592, %v4180
  %v4625 = vmul.f32 %v4593, %v4177
  %v4626 = vmul.f32 %v4594, %v4178
  %v4627 = vmul.f32 %v4595, %v4179
  %v4628 = vmul.f32 %v4596, %v4180
  %v4629 = vmul.f32 %v4597, %v4177
  %v4630 = vmul.f32 %v4598, %v4178
  %v4631 = vmul.f32 %v4599, %v4179
  %v4632 = vmul.f32 %v4600, %v4180
  %v4633 = vmul.f32 %v4601, %v4177
  %v4634 = vmul.f32 %v4602, %v4178
  %v4635 = vmul.f32 %v4603, %v4179
  %v4636 = vmul.f32 %v4604, %v4180
  %v4637 = vmul.f32 %v4605, %v4177
  %v4638 = vmul.f32 %v4606, %v4178
  %v4639 = vmul.f32 %v4607, %v4179
  %v4640 = vmul.f32 %v4608, %v4180
  %v4641 = vmul.f32 %v4609, %v4177
  %v4642 = vmul.f32 %v4610, %v4178
  %v4643 = vmul.f32 %v4611, %v4179
  %v4644 = vmul.f32 %v4612, %v4180
  %v4645 = vsel %vm517, %v4613, 0.0
  %v4646 = vsel %vm517, %v4614, 0.0
  %v4647 = vadd.f32 %v4645, %v4646
  %v4648 = vsel %vm517, %v4615, 0.0
  %v4649 = vadd.f32 %v4647, %v4648
  %v4650 = vsel %vm517, %v4616, 0.0
  %v4651 = vadd.f32 %v4649, %v4650
  %v4652 = vrot.slane %v4651, 4
  %v4653 = vadd.f32 %v4651, %v4652
  %v4654 = vrot.slane %v4653, 2
  %v4655 = vadd.f32 %v4653, %v4654
  %v4656 = vrot.slane %v4655, 1
  %v4657 = vadd.f32 %v4655, %v4656
  %v4658 = vsel %vm517, %v4617, 0.0
  %v4659 = vsel %vm517, %v4618, 0.0
  %v4660 = vadd.f32 %v4658, %v4659
  %v4661 = vsel %vm517, %v4619, 0.0
  %v4662 = vadd.f32 %v4660, %v4661
  %v4663 = vsel %vm517, %v4620, 0.0
  %v4664 = vadd.f32 %v4662, %v4663
  %v4665 = vrot.slane %v4664, 4
  %v4666 = vadd.f32 %v4664, %v4665
  %v4667 = vrot.slane %v4666, 2
  %v4668 = vadd.f32 %v4666, %v4667
  %v4669 = vrot.slane %v4668, 1
  %v4670 = vadd.f32 %v4668, %v4669
  %v4671 = vsel %vm517, %v4621, 0.0
  %v4672 = vsel %vm517, %v4622, 0.0
  %v4673 = vadd.f32 %v4671, %v4672
  %v4674 = vsel %vm517, %v4623, 0.0
  %v4675 = vadd.f32 %v4673, %v4674
  %v4676 = vsel %vm517, %v4624, 0.0
  %v4677 = vadd.f32 %v4675, %v4676
  %v4678 = vrot.slane %v4677, 4
  %v4679 = vadd.f32 %v4677, %v4678
  %v4680 = vrot.slane %v4679, 2
  %v4681 = vadd.f32 %v4679, %v4680
  %v4682 = vrot.slane %v4681, 1
  %v4683 = vadd.f32 %v4681, %v4682
  %v4684 = vsel %vm517, %v4625, 0.0
  %v4685 = vsel %vm517, %v4626, 0.0
  %v4686 = vadd.f32 %v4684, %v4685
  %v4687 = vsel %vm517, %v4627, 0.0
  %v4688 = vadd.f32 %v4686, %v4687
  %v4689 = vsel %vm517, %v4628, 0.0
  %v4690 = vadd.f32 %v4688, %v4689
  %v4691 = vrot.slane %v4690, 4
  %v4692 = vadd.f32 %v4690, %v4691
  %v4693 = vrot.slane %v4692, 2
  %v4694 = vadd.f32 %v4692, %v4693
  %v4695 = vrot.slane %v4694, 1
  %v4696 = vadd.f32 %v4694, %v4695
  %v4697 = vsel %vm517, %v4629, 0.0
  %v4698 = vsel %vm517, %v4630, 0.0
  %v4699 = vadd.f32 %v4697, %v4698
  %v4700 = vsel %vm517, %v4631, 0.0
  %v4701 = vadd.f32 %v4699, %v4700
  %v4702 = vsel %vm517, %v4632, 0.0
  %v4703 = vadd.f32 %v4701, %v4702
  %v4704 = vrot.slane %v4703, 4
  %v4705 = vadd.f32 %v4703, %v4704
  %v4706 = vrot.slane %v4705, 2
  %v4707 = vadd.f32 %v4705, %v4706
  %v4708 = vrot.slane %v4707, 1
  %v4709 = vadd.f32 %v4707, %v4708
  %v4710 = vsel %vm517, %v4633, 0.0
  %v4711 = vsel %vm517, %v4634, 0.0
  %v4712 = vadd.f32 %v4710, %v4711
  %v4713 = vsel %vm517, %v4635, 0.0
  %v4714 = vadd.f32 %v4712, %v4713
  %v4715 = vsel %vm517, %v4636, 0.0
  %v4716 = vadd.f32 %v4714, %v4715
  %v4717 = vrot.slane %v4716, 4
  %v4718 = vadd.f32 %v4716, %v4717
  %v4719 = vrot.slane %v4718, 2
  %v4720 = vadd.f32 %v4718, %v4719
  %v4721 = vrot.slane %v4720, 1
  %v4722 = vadd.f32 %v4720, %v4721
  %v4723 = vsel %vm517, %v4637, 0.0
  %v4724 = vsel %vm517, %v4638, 0.0
  %v4725 = vadd.f32 %v4723, %v4724
  %v4726 = vsel %vm517, %v4639, 0.0
  %v4727 = vadd.f32 %v4725, %v4726
  %v4728 = vsel %vm517, %v4640, 0.0
  %v4729 = vadd.f32 %v4727, %v4728
  %v4730 = vrot.slane %v4729, 4
  %v4731 = vadd.f32 %v4729, %v4730
  %v4732 = vrot.slane %v4731, 2
  %v4733 = vadd.f32 %v4731, %v4732
  %v4734 = vrot.slane %v4733, 1
  %v4735 = vadd.f32 %v4733, %v4734
  %v4736 = vsel %vm517, %v4641, 0.0
  %v4737 = vsel %vm517, %v4642, 0.0
  %v4738 = vadd.f32 %v4736, %v4737
  %v4739 = vsel %vm517, %v4643, 0.0
  %v4740 = vadd.f32 %v4738, %v4739
  %v4741 = vsel %vm517, %v4644, 0.0
  %v4742 = vadd.f32 %v4740, %v4741
  %v4743 = vrot.slane %v4742, 4
  %v4744 = vadd.f32 %v4742, %v4743
  %v4745 = vrot.slane %v4744, 2
  %v4746 = vadd.f32 %v4744, %v4745
  %v4747 = vrot.slane %v4746, 1
  %v4748 = vadd.f32 %v4746, %v4747
  %v4749 = vadd.f32 %v4657, %v4187
  %v4750 = vadd.f32 %v4670, %v4187
  %v4751 = vadd.f32 %v4683, %v4187
  %v4752 = vadd.f32 %v4696, %v4187
  %v4753 = vadd.f32 %v4709, %v4187
  %v4754 = vadd.f32 %v4722, %v4187
  %v4755 = vadd.f32 %v4735, %v4187
  %v4756 = vadd.f32 %v4748, %v4187
  %v4765 = vrot.slane %v4189, 4
  %v4766 = vrot.slane %v4190, 4
  %v4767 = vrot.slane %v4191, 4
  %v4768 = vrot.slane %v4192, 4
  %v4769 = vrot.slane %v4193, 4
  %v4770 = vrot.slane %v4194, 4
  %v4771 = vrot.slane %v4195, 4
  %v4772 = vrot.slane %v4196, 4
  %v4781 = vsub.f32 %v4749, %v4765
  %v4782 = vsub.f32 %v4750, %v4766
  %v4783 = vsub.f32 %v4751, %v4767
  %v4784 = vsub.f32 %v4752, %v4768
  %v4785 = vsub.f32 %v4753, %v4769
  %v4786 = vsub.f32 %v4754, %v4770
  %v4787 = vsub.f32 %v4755, %v4771
  %v4788 = vsub.f32 %v4756, %v4772
  %v4789 = vmul.f32 %v4781, 0.25
  %v4790 = vmul.f32 %v4782, 0.25
  %v4791 = vmul.f32 %v4783, 0.25
  %v4792 = vmul.f32 %v4784, 0.25
  %v4793 = vmul.f32 %v4785, 0.25
  %v4794 = vmul.f32 %v4786, 0.25
  %v4795 = vmul.f32 %v4787, 0.25
  %v4796 = vmul.f32 %v4788, 0.25
  %v4797 = vlaneseq
  %v4798 = vshrl.u32 %v4797, 7
  %v4799 = vsub.s32 0, %v4798
  %v4800 = vrot.slane %v4789, %v4799
  %v4801 = vlaneseq
  %v4802 = vshrl.u32 %v4801, 7
  %v4803 = vsub.s32 0, %v4802
  %v4804 = vrot.slane %v4790, %v4803
  %v4805 = vlaneseq
  %v4806 = vshrl.u32 %v4805, 7
  %v4807 = vsub.s32 0, %v4806
  %v4808 = vrot.slane %v4791, %v4807
  %v4809 = vlaneseq
  %v4810 = vshrl.u32 %v4809, 7
  %v4811 = vsub.s32 0, %v4810
  %v4812 = vrot.slane %v4792, %v4811
  %v4813 = vlaneseq
  %v4814 = vshrl.u32 %v4813, 7
  %v4815 = vsub.s32 0, %v4814
  %v4816 = vrot.slane %v4793, %v4815
  %v4817 = vlaneseq
  %v4818 = vshrl.u32 %v4817, 7
  %v4819 = vsub.s32 0, %v4818
  %v4820 = vrot.slane %v4794, %v4819
  %v4821 = vlaneseq
  %v4822 = vshrl.u32 %v4821, 7
  %v4823 = vsub.s32 0, %v4822
  %v4824 = vrot.slane %v4795, %v4823
  %v4825 = vlaneseq
  %v4826 = vshrl.u32 %v4825, 7
  %v4827 = vsub.s32 0, %v4826
  %v4828 = vrot.slane %v4796, %v4827
  %v4829 = vmul.f32 %v4800, %v4581
  %v4830 = vmul.f32 %v4800, %v4582
  %v4831 = vmul.f32 %v4800, %v4583
  %v4832 = vmul.f32 %v4800, %v4584
  %v4833 = vmul.f32 %v4804, %v4585
  %v4834 = vmul.f32 %v4804, %v4586
  %v4835 = vmul.f32 %v4804, %v4587
  %v4836 = vmul.f32 %v4804, %v4588
  %v4837 = vmul.f32 %v4808, %v4589
  %v4838 = vmul.f32 %v4808, %v4590
  %v4839 = vmul.f32 %v4808, %v4591
  %v4840 = vmul.f32 %v4808, %v4592
  %v4841 = vmul.f32 %v4812, %v4593
  %v4842 = vmul.f32 %v4812, %v4594
  %v4843 = vmul.f32 %v4812, %v4595
  %v4844 = vmul.f32 %v4812, %v4596
  %v4845 = vmul.f32 %v4816, %v4597
  %v4846 = vmul.f32 %v4816, %v4598
  %v4847 = vmul.f32 %v4816, %v4599
  %v4848 = vmul.f32 %v4816, %v4600
  %v4849 = vmul.f32 %v4820, %v4601
  %v4850 = vmul.f32 %v4820, %v4602
  %v4851 = vmul.f32 %v4820, %v4603
  %v4852 = vmul.f32 %v4820, %v4604
  %v4853 = vmul.f32 %v4824, %v4605
  %v4854 = vmul.f32 %v4824, %v4606
  %v4855 = vmul.f32 %v4824, %v4607
  %v4856 = vmul.f32 %v4824, %v4608
  %v4857 = vmul.f32 %v4828, %v4609
  %v4858 = vmul.f32 %v4828, %v4610
  %v4859 = vmul.f32 %v4828, %v4611
  %v4860 = vmul.f32 %v4828, %v4612
  %v4861 = vsel %vm517, %v4829, 0.0
  %v4862 = vsel %vm517, %v4833, 0.0
  %v4863 = vadd.f32 %v4861, %v4862
  %v4864 = vsel %vm517, %v4837, 0.0
  %v4865 = vadd.f32 %v4863, %v4864
  %v4866 = vsel %vm517, %v4841, 0.0
  %v4867 = vadd.f32 %v4865, %v4866
  %v4868 = vsel %vm517, %v4845, 0.0
  %v4869 = vadd.f32 %v4867, %v4868
  %v4870 = vsel %vm517, %v4849, 0.0
  %v4871 = vadd.f32 %v4869, %v4870
  %v4872 = vsel %vm517, %v4853, 0.0
  %v4873 = vadd.f32 %v4871, %v4872
  %v4874 = vsel %vm517, %v4857, 0.0
  %v4875 = vadd.f32 %v4873, %v4874
  %v4876 = vsel %vm517, %v4830, 0.0
  %v4877 = vsel %vm517, %v4834, 0.0
  %v4878 = vadd.f32 %v4876, %v4877
  %v4879 = vsel %vm517, %v4838, 0.0
  %v4880 = vadd.f32 %v4878, %v4879
  %v4881 = vsel %vm517, %v4842, 0.0
  %v4882 = vadd.f32 %v4880, %v4881
  %v4883 = vsel %vm517, %v4846, 0.0
  %v4884 = vadd.f32 %v4882, %v4883
  %v4885 = vsel %vm517, %v4850, 0.0
  %v4886 = vadd.f32 %v4884, %v4885
  %v4887 = vsel %vm517, %v4854, 0.0
  %v4888 = vadd.f32 %v4886, %v4887
  %v4889 = vsel %vm517, %v4858, 0.0
  %v4890 = vadd.f32 %v4888, %v4889
  %v4891 = vsel %vm517, %v4831, 0.0
  %v4892 = vsel %vm517, %v4835, 0.0
  %v4893 = vadd.f32 %v4891, %v4892
  %v4894 = vsel %vm517, %v4839, 0.0
  %v4895 = vadd.f32 %v4893, %v4894
  %v4896 = vsel %vm517, %v4843, 0.0
  %v4897 = vadd.f32 %v4895, %v4896
  %v4898 = vsel %vm517, %v4847, 0.0
  %v4899 = vadd.f32 %v4897, %v4898
  %v4900 = vsel %vm517, %v4851, 0.0
  %v4901 = vadd.f32 %v4899, %v4900
  %v4902 = vsel %vm517, %v4855, 0.0
  %v4903 = vadd.f32 %v4901, %v4902
  %v4904 = vsel %vm517, %v4859, 0.0
  %v4905 = vadd.f32 %v4903, %v4904
  %v4906 = vsel %vm517, %v4832, 0.0
  %v4907 = vsel %vm517, %v4836, 0.0
  %v4908 = vadd.f32 %v4906, %v4907
  %v4909 = vsel %vm517, %v4840, 0.0
  %v4910 = vadd.f32 %v4908, %v4909
  %v4911 = vsel %vm517, %v4844, 0.0
  %v4912 = vadd.f32 %v4910, %v4911
  %v4913 = vsel %vm517, %v4848, 0.0
  %v4914 = vadd.f32 %v4912, %v4913
  %v4915 = vsel %vm517, %v4852, 0.0
  %v4916 = vadd.f32 %v4914, %v4915
  %v4917 = vsel %vm517, %v4856, 0.0
  %v4918 = vadd.f32 %v4916, %v4917
  %v4919 = vsel %vm517, %v4860, 0.0
  %v4920 = vadd.f32 %v4918, %v4919
  %v4921 = vsel %vm794, %v4789, 0.0
  %v4922 = vsel %vm794, %v4790, 0.0
  %v4923 = vadd.f32 %v4921, %v4922
  %v4924 = vsel %vm794, %v4791, 0.0
  %v4925 = vadd.f32 %v4923, %v4924
  %v4926 = vsel %vm794, %v4792, 0.0
  %v4927 = vadd.f32 %v4925, %v4926
  %v4928 = vsel %vm794, %v4793, 0.0
  %v4929 = vadd.f32 %v4927, %v4928
  %v4930 = vsel %vm794, %v4794, 0.0
  %v4931 = vadd.f32 %v4929, %v4930
  %v4932 = vsel %vm794, %v4795, 0.0
  %v4933 = vadd.f32 %v4931, %v4932
  %v4934 = vsel %vm794, %v4796, 0.0
  %v4935 = vadd.f32 %v4933, %v4934
  %vm4936 = vcmp.gt.f32.partialorder %v4581, 0.0
  %vm4937 = vcmp.gt.f32.partialorder %v4582, 0.0
  %vm4938 = vcmp.gt.f32.partialorder %v4583, 0.0
  %vm4939 = vcmp.gt.f32.partialorder %v4584, 0.0
  %vm4940 = vcmp.gt.f32.partialorder %v4585, 0.0
  %vm4941 = vcmp.gt.f32.partialorder %v4586, 0.0
  %vm4942 = vcmp.gt.f32.partialorder %v4587, 0.0
  %vm4943 = vcmp.gt.f32.partialorder %v4588, 0.0
  %vm4944 = vcmp.gt.f32.partialorder %v4589, 0.0
  %vm4945 = vcmp.gt.f32.partialorder %v4590, 0.0
  %vm4946 = vcmp.gt.f32.partialorder %v4591, 0.0
  %vm4947 = vcmp.gt.f32.partialorder %v4592, 0.0
  %vm4948 = vcmp.gt.f32.partialorder %v4593, 0.0
  %vm4949 = vcmp.gt.f32.partialorder %v4594, 0.0
  %vm4950 = vcmp.gt.f32.partialorder %v4595, 0.0
  %vm4951 = vcmp.gt.f32.partialorder %v4596, 0.0
  %vm4952 = vcmp.gt.f32.partialorder %v4597, 0.0
  %vm4953 = vcmp.gt.f32.partialorder %v4598, 0.0
  %vm4954 = vcmp.gt.f32.partialorder %v4599, 0.0
  %vm4955 = vcmp.gt.f32.partialorder %v4600, 0.0
  %vm4956 = vcmp.gt.f32.partialorder %v4601, 0.0
  %vm4957 = vcmp.gt.f32.partialorder %v4602, 0.0
  %vm4958 = vcmp.gt.f32.partialorder %v4603, 0.0
  %vm4959 = vcmp.gt.f32.partialorder %v4604, 0.0
  %vm4960 = vcmp.gt.f32.partialorder %v4605, 0.0
  %vm4961 = vcmp.gt.f32.partialorder %v4606, 0.0
  %vm4962 = vcmp.gt.f32.partialorder %v4607, 0.0
  %vm4963 = vcmp.gt.f32.partialorder %v4608, 0.0
  %vm4964 = vcmp.gt.f32.partialorder %v4609, 0.0
  %vm4965 = vcmp.gt.f32.partialorder %v4610, 0.0
  %vm4966 = vcmp.gt.f32.partialorder %v4611, 0.0
  %vm4967 = vcmp.gt.f32.partialorder %v4612, 0.0
  %v4968 = vmul.f32 %v4800, %v4177
  %v4969 = vmul.f32 %v4800, %v4178
  %v4970 = vmul.f32 %v4800, %v4179
  %v4971 = vmul.f32 %v4800, %v4180
  %v4972 = vmul.f32 %v4804, %v4177
  %v4973 = vmul.f32 %v4804, %v4178
  %v4974 = vmul.f32 %v4804, %v4179
  %v4975 = vmul.f32 %v4804, %v4180
  %v4976 = vmul.f32 %v4808, %v4177
  %v4977 = vmul.f32 %v4808, %v4178
  %v4978 = vmul.f32 %v4808, %v4179
  %v4979 = vmul.f32 %v4808, %v4180
  %v4980 = vmul.f32 %v4812, %v4177
  %v4981 = vmul.f32 %v4812, %v4178
  %v4982 = vmul.f32 %v4812, %v4179
  %v4983 = vmul.f32 %v4812, %v4180
  %v4984 = vmul.f32 %v4816, %v4177
  %v4985 = vmul.f32 %v4816, %v4178
  %v4986 = vmul.f32 %v4816, %v4179
  %v4987 = vmul.f32 %v4816, %v4180
  %v4988 = vmul.f32 %v4820, %v4177
  %v4989 = vmul.f32 %v4820, %v4178
  %v4990 = vmul.f32 %v4820, %v4179
  %v4991 = vmul.f32 %v4820, %v4180
  %v4992 = vmul.f32 %v4824, %v4177
  %v4993 = vmul.f32 %v4824, %v4178
  %v4994 = vmul.f32 %v4824, %v4179
  %v4995 = vmul.f32 %v4824, %v4180
  %v4996 = vmul.f32 %v4828, %v4177
  %v4997 = vmul.f32 %v4828, %v4178
  %v4998 = vmul.f32 %v4828, %v4179
  %v4999 = vmul.f32 %v4828, %v4180
  %v5000 = vsel %vm4936, %v4968, 0.0
  %v5001 = vsel %vm4937, %v4969, 0.0
  %v5002 = vsel %vm4938, %v4970, 0.0
  %v5003 = vsel %vm4939, %v4971, 0.0
  %v5004 = vsel %vm4940, %v4972, 0.0
  %v5005 = vsel %vm4941, %v4973, 0.0
  %v5006 = vsel %vm4942, %v4974, 0.0
  %v5007 = vsel %vm4943, %v4975, 0.0
  %v5008 = vsel %vm4944, %v4976, 0.0
  %v5009 = vsel %vm4945, %v4977, 0.0
  %v5010 = vsel %vm4946, %v4978, 0.0
  %v5011 = vsel %vm4947, %v4979, 0.0
  %v5012 = vsel %vm4948, %v4980, 0.0
  %v5013 = vsel %vm4949, %v4981, 0.0
  %v5014 = vsel %vm4950, %v4982, 0.0
  %v5015 = vsel %vm4951, %v4983, 0.0
  %v5016 = vsel %vm4952, %v4984, 0.0
  %v5017 = vsel %vm4953, %v4985, 0.0
  %v5018 = vsel %vm4954, %v4986, 0.0
  %v5019 = vsel %vm4955, %v4987, 0.0
  %v5020 = vsel %vm4956, %v4988, 0.0
  %v5021 = vsel %vm4957, %v4989, 0.0
  %v5022 = vsel %vm4958, %v4990, 0.0
  %v5023 = vsel %vm4959, %v4991, 0.0
  %v5024 = vsel %vm4960, %v4992, 0.0
  %v5025 = vsel %vm4961, %v4993, 0.0
  %v5026 = vsel %vm4962, %v4994, 0.0
  %v5027 = vsel %vm4963, %v4995, 0.0
  %v5028 = vsel %vm4964, %v4996, 0.0
  %v5029 = vsel %vm4965, %v4997, 0.0
  %v5030 = vsel %vm4966, %v4998, 0.0
  %v5031 = vsel %vm4967, %v4999, 0.0
  %v5032 = vsel %vm517, %v5000, 0.0
  %v5033 = vsel %vm517, %v5004, 0.0
  %v5034 = vadd.f32 %v5032, %v5033
  %v5035 = vsel %vm517, %v5008, 0.0
  %v5036 = vadd.f32 %v5034, %v5035
  %v5037 = vsel %vm517, %v5012, 0.0
  %v5038 = vadd.f32 %v5036, %v5037
  %v5039 = vsel %vm517, %v5016, 0.0
  %v5040 = vadd.f32 %v5038, %v5039
  %v5041 = vsel %vm517, %v5020, 0.0
  %v5042 = vadd.f32 %v5040, %v5041
  %v5043 = vsel %vm517, %v5024, 0.0
  %v5044 = vadd.f32 %v5042, %v5043
  %v5045 = vsel %vm517, %v5028, 0.0
  %v5046 = vadd.f32 %v5044, %v5045
  %v5047 = vsel %vm517, %v5001, 0.0
  %v5048 = vsel %vm517, %v5005, 0.0
  %v5049 = vadd.f32 %v5047, %v5048
  %v5050 = vsel %vm517, %v5009, 0.0
  %v5051 = vadd.f32 %v5049, %v5050
  %v5052 = vsel %vm517, %v5013, 0.0
  %v5053 = vadd.f32 %v5051, %v5052
  %v5054 = vsel %vm517, %v5017, 0.0
  %v5055 = vadd.f32 %v5053, %v5054
  %v5056 = vsel %vm517, %v5021, 0.0
  %v5057 = vadd.f32 %v5055, %v5056
  %v5058 = vsel %vm517, %v5025, 0.0
  %v5059 = vadd.f32 %v5057, %v5058
  %v5060 = vsel %vm517, %v5029, 0.0
  %v5061 = vadd.f32 %v5059, %v5060
  %v5062 = vsel %vm517, %v5002, 0.0
  %v5063 = vsel %vm517, %v5006, 0.0
  %v5064 = vadd.f32 %v5062, %v5063
  %v5065 = vsel %vm517, %v5010, 0.0
  %v5066 = vadd.f32 %v5064, %v5065
  %v5067 = vsel %vm517, %v5014, 0.0
  %v5068 = vadd.f32 %v5066, %v5067
  %v5069 = vsel %vm517, %v5018, 0.0
  %v5070 = vadd.f32 %v5068, %v5069
  %v5071 = vsel %vm517, %v5022, 0.0
  %v5072 = vadd.f32 %v5070, %v5071
  %v5073 = vsel %vm517, %v5026, 0.0
  %v5074 = vadd.f32 %v5072, %v5073
  %v5075 = vsel %vm517, %v5030, 0.0
  %v5076 = vadd.f32 %v5074, %v5075
  %v5077 = vsel %vm517, %v5003, 0.0
  %v5078 = vsel %vm517, %v5007, 0.0
  %v5079 = vadd.f32 %v5077, %v5078
  %v5080 = vsel %vm517, %v5011, 0.0
  %v5081 = vadd.f32 %v5079, %v5080
  %v5082 = vsel %vm517, %v5015, 0.0
  %v5083 = vadd.f32 %v5081, %v5082
  %v5084 = vsel %vm517, %v5019, 0.0
  %v5085 = vadd.f32 %v5083, %v5084
  %v5086 = vsel %vm517, %v5023, 0.0
  %v5087 = vadd.f32 %v5085, %v5086
  %v5088 = vsel %vm517, %v5027, 0.0
  %v5089 = vadd.f32 %v5087, %v5088
  %v5090 = vsel %vm517, %v5031, 0.0
  %v5091 = vadd.f32 %v5089, %v5090
  %v5092 = vmul.f32 %v4200, %v5000
  %v5093 = vmul.f32 %v4200, %v5001
  %v5094 = vmul.f32 %v4200, %v5002
  %v5095 = vmul.f32 %v4200, %v5003
  %v5096 = vmul.f32 %v4204, %v5004
  %v5097 = vmul.f32 %v4204, %v5005
  %v5098 = vmul.f32 %v4204, %v5006
  %v5099 = vmul.f32 %v4204, %v5007
  %v5100 = vmul.f32 %v4208, %v5008
  %v5101 = vmul.f32 %v4208, %v5009
  %v5102 = vmul.f32 %v4208, %v5010
  %v5103 = vmul.f32 %v4208, %v5011
  %v5104 = vmul.f32 %v4212, %v5012
  %v5105 = vmul.f32 %v4212, %v5013
  %v5106 = vmul.f32 %v4212, %v5014
  %v5107 = vmul.f32 %v4212, %v5015
  %v5108 = vmul.f32 %v4216, %v5016
  %v5109 = vmul.f32 %v4216, %v5017
  %v5110 = vmul.f32 %v4216, %v5018
  %v5111 = vmul.f32 %v4216, %v5019
  %v5112 = vmul.f32 %v4220, %v5020
  %v5113 = vmul.f32 %v4220, %v5021
  %v5114 = vmul.f32 %v4220, %v5022
  %v5115 = vmul.f32 %v4220, %v5023
  %v5116 = vmul.f32 %v4224, %v5024
  %v5117 = vmul.f32 %v4224, %v5025
  %v5118 = vmul.f32 %v4224, %v5026
  %v5119 = vmul.f32 %v4224, %v5027
  %v5120 = vmul.f32 %v4228, %v5028
  %v5121 = vmul.f32 %v4228, %v5029
  %v5122 = vmul.f32 %v4228, %v5030
  %v5123 = vmul.f32 %v4228, %v5031
  %v5124 = vsel %vm517, %v5092, 0.0
  %v5125 = vsel %vm517, %v5096, 0.0
  %v5126 = vadd.f32 %v5124, %v5125
  %v5127 = vsel %vm517, %v5100, 0.0
  %v5128 = vadd.f32 %v5126, %v5127
  %v5129 = vsel %vm517, %v5104, 0.0
  %v5130 = vadd.f32 %v5128, %v5129
  %v5131 = vsel %vm517, %v5108, 0.0
  %v5132 = vadd.f32 %v5130, %v5131
  %v5133 = vsel %vm517, %v5112, 0.0
  %v5134 = vadd.f32 %v5132, %v5133
  %v5135 = vsel %vm517, %v5116, 0.0
  %v5136 = vadd.f32 %v5134, %v5135
  %v5137 = vsel %vm517, %v5120, 0.0
  %v5138 = vadd.f32 %v5136, %v5137
  %v5139 = vsel %vm517, %v5093, 0.0
  %v5140 = vsel %vm517, %v5097, 0.0
  %v5141 = vadd.f32 %v5139, %v5140
  %v5142 = vsel %vm517, %v5101, 0.0
  %v5143 = vadd.f32 %v5141, %v5142
  %v5144 = vsel %vm517, %v5105, 0.0
  %v5145 = vadd.f32 %v5143, %v5144
  %v5146 = vsel %vm517, %v5109, 0.0
  %v5147 = vadd.f32 %v5145, %v5146
  %v5148 = vsel %vm517, %v5113, 0.0
  %v5149 = vadd.f32 %v5147, %v5148
  %v5150 = vsel %vm517, %v5117, 0.0
  %v5151 = vadd.f32 %v5149, %v5150
  %v5152 = vsel %vm517, %v5121, 0.0
  %v5153 = vadd.f32 %v5151, %v5152
  %v5154 = vsel %vm517, %v5094, 0.0
  %v5155 = vsel %vm517, %v5098, 0.0
  %v5156 = vadd.f32 %v5154, %v5155
  %v5157 = vsel %vm517, %v5102, 0.0
  %v5158 = vadd.f32 %v5156, %v5157
  %v5159 = vsel %vm517, %v5106, 0.0
  %v5160 = vadd.f32 %v5158, %v5159
  %v5161 = vsel %vm517, %v5110, 0.0
  %v5162 = vadd.f32 %v5160, %v5161
  %v5163 = vsel %vm517, %v5114, 0.0
  %v5164 = vadd.f32 %v5162, %v5163
  %v5165 = vsel %vm517, %v5118, 0.0
  %v5166 = vadd.f32 %v5164, %v5165
  %v5167 = vsel %vm517, %v5122, 0.0
  %v5168 = vadd.f32 %v5166, %v5167
  %v5169 = vsel %vm517, %v5095, 0.0
  %v5170 = vsel %vm517, %v5099, 0.0
  %v5171 = vadd.f32 %v5169, %v5170
  %v5172 = vsel %vm517, %v5103, 0.0
  %v5173 = vadd.f32 %v5171, %v5172
  %v5174 = vsel %vm517, %v5107, 0.0
  %v5175 = vadd.f32 %v5173, %v5174
  %v5176 = vsel %vm517, %v5111, 0.0
  %v5177 = vadd.f32 %v5175, %v5176
  %v5178 = vsel %vm517, %v5115, 0.0
  %v5179 = vadd.f32 %v5177, %v5178
  %v5180 = vsel %vm517, %v5119, 0.0
  %v5181 = vadd.f32 %v5179, %v5180
  %v5182 = vsel %vm517, %v5123, 0.0
  %v5183 = vadd.f32 %v5181, %v5182
  %v5184 = vmax.f32 %v5138, -10.0
  %v5185 = vmax.f32 %v5153, -10.0
  %v5186 = vmax.f32 %v5168, -10.0
  %v5187 = vmax.f32 %v5183, -10.0
  %v5188 = vmin.f32 %v5184, 10.0
  %v5189 = vmin.f32 %v5185, 10.0
  %v5190 = vmin.f32 %v5186, 10.0
  %v5191 = vmin.f32 %v5187, 10.0
  %v5192 = vand.u32 2147483647, %v5138
  %v5193 = vand.u32 2147483647, %v5153
  %v5194 = vand.u32 2147483647, %v5168
  %v5195 = vand.u32 2147483647, %v5183
  %vm5196 = vcmp.eq.f32.partialorder %v5192, 10.0
  %vm5197 = vcmp.eq.f32.partialorder %v5193, 10.0
  %vm5198 = vcmp.eq.f32.partialorder %v5194, 10.0
  %vm5199 = vcmp.eq.f32.partialorder %v5195, 10.0
  %v5200 = vsel %vm5196, 0.0, %v5188
  %v5201 = vsel %vm5197, 0.0, %v5189
  %v5202 = vsel %vm5198, 0.0, %v5190
  %v5203 = vsel %vm5199, 0.0, %v5191
  %v5204 = vmul.f32 %v5200, 0.01
  %v5205 = vmul.f32 %v5201, 0.01
  %v5206 = vmul.f32 %v5202, 0.01
  %v5207 = vmul.f32 %v5203, 0.01
  %v5208 = vsub.f32 %v3761, %v5204
  %v5209 = vsub.f32 %v3762, %v5205
  %v5210 = vsub.f32 %v3763, %v5206
  %v5211 = vsub.f32 %v3764, %v5207
  %v5212 = vmul.f32 %v4296, %v5000
  %v5213 = vmul.f32 %v4296, %v5001
  %v5214 = vmul.f32 %v4296, %v5002
  %v5215 = vmul.f32 %v4296, %v5003
  %v5216 = vmul.f32 %v4300, %v5004
  %v5217 = vmul.f32 %v4300, %v5005
  %v5218 = vmul.f32 %v4300, %v5006
  %v5219 = vmul.f32 %v4300, %v5007
  %v5220 = vmul.f32 %v4304, %v5008
  %v5221 = vmul.f32 %v4304, %v5009
  %v5222 = vmul.f32 %v4304, %v5010
  %v5223 = vmul.f32 %v4304, %v5011
  %v5224 = vmul.f32 %v4308, %v5012
  %v5225 = vmul.f32 %v4308, %v5013
  %v5226 = vmul.f32 %v4308, %v5014
  %v5227 = vmul.f32 %v4308, %v5015
  %v5228 = vmul.f32 %v4312, %v5016
  %v5229 = vmul.f32 %v4312, %v5017
  %v5230 = vmul.f32 %v4312, %v5018
  %v5231 = vmul.f32 %v4312, %v5019
  %v5232 = vmul.f32 %v4316, %v5020
  %v5233 = vmul.f32 %v4316, %v5021
  %v5234 = vmul.f32 %v4316, %v5022
  %v5235 = vmul.f32 %v4316, %v5023
  %v5236 = vmul.f32 %v4320, %v5024
  %v5237 = vmul.f32 %v4320, %v5025
  %v5238 = vmul.f32 %v4320, %v5026
  %v5239 = vmul.f32 %v4320, %v5027
  %v5240 = vmul.f32 %v4324, %v5028
  %v5241 = vmul.f32 %v4324, %v5029
  %v5242 = vmul.f32 %v4324, %v5030
  %v5243 = vmul.f32 %v4324, %v5031
  %v5244 = vsel %vm517, %v5212, 0.0
  %v5245 = vsel %vm517, %v5216, 0.0
  %v5246 = vadd.f32 %v5244, %v5245
  %v5247 = vsel %vm517, %v5220, 0.0
  %v5248 = vadd.f32 %v5246, %v5247
  %v5249 = vsel %vm517, %v5224, 0.0
  %v5250 = vadd.f32 %v5248, %v5249
  %v5251 = vsel %vm517, %v5228, 0.0
  %v5252 = vadd.f32 %v5250, %v5251
  %v5253 = vsel %vm517, %v5232, 0.0
  %v5254 = vadd.f32 %v5252, %v5253
  %v5255 = vsel %vm517, %v5236, 0.0
  %v5256 = vadd.f32 %v5254, %v5255
  %v5257 = vsel %vm517, %v5240, 0.0
  %v5258 = vadd.f32 %v5256, %v5257
  %v5259 = vsel %vm517, %v5213, 0.0
  %v5260 = vsel %vm517, %v5217, 0.0
  %v5261 = vadd.f32 %v5259, %v5260
  %v5262 = vsel %vm517, %v5221, 0.0
  %v5263 = vadd.f32 %v5261, %v5262
  %v5264 = vsel %vm517, %v5225, 0.0
  %v5265 = vadd.f32 %v5263, %v5264
  %v5266 = vsel %vm517, %v5229, 0.0
  %v5267 = vadd.f32 %v5265, %v5266
  %v5268 = vsel %vm517, %v5233, 0.0
  %v5269 = vadd.f32 %v5267, %v5268
  %v5270 = vsel %vm517, %v5237, 0.0
  %v5271 = vadd.f32 %v5269, %v5270
  %v5272 = vsel %vm517, %v5241, 0.0
  %v5273 = vadd.f32 %v5271, %v5272
  %v5274 = vsel %vm517, %v5214, 0.0
  %v5275 = vsel %vm517, %v5218, 0.0
  %v5276 = vadd.f32 %v5274, %v5275
  %v5277 = vsel %vm517, %v5222, 0.0
  %v5278 = vadd.f32 %v5276, %v5277
  %v5279 = vsel %vm517, %v5226, 0.0
  %v5280 = vadd.f32 %v5278, %v5279
  %v5281 = vsel %vm517, %v5230, 0.0
  %v5282 = vadd.f32 %v5280, %v5281
  %v5283 = vsel %vm517, %v5234, 0.0
  %v5284 = vadd.f32 %v5282, %v5283
  %v5285 = vsel %vm517, %v5238, 0.0
  %v5286 = vadd.f32 %v5284, %v5285
  %v5287 = vsel %vm517, %v5242, 0.0
  %v5288 = vadd.f32 %v5286, %v5287
  %v5289 = vsel %vm517, %v5215, 0.0
  %v5290 = vsel %vm517, %v5219, 0.0
  %v5291 = vadd.f32 %v5289, %v5290
  %v5292 = vsel %vm517, %v5223, 0.0
  %v5293 = vadd.f32 %v5291, %v5292
  %v5294 = vsel %vm517, %v5227, 0.0
  %v5295 = vadd.f32 %v5293, %v5294
  %v5296 = vsel %vm517, %v5231, 0.0
  %v5297 = vadd.f32 %v5295, %v5296
  %v5298 = vsel %vm517, %v5235, 0.0
  %v5299 = vadd.f32 %v5297, %v5298
  %v5300 = vsel %vm517, %v5239, 0.0
  %v5301 = vadd.f32 %v5299, %v5300
  %v5302 = vsel %vm517, %v5243, 0.0
  %v5303 = vadd.f32 %v5301, %v5302
  %v5304 = vmax.f32 %v5258, -10.0
  %v5305 = vmax.f32 %v5273, -10.0
  %v5306 = vmax.f32 %v5288, -10.0
  %v5307 = vmax.f32 %v5303, -10.0
  %v5308 = vmin.f32 %v5304, 10.0
  %v5309 = vmin.f32 %v5305, 10.0
  %v5310 = vmin.f32 %v5306, 10.0
  %v5311 = vmin.f32 %v5307, 10.0
  %v5312 = vand.u32 2147483647, %v5258
  %v5313 = vand.u32 2147483647, %v5273
  %v5314 = vand.u32 2147483647, %v5288
  %v5315 = vand.u32 2147483647, %v5303
  %vm5316 = vcmp.eq.f32.partialorder %v5312, 10.0
  %vm5317 = vcmp.eq.f32.partialorder %v5313, 10.0
  %vm5318 = vcmp.eq.f32.partialorder %v5314, 10.0
  %vm5319 = vcmp.eq.f32.partialorder %v5315, 10.0
  %v5320 = vsel %vm5316, 0.0, %v5308
  %v5321 = vsel %vm5317, 0.0, %v5309
  %v5322 = vsel %vm5318, 0.0, %v5310
  %v5323 = vsel %vm5319, 0.0, %v5311
  %v5324 = vmul.f32 %v5320, 0.01
  %v5325 = vmul.f32 %v5321, 0.01
  %v5326 = vmul.f32 %v5322, 0.01
  %v5327 = vmul.f32 %v5323, 0.01
  %v5328 = vsub.f32 %v3881, %v5324
  %v5329 = vsub.f32 %v3882, %v5325
  %v5330 = vsub.f32 %v3883, %v5326
  %v5331 = vsub.f32 %v3884, %v5327
  %v5332 = vmul.f32 %v4392, %v5000
  %v5333 = vmul.f32 %v4392, %v5001
  %v5334 = vmul.f32 %v4392, %v5002
  %v5335 = vmul.f32 %v4392, %v5003
  %v5336 = vmul.f32 %v4396, %v5004
  %v5337 = vmul.f32 %v4396, %v5005
  %v5338 = vmul.f32 %v4396, %v5006
  %v5339 = vmul.f32 %v4396, %v5007
  %v5340 = vmul.f32 %v4400, %v5008
  %v5341 = vmul.f32 %v4400, %v5009
  %v5342 = vmul.f32 %v4400, %v5010
  %v5343 = vmul.f32 %v4400, %v5011
  %v5344 = vmul.f32 %v4404, %v5012
  %v5345 = vmul.f32 %v4404, %v5013
  %v5346 = vmul.f32 %v4404, %v5014
  %v5347 = vmul.f32 %v4404, %v5015
  %v5348 = vmul.f32 %v4408, %v5016
  %v5349 = vmul.f32 %v4408, %v5017
  %v5350 = vmul.f32 %v4408, %v5018
  %v5351 = vmul.f32 %v4408, %v5019
  %v5352 = vmul.f32 %v4412, %v5020
  %v5353 = vmul.f32 %v4412, %v5021
  %v5354 = vmul.f32 %v4412, %v5022
  %v5355 = vmul.f32 %v4412, %v5023
  %v5356 = vmul.f32 %v4416, %v5024
  %v5357 = vmul.f32 %v4416, %v5025
  %v5358 = vmul.f32 %v4416, %v5026
  %v5359 = vmul.f32 %v4416, %v5027
  %v5360 = vmul.f32 %v4420, %v5028
  %v5361 = vmul.f32 %v4420, %v5029
  %v5362 = vmul.f32 %v4420, %v5030
  %v5363 = vmul.f32 %v4420, %v5031
  %v5364 = vsel %vm517, %v5332, 0.0
  %v5365 = vsel %vm517, %v5336, 0.0
  %v5366 = vadd.f32 %v5364, %v5365
  %v5367 = vsel %vm517, %v5340, 0.0
  %v5368 = vadd.f32 %v5366, %v5367
  %v5369 = vsel %vm517, %v5344, 0.0
  %v5370 = vadd.f32 %v5368, %v5369
  %v5371 = vsel %vm517, %v5348, 0.0
  %v5372 = vadd.f32 %v5370, %v5371
  %v5373 = vsel %vm517, %v5352, 0.0
  %v5374 = vadd.f32 %v5372, %v5373
  %v5375 = vsel %vm517, %v5356, 0.0
  %v5376 = vadd.f32 %v5374, %v5375
  %v5377 = vsel %vm517, %v5360, 0.0
  %v5378 = vadd.f32 %v5376, %v5377
  %v5379 = vsel %vm517, %v5333, 0.0
  %v5380 = vsel %vm517, %v5337, 0.0
  %v5381 = vadd.f32 %v5379, %v5380
  %v5382 = vsel %vm517, %v5341, 0.0
  %v5383 = vadd.f32 %v5381, %v5382
  %v5384 = vsel %vm517, %v5345, 0.0
  %v5385 = vadd.f32 %v5383, %v5384
  %v5386 = vsel %vm517, %v5349, 0.0
  %v5387 = vadd.f32 %v5385, %v5386
  %v5388 = vsel %vm517, %v5353, 0.0
  %v5389 = vadd.f32 %v5387, %v5388
  %v5390 = vsel %vm517, %v5357, 0.0
  %v5391 = vadd.f32 %v5389, %v5390
  %v5392 = vsel %vm517, %v5361, 0.0
  %v5393 = vadd.f32 %v5391, %v5392
  %v5394 = vsel %vm517, %v5334, 0.0
  %v5395 = vsel %vm517, %v5338, 0.0
  %v5396 = vadd.f32 %v5394, %v5395
  %v5397 = vsel %vm517, %v5342, 0.0
  %v5398 = vadd.f32 %v5396, %v5397
  %v5399 = vsel %vm517, %v5346, 0.0
  %v5400 = vadd.f32 %v5398, %v5399
  %v5401 = vsel %vm517, %v5350, 0.0
  %v5402 = vadd.f32 %v5400, %v5401
  %v5403 = vsel %vm517, %v5354, 0.0
  %v5404 = vadd.f32 %v5402, %v5403
  %v5405 = vsel %vm517, %v5358, 0.0
  %v5406 = vadd.f32 %v5404, %v5405
  %v5407 = vsel %vm517, %v5362, 0.0
  %v5408 = vadd.f32 %v5406, %v5407
  %v5409 = vsel %vm517, %v5335, 0.0
  %v5410 = vsel %vm517, %v5339, 0.0
  %v5411 = vadd.f32 %v5409, %v5410
  %v5412 = vsel %vm517, %v5343, 0.0
  %v5413 = vadd.f32 %v5411, %v5412
  %v5414 = vsel %vm517, %v5347, 0.0
  %v5415 = vadd.f32 %v5413, %v5414
  %v5416 = vsel %vm517, %v5351, 0.0
  %v5417 = vadd.f32 %v5415, %v5416
  %v5418 = vsel %vm517, %v5355, 0.0
  %v5419 = vadd.f32 %v5417, %v5418
  %v5420 = vsel %vm517, %v5359, 0.0
  %v5421 = vadd.f32 %v5419, %v5420
  %v5422 = vsel %vm517, %v5363, 0.0
  %v5423 = vadd.f32 %v5421, %v5422
  %v5424 = vmax.f32 %v5378, -10.0
  %v5425 = vmax.f32 %v5393, -10.0
  %v5426 = vmax.f32 %v5408, -10.0
  %v5427 = vmax.f32 %v5423, -10.0
  %v5428 = vmin.f32 %v5424, 10.0
  %v5429 = vmin.f32 %v5425, 10.0
  %v5430 = vmin.f32 %v5426, 10.0
  %v5431 = vmin.f32 %v5427, 10.0
  %v5432 = vand.u32 2147483647, %v5378
  %v5433 = vand.u32 2147483647, %v5393
  %v5434 = vand.u32 2147483647, %v5408
  %v5435 = vand.u32 2147483647, %v5423
  %vm5436 = vcmp.eq.f32.partialorder %v5432, 10.0
  %vm5437 = vcmp.eq.f32.partialorder %v5433, 10.0
  %vm5438 = vcmp.eq.f32.partialorder %v5434, 10.0
  %vm5439 = vcmp.eq.f32.partialorder %v5435, 10.0
  %v5440 = vsel %vm5436, 0.0, %v5428
  %v5441 = vsel %vm5437, 0.0, %v5429
  %v5442 = vsel %vm5438, 0.0, %v5430
  %v5443 = vsel %vm5439, 0.0, %v5431
  %v5444 = vmul.f32 %v5440, 0.01
  %v5445 = vmul.f32 %v5441, 0.01
  %v5446 = vmul.f32 %v5442, 0.01
  %v5447 = vmul.f32 %v5443, 0.01
  %v5448 = vsub.f32 %v4001, %v5444
  %v5449 = vsub.f32 %v4002, %v5445
  %v5450 = vsub.f32 %v4003, %v5446
  %v5451 = vsub.f32 %v4004, %v5447
  %v5452 = vmul.f32 %v4488, %v5000
  %v5453 = vmul.f32 %v4488, %v5001
  %v5454 = vmul.f32 %v4488, %v5002
  %v5455 = vmul.f32 %v4488, %v5003
  %v5456 = vmul.f32 %v4492, %v5004
  %v5457 = vmul.f32 %v4492, %v5005
  %v5458 = vmul.f32 %v4492, %v5006
  %v5459 = vmul.f32 %v4492, %v5007
  %v5460 = vmul.f32 %v4496, %v5008
  %v5461 = vmul.f32 %v4496, %v5009
  %v5462 = vmul.f32 %v4496, %v5010
  %v5463 = vmul.f32 %v4496, %v5011
  %v5464 = vmul.f32 %v4500, %v5012
  %v5465 = vmul.f32 %v4500, %v5013
  %v5466 = vmul.f32 %v4500, %v5014
  %v5467 = vmul.f32 %v4500, %v5015
  %v5468 = vmul.f32 %v4504, %v5016
  %v5469 = vmul.f32 %v4504, %v5017
  %v5470 = vmul.f32 %v4504, %v5018
  %v5471 = vmul.f32 %v4504, %v5019
  %v5472 = vmul.f32 %v4508, %v5020
  %v5473 = vmul.f32 %v4508, %v5021
  %v5474 = vmul.f32 %v4508, %v5022
  %v5475 = vmul.f32 %v4508, %v5023
  %v5476 = vmul.f32 %v4512, %v5024
  %v5477 = vmul.f32 %v4512, %v5025
  %v5478 = vmul.f32 %v4512, %v5026
  %v5479 = vmul.f32 %v4512, %v5027
  %v5480 = vmul.f32 %v4516, %v5028
  %v5481 = vmul.f32 %v4516, %v5029
  %v5482 = vmul.f32 %v4516, %v5030
  %v5483 = vmul.f32 %v4516, %v5031
  %v5484 = vsel %vm517, %v5452, 0.0
  %v5485 = vsel %vm517, %v5456, 0.0
  %v5486 = vadd.f32 %v5484, %v5485
  %v5487 = vsel %vm517, %v5460, 0.0
  %v5488 = vadd.f32 %v5486, %v5487
  %v5489 = vsel %vm517, %v5464, 0.0
  %v5490 = vadd.f32 %v5488, %v5489
  %v5491 = vsel %vm517, %v5468, 0.0
  %v5492 = vadd.f32 %v5490, %v5491
  %v5493 = vsel %vm517, %v5472, 0.0
  %v5494 = vadd.f32 %v5492, %v5493
  %v5495 = vsel %vm517, %v5476, 0.0
  %v5496 = vadd.f32 %v5494, %v5495
  %v5497 = vsel %vm517, %v5480, 0.0
  %v5498 = vadd.f32 %v5496, %v5497
  %v5499 = vsel %vm517, %v5453, 0.0
  %v5500 = vsel %vm517, %v5457, 0.0
  %v5501 = vadd.f32 %v5499, %v5500
  %v5502 = vsel %vm517, %v5461, 0.0
  %v5503 = vadd.f32 %v5501, %v5502
  %v5504 = vsel %vm517, %v5465, 0.0
  %v5505 = vadd.f32 %v5503, %v5504
  %v5506 = vsel %vm517, %v5469, 0.0
  %v5507 = vadd.f32 %v5505, %v5506
  %v5508 = vsel %vm517, %v5473, 0.0
  %v5509 = vadd.f32 %v5507, %v5508
  %v5510 = vsel %vm517, %v5477, 0.0
  %v5511 = vadd.f32 %v5509, %v5510
  %v5512 = vsel %vm517, %v5481, 0.0
  %v5513 = vadd.f32 %v5511, %v5512
  %v5514 = vsel %vm517, %v5454, 0.0
  %v5515 = vsel %vm517, %v5458, 0.0
  %v5516 = vadd.f32 %v5514, %v5515
  %v5517 = vsel %vm517, %v5462, 0.0
  %v5518 = vadd.f32 %v5516, %v5517
  %v5519 = vsel %vm517, %v5466, 0.0
  %v5520 = vadd.f32 %v5518, %v5519
  %v5521 = vsel %vm517, %v5470, 0.0
  %v5522 = vadd.f32 %v5520, %v5521
  %v5523 = vsel %vm517, %v5474, 0.0
  %v5524 = vadd.f32 %v5522, %v5523
  %v5525 = vsel %vm517, %v5478, 0.0
  %v5526 = vadd.f32 %v5524, %v5525
  %v5527 = vsel %vm517, %v5482, 0.0
  %v5528 = vadd.f32 %v5526, %v5527
  %v5529 = vsel %vm517, %v5455, 0.0
  %v5530 = vsel %vm517, %v5459, 0.0
  %v5531 = vadd.f32 %v5529, %v5530
  %v5532 = vsel %vm517, %v5463, 0.0
  %v5533 = vadd.f32 %v5531, %v5532
  %v5534 = vsel %vm517, %v5467, 0.0
  %v5535 = vadd.f32 %v5533, %v5534
  %v5536 = vsel %vm517, %v5471, 0.0
  %v5537 = vadd.f32 %v5535, %v5536
  %v5538 = vsel %vm517, %v5475, 0.0
  %v5539 = vadd.f32 %v5537, %v5538
  %v5540 = vsel %vm517, %v5479, 0.0
  %v5541 = vadd.f32 %v5539, %v5540
  %v5542 = vsel %vm517, %v5483, 0.0
  %v5543 = vadd.f32 %v5541, %v5542
  %v5544 = vmax.f32 %v5498, -10.0
  %v5545 = vmax.f32 %v5513, -10.0
  %v5546 = vmax.f32 %v5528, -10.0
  %v5547 = vmax.f32 %v5543, -10.0
  %v5548 = vmin.f32 %v5544, 10.0
  %v5549 = vmin.f32 %v5545, 10.0
  %v5550 = vmin.f32 %v5546, 10.0
  %v5551 = vmin.f32 %v5547, 10.0
  %v5552 = vand.u32 2147483647, %v5498
  %v5553 = vand.u32 2147483647, %v5513
  %v5554 = vand.u32 2147483647, %v5528
  %v5555 = vand.u32 2147483647, %v5543
  %vm5556 = vcmp.eq.f32.partialorder %v5552, 10.0
  %vm5557 = vcmp.eq.f32.partialorder %v5553, 10.0
  %vm5558 = vcmp.eq.f32.partialorder %v5554, 10.0
  %vm5559 = vcmp.eq.f32.partialorder %v5555, 10.0
  %v5560 = vsel %vm5556, 0.0, %v5548
  %v5561 = vsel %vm5557, 0.0, %v5549
  %v5562 = vsel %vm5558, 0.0, %v5550
  %v5563 = vsel %vm5559, 0.0, %v5551
  %v5564 = vmul.f32 %v5560, 0.01
  %v5565 = vmul.f32 %v5561, 0.01
  %v5566 = vmul.f32 %v5562, 0.01
  %v5567 = vmul.f32 %v5563, 0.01
  %v5568 = vsub.f32 %v4121, %v5564
  %v5569 = vsub.f32 %v4122, %v5565
  %v5570 = vsub.f32 %v4123, %v5566
  %v5571 = vsub.f32 %v4124, %v5567
  %v5572 = vmax.f32 %v5046, -10.0
  %v5573 = vmax.f32 %v5061, -10.0
  %v5574 = vmax.f32 %v5076, -10.0
  %v5575 = vmax.f32 %v5091, -10.0
  %v5576 = vmin.f32 %v5572, 10.0
  %v5577 = vmin.f32 %v5573, 10.0
  %v5578 = vmin.f32 %v5574, 10.0
  %v5579 = vmin.f32 %v5575, 10.0
  %v5580 = vand.u32 2147483647, %v5046
  %v5581 = vand.u32 2147483647, %v5061
  %v5582 = vand.u32 2147483647, %v5076
  %v5583 = vand.u32 2147483647, %v5091
  %vm5584 = vcmp.eq.f32.partialorder %v5580, 10.0
  %vm5585 = vcmp.eq.f32.partialorder %v5581, 10.0
  %vm5586 = vcmp.eq.f32.partialorder %v5582, 10.0
  %vm5587 = vcmp.eq.f32.partialorder %v5583, 10.0
  %v5588 = vsel %vm5584, 0.0, %v5576
  %v5589 = vsel %vm5585, 0.0, %v5577
  %v5590 = vsel %vm5586, 0.0, %v5578
  %v5591 = vsel %vm5587, 0.0, %v5579
  %v5592 = vmul.f32 %v5588, 0.01
  %v5593 = vmul.f32 %v5589, 0.01
  %v5594 = vmul.f32 %v5590, 0.01
  %v5595 = vmul.f32 %v5591, 0.01
  %v5596 = vsub.f32 %v4149, %v5592
  %v5597 = vsub.f32 %v4150, %v5593
  %v5598 = vsub.f32 %v4151, %v5594
  %v5599 = vsub.f32 %v4152, %v5595
  %v5600 = vmax.f32 %v4875, -10.0
  %v5601 = vmax.f32 %v4890, -10.0
  %v5602 = vmax.f32 %v4905, -10.0
  %v5603 = vmax.f32 %v4920, -10.0
  %v5604 = vmin.f32 %v5600, 10.0
  %v5605 = vmin.f32 %v5601, 10.0
  %v5606 = vmin.f32 %v5602, 10.0
  %v5607 = vmin.f32 %v5603, 10.0
  %v5608 = vand.u32 2147483647, %v4875
  %v5609 = vand.u32 2147483647, %v4890
  %v5610 = vand.u32 2147483647, %v4905
  %v5611 = vand.u32 2147483647, %v4920
  %vm5612 = vcmp.eq.f32.partialorder %v5608, 10.0
  %vm5613 = vcmp.eq.f32.partialorder %v5609, 10.0
  %vm5614 = vcmp.eq.f32.partialorder %v5610, 10.0
  %vm5615 = vcmp.eq.f32.partialorder %v5611, 10.0
  %v5616 = vsel %vm5612, 0.0, %v5604
  %v5617 = vsel %vm5613, 0.0, %v5605
  %v5618 = vsel %vm5614, 0.0, %v5606
  %v5619 = vsel %vm5615, 0.0, %v5607
  %v5620 = vmul.f32 %v5616, 0.01
  %v5621 = vmul.f32 %v5617, 0.01
  %v5622 = vmul.f32 %v5618, 0.01
  %v5623 = vmul.f32 %v5619, 0.01
  %v5624 = vsub.f32 %v4177, %v5620
  %v5625 = vsub.f32 %v4178, %v5621
  %v5626 = vsub.f32 %v4179, %v5622
  %v5627 = vsub.f32 %v4180, %v5623
  %v5628 = vmax.f32 %v4935, -10.0
  %v5629 = vmin.f32 %v5628, 10.0
  %v5630 = vand.u32 2147483647, %v4935
  %vm5631 = vcmp.eq.f32.partialorder %v5630, 10.0
  %v5632 = vsel %vm5631, 0.0, %v5629
  %v5633 = vmul.f32 %v5632, 0.01
  %v5634 = vsub.f32 %v4187, %v5633
  %s5635 = scalar_lea.vmem %s0, 192
  %v5636 = vld [vmem:[%s5635] sm:$0x1f]
  %v5637 = vld [vmem:[%s5635 + $0x8] sm:$0x1f]
  %v5638 = vld [vmem:[%s5635 + $0x10] sm:$0x1f]
  %v5639 = vld [vmem:[%s5635 + $0x18] sm:$0x1f]
  %v5640 = vld [vmem:[%s5635 + $0x20] sm:$0x1f]
  %v5641 = vld [vmem:[%s5635 + $0x28] sm:$0x1f]
  %v5642 = vld [vmem:[%s5635 + $0x30] sm:$0x1f]
  %v5643 = vld [vmem:[%s5635 + $0x38] sm:$0x1f]
  %v5644 = vlaneseq
  %v5645 = vshrl.u32 %v5644, 7
  %v5646 = vsub.s32 0, %v5645
  %v5647 = vrot.slane %v5636, %v5646
  %v5648 = vlaneseq
  %v5649 = vshrl.u32 %v5648, 7
  %v5650 = vsub.s32 0, %v5649
  %v5651 = vrot.slane %v5637, %v5650
  %v5652 = vlaneseq
  %v5653 = vshrl.u32 %v5652, 7
  %v5654 = vsub.s32 0, %v5653
  %v5655 = vrot.slane %v5638, %v5654
  %v5656 = vlaneseq
  %v5657 = vshrl.u32 %v5656, 7
  %v5658 = vsub.s32 0, %v5657
  %v5659 = vrot.slane %v5639, %v5658
  %v5660 = vlaneseq
  %v5661 = vshrl.u32 %v5660, 7
  %v5662 = vsub.s32 0, %v5661
  %v5663 = vrot.slane %v5640, %v5662
  %v5664 = vlaneseq
  %v5665 = vshrl.u32 %v5664, 7
  %v5666 = vsub.s32 0, %v5665
  %v5667 = vrot.slane %v5641, %v5666
  %v5668 = vlaneseq
  %v5669 = vshrl.u32 %v5668, 7
  %v5670 = vsub.s32 0, %v5669
  %v5671 = vrot.slane %v5642, %v5670
  %v5672 = vlaneseq
  %v5673 = vshrl.u32 %v5672, 7
  %v5674 = vsub.s32 0, %v5673
  %v5675 = vrot.slane %v5643, %v5674
  %v5676 = vmul.f32 %v5647, %v5208
  %v5677 = vmul.f32 %v5647, %v5209
  %v5678 = vmul.f32 %v5647, %v5210
  %v5679 = vmul.f32 %v5647, %v5211
  %v5680 = vmul.f32 %v5651, %v5208
  %v5681 = vmul.f32 %v5651, %v5209
  %v5682 = vmul.f32 %v5651, %v5210
  %v5683 = vmul.f32 %v5651, %v5211
  %v5684 = vmul.f32 %v5655, %v5208
  %v5685 = vmul.f32 %v5655, %v5209
  %v5686 = vmul.f32 %v5655, %v5210
  %v5687 = vmul.f32 %v5655, %v5211
  %v5688 = vmul.f32 %v5659, %v5208
  %v5689 = vmul.f32 %v5659, %v5209
  %v5690 = vmul.f32 %v5659, %v5210
  %v5691 = vmul.f32 %v5659, %v5211
  %v5692 = vmul.f32 %v5663, %v5208
  %v5693 = vmul.f32 %v5663, %v5209
  %v5694 = vmul.f32 %v5663, %v5210
  %v5695 = vmul.f32 %v5663, %v5211
  %v5696 = vmul.f32 %v5667, %v5208
  %v5697 = vmul.f32 %v5667, %v5209
  %v5698 = vmul.f32 %v5667, %v5210
  %v5699 = vmul.f32 %v5667, %v5211
  %v5700 = vmul.f32 %v5671, %v5208
  %v5701 = vmul.f32 %v5671, %v5209
  %v5702 = vmul.f32 %v5671, %v5210
  %v5703 = vmul.f32 %v5671, %v5211
  %v5704 = vmul.f32 %v5675, %v5208
  %v5705 = vmul.f32 %v5675, %v5209
  %v5706 = vmul.f32 %v5675, %v5210
  %v5707 = vmul.f32 %v5675, %v5211
  %v5708 = vadd.f32 %v5596, %v5676
  %v5709 = vadd.f32 %v5597, %v5677
  %v5710 = vadd.f32 %v5598, %v5678
  %v5711 = vadd.f32 %v5599, %v5679
  %v5712 = vadd.f32 %v5596, %v5680
  %v5713 = vadd.f32 %v5597, %v5681
  %v5714 = vadd.f32 %v5598, %v5682
  %v5715 = vadd.f32 %v5599, %v5683
  %v5716 = vadd.f32 %v5596, %v5684
  %v5717 = vadd.f32 %v5597, %v5685
  %v5718 = vadd.f32 %v5598, %v5686
  %v5719 = vadd.f32 %v5599, %v5687
  %v5720 = vadd.f32 %v5596, %v5688
  %v5721 = vadd.f32 %v5597, %v5689
  %v5722 = vadd.f32 %v5598, %v5690
  %v5723 = vadd.f32 %v5599, %v5691
  %v5724 = vadd.f32 %v5596, %v5692
  %v5725 = vadd.f32 %v5597, %v5693
  %v5726 = vadd.f32 %v5598, %v5694
  %v5727 = vadd.f32 %v5599, %v5695
  %v5728 = vadd.f32 %v5596, %v5696
  %v5729 = vadd.f32 %v5597, %v5697
  %v5730 = vadd.f32 %v5598, %v5698
  %v5731 = vadd.f32 %v5599, %v5699
  %v5732 = vadd.f32 %v5596, %v5700
  %v5733 = vadd.f32 %v5597, %v5701
  %v5734 = vadd.f32 %v5598, %v5702
  %v5735 = vadd.f32 %v5599, %v5703
  %v5736 = vadd.f32 %v5596, %v5704
  %v5737 = vadd.f32 %v5597, %v5705
  %v5738 = vadd.f32 %v5598, %v5706
  %v5739 = vadd.f32 %v5599, %v5707
  %v5740 = vlaneseq
  %v5741 = vshrl.u32 %v5740, 7
  %v5742 = vsub.s32 1, %v5741
  %v5743 = vrot.slane %v5636, %v5742
  %v5744 = vlaneseq
  %v5745 = vshrl.u32 %v5744, 7
  %v5746 = vsub.s32 1, %v5745
  %v5747 = vrot.slane %v5637, %v5746
  %v5748 = vlaneseq
  %v5749 = vshrl.u32 %v5748, 7
  %v5750 = vsub.s32 1, %v5749
  %v5751 = vrot.slane %v5638, %v5750
  %v5752 = vlaneseq
  %v5753 = vshrl.u32 %v5752, 7
  %v5754 = vsub.s32 1, %v5753
  %v5755 = vrot.slane %v5639, %v5754
  %v5756 = vlaneseq
  %v5757 = vshrl.u32 %v5756, 7
  %v5758 = vsub.s32 1, %v5757
  %v5759 = vrot.slane %v5640, %v5758
  %v5760 = vlaneseq
  %v5761 = vshrl.u32 %v5760, 7
  %v5762 = vsub.s32 1, %v5761
  %v5763 = vrot.slane %v5641, %v5762
  %v5764 = vlaneseq
  %v5765 = vshrl.u32 %v5764, 7
  %v5766 = vsub.s32 1, %v5765
  %v5767 = vrot.slane %v5642, %v5766
  %v5768 = vlaneseq
  %v5769 = vshrl.u32 %v5768, 7
  %v5770 = vsub.s32 1, %v5769
  %v5771 = vrot.slane %v5643, %v5770
  %v5772 = vmul.f32 %v5743, %v5328
  %v5773 = vmul.f32 %v5743, %v5329
  %v5774 = vmul.f32 %v5743, %v5330
  %v5775 = vmul.f32 %v5743, %v5331
  %v5776 = vmul.f32 %v5747, %v5328
  %v5777 = vmul.f32 %v5747, %v5329
  %v5778 = vmul.f32 %v5747, %v5330
  %v5779 = vmul.f32 %v5747, %v5331
  %v5780 = vmul.f32 %v5751, %v5328
  %v5781 = vmul.f32 %v5751, %v5329
  %v5782 = vmul.f32 %v5751, %v5330
  %v5783 = vmul.f32 %v5751, %v5331
  %v5784 = vmul.f32 %v5755, %v5328
  %v5785 = vmul.f32 %v5755, %v5329
  %v5786 = vmul.f32 %v5755, %v5330
  %v5787 = vmul.f32 %v5755, %v5331
  %v5788 = vmul.f32 %v5759, %v5328
  %v5789 = vmul.f32 %v5759, %v5329
  %v5790 = vmul.f32 %v5759, %v5330
  %v5791 = vmul.f32 %v5759, %v5331
  %v5792 = vmul.f32 %v5763, %v5328
  %v5793 = vmul.f32 %v5763, %v5329
  %v5794 = vmul.f32 %v5763, %v5330
  %v5795 = vmul.f32 %v5763, %v5331
  %v5796 = vmul.f32 %v5767, %v5328
  %v5797 = vmul.f32 %v5767, %v5329
  %v5798 = vmul.f32 %v5767, %v5330
  %v5799 = vmul.f32 %v5767, %v5331
  %v5800 = vmul.f32 %v5771, %v5328
  %v5801 = vmul.f32 %v5771, %v5329
  %v5802 = vmul.f32 %v5771, %v5330
  %v5803 = vmul.f32 %v5771, %v5331
  %v5804 = vadd.f32 %v5708, %v5772
  %v5805 = vadd.f32 %v5709, %v5773
  %v5806 = vadd.f32 %v5710, %v5774
  %v5807 = vadd.f32 %v5711, %v5775
  %v5808 = vadd.f32 %v5712, %v5776
  %v5809 = vadd.f32 %v5713, %v5777
  %v5810 = vadd.f32 %v5714, %v5778
  %v5811 = vadd.f32 %v5715, %v5779
  %v5812 = vadd.f32 %v5716, %v5780
  %v5813 = vadd.f32 %v5717, %v5781
  %v5814 = vadd.f32 %v5718, %v5782
  %v5815 = vadd.f32 %v5719, %v5783
  %v5816 = vadd.f32 %v5720, %v5784
  %v5817 = vadd.f32 %v5721, %v5785
  %v5818 = vadd.f32 %v5722, %v5786
  %v5819 = vadd.f32 %v5723, %v5787
  %v5820 = vadd.f32 %v5724, %v5788
  %v5821 = vadd.f32 %v5725, %v5789
  %v5822 = vadd.f32 %v5726, %v5790
  %v5823 = vadd.f32 %v5727, %v5791
  %v5824 = vadd.f32 %v5728, %v5792
  %v5825 = vadd.f32 %v5729, %v5793
  %v5826 = vadd.f32 %v5730, %v5794
  %v5827 = vadd.f32 %v5731, %v5795
  %v5828 = vadd.f32 %v5732, %v5796
  %v5829 = vadd.f32 %v5733, %v5797
  %v5830 = vadd.f32 %v5734, %v5798
  %v5831 = vadd.f32 %v5735, %v5799
  %v5832 = vadd.f32 %v5736, %v5800
  %v5833 = vadd.f32 %v5737, %v5801
  %v5834 = vadd.f32 %v5738, %v5802
  %v5835 = vadd.f32 %v5739, %v5803
  %v5836 = vlaneseq
  %v5837 = vshrl.u32 %v5836, 7
  %v5838 = vsub.s32 2, %v5837
  %v5839 = vrot.slane %v5636, %v5838
  %v5840 = vlaneseq
  %v5841 = vshrl.u32 %v5840, 7
  %v5842 = vsub.s32 2, %v5841
  %v5843 = vrot.slane %v5637, %v5842
  %v5844 = vlaneseq
  %v5845 = vshrl.u32 %v5844, 7
  %v5846 = vsub.s32 2, %v5845
  %v5847 = vrot.slane %v5638, %v5846
  %v5848 = vlaneseq
  %v5849 = vshrl.u32 %v5848, 7
  %v5850 = vsub.s32 2, %v5849
  %v5851 = vrot.slane %v5639, %v5850
  %v5852 = vlaneseq
  %v5853 = vshrl.u32 %v5852, 7
  %v5854 = vsub.s32 2, %v5853
  %v5855 = vrot.slane %v5640, %v5854
  %v5856 = vlaneseq
  %v5857 = vshrl.u32 %v5856, 7
  %v5858 = vsub.s32 2, %v5857
  %v5859 = vrot.slane %v5641, %v5858
  %v5860 = vlaneseq
  %v5861 = vshrl.u32 %v5860, 7
  %v5862 = vsub.s32 2, %v5861
  %v5863 = vrot.slane %v5642, %v5862
  %v5864 = vlaneseq
  %v5865 = vshrl.u32 %v5864, 7
  %v5866 = vsub.s32 2, %v5865
  %v5867 = vrot.slane %v5643, %v5866
  %v5868 = vmul.f32 %v5839, %v5448
  %v5869 = vmul.f32 %v5839, %v5449
  %v5870 = vmul.f32 %v5839, %v5450
  %v5871 = vmul.f32 %v5839, %v5451
  %v5872 = vmul.f32 %v5843, %v5448
  %v5873 = vmul.f32 %v5843, %v5449
  %v5874 = vmul.f32 %v5843, %v5450
  %v5875 = vmul.f32 %v5843, %v5451
  %v5876 = vmul.f32 %v5847, %v5448
  %v5877 = vmul.f32 %v5847, %v5449
  %v5878 = vmul.f32 %v5847, %v5450
  %v5879 = vmul.f32 %v5847, %v5451
  %v5880 = vmul.f32 %v5851, %v5448
  %v5881 = vmul.f32 %v5851, %v5449
  %v5882 = vmul.f32 %v5851, %v5450
  %v5883 = vmul.f32 %v5851, %v5451
  %v5884 = vmul.f32 %v5855, %v5448
  %v5885 = vmul.f32 %v5855, %v5449
  %v5886 = vmul.f32 %v5855, %v5450
  %v5887 = vmul.f32 %v5855, %v5451
  %v5888 = vmul.f32 %v5859, %v5448
  %v5889 = vmul.f32 %v5859, %v5449
  %v5890 = vmul.f32 %v5859, %v5450
  %v5891 = vmul.f32 %v5859, %v5451
  %v5892 = vmul.f32 %v5863, %v5448
  %v5893 = vmul.f32 %v5863, %v5449
  %v5894 = vmul.f32 %v5863, %v5450
  %v5895 = vmul.f32 %v5863, %v5451
  %v5896 = vmul.f32 %v5867, %v5448
  %v5897 = vmul.f32 %v5867, %v5449
  %v5898 = vmul.f32 %v5867, %v5450
  %v5899 = vmul.f32 %v5867, %v5451
  %v5900 = vadd.f32 %v5804, %v5868
  %v5901 = vadd.f32 %v5805, %v5869
  %v5902 = vadd.f32 %v5806, %v5870
  %v5903 = vadd.f32 %v5807, %v5871
  %v5904 = vadd.f32 %v5808, %v5872
  %v5905 = vadd.f32 %v5809, %v5873
  %v5906 = vadd.f32 %v5810, %v5874
  %v5907 = vadd.f32 %v5811, %v5875
  %v5908 = vadd.f32 %v5812, %v5876
  %v5909 = vadd.f32 %v5813, %v5877
  %v5910 = vadd.f32 %v5814, %v5878
  %v5911 = vadd.f32 %v5815, %v5879
  %v5912 = vadd.f32 %v5816, %v5880
  %v5913 = vadd.f32 %v5817, %v5881
  %v5914 = vadd.f32 %v5818, %v5882
  %v5915 = vadd.f32 %v5819, %v5883
  %v5916 = vadd.f32 %v5820, %v5884
  %v5917 = vadd.f32 %v5821, %v5885
  %v5918 = vadd.f32 %v5822, %v5886
  %v5919 = vadd.f32 %v5823, %v5887
  %v5920 = vadd.f32 %v5824, %v5888
  %v5921 = vadd.f32 %v5825, %v5889
  %v5922 = vadd.f32 %v5826, %v5890
  %v5923 = vadd.f32 %v5827, %v5891
  %v5924 = vadd.f32 %v5828, %v5892
  %v5925 = vadd.f32 %v5829, %v5893
  %v5926 = vadd.f32 %v5830, %v5894
  %v5927 = vadd.f32 %v5831, %v5895
  %v5928 = vadd.f32 %v5832, %v5896
  %v5929 = vadd.f32 %v5833, %v5897
  %v5930 = vadd.f32 %v5834, %v5898
  %v5931 = vadd.f32 %v5835, %v5899
  %v5932 = vlaneseq
  %v5933 = vshrl.u32 %v5932, 7
  %v5934 = vsub.s32 3, %v5933
  %v5935 = vrot.slane %v5636, %v5934
  %v5936 = vlaneseq
  %v5937 = vshrl.u32 %v5936, 7
  %v5938 = vsub.s32 3, %v5937
  %v5939 = vrot.slane %v5637, %v5938
  %v5940 = vlaneseq
  %v5941 = vshrl.u32 %v5940, 7
  %v5942 = vsub.s32 3, %v5941
  %v5943 = vrot.slane %v5638, %v5942
  %v5944 = vlaneseq
  %v5945 = vshrl.u32 %v5944, 7
  %v5946 = vsub.s32 3, %v5945
  %v5947 = vrot.slane %v5639, %v5946
  %v5948 = vlaneseq
  %v5949 = vshrl.u32 %v5948, 7
  %v5950 = vsub.s32 3, %v5949
  %v5951 = vrot.slane %v5640, %v5950
  %v5952 = vlaneseq
  %v5953 = vshrl.u32 %v5952, 7
  %v5954 = vsub.s32 3, %v5953
  %v5955 = vrot.slane %v5641, %v5954
  %v5956 = vlaneseq
  %v5957 = vshrl.u32 %v5956, 7
  %v5958 = vsub.s32 3, %v5957
  %v5959 = vrot.slane %v5642, %v5958
  %v5960 = vlaneseq
  %v5961 = vshrl.u32 %v5960, 7
  %v5962 = vsub.s32 3, %v5961
  %v5963 = vrot.slane %v5643, %v5962
  %v5964 = vmul.f32 %v5935, %v5568
  %v5965 = vmul.f32 %v5935, %v5569
  %v5966 = vmul.f32 %v5935, %v5570
  %v5967 = vmul.f32 %v5935, %v5571
  %v5968 = vmul.f32 %v5939, %v5568
  %v5969 = vmul.f32 %v5939, %v5569
  %v5970 = vmul.f32 %v5939, %v5570
  %v5971 = vmul.f32 %v5939, %v5571
  %v5972 = vmul.f32 %v5943, %v5568
  %v5973 = vmul.f32 %v5943, %v5569
  %v5974 = vmul.f32 %v5943, %v5570
  %v5975 = vmul.f32 %v5943, %v5571
  %v5976 = vmul.f32 %v5947, %v5568
  %v5977 = vmul.f32 %v5947, %v5569
  %v5978 = vmul.f32 %v5947, %v5570
  %v5979 = vmul.f32 %v5947, %v5571
  %v5980 = vmul.f32 %v5951, %v5568
  %v5981 = vmul.f32 %v5951, %v5569
  %v5982 = vmul.f32 %v5951, %v5570
  %v5983 = vmul.f32 %v5951, %v5571
  %v5984 = vmul.f32 %v5955, %v5568
  %v5985 = vmul.f32 %v5955, %v5569
  %v5986 = vmul.f32 %v5955, %v5570
  %v5987 = vmul.f32 %v5955, %v5571
  %v5988 = vmul.f32 %v5959, %v5568
  %v5989 = vmul.f32 %v5959, %v5569
  %v5990 = vmul.f32 %v5959, %v5570
  %v5991 = vmul.f32 %v5959, %v5571
  %v5992 = vmul.f32 %v5963, %v5568
  %v5993 = vmul.f32 %v5963, %v5569
  %v5994 = vmul.f32 %v5963, %v5570
  %v5995 = vmul.f32 %v5963, %v5571
  %v5996 = vadd.f32 %v5900, %v5964
  %v5997 = vadd.f32 %v5901, %v5965
  %v5998 = vadd.f32 %v5902, %v5966
  %v5999 = vadd.f32 %v5903, %v5967
  %v6000 = vadd.f32 %v5904, %v5968
  %v6001 = vadd.f32 %v5905, %v5969
  %v6002 = vadd.f32 %v5906, %v5970
  %v6003 = vadd.f32 %v5907, %v5971
  %v6004 = vadd.f32 %v5908, %v5972
  %v6005 = vadd.f32 %v5909, %v5973
  %v6006 = vadd.f32 %v5910, %v5974
  %v6007 = vadd.f32 %v5911, %v5975
  %v6008 = vadd.f32 %v5912, %v5976
  %v6009 = vadd.f32 %v5913, %v5977
  %v6010 = vadd.f32 %v5914, %v5978
  %v6011 = vadd.f32 %v5915, %v5979
  %v6012 = vadd.f32 %v5916, %v5980
  %v6013 = vadd.f32 %v5917, %v5981
  %v6014 = vadd.f32 %v5918, %v5982
  %v6015 = vadd.f32 %v5919, %v5983
  %v6016 = vadd.f32 %v5920, %v5984
  %v6017 = vadd.f32 %v5921, %v5985
  %v6018 = vadd.f32 %v5922, %v5986
  %v6019 = vadd.f32 %v5923, %v5987
  %v6020 = vadd.f32 %v5924, %v5988
  %v6021 = vadd.f32 %v5925, %v5989
  %v6022 = vadd.f32 %v5926, %v5990
  %v6023 = vadd.f32 %v5927, %v5991
  %v6024 = vadd.f32 %v5928, %v5992
  %v6025 = vadd.f32 %v5929, %v5993
  %v6026 = vadd.f32 %v5930, %v5994
  %v6027 = vadd.f32 %v5931, %v5995
  %v6028 = vmax.f32 %v5996, 0.0
  %v6029 = vmax.f32 %v5997, 0.0
  %v6030 = vmax.f32 %v5998, 0.0
  %v6031 = vmax.f32 %v5999, 0.0
  %v6032 = vmax.f32 %v6000, 0.0
  %v6033 = vmax.f32 %v6001, 0.0
  %v6034 = vmax.f32 %v6002, 0.0
  %v6035 = vmax.f32 %v6003, 0.0
  %v6036 = vmax.f32 %v6004, 0.0
  %v6037 = vmax.f32 %v6005, 0.0
  %v6038 = vmax.f32 %v6006, 0.0
  %v6039 = vmax.f32 %v6007, 0.0
  %v6040 = vmax.f32 %v6008, 0.0
  %v6041 = vmax.f32 %v6009, 0.0
  %v6042 = vmax.f32 %v6010, 0.0
  %v6043 = vmax.f32 %v6011, 0.0
  %v6044 = vmax.f32 %v6012, 0.0
  %v6045 = vmax.f32 %v6013, 0.0
  %v6046 = vmax.f32 %v6014, 0.0
  %v6047 = vmax.f32 %v6015, 0.0
  %v6048 = vmax.f32 %v6016, 0.0
  %v6049 = vmax.f32 %v6017, 0.0
  %v6050 = vmax.f32 %v6018, 0.0
  %v6051 = vmax.f32 %v6019, 0.0
  %v6052 = vmax.f32 %v6020, 0.0
  %v6053 = vmax.f32 %v6021, 0.0
  %v6054 = vmax.f32 %v6022, 0.0
  %v6055 = vmax.f32 %v6023, 0.0
  %v6056 = vmax.f32 %v6024, 0.0
  %v6057 = vmax.f32 %v6025, 0.0
  %v6058 = vmax.f32 %v6026, 0.0
  %v6059 = vmax.f32 %v6027, 0.0
  %v6060 = vmul.f32 %v6028, %v5624
  %v6061 = vmul.f32 %v6029, %v5625
  %v6062 = vmul.f32 %v6030, %v5626
  %v6063 = vmul.f32 %v6031, %v5627
  %v6064 = vmul.f32 %v6032, %v5624
  %v6065 = vmul.f32 %v6033, %v5625
  %v6066 = vmul.f32 %v6034, %v5626
  %v6067 = vmul.f32 %v6035, %v5627
  %v6068 = vmul.f32 %v6036, %v5624
  %v6069 = vmul.f32 %v6037, %v5625
  %v6070 = vmul.f32 %v6038, %v5626
  %v6071 = vmul.f32 %v6039, %v5627
  %v6072 = vmul.f32 %v6040, %v5624
  %v6073 = vmul.f32 %v6041, %v5625
  %v6074 = vmul.f32 %v6042, %v5626
  %v6075 = vmul.f32 %v6043, %v5627
  %v6076 = vmul.f32 %v6044, %v5624
  %v6077 = vmul.f32 %v6045, %v5625
  %v6078 = vmul.f32 %v6046, %v5626
  %v6079 = vmul.f32 %v6047, %v5627
  %v6080 = vmul.f32 %v6048, %v5624
  %v6081 = vmul.f32 %v6049, %v5625
  %v6082 = vmul.f32 %v6050, %v5626
  %v6083 = vmul.f32 %v6051, %v5627
  %v6084 = vmul.f32 %v6052, %v5624
  %v6085 = vmul.f32 %v6053, %v5625
  %v6086 = vmul.f32 %v6054, %v5626
  %v6087 = vmul.f32 %v6055, %v5627
  %v6088 = vmul.f32 %v6056, %v5624
  %v6089 = vmul.f32 %v6057, %v5625
  %v6090 = vmul.f32 %v6058, %v5626
  %v6091 = vmul.f32 %v6059, %v5627
  %v6092 = vsel %vm517, %v6060, 0.0
  %v6093 = vsel %vm517, %v6061, 0.0
  %v6094 = vadd.f32 %v6092, %v6093
  %v6095 = vsel %vm517, %v6062, 0.0
  %v6096 = vadd.f32 %v6094, %v6095
  %v6097 = vsel %vm517, %v6063, 0.0
  %v6098 = vadd.f32 %v6096, %v6097
  %v6099 = vrot.slane %v6098, 4
  %v6100 = vadd.f32 %v6098, %v6099
  %v6101 = vrot.slane %v6100, 2
  %v6102 = vadd.f32 %v6100, %v6101
  %v6103 = vrot.slane %v6102, 1
  %v6104 = vadd.f32 %v6102, %v6103
  %v6105 = vsel %vm517, %v6064, 0.0
  %v6106 = vsel %vm517, %v6065, 0.0
  %v6107 = vadd.f32 %v6105, %v6106
  %v6108 = vsel %vm517, %v6066, 0.0
  %v6109 = vadd.f32 %v6107, %v6108
  %v6110 = vsel %vm517, %v6067, 0.0
  %v6111 = vadd.f32 %v6109, %v6110
  %v6112 = vrot.slane %v6111, 4
  %v6113 = vadd.f32 %v6111, %v6112
  %v6114 = vrot.slane %v6113, 2
  %v6115 = vadd.f32 %v6113, %v6114
  %v6116 = vrot.slane %v6115, 1
  %v6117 = vadd.f32 %v6115, %v6116
  %v6118 = vsel %vm517, %v6068, 0.0
  %v6119 = vsel %vm517, %v6069, 0.0
  %v6120 = vadd.f32 %v6118, %v6119
  %v6121 = vsel %vm517, %v6070, 0.0
  %v6122 = vadd.f32 %v6120, %v6121
  %v6123 = vsel %vm517, %v6071, 0.0
  %v6124 = vadd.f32 %v6122, %v6123
  %v6125 = vrot.slane %v6124, 4
  %v6126 = vadd.f32 %v6124, %v6125
  %v6127 = vrot.slane %v6126, 2
  %v6128 = vadd.f32 %v6126, %v6127
  %v6129 = vrot.slane %v6128, 1
  %v6130 = vadd.f32 %v6128, %v6129
  %v6131 = vsel %vm517, %v6072, 0.0
  %v6132 = vsel %vm517, %v6073, 0.0
  %v6133 = vadd.f32 %v6131, %v6132
  %v6134 = vsel %vm517, %v6074, 0.0
  %v6135 = vadd.f32 %v6133, %v6134
  %v6136 = vsel %vm517, %v6075, 0.0
  %v6137 = vadd.f32 %v6135, %v6136
  %v6138 = vrot.slane %v6137, 4
  %v6139 = vadd.f32 %v6137, %v6138
  %v6140 = vrot.slane %v6139, 2
  %v6141 = vadd.f32 %v6139, %v6140
  %v6142 = vrot.slane %v6141, 1
  %v6143 = vadd.f32 %v6141, %v6142
  %v6144 = vsel %vm517, %v6076, 0.0
  %v6145 = vsel %vm517, %v6077, 0.0
  %v6146 = vadd.f32 %v6144, %v6145
  %v6147 = vsel %vm517, %v6078, 0.0
  %v6148 = vadd.f32 %v6146, %v6147
  %v6149 = vsel %vm517, %v6079, 0.0
  %v6150 = vadd.f32 %v6148, %v6149
  %v6151 = vrot.slane %v6150, 4
  %v6152 = vadd.f32 %v6150, %v6151
  %v6153 = vrot.slane %v6152, 2
  %v6154 = vadd.f32 %v6152, %v6153
  %v6155 = vrot.slane %v6154, 1
  %v6156 = vadd.f32 %v6154, %v6155
  %v6157 = vsel %vm517, %v6080, 0.0
  %v6158 = vsel %vm517, %v6081, 0.0
  %v6159 = vadd.f32 %v6157, %v6158
  %v6160 = vsel %vm517, %v6082, 0.0
  %v6161 = vadd.f32 %v6159, %v6160
  %v6162 = vsel %vm517, %v6083, 0.0
  %v6163 = vadd.f32 %v6161, %v6162
  %v6164 = vrot.slane %v6163, 4
  %v6165 = vadd.f32 %v6163, %v6164
  %v6166 = vrot.slane %v6165, 2
  %v6167 = vadd.f32 %v6165, %v6166
  %v6168 = vrot.slane %v6167, 1
  %v6169 = vadd.f32 %v6167, %v6168
  %v6170 = vsel %vm517, %v6084, 0.0
  %v6171 = vsel %vm517, %v6085, 0.0
  %v6172 = vadd.f32 %v6170, %v6171
  %v6173 = vsel %vm517, %v6086, 0.0
  %v6174 = vadd.f32 %v6172, %v6173
  %v6175 = vsel %vm517, %v6087, 0.0
  %v6176 = vadd.f32 %v6174, %v6175
  %v6177 = vrot.slane %v6176, 4
  %v6178 = vadd.f32 %v6176, %v6177
  %v6179 = vrot.slane %v6178, 2
  %v6180 = vadd.f32 %v6178, %v6179
  %v6181 = vrot.slane %v6180, 1
  %v6182 = vadd.f32 %v6180, %v6181
  %v6183 = vsel %vm517, %v6088, 0.0
  %v6184 = vsel %vm517, %v6089, 0.0
  %v6185 = vadd.f32 %v6183, %v6184
  %v6186 = vsel %vm517, %v6090, 0.0
  %v6187 = vadd.f32 %v6185, %v6186
  %v6188 = vsel %vm517, %v6091, 0.0
  %v6189 = vadd.f32 %v6187, %v6188
  %v6190 = vrot.slane %v6189, 4
  %v6191 = vadd.f32 %v6189, %v6190
  %v6192 = vrot.slane %v6191, 2
  %v6193 = vadd.f32 %v6191, %v6192
  %v6194 = vrot.slane %v6193, 1
  %v6195 = vadd.f32 %v6193, %v6194
  %v6196 = vadd.f32 %v6104, %v5634
  %v6197 = vadd.f32 %v6117, %v5634
  %v6198 = vadd.f32 %v6130, %v5634
  %v6199 = vadd.f32 %v6143, %v5634
  %v6200 = vadd.f32 %v6156, %v5634
  %v6201 = vadd.f32 %v6169, %v5634
  %v6202 = vadd.f32 %v6182, %v5634
  %v6203 = vadd.f32 %v6195, %v5634
  %v6212 = vrot.slane %v5636, 4
  %v6213 = vrot.slane %v5637, 4
  %v6214 = vrot.slane %v5638, 4
  %v6215 = vrot.slane %v5639, 4
  %v6216 = vrot.slane %v5640, 4
  %v6217 = vrot.slane %v5641, 4
  %v6218 = vrot.slane %v5642, 4
  %v6219 = vrot.slane %v5643, 4
  %v6228 = vsub.f32 %v6196, %v6212
  %v6229 = vsub.f32 %v6197, %v6213
  %v6230 = vsub.f32 %v6198, %v6214
  %v6231 = vsub.f32 %v6199, %v6215
  %v6232 = vsub.f32 %v6200, %v6216
  %v6233 = vsub.f32 %v6201, %v6217
  %v6234 = vsub.f32 %v6202, %v6218
  %v6235 = vsub.f32 %v6203, %v6219
  %v6236 = vmul.f32 %v6228, 0.25
  %v6237 = vmul.f32 %v6229, 0.25
  %v6238 = vmul.f32 %v6230, 0.25
  %v6239 = vmul.f32 %v6231, 0.25
  %v6240 = vmul.f32 %v6232, 0.25
  %v6241 = vmul.f32 %v6233, 0.25
  %v6242 = vmul.f32 %v6234, 0.25
  %v6243 = vmul.f32 %v6235, 0.25
  %v6244 = vlaneseq
  %v6245 = vshrl.u32 %v6244, 7
  %v6246 = vsub.s32 0, %v6245
  %v6247 = vrot.slane %v6236, %v6246
  %v6248 = vlaneseq
  %v6249 = vshrl.u32 %v6248, 7
  %v6250 = vsub.s32 0, %v6249
  %v6251 = vrot.slane %v6237, %v6250
  %v6252 = vlaneseq
  %v6253 = vshrl.u32 %v6252, 7
  %v6254 = vsub.s32 0, %v6253
  %v6255 = vrot.slane %v6238, %v6254
  %v6256 = vlaneseq
  %v6257 = vshrl.u32 %v6256, 7
  %v6258 = vsub.s32 0, %v6257
  %v6259 = vrot.slane %v6239, %v6258
  %v6260 = vlaneseq
  %v6261 = vshrl.u32 %v6260, 7
  %v6262 = vsub.s32 0, %v6261
  %v6263 = vrot.slane %v6240, %v6262
  %v6264 = vlaneseq
  %v6265 = vshrl.u32 %v6264, 7
  %v6266 = vsub.s32 0, %v6265
  %v6267 = vrot.slane %v6241, %v6266
  %v6268 = vlaneseq
  %v6269 = vshrl.u32 %v6268, 7
  %v6270 = vsub.s32 0, %v6269
  %v6271 = vrot.slane %v6242, %v6270
  %v6272 = vlaneseq
  %v6273 = vshrl.u32 %v6272, 7
  %v6274 = vsub.s32 0, %v6273
  %v6275 = vrot.slane %v6243, %v6274
  %v6276 = vmul.f32 %v6247, %v6028
  %v6277 = vmul.f32 %v6247, %v6029
  %v6278 = vmul.f32 %v6247, %v6030
  %v6279 = vmul.f32 %v6247, %v6031
  %v6280 = vmul.f32 %v6251, %v6032
  %v6281 = vmul.f32 %v6251, %v6033
  %v6282 = vmul.f32 %v6251, %v6034
  %v6283 = vmul.f32 %v6251, %v6035
  %v6284 = vmul.f32 %v6255, %v6036
  %v6285 = vmul.f32 %v6255, %v6037
  %v6286 = vmul.f32 %v6255, %v6038
  %v6287 = vmul.f32 %v6255, %v6039
  %v6288 = vmul.f32 %v6259, %v6040
  %v6289 = vmul.f32 %v6259, %v6041
  %v6290 = vmul.f32 %v6259, %v6042
  %v6291 = vmul.f32 %v6259, %v6043
  %v6292 = vmul.f32 %v6263, %v6044
  %v6293 = vmul.f32 %v6263, %v6045
  %v6294 = vmul.f32 %v6263, %v6046
  %v6295 = vmul.f32 %v6263, %v6047
  %v6296 = vmul.f32 %v6267, %v6048
  %v6297 = vmul.f32 %v6267, %v6049
  %v6298 = vmul.f32 %v6267, %v6050
  %v6299 = vmul.f32 %v6267, %v6051
  %v6300 = vmul.f32 %v6271, %v6052
  %v6301 = vmul.f32 %v6271, %v6053
  %v6302 = vmul.f32 %v6271, %v6054
  %v6303 = vmul.f32 %v6271, %v6055
  %v6304 = vmul.f32 %v6275, %v6056
  %v6305 = vmul.f32 %v6275, %v6057
  %v6306 = vmul.f32 %v6275, %v6058
  %v6307 = vmul.f32 %v6275, %v6059
  %v6308 = vsel %vm517, %v6276, 0.0
  %v6309 = vsel %vm517, %v6280, 0.0
  %v6310 = vadd.f32 %v6308, %v6309
  %v6311 = vsel %vm517, %v6284, 0.0
  %v6312 = vadd.f32 %v6310, %v6311
  %v6313 = vsel %vm517, %v6288, 0.0
  %v6314 = vadd.f32 %v6312, %v6313
  %v6315 = vsel %vm517, %v6292, 0.0
  %v6316 = vadd.f32 %v6314, %v6315
  %v6317 = vsel %vm517, %v6296, 0.0
  %v6318 = vadd.f32 %v6316, %v6317
  %v6319 = vsel %vm517, %v6300, 0.0
  %v6320 = vadd.f32 %v6318, %v6319
  %v6321 = vsel %vm517, %v6304, 0.0
  %v6322 = vadd.f32 %v6320, %v6321
  %v6323 = vsel %vm517, %v6277, 0.0
  %v6324 = vsel %vm517, %v6281, 0.0
  %v6325 = vadd.f32 %v6323, %v6324
  %v6326 = vsel %vm517, %v6285, 0.0
  %v6327 = vadd.f32 %v6325, %v6326
  %v6328 = vsel %vm517, %v6289, 0.0
  %v6329 = vadd.f32 %v6327, %v6328
  %v6330 = vsel %vm517, %v6293, 0.0
  %v6331 = vadd.f32 %v6329, %v6330
  %v6332 = vsel %vm517, %v6297, 0.0
  %v6333 = vadd.f32 %v6331, %v6332
  %v6334 = vsel %vm517, %v6301, 0.0
  %v6335 = vadd.f32 %v6333, %v6334
  %v6336 = vsel %vm517, %v6305, 0.0
  %v6337 = vadd.f32 %v6335, %v6336
  %v6338 = vsel %vm517, %v6278, 0.0
  %v6339 = vsel %vm517, %v6282, 0.0
  %v6340 = vadd.f32 %v6338, %v6339
  %v6341 = vsel %vm517, %v6286, 0.0
  %v6342 = vadd.f32 %v6340, %v6341
  %v6343 = vsel %vm517, %v6290, 0.0
  %v6344 = vadd.f32 %v6342, %v6343
  %v6345 = vsel %vm517, %v6294, 0.0
  %v6346 = vadd.f32 %v6344, %v6345
  %v6347 = vsel %vm517, %v6298, 0.0
  %v6348 = vadd.f32 %v6346, %v6347
  %v6349 = vsel %vm517, %v6302, 0.0
  %v6350 = vadd.f32 %v6348, %v6349
  %v6351 = vsel %vm517, %v6306, 0.0
  %v6352 = vadd.f32 %v6350, %v6351
  %v6353 = vsel %vm517, %v6279, 0.0
  %v6354 = vsel %vm517, %v6283, 0.0
  %v6355 = vadd.f32 %v6353, %v6354
  %v6356 = vsel %vm517, %v6287, 0.0
  %v6357 = vadd.f32 %v6355, %v6356
  %v6358 = vsel %vm517, %v6291, 0.0
  %v6359 = vadd.f32 %v6357, %v6358
  %v6360 = vsel %vm517, %v6295, 0.0
  %v6361 = vadd.f32 %v6359, %v6360
  %v6362 = vsel %vm517, %v6299, 0.0
  %v6363 = vadd.f32 %v6361, %v6362
  %v6364 = vsel %vm517, %v6303, 0.0
  %v6365 = vadd.f32 %v6363, %v6364
  %v6366 = vsel %vm517, %v6307, 0.0
  %v6367 = vadd.f32 %v6365, %v6366
  %v6368 = vsel %vm794, %v6236, 0.0
  %v6369 = vsel %vm794, %v6237, 0.0
  %v6370 = vadd.f32 %v6368, %v6369
  %v6371 = vsel %vm794, %v6238, 0.0
  %v6372 = vadd.f32 %v6370, %v6371
  %v6373 = vsel %vm794, %v6239, 0.0
  %v6374 = vadd.f32 %v6372, %v6373
  %v6375 = vsel %vm794, %v6240, 0.0
  %v6376 = vadd.f32 %v6374, %v6375
  %v6377 = vsel %vm794, %v6241, 0.0
  %v6378 = vadd.f32 %v6376, %v6377
  %v6379 = vsel %vm794, %v6242, 0.0
  %v6380 = vadd.f32 %v6378, %v6379
  %v6381 = vsel %vm794, %v6243, 0.0
  %v6382 = vadd.f32 %v6380, %v6381
  %vm6383 = vcmp.gt.f32.partialorder %v6028, 0.0
  %vm6384 = vcmp.gt.f32.partialorder %v6029, 0.0
  %vm6385 = vcmp.gt.f32.partialorder %v6030, 0.0
  %vm6386 = vcmp.gt.f32.partialorder %v6031, 0.0
  %vm6387 = vcmp.gt.f32.partialorder %v6032, 0.0
  %vm6388 = vcmp.gt.f32.partialorder %v6033, 0.0
  %vm6389 = vcmp.gt.f32.partialorder %v6034, 0.0
  %vm6390 = vcmp.gt.f32.partialorder %v6035, 0.0
  %vm6391 = vcmp.gt.f32.partialorder %v6036, 0.0
  %vm6392 = vcmp.gt.f32.partialorder %v6037, 0.0
  %vm6393 = vcmp.gt.f32.partialorder %v6038, 0.0
  %vm6394 = vcmp.gt.f32.partialorder %v6039, 0.0
  %vm6395 = vcmp.gt.f32.partialorder %v6040, 0.0
  %vm6396 = vcmp.gt.f32.partialorder %v6041, 0.0
  %vm6397 = vcmp.gt.f32.partialorder %v6042, 0.0
  %vm6398 = vcmp.gt.f32.partialorder %v6043, 0.0
  %vm6399 = vcmp.gt.f32.partialorder %v6044, 0.0
  %vm6400 = vcmp.gt.f32.partialorder %v6045, 0.0
  %vm6401 = vcmp.gt.f32.partialorder %v6046, 0.0
  %vm6402 = vcmp.gt.f32.partialorder %v6047, 0.0
  %vm6403 = vcmp.gt.f32.partialorder %v6048, 0.0
  %vm6404 = vcmp.gt.f32.partialorder %v6049, 0.0
  %vm6405 = vcmp.gt.f32.partialorder %v6050, 0.0
  %vm6406 = vcmp.gt.f32.partialorder %v6051, 0.0
  %vm6407 = vcmp.gt.f32.partialorder %v6052, 0.0
  %vm6408 = vcmp.gt.f32.partialorder %v6053, 0.0
  %vm6409 = vcmp.gt.f32.partialorder %v6054, 0.0
  %vm6410 = vcmp.gt.f32.partialorder %v6055, 0.0
  %vm6411 = vcmp.gt.f32.partialorder %v6056, 0.0
  %vm6412 = vcmp.gt.f32.partialorder %v6057, 0.0
  %vm6413 = vcmp.gt.f32.partialorder %v6058, 0.0
  %vm6414 = vcmp.gt.f32.partialorder %v6059, 0.0
  %v6415 = vmul.f32 %v6247, %v5624
  %v6416 = vmul.f32 %v6247, %v5625
  %v6417 = vmul.f32 %v6247, %v5626
  %v6418 = vmul.f32 %v6247, %v5627
  %v6419 = vmul.f32 %v6251, %v5624
  %v6420 = vmul.f32 %v6251, %v5625
  %v6421 = vmul.f32 %v6251, %v5626
  %v6422 = vmul.f32 %v6251, %v5627
  %v6423 = vmul.f32 %v6255, %v5624
  %v6424 = vmul.f32 %v6255, %v5625
  %v6425 = vmul.f32 %v6255, %v5626
  %v6426 = vmul.f32 %v6255, %v5627
  %v6427 = vmul.f32 %v6259, %v5624
  %v6428 = vmul.f32 %v6259, %v5625
  %v6429 = vmul.f32 %v6259, %v5626
  %v6430 = vmul.f32 %v6259, %v5627
  %v6431 = vmul.f32 %v6263, %v5624
  %v6432 = vmul.f32 %v6263, %v5625
  %v6433 = vmul.f32 %v6263, %v5626
  %v6434 = vmul.f32 %v6263, %v5627
  %v6435 = vmul.f32 %v6267, %v5624
  %v6436 = vmul.f32 %v6267, %v5625
  %v6437 = vmul.f32 %v6267, %v5626
  %v6438 = vmul.f32 %v6267, %v5627
  %v6439 = vmul.f32 %v6271, %v5624
  %v6440 = vmul.f32 %v6271, %v5625
  %v6441 = vmul.f32 %v6271, %v5626
  %v6442 = vmul.f32 %v6271, %v5627
  %v6443 = vmul.f32 %v6275, %v5624
  %v6444 = vmul.f32 %v6275, %v5625
  %v6445 = vmul.f32 %v6275, %v5626
  %v6446 = vmul.f32 %v6275, %v5627
  %v6447 = vsel %vm6383, %v6415, 0.0
  %v6448 = vsel %vm6384, %v6416, 0.0
  %v6449 = vsel %vm6385, %v6417, 0.0
  %v6450 = vsel %vm6386, %v6418, 0.0
  %v6451 = vsel %vm6387, %v6419, 0.0
  %v6452 = vsel %vm6388, %v6420, 0.0
  %v6453 = vsel %vm6389, %v6421, 0.0
  %v6454 = vsel %vm6390, %v6422, 0.0
  %v6455 = vsel %vm6391, %v6423, 0.0
  %v6456 = vsel %vm6392, %v6424, 0.0
  %v6457 = vsel %vm6393, %v6425, 0.0
  %v6458 = vsel %vm6394, %v6426, 0.0
  %v6459 = vsel %vm6395, %v6427, 0.0
  %v6460 = vsel %vm6396, %v6428, 0.0
  %v6461 = vsel %vm6397, %v6429, 0.0
  %v6462 = vsel %vm6398, %v6430, 0.0
  %v6463 = vsel %vm6399, %v6431, 0.0
  %v6464 = vsel %vm6400, %v6432, 0.0
  %v6465 = vsel %vm6401, %v6433, 0.0
  %v6466 = vsel %vm6402, %v6434, 0.0
  %v6467 = vsel %vm6403, %v6435, 0.0
  %v6468 = vsel %vm6404, %v6436, 0.0
  %v6469 = vsel %vm6405, %v6437, 0.0
  %v6470 = vsel %vm6406, %v6438, 0.0
  %v6471 = vsel %vm6407, %v6439, 0.0
  %v6472 = vsel %vm6408, %v6440, 0.0
  %v6473 = vsel %vm6409, %v6441, 0.0
  %v6474 = vsel %vm6410, %v6442, 0.0
  %v6475 = vsel %vm6411, %v6443, 0.0
  %v6476 = vsel %vm6412, %v6444, 0.0
  %v6477 = vsel %vm6413, %v6445, 0.0
  %v6478 = vsel %vm6414, %v6446, 0.0
  %v6479 = vsel %vm517, %v6447, 0.0
  %v6480 = vsel %vm517, %v6451, 0.0
  %v6481 = vadd.f32 %v6479, %v6480
  %v6482 = vsel %vm517, %v6455, 0.0
  %v6483 = vadd.f32 %v6481, %v6482
  %v6484 = vsel %vm517, %v6459, 0.0
  %v6485 = vadd.f32 %v6483, %v6484
  %v6486 = vsel %vm517, %v6463, 0.0
  %v6487 = vadd.f32 %v6485, %v6486
  %v6488 = vsel %vm517, %v6467, 0.0
  %v6489 = vadd.f32 %v6487, %v6488
  %v6490 = vsel %vm517, %v6471, 0.0
  %v6491 = vadd.f32 %v6489, %v6490
  %v6492 = vsel %vm517, %v6475, 0.0
  %v6493 = vadd.f32 %v6491, %v6492
  %v6494 = vsel %vm517, %v6448, 0.0
  %v6495 = vsel %vm517, %v6452, 0.0
  %v6496 = vadd.f32 %v6494, %v6495
  %v6497 = vsel %vm517, %v6456, 0.0
  %v6498 = vadd.f32 %v6496, %v6497
  %v6499 = vsel %vm517, %v6460, 0.0
  %v6500 = vadd.f32 %v6498, %v6499
  %v6501 = vsel %vm517, %v6464, 0.0
  %v6502 = vadd.f32 %v6500, %v6501
  %v6503 = vsel %vm517, %v6468, 0.0
  %v6504 = vadd.f32 %v6502, %v6503
  %v6505 = vsel %vm517, %v6472, 0.0
  %v6506 = vadd.f32 %v6504, %v6505
  %v6507 = vsel %vm517, %v6476, 0.0
  %v6508 = vadd.f32 %v6506, %v6507
  %v6509 = vsel %vm517, %v6449, 0.0
  %v6510 = vsel %vm517, %v6453, 0.0
  %v6511 = vadd.f32 %v6509, %v6510
  %v6512 = vsel %vm517, %v6457, 0.0
  %v6513 = vadd.f32 %v6511, %v6512
  %v6514 = vsel %vm517, %v6461, 0.0
  %v6515 = vadd.f32 %v6513, %v6514
  %v6516 = vsel %vm517, %v6465, 0.0
  %v6517 = vadd.f32 %v6515, %v6516
  %v6518 = vsel %vm517, %v6469, 0.0
  %v6519 = vadd.f32 %v6517, %v6518
  %v6520 = vsel %vm517, %v6473, 0.0
  %v6521 = vadd.f32 %v6519, %v6520
  %v6522 = vsel %vm517, %v6477, 0.0
  %v6523 = vadd.f32 %v6521, %v6522
  %v6524 = vsel %vm517, %v6450, 0.0
  %v6525 = vsel %vm517, %v6454, 0.0
  %v6526 = vadd.f32 %v6524, %v6525
  %v6527 = vsel %vm517, %v6458, 0.0
  %v6528 = vadd.f32 %v6526, %v6527
  %v6529 = vsel %vm517, %v6462, 0.0
  %v6530 = vadd.f32 %v6528, %v6529
  %v6531 = vsel %vm517, %v6466, 0.0
  %v6532 = vadd.f32 %v6530, %v6531
  %v6533 = vsel %vm517, %v6470, 0.0
  %v6534 = vadd.f32 %v6532, %v6533
  %v6535 = vsel %vm517, %v6474, 0.0
  %v6536 = vadd.f32 %v6534, %v6535
  %v6537 = vsel %vm517, %v6478, 0.0
  %v6538 = vadd.f32 %v6536, %v6537
  %v6539 = vmul.f32 %v5647, %v6447
  %v6540 = vmul.f32 %v5647, %v6448
  %v6541 = vmul.f32 %v5647, %v6449
  %v6542 = vmul.f32 %v5647, %v6450
  %v6543 = vmul.f32 %v5651, %v6451
  %v6544 = vmul.f32 %v5651, %v6452
  %v6545 = vmul.f32 %v5651, %v6453
  %v6546 = vmul.f32 %v5651, %v6454
  %v6547 = vmul.f32 %v5655, %v6455
  %v6548 = vmul.f32 %v5655, %v6456
  %v6549 = vmul.f32 %v5655, %v6457
  %v6550 = vmul.f32 %v5655, %v6458
  %v6551 = vmul.f32 %v5659, %v6459
  %v6552 = vmul.f32 %v5659, %v6460
  %v6553 = vmul.f32 %v5659, %v6461
  %v6554 = vmul.f32 %v5659, %v6462
  %v6555 = vmul.f32 %v5663, %v6463
  %v6556 = vmul.f32 %v5663, %v6464
  %v6557 = vmul.f32 %v5663, %v6465
  %v6558 = vmul.f32 %v5663, %v6466
  %v6559 = vmul.f32 %v5667, %v6467
  %v6560 = vmul.f32 %v5667, %v6468
  %v6561 = vmul.f32 %v5667, %v6469
  %v6562 = vmul.f32 %v5667, %v6470
  %v6563 = vmul.f32 %v5671, %v6471
  %v6564 = vmul.f32 %v5671, %v6472
  %v6565 = vmul.f32 %v5671, %v6473
  %v6566 = vmul.f32 %v5671, %v6474
  %v6567 = vmul.f32 %v5675, %v6475
  %v6568 = vmul.f32 %v5675, %v6476
  %v6569 = vmul.f32 %v5675, %v6477
  %v6570 = vmul.f32 %v5675, %v6478
  %v6571 = vsel %vm517, %v6539, 0.0
  %v6572 = vsel %vm517, %v6543, 0.0
  %v6573 = vadd.f32 %v6571, %v6572
  %v6574 = vsel %vm517, %v6547, 0.0
  %v6575 = vadd.f32 %v6573, %v6574
  %v6576 = vsel %vm517, %v6551, 0.0
  %v6577 = vadd.f32 %v6575, %v6576
  %v6578 = vsel %vm517, %v6555, 0.0
  %v6579 = vadd.f32 %v6577, %v6578
  %v6580 = vsel %vm517, %v6559, 0.0
  %v6581 = vadd.f32 %v6579, %v6580
  %v6582 = vsel %vm517, %v6563, 0.0
  %v6583 = vadd.f32 %v6581, %v6582
  %v6584 = vsel %vm517, %v6567, 0.0
  %v6585 = vadd.f32 %v6583, %v6584
  %v6586 = vsel %vm517, %v6540, 0.0
  %v6587 = vsel %vm517, %v6544, 0.0
  %v6588 = vadd.f32 %v6586, %v6587
  %v6589 = vsel %vm517, %v6548, 0.0
  %v6590 = vadd.f32 %v6588, %v6589
  %v6591 = vsel %vm517, %v6552, 0.0
  %v6592 = vadd.f32 %v6590, %v6591
  %v6593 = vsel %vm517, %v6556, 0.0
  %v6594 = vadd.f32 %v6592, %v6593
  %v6595 = vsel %vm517, %v6560, 0.0
  %v6596 = vadd.f32 %v6594, %v6595
  %v6597 = vsel %vm517, %v6564, 0.0
  %v6598 = vadd.f32 %v6596, %v6597
  %v6599 = vsel %vm517, %v6568, 0.0
  %v6600 = vadd.f32 %v6598, %v6599
  %v6601 = vsel %vm517, %v6541, 0.0
  %v6602 = vsel %vm517, %v6545, 0.0
  %v6603 = vadd.f32 %v6601, %v6602
  %v6604 = vsel %vm517, %v6549, 0.0
  %v6605 = vadd.f32 %v6603, %v6604
  %v6606 = vsel %vm517, %v6553, 0.0
  %v6607 = vadd.f32 %v6605, %v6606
  %v6608 = vsel %vm517, %v6557, 0.0
  %v6609 = vadd.f32 %v6607, %v6608
  %v6610 = vsel %vm517, %v6561, 0.0
  %v6611 = vadd.f32 %v6609, %v6610
  %v6612 = vsel %vm517, %v6565, 0.0
  %v6613 = vadd.f32 %v6611, %v6612
  %v6614 = vsel %vm517, %v6569, 0.0
  %v6615 = vadd.f32 %v6613, %v6614
  %v6616 = vsel %vm517, %v6542, 0.0
  %v6617 = vsel %vm517, %v6546, 0.0
  %v6618 = vadd.f32 %v6616, %v6617
  %v6619 = vsel %vm517, %v6550, 0.0
  %v6620 = vadd.f32 %v6618, %v6619
  %v6621 = vsel %vm517, %v6554, 0.0
  %v6622 = vadd.f32 %v6620, %v6621
  %v6623 = vsel %vm517, %v6558, 0.0
  %v6624 = vadd.f32 %v6622, %v6623
  %v6625 = vsel %vm517, %v6562, 0.0
  %v6626 = vadd.f32 %v6624, %v6625
  %v6627 = vsel %vm517, %v6566, 0.0
  %v6628 = vadd.f32 %v6626, %v6627
  %v6629 = vsel %vm517, %v6570, 0.0
  %v6630 = vadd.f32 %v6628, %v6629
  %v6631 = vmax.f32 %v6585, -10.0
  %v6632 = vmax.f32 %v6600, -10.0
  %v6633 = vmax.f32 %v6615, -10.0
  %v6634 = vmax.f32 %v6630, -10.0
  %v6635 = vmin.f32 %v6631, 10.0
  %v6636 = vmin.f32 %v6632, 10.0
  %v6637 = vmin.f32 %v6633, 10.0
  %v6638 = vmin.f32 %v6634, 10.0
  %v6639 = vand.u32 2147483647, %v6585
  %v6640 = vand.u32 2147483647, %v6600
  %v6641 = vand.u32 2147483647, %v6615
  %v6642 = vand.u32 2147483647, %v6630
  %vm6643 = vcmp.eq.f32.partialorder %v6639, 10.0
  %vm6644 = vcmp.eq.f32.partialorder %v6640, 10.0
  %vm6645 = vcmp.eq.f32.partialorder %v6641, 10.0
  %vm6646 = vcmp.eq.f32.partialorder %v6642, 10.0
  %v6647 = vsel %vm6643, 0.0, %v6635
  %v6648 = vsel %vm6644, 0.0, %v6636
  %v6649 = vsel %vm6645, 0.0, %v6637
  %v6650 = vsel %vm6646, 0.0, %v6638
  %v6651 = vmul.f32 %v6647, 0.01
  %v6652 = vmul.f32 %v6648, 0.01
  %v6653 = vmul.f32 %v6649, 0.01
  %v6654 = vmul.f32 %v6650, 0.01
  %v6655 = vsub.f32 %v5208, %v6651
  %v6656 = vsub.f32 %v5209, %v6652
  %v6657 = vsub.f32 %v5210, %v6653
  %v6658 = vsub.f32 %v5211, %v6654
  %v6659 = vmul.f32 %v5743, %v6447
  %v6660 = vmul.f32 %v5743, %v6448
  %v6661 = vmul.f32 %v5743, %v6449
  %v6662 = vmul.f32 %v5743, %v6450
  %v6663 = vmul.f32 %v5747, %v6451
  %v6664 = vmul.f32 %v5747, %v6452
  %v6665 = vmul.f32 %v5747, %v6453
  %v6666 = vmul.f32 %v5747, %v6454
  %v6667 = vmul.f32 %v5751, %v6455
  %v6668 = vmul.f32 %v5751, %v6456
  %v6669 = vmul.f32 %v5751, %v6457
  %v6670 = vmul.f32 %v5751, %v6458
  %v6671 = vmul.f32 %v5755, %v6459
  %v6672 = vmul.f32 %v5755, %v6460
  %v6673 = vmul.f32 %v5755, %v6461
  %v6674 = vmul.f32 %v5755, %v6462
  %v6675 = vmul.f32 %v5759, %v6463
  %v6676 = vmul.f32 %v5759, %v6464
  %v6677 = vmul.f32 %v5759, %v6465
  %v6678 = vmul.f32 %v5759, %v6466
  %v6679 = vmul.f32 %v5763, %v6467
  %v6680 = vmul.f32 %v5763, %v6468
  %v6681 = vmul.f32 %v5763, %v6469
  %v6682 = vmul.f32 %v5763, %v6470
  %v6683 = vmul.f32 %v5767, %v6471
  %v6684 = vmul.f32 %v5767, %v6472
  %v6685 = vmul.f32 %v5767, %v6473
  %v6686 = vmul.f32 %v5767, %v6474
  %v6687 = vmul.f32 %v5771, %v6475
  %v6688 = vmul.f32 %v5771, %v6476
  %v6689 = vmul.f32 %v5771, %v6477
  %v6690 = vmul.f32 %v5771, %v6478
  %v6691 = vsel %vm517, %v6659, 0.0
  %v6692 = vsel %vm517, %v6663, 0.0
  %v6693 = vadd.f32 %v6691, %v6692
  %v6694 = vsel %vm517, %v6667, 0.0
  %v6695 = vadd.f32 %v6693, %v6694
  %v6696 = vsel %vm517, %v6671, 0.0
  %v6697 = vadd.f32 %v6695, %v6696
  %v6698 = vsel %vm517, %v6675, 0.0
  %v6699 = vadd.f32 %v6697, %v6698
  %v6700 = vsel %vm517, %v6679, 0.0
  %v6701 = vadd.f32 %v6699, %v6700
  %v6702 = vsel %vm517, %v6683, 0.0
  %v6703 = vadd.f32 %v6701, %v6702
  %v6704 = vsel %vm517, %v6687, 0.0
  %v6705 = vadd.f32 %v6703, %v6704
  %v6706 = vsel %vm517, %v6660, 0.0
  %v6707 = vsel %vm517, %v6664, 0.0
  %v6708 = vadd.f32 %v6706, %v6707
  %v6709 = vsel %vm517, %v6668, 0.0
  %v6710 = vadd.f32 %v6708, %v6709
  %v6711 = vsel %vm517, %v6672, 0.0
  %v6712 = vadd.f32 %v6710, %v6711
  %v6713 = vsel %vm517, %v6676, 0.0
  %v6714 = vadd.f32 %v6712, %v6713
  %v6715 = vsel %vm517, %v6680, 0.0
  %v6716 = vadd.f32 %v6714, %v6715
  %v6717 = vsel %vm517, %v6684, 0.0
  %v6718 = vadd.f32 %v6716, %v6717
  %v6719 = vsel %vm517, %v6688, 0.0
  %v6720 = vadd.f32 %v6718, %v6719
  %v6721 = vsel %vm517, %v6661, 0.0
  %v6722 = vsel %vm517, %v6665, 0.0
  %v6723 = vadd.f32 %v6721, %v6722
  %v6724 = vsel %vm517, %v6669, 0.0
  %v6725 = vadd.f32 %v6723, %v6724
  %v6726 = vsel %vm517, %v6673, 0.0
  %v6727 = vadd.f32 %v6725, %v6726
  %v6728 = vsel %vm517, %v6677, 0.0
  %v6729 = vadd.f32 %v6727, %v6728
  %v6730 = vsel %vm517, %v6681, 0.0
  %v6731 = vadd.f32 %v6729, %v6730
  %v6732 = vsel %vm517, %v6685, 0.0
  %v6733 = vadd.f32 %v6731, %v6732
  %v6734 = vsel %vm517, %v6689, 0.0
  %v6735 = vadd.f32 %v6733, %v6734
  %v6736 = vsel %vm517, %v6662, 0.0
  %v6737 = vsel %vm517, %v6666, 0.0
  %v6738 = vadd.f32 %v6736, %v6737
  %v6739 = vsel %vm517, %v6670, 0.0
  %v6740 = vadd.f32 %v6738, %v6739
  %v6741 = vsel %vm517, %v6674, 0.0
  %v6742 = vadd.f32 %v6740, %v6741
  %v6743 = vsel %vm517, %v6678, 0.0
  %v6744 = vadd.f32 %v6742, %v6743
  %v6745 = vsel %vm517, %v6682, 0.0
  %v6746 = vadd.f32 %v6744, %v6745
  %v6747 = vsel %vm517, %v6686, 0.0
  %v6748 = vadd.f32 %v6746, %v6747
  %v6749 = vsel %vm517, %v6690, 0.0
  %v6750 = vadd.f32 %v6748, %v6749
  %v6751 = vmax.f32 %v6705, -10.0
  %v6752 = vmax.f32 %v6720, -10.0
  %v6753 = vmax.f32 %v6735, -10.0
  %v6754 = vmax.f32 %v6750, -10.0
  %v6755 = vmin.f32 %v6751, 10.0
  %v6756 = vmin.f32 %v6752, 10.0
  %v6757 = vmin.f32 %v6753, 10.0
  %v6758 = vmin.f32 %v6754, 10.0
  %v6759 = vand.u32 2147483647, %v6705
  %v6760 = vand.u32 2147483647, %v6720
  %v6761 = vand.u32 2147483647, %v6735
  %v6762 = vand.u32 2147483647, %v6750
  %vm6763 = vcmp.eq.f32.partialorder %v6759, 10.0
  %vm6764 = vcmp.eq.f32.partialorder %v6760, 10.0
  %vm6765 = vcmp.eq.f32.partialorder %v6761, 10.0
  %vm6766 = vcmp.eq.f32.partialorder %v6762, 10.0
  %v6767 = vsel %vm6763, 0.0, %v6755
  %v6768 = vsel %vm6764, 0.0, %v6756
  %v6769 = vsel %vm6765, 0.0, %v6757
  %v6770 = vsel %vm6766, 0.0, %v6758
  %v6771 = vmul.f32 %v6767, 0.01
  %v6772 = vmul.f32 %v6768, 0.01
  %v6773 = vmul.f32 %v6769, 0.01
  %v6774 = vmul.f32 %v6770, 0.01
  %v6775 = vsub.f32 %v5328, %v6771
  %v6776 = vsub.f32 %v5329, %v6772
  %v6777 = vsub.f32 %v5330, %v6773
  %v6778 = vsub.f32 %v5331, %v6774
  %v6779 = vmul.f32 %v5839, %v6447
  %v6780 = vmul.f32 %v5839, %v6448
  %v6781 = vmul.f32 %v5839, %v6449
  %v6782 = vmul.f32 %v5839, %v6450
  %v6783 = vmul.f32 %v5843, %v6451
  %v6784 = vmul.f32 %v5843, %v6452
  %v6785 = vmul.f32 %v5843, %v6453
  %v6786 = vmul.f32 %v5843, %v6454
  %v6787 = vmul.f32 %v5847, %v6455
  %v6788 = vmul.f32 %v5847, %v6456
  %v6789 = vmul.f32 %v5847, %v6457
  %v6790 = vmul.f32 %v5847, %v6458
  %v6791 = vmul.f32 %v5851, %v6459
  %v6792 = vmul.f32 %v5851, %v6460
  %v6793 = vmul.f32 %v5851, %v6461
  %v6794 = vmul.f32 %v5851, %v6462
  %v6795 = vmul.f32 %v5855, %v6463
  %v6796 = vmul.f32 %v5855, %v6464
  %v6797 = vmul.f32 %v5855, %v6465
  %v6798 = vmul.f32 %v5855, %v6466
  %v6799 = vmul.f32 %v5859, %v6467
  %v6800 = vmul.f32 %v5859, %v6468
  %v6801 = vmul.f32 %v5859, %v6469
  %v6802 = vmul.f32 %v5859, %v6470
  %v6803 = vmul.f32 %v5863, %v6471
  %v6804 = vmul.f32 %v5863, %v6472
  %v6805 = vmul.f32 %v5863, %v6473
  %v6806 = vmul.f32 %v5863, %v6474
  %v6807 = vmul.f32 %v5867, %v6475
  %v6808 = vmul.f32 %v5867, %v6476
  %v6809 = vmul.f32 %v5867, %v6477
  %v6810 = vmul.f32 %v5867, %v6478
  %v6811 = vsel %vm517, %v6779, 0.0
  %v6812 = vsel %vm517, %v6783, 0.0
  %v6813 = vadd.f32 %v6811, %v6812
  %v6814 = vsel %vm517, %v6787, 0.0
  %v6815 = vadd.f32 %v6813, %v6814
  %v6816 = vsel %vm517, %v6791, 0.0
  %v6817 = vadd.f32 %v6815, %v6816
  %v6818 = vsel %vm517, %v6795, 0.0
  %v6819 = vadd.f32 %v6817, %v6818
  %v6820 = vsel %vm517, %v6799, 0.0
  %v6821 = vadd.f32 %v6819, %v6820
  %v6822 = vsel %vm517, %v6803, 0.0
  %v6823 = vadd.f32 %v6821, %v6822
  %v6824 = vsel %vm517, %v6807, 0.0
  %v6825 = vadd.f32 %v6823, %v6824
  %v6826 = vsel %vm517, %v6780, 0.0
  %v6827 = vsel %vm517, %v6784, 0.0
  %v6828 = vadd.f32 %v6826, %v6827
  %v6829 = vsel %vm517, %v6788, 0.0
  %v6830 = vadd.f32 %v6828, %v6829
  %v6831 = vsel %vm517, %v6792, 0.0
  %v6832 = vadd.f32 %v6830, %v6831
  %v6833 = vsel %vm517, %v6796, 0.0
  %v6834 = vadd.f32 %v6832, %v6833
  %v6835 = vsel %vm517, %v6800, 0.0
  %v6836 = vadd.f32 %v6834, %v6835
  %v6837 = vsel %vm517, %v6804, 0.0
  %v6838 = vadd.f32 %v6836, %v6837
  %v6839 = vsel %vm517, %v6808, 0.0
  %v6840 = vadd.f32 %v6838, %v6839
  %v6841 = vsel %vm517, %v6781, 0.0
  %v6842 = vsel %vm517, %v6785, 0.0
  %v6843 = vadd.f32 %v6841, %v6842
  %v6844 = vsel %vm517, %v6789, 0.0
  %v6845 = vadd.f32 %v6843, %v6844
  %v6846 = vsel %vm517, %v6793, 0.0
  %v6847 = vadd.f32 %v6845, %v6846
  %v6848 = vsel %vm517, %v6797, 0.0
  %v6849 = vadd.f32 %v6847, %v6848
  %v6850 = vsel %vm517, %v6801, 0.0
  %v6851 = vadd.f32 %v6849, %v6850
  %v6852 = vsel %vm517, %v6805, 0.0
  %v6853 = vadd.f32 %v6851, %v6852
  %v6854 = vsel %vm517, %v6809, 0.0
  %v6855 = vadd.f32 %v6853, %v6854
  %v6856 = vsel %vm517, %v6782, 0.0
  %v6857 = vsel %vm517, %v6786, 0.0
  %v6858 = vadd.f32 %v6856, %v6857
  %v6859 = vsel %vm517, %v6790, 0.0
  %v6860 = vadd.f32 %v6858, %v6859
  %v6861 = vsel %vm517, %v6794, 0.0
  %v6862 = vadd.f32 %v6860, %v6861
  %v6863 = vsel %vm517, %v6798, 0.0
  %v6864 = vadd.f32 %v6862, %v6863
  %v6865 = vsel %vm517, %v6802, 0.0
  %v6866 = vadd.f32 %v6864, %v6865
  %v6867 = vsel %vm517, %v6806, 0.0
  %v6868 = vadd.f32 %v6866, %v6867
  %v6869 = vsel %vm517, %v6810, 0.0
  %v6870 = vadd.f32 %v6868, %v6869
  %v6871 = vmax.f32 %v6825, -10.0
  %v6872 = vmax.f32 %v6840, -10.0
  %v6873 = vmax.f32 %v6855, -10.0
  %v6874 = vmax.f32 %v6870, -10.0
  %v6875 = vmin.f32 %v6871, 10.0
  %v6876 = vmin.f32 %v6872, 10.0
  %v6877 = vmin.f32 %v6873, 10.0
  %v6878 = vmin.f32 %v6874, 10.0
  %v6879 = vand.u32 2147483647, %v6825
  %v6880 = vand.u32 2147483647, %v6840
  %v6881 = vand.u32 2147483647, %v6855
  %v6882 = vand.u32 2147483647, %v6870
  %vm6883 = vcmp.eq.f32.partialorder %v6879, 10.0
  %vm6884 = vcmp.eq.f32.partialorder %v6880, 10.0
  %vm6885 = vcmp.eq.f32.partialorder %v6881, 10.0
  %vm6886 = vcmp.eq.f32.partialorder %v6882, 10.0
  %v6887 = vsel %vm6883, 0.0, %v6875
  %v6888 = vsel %vm6884, 0.0, %v6876
  %v6889 = vsel %vm6885, 0.0, %v6877
  %v6890 = vsel %vm6886, 0.0, %v6878
  %v6891 = vmul.f32 %v6887, 0.01
  %v6892 = vmul.f32 %v6888, 0.01
  %v6893 = vmul.f32 %v6889, 0.01
  %v6894 = vmul.f32 %v6890, 0.01
  %v6895 = vsub.f32 %v5448, %v6891
  %v6896 = vsub.f32 %v5449, %v6892
  %v6897 = vsub.f32 %v5450, %v6893
  %v6898 = vsub.f32 %v5451, %v6894
  %v6899 = vmul.f32 %v5935, %v6447
  %v6900 = vmul.f32 %v5935, %v6448
  %v6901 = vmul.f32 %v5935, %v6449
  %v6902 = vmul.f32 %v5935, %v6450
  %v6903 = vmul.f32 %v5939, %v6451
  %v6904 = vmul.f32 %v5939, %v6452
  %v6905 = vmul.f32 %v5939, %v6453
  %v6906 = vmul.f32 %v5939, %v6454
  %v6907 = vmul.f32 %v5943, %v6455
  %v6908 = vmul.f32 %v5943, %v6456
  %v6909 = vmul.f32 %v5943, %v6457
  %v6910 = vmul.f32 %v5943, %v6458
  %v6911 = vmul.f32 %v5947, %v6459
  %v6912 = vmul.f32 %v5947, %v6460
  %v6913 = vmul.f32 %v5947, %v6461
  %v6914 = vmul.f32 %v5947, %v6462
  %v6915 = vmul.f32 %v5951, %v6463
  %v6916 = vmul.f32 %v5951, %v6464
  %v6917 = vmul.f32 %v5951, %v6465
  %v6918 = vmul.f32 %v5951, %v6466
  %v6919 = vmul.f32 %v5955, %v6467
  %v6920 = vmul.f32 %v5955, %v6468
  %v6921 = vmul.f32 %v5955, %v6469
  %v6922 = vmul.f32 %v5955, %v6470
  %v6923 = vmul.f32 %v5959, %v6471
  %v6924 = vmul.f32 %v5959, %v6472
  %v6925 = vmul.f32 %v5959, %v6473
  %v6926 = vmul.f32 %v5959, %v6474
  %v6927 = vmul.f32 %v5963, %v6475
  %v6928 = vmul.f32 %v5963, %v6476
  %v6929 = vmul.f32 %v5963, %v6477
  %v6930 = vmul.f32 %v5963, %v6478
  %v6931 = vsel %vm517, %v6899, 0.0
  %v6932 = vsel %vm517, %v6903, 0.0
  %v6933 = vadd.f32 %v6931, %v6932
  %v6934 = vsel %vm517, %v6907, 0.0
  %v6935 = vadd.f32 %v6933, %v6934
  %v6936 = vsel %vm517, %v6911, 0.0
  %v6937 = vadd.f32 %v6935, %v6936
  %v6938 = vsel %vm517, %v6915, 0.0
  %v6939 = vadd.f32 %v6937, %v6938
  %v6940 = vsel %vm517, %v6919, 0.0
  %v6941 = vadd.f32 %v6939, %v6940
  %v6942 = vsel %vm517, %v6923, 0.0
  %v6943 = vadd.f32 %v6941, %v6942
  %v6944 = vsel %vm517, %v6927, 0.0
  %v6945 = vadd.f32 %v6943, %v6944
  %v6946 = vsel %vm517, %v6900, 0.0
  %v6947 = vsel %vm517, %v6904, 0.0
  %v6948 = vadd.f32 %v6946, %v6947
  %v6949 = vsel %vm517, %v6908, 0.0
  %v6950 = vadd.f32 %v6948, %v6949
  %v6951 = vsel %vm517, %v6912, 0.0
  %v6952 = vadd.f32 %v6950, %v6951
  %v6953 = vsel %vm517, %v6916, 0.0
  %v6954 = vadd.f32 %v6952, %v6953
  %v6955 = vsel %vm517, %v6920, 0.0
  %v6956 = vadd.f32 %v6954, %v6955
  %v6957 = vsel %vm517, %v6924, 0.0
  %v6958 = vadd.f32 %v6956, %v6957
  %v6959 = vsel %vm517, %v6928, 0.0
  %v6960 = vadd.f32 %v6958, %v6959
  %v6961 = vsel %vm517, %v6901, 0.0
  %v6962 = vsel %vm517, %v6905, 0.0
  %v6963 = vadd.f32 %v6961, %v6962
  %v6964 = vsel %vm517, %v6909, 0.0
  %v6965 = vadd.f32 %v6963, %v6964
  %v6966 = vsel %vm517, %v6913, 0.0
  %v6967 = vadd.f32 %v6965, %v6966
  %v6968 = vsel %vm517, %v6917, 0.0
  %v6969 = vadd.f32 %v6967, %v6968
  %v6970 = vsel %vm517, %v6921, 0.0
  %v6971 = vadd.f32 %v6969, %v6970
  %v6972 = vsel %vm517, %v6925, 0.0
  %v6973 = vadd.f32 %v6971, %v6972
  %v6974 = vsel %vm517, %v6929, 0.0
  %v6975 = vadd.f32 %v6973, %v6974
  %v6976 = vsel %vm517, %v6902, 0.0
  %v6977 = vsel %vm517, %v6906, 0.0
  %v6978 = vadd.f32 %v6976, %v6977
  %v6979 = vsel %vm517, %v6910, 0.0
  %v6980 = vadd.f32 %v6978, %v6979
  %v6981 = vsel %vm517, %v6914, 0.0
  %v6982 = vadd.f32 %v6980, %v6981
  %v6983 = vsel %vm517, %v6918, 0.0
  %v6984 = vadd.f32 %v6982, %v6983
  %v6985 = vsel %vm517, %v6922, 0.0
  %v6986 = vadd.f32 %v6984, %v6985
  %v6987 = vsel %vm517, %v6926, 0.0
  %v6988 = vadd.f32 %v6986, %v6987
  %v6989 = vsel %vm517, %v6930, 0.0
  %v6990 = vadd.f32 %v6988, %v6989
  %v6991 = vmax.f32 %v6945, -10.0
  %v6992 = vmax.f32 %v6960, -10.0
  %v6993 = vmax.f32 %v6975, -10.0
  %v6994 = vmax.f32 %v6990, -10.0
  %v6995 = vmin.f32 %v6991, 10.0
  %v6996 = vmin.f32 %v6992, 10.0
  %v6997 = vmin.f32 %v6993, 10.0
  %v6998 = vmin.f32 %v6994, 10.0
  %v6999 = vand.u32 2147483647, %v6945
  %v7000 = vand.u32 2147483647, %v6960
  %v7001 = vand.u32 2147483647, %v6975
  %v7002 = vand.u32 2147483647, %v6990
  %vm7003 = vcmp.eq.f32.partialorder %v6999, 10.0
  %vm7004 = vcmp.eq.f32.partialorder %v7000, 10.0
  %vm7005 = vcmp.eq.f32.partialorder %v7001, 10.0
  %vm7006 = vcmp.eq.f32.partialorder %v7002, 10.0
  %v7007 = vsel %vm7003, 0.0, %v6995
  %v7008 = vsel %vm7004, 0.0, %v6996
  %v7009 = vsel %vm7005, 0.0, %v6997
  %v7010 = vsel %vm7006, 0.0, %v6998
  %v7011 = vmul.f32 %v7007, 0.01
  %v7012 = vmul.f32 %v7008, 0.01
  %v7013 = vmul.f32 %v7009, 0.01
  %v7014 = vmul.f32 %v7010, 0.01
  %v7015 = vsub.f32 %v5568, %v7011
  %v7016 = vsub.f32 %v5569, %v7012
  %v7017 = vsub.f32 %v5570, %v7013
  %v7018 = vsub.f32 %v5571, %v7014
  %v7019 = vmax.f32 %v6493, -10.0
  %v7020 = vmax.f32 %v6508, -10.0
  %v7021 = vmax.f32 %v6523, -10.0
  %v7022 = vmax.f32 %v6538, -10.0
  %v7023 = vmin.f32 %v7019, 10.0
  %v7024 = vmin.f32 %v7020, 10.0
  %v7025 = vmin.f32 %v7021, 10.0
  %v7026 = vmin.f32 %v7022, 10.0
  %v7027 = vand.u32 2147483647, %v6493
  %v7028 = vand.u32 2147483647, %v6508
  %v7029 = vand.u32 2147483647, %v6523
  %v7030 = vand.u32 2147483647, %v6538
  %vm7031 = vcmp.eq.f32.partialorder %v7027, 10.0
  %vm7032 = vcmp.eq.f32.partialorder %v7028, 10.0
  %vm7033 = vcmp.eq.f32.partialorder %v7029, 10.0
  %vm7034 = vcmp.eq.f32.partialorder %v7030, 10.0
  %v7035 = vsel %vm7031, 0.0, %v7023
  %v7036 = vsel %vm7032, 0.0, %v7024
  %v7037 = vsel %vm7033, 0.0, %v7025
  %v7038 = vsel %vm7034, 0.0, %v7026
  %v7039 = vmul.f32 %v7035, 0.01
  %v7040 = vmul.f32 %v7036, 0.01
  %v7041 = vmul.f32 %v7037, 0.01
  %v7042 = vmul.f32 %v7038, 0.01
  %v7043 = vsub.f32 %v5596, %v7039
  %v7044 = vsub.f32 %v5597, %v7040
  %v7045 = vsub.f32 %v5598, %v7041
  %v7046 = vsub.f32 %v5599, %v7042
  %v7047 = vmax.f32 %v6322, -10.0
  %v7048 = vmax.f32 %v6337, -10.0
  %v7049 = vmax.f32 %v6352, -10.0
  %v7050 = vmax.f32 %v6367, -10.0
  %v7051 = vmin.f32 %v7047, 10.0
  %v7052 = vmin.f32 %v7048, 10.0
  %v7053 = vmin.f32 %v7049, 10.0
  %v7054 = vmin.f32 %v7050, 10.0
  %v7055 = vand.u32 2147483647, %v6322
  %v7056 = vand.u32 2147483647, %v6337
  %v7057 = vand.u32 2147483647, %v6352
  %v7058 = vand.u32 2147483647, %v6367
  %vm7059 = vcmp.eq.f32.partialorder %v7055, 10.0
  %vm7060 = vcmp.eq.f32.partialorder %v7056, 10.0
  %vm7061 = vcmp.eq.f32.partialorder %v7057, 10.0
  %vm7062 = vcmp.eq.f32.partialorder %v7058, 10.0
  %v7063 = vsel %vm7059, 0.0, %v7051
  %v7064 = vsel %vm7060, 0.0, %v7052
  %v7065 = vsel %vm7061, 0.0, %v7053
  %v7066 = vsel %vm7062, 0.0, %v7054
  %v7067 = vmul.f32 %v7063, 0.01
  %v7068 = vmul.f32 %v7064, 0.01
  %v7069 = vmul.f32 %v7065, 0.01
  %v7070 = vmul.f32 %v7066, 0.01
  %v7071 = vsub.f32 %v5624, %v7067
  %v7072 = vsub.f32 %v5625, %v7068
  %v7073 = vsub.f32 %v5626, %v7069
  %v7074 = vsub.f32 %v5627, %v7070
  %v7075 = vmax.f32 %v6382, -10.0
  %v7076 = vmin.f32 %v7075, 10.0
  %v7077 = vand.u32 2147483647, %v6382
  %vm7078 = vcmp.eq.f32.partialorder %v7077, 10.0
  %v7079 = vsel %vm7078, 0.0, %v7076
  %v7080 = vmul.f32 %v7079, 0.01
  %v7081 = vsub.f32 %v5634, %v7080
  %s7082 = scalar_lea.vmem %s0, 256
  %v7083 = vld [vmem:[%s7082] sm:$0x1f]
  %v7084 = vld [vmem:[%s7082 + $0x8] sm:$0x1f]
  %v7085 = vld [vmem:[%s7082 + $0x10] sm:$0x1f]
  %v7086 = vld [vmem:[%s7082 + $0x18] sm:$0x1f]
  %v7087 = vld [vmem:[%s7082 + $0x20] sm:$0x1f]
  %v7088 = vld [vmem:[%s7082 + $0x28] sm:$0x1f]
  %v7089 = vld [vmem:[%s7082 + $0x30] sm:$0x1f]
  %v7090 = vld [vmem:[%s7082 + $0x38] sm:$0x1f]
  %v7091 = vlaneseq
  %v7092 = vshrl.u32 %v7091, 7
  %v7093 = vsub.s32 0, %v7092
  %v7094 = vrot.slane %v7083, %v7093
  %v7095 = vlaneseq
  %v7096 = vshrl.u32 %v7095, 7
  %v7097 = vsub.s32 0, %v7096
  %v7098 = vrot.slane %v7084, %v7097
  %v7099 = vlaneseq
  %v7100 = vshrl.u32 %v7099, 7
  %v7101 = vsub.s32 0, %v7100
  %v7102 = vrot.slane %v7085, %v7101
  %v7103 = vlaneseq
  %v7104 = vshrl.u32 %v7103, 7
  %v7105 = vsub.s32 0, %v7104
  %v7106 = vrot.slane %v7086, %v7105
  %v7107 = vlaneseq
  %v7108 = vshrl.u32 %v7107, 7
  %v7109 = vsub.s32 0, %v7108
  %v7110 = vrot.slane %v7087, %v7109
  %v7111 = vlaneseq
  %v7112 = vshrl.u32 %v7111, 7
  %v7113 = vsub.s32 0, %v7112
  %v7114 = vrot.slane %v7088, %v7113
  %v7115 = vlaneseq
  %v7116 = vshrl.u32 %v7115, 7
  %v7117 = vsub.s32 0, %v7116
  %v7118 = vrot.slane %v7089, %v7117
  %v7119 = vlaneseq
  %v7120 = vshrl.u32 %v7119, 7
  %v7121 = vsub.s32 0, %v7120
  %v7122 = vrot.slane %v7090, %v7121
  %v7123 = vmul.f32 %v7094, %v6655
  %v7124 = vmul.f32 %v7094, %v6656
  %v7125 = vmul.f32 %v7094, %v6657
  %v7126 = vmul.f32 %v7094, %v6658
  %v7127 = vmul.f32 %v7098, %v6655
  %v7128 = vmul.f32 %v7098, %v6656
  %v7129 = vmul.f32 %v7098, %v6657
  %v7130 = vmul.f32 %v7098, %v6658
  %v7131 = vmul.f32 %v7102, %v6655
  %v7132 = vmul.f32 %v7102, %v6656
  %v7133 = vmul.f32 %v7102, %v6657
  %v7134 = vmul.f32 %v7102, %v6658
  %v7135 = vmul.f32 %v7106, %v6655
  %v7136 = vmul.f32 %v7106, %v6656
  %v7137 = vmul.f32 %v7106, %v6657
  %v7138 = vmul.f32 %v7106, %v6658
  %v7139 = vmul.f32 %v7110, %v6655
  %v7140 = vmul.f32 %v7110, %v6656
  %v7141 = vmul.f32 %v7110, %v6657
  %v7142 = vmul.f32 %v7110, %v6658
  %v7143 = vmul.f32 %v7114, %v6655
  %v7144 = vmul.f32 %v7114, %v6656
  %v7145 = vmul.f32 %v7114, %v6657
  %v7146 = vmul.f32 %v7114, %v6658
  %v7147 = vmul.f32 %v7118, %v6655
  %v7148 = vmul.f32 %v7118, %v6656
  %v7149 = vmul.f32 %v7118, %v6657
  %v7150 = vmul.f32 %v7118, %v6658
  %v7151 = vmul.f32 %v7122, %v6655
  %v7152 = vmul.f32 %v7122, %v6656
  %v7153 = vmul.f32 %v7122, %v6657
  %v7154 = vmul.f32 %v7122, %v6658
  %v7155 = vadd.f32 %v7043, %v7123
  %v7156 = vadd.f32 %v7044, %v7124
  %v7157 = vadd.f32 %v7045, %v7125
  %v7158 = vadd.f32 %v7046, %v7126
  %v7159 = vadd.f32 %v7043, %v7127
  %v7160 = vadd.f32 %v7044, %v7128
  %v7161 = vadd.f32 %v7045, %v7129
  %v7162 = vadd.f32 %v7046, %v7130
  %v7163 = vadd.f32 %v7043, %v7131
  %v7164 = vadd.f32 %v7044, %v7132
  %v7165 = vadd.f32 %v7045, %v7133
  %v7166 = vadd.f32 %v7046, %v7134
  %v7167 = vadd.f32 %v7043, %v7135
  %v7168 = vadd.f32 %v7044, %v7136
  %v7169 = vadd.f32 %v7045, %v7137
  %v7170 = vadd.f32 %v7046, %v7138
  %v7171 = vadd.f32 %v7043, %v7139
  %v7172 = vadd.f32 %v7044, %v7140
  %v7173 = vadd.f32 %v7045, %v7141
  %v7174 = vadd.f32 %v7046, %v7142
  %v7175 = vadd.f32 %v7043, %v7143
  %v7176 = vadd.f32 %v7044, %v7144
  %v7177 = vadd.f32 %v7045, %v7145
  %v7178 = vadd.f32 %v7046, %v7146
  %v7179 = vadd.f32 %v7043, %v7147
  %v7180 = vadd.f32 %v7044, %v7148
  %v7181 = vadd.f32 %v7045, %v7149
  %v7182 = vadd.f32 %v7046, %v7150
  %v7183 = vadd.f32 %v7043, %v7151
  %v7184 = vadd.f32 %v7044, %v7152
  %v7185 = vadd.f32 %v7045, %v7153
  %v7186 = vadd.f32 %v7046, %v7154
  %v7187 = vlaneseq
  %v7188 = vshrl.u32 %v7187, 7
  %v7189 = vsub.s32 1, %v7188
  %v7190 = vrot.slane %v7083, %v7189
  %v7191 = vlaneseq
  %v7192 = vshrl.u32 %v7191, 7
  %v7193 = vsub.s32 1, %v7192
  %v7194 = vrot.slane %v7084, %v7193
  %v7195 = vlaneseq
  %v7196 = vshrl.u32 %v7195, 7
  %v7197 = vsub.s32 1, %v7196
  %v7198 = vrot.slane %v7085, %v7197
  %v7199 = vlaneseq
  %v7200 = vshrl.u32 %v7199, 7
  %v7201 = vsub.s32 1, %v7200
  %v7202 = vrot.slane %v7086, %v7201
  %v7203 = vlaneseq
  %v7204 = vshrl.u32 %v7203, 7
  %v7205 = vsub.s32 1, %v7204
  %v7206 = vrot.slane %v7087, %v7205
  %v7207 = vlaneseq
  %v7208 = vshrl.u32 %v7207, 7
  %v7209 = vsub.s32 1, %v7208
  %v7210 = vrot.slane %v7088, %v7209
  %v7211 = vlaneseq
  %v7212 = vshrl.u32 %v7211, 7
  %v7213 = vsub.s32 1, %v7212
  %v7214 = vrot.slane %v7089, %v7213
  %v7215 = vlaneseq
  %v7216 = vshrl.u32 %v7215, 7
  %v7217 = vsub.s32 1, %v7216
  %v7218 = vrot.slane %v7090, %v7217
  %v7219 = vmul.f32 %v7190, %v6775
  %v7220 = vmul.f32 %v7190, %v6776
  %v7221 = vmul.f32 %v7190, %v6777
  %v7222 = vmul.f32 %v7190, %v6778
  %v7223 = vmul.f32 %v7194, %v6775
  %v7224 = vmul.f32 %v7194, %v6776
  %v7225 = vmul.f32 %v7194, %v6777
  %v7226 = vmul.f32 %v7194, %v6778
  %v7227 = vmul.f32 %v7198, %v6775
  %v7228 = vmul.f32 %v7198, %v6776
  %v7229 = vmul.f32 %v7198, %v6777
  %v7230 = vmul.f32 %v7198, %v6778
  %v7231 = vmul.f32 %v7202, %v6775
  %v7232 = vmul.f32 %v7202, %v6776
  %v7233 = vmul.f32 %v7202, %v6777
  %v7234 = vmul.f32 %v7202, %v6778
  %v7235 = vmul.f32 %v7206, %v6775
  %v7236 = vmul.f32 %v7206, %v6776
  %v7237 = vmul.f32 %v7206, %v6777
  %v7238 = vmul.f32 %v7206, %v6778
  %v7239 = vmul.f32 %v7210, %v6775
  %v7240 = vmul.f32 %v7210, %v6776
  %v7241 = vmul.f32 %v7210, %v6777
  %v7242 = vmul.f32 %v7210, %v6778
  %v7243 = vmul.f32 %v7214, %v6775
  %v7244 = vmul.f32 %v7214, %v6776
  %v7245 = vmul.f32 %v7214, %v6777
  %v7246 = vmul.f32 %v7214, %v6778
  %v7247 = vmul.f32 %v7218, %v6775
  %v7248 = vmul.f32 %v7218, %v6776
  %v7249 = vmul.f32 %v7218, %v6777
  %v7250 = vmul.f32 %v7218, %v6778
  %v7251 = vadd.f32 %v7155, %v7219
  %v7252 = vadd.f32 %v7156, %v7220
  %v7253 = vadd.f32 %v7157, %v7221
  %v7254 = vadd.f32 %v7158, %v7222
  %v7255 = vadd.f32 %v7159, %v7223
  %v7256 = vadd.f32 %v7160, %v7224
  %v7257 = vadd.f32 %v7161, %v7225
  %v7258 = vadd.f32 %v7162, %v7226
  %v7259 = vadd.f32 %v7163, %v7227
  %v7260 = vadd.f32 %v7164, %v7228
  %v7261 = vadd.f32 %v7165, %v7229
  %v7262 = vadd.f32 %v7166, %v7230
  %v7263 = vadd.f32 %v7167, %v7231
  %v7264 = vadd.f32 %v7168, %v7232
  %v7265 = vadd.f32 %v7169, %v7233
  %v7266 = vadd.f32 %v7170, %v7234
  %v7267 = vadd.f32 %v7171, %v7235
  %v7268 = vadd.f32 %v7172, %v7236
  %v7269 = vadd.f32 %v7173, %v7237
  %v7270 = vadd.f32 %v7174, %v7238
  %v7271 = vadd.f32 %v7175, %v7239
  %v7272 = vadd.f32 %v7176, %v7240
  %v7273 = vadd.f32 %v7177, %v7241
  %v7274 = vadd.f32 %v7178, %v7242
  %v7275 = vadd.f32 %v7179, %v7243
  %v7276 = vadd.f32 %v7180, %v7244
  %v7277 = vadd.f32 %v7181, %v7245
  %v7278 = vadd.f32 %v7182, %v7246
  %v7279 = vadd.f32 %v7183, %v7247
  %v7280 = vadd.f32 %v7184, %v7248
  %v7281 = vadd.f32 %v7185, %v7249
  %v7282 = vadd.f32 %v7186, %v7250
  %v7283 = vlaneseq
  %v7284 = vshrl.u32 %v7283, 7
  %v7285 = vsub.s32 2, %v7284
  %v7286 = vrot.slane %v7083, %v7285
  %v7287 = vlaneseq
  %v7288 = vshrl.u32 %v7287, 7
  %v7289 = vsub.s32 2, %v7288
  %v7290 = vrot.slane %v7084, %v7289
  %v7291 = vlaneseq
  %v7292 = vshrl.u32 %v7291, 7
  %v7293 = vsub.s32 2, %v7292
  %v7294 = vrot.slane %v7085, %v7293
  %v7295 = vlaneseq
  %v7296 = vshrl.u32 %v7295, 7
  %v7297 = vsub.s32 2, %v7296
  %v7298 = vrot.slane %v7086, %v7297
  %v7299 = vlaneseq
  %v7300 = vshrl.u32 %v7299, 7
  %v7301 = vsub.s32 2, %v7300
  %v7302 = vrot.slane %v7087, %v7301
  %v7303 = vlaneseq
  %v7304 = vshrl.u32 %v7303, 7
  %v7305 = vsub.s32 2, %v7304
  %v7306 = vrot.slane %v7088, %v7305
  %v7307 = vlaneseq
  %v7308 = vshrl.u32 %v7307, 7
  %v7309 = vsub.s32 2, %v7308
  %v7310 = vrot.slane %v7089, %v7309
  %v7311 = vlaneseq
  %v7312 = vshrl.u32 %v7311, 7
  %v7313 = vsub.s32 2, %v7312
  %v7314 = vrot.slane %v7090, %v7313
  %v7315 = vmul.f32 %v7286, %v6895
  %v7316 = vmul.f32 %v7286, %v6896
  %v7317 = vmul.f32 %v7286, %v6897
  %v7318 = vmul.f32 %v7286, %v6898
  %v7319 = vmul.f32 %v7290, %v6895
  %v7320 = vmul.f32 %v7290, %v6896
  %v7321 = vmul.f32 %v7290, %v6897
  %v7322 = vmul.f32 %v7290, %v6898
  %v7323 = vmul.f32 %v7294, %v6895
  %v7324 = vmul.f32 %v7294, %v6896
  %v7325 = vmul.f32 %v7294, %v6897
  %v7326 = vmul.f32 %v7294, %v6898
  %v7327 = vmul.f32 %v7298, %v6895
  %v7328 = vmul.f32 %v7298, %v6896
  %v7329 = vmul.f32 %v7298, %v6897
  %v7330 = vmul.f32 %v7298, %v6898
  %v7331 = vmul.f32 %v7302, %v6895
  %v7332 = vmul.f32 %v7302, %v6896
  %v7333 = vmul.f32 %v7302, %v6897
  %v7334 = vmul.f32 %v7302, %v6898
  %v7335 = vmul.f32 %v7306, %v6895
  %v7336 = vmul.f32 %v7306, %v6896
  %v7337 = vmul.f32 %v7306, %v6897
  %v7338 = vmul.f32 %v7306, %v6898
  %v7339 = vmul.f32 %v7310, %v6895
  %v7340 = vmul.f32 %v7310, %v6896
  %v7341 = vmul.f32 %v7310, %v6897
  %v7342 = vmul.f32 %v7310, %v6898
  %v7343 = vmul.f32 %v7314, %v6895
  %v7344 = vmul.f32 %v7314, %v6896
  %v7345 = vmul.f32 %v7314, %v6897
  %v7346 = vmul.f32 %v7314, %v6898
  %v7347 = vadd.f32 %v7251, %v7315
  %v7348 = vadd.f32 %v7252, %v7316
  %v7349 = vadd.f32 %v7253, %v7317
  %v7350 = vadd.f32 %v7254, %v7318
  %v7351 = vadd.f32 %v7255, %v7319
  %v7352 = vadd.f32 %v7256, %v7320
  %v7353 = vadd.f32 %v7257, %v7321
  %v7354 = vadd.f32 %v7258, %v7322
  %v7355 = vadd.f32 %v7259, %v7323
  %v7356 = vadd.f32 %v7260, %v7324
  %v7357 = vadd.f32 %v7261, %v7325
  %v7358 = vadd.f32 %v7262, %v7326
  %v7359 = vadd.f32 %v7263, %v7327
  %v7360 = vadd.f32 %v7264, %v7328
  %v7361 = vadd.f32 %v7265, %v7329
  %v7362 = vadd.f32 %v7266, %v7330
  %v7363 = vadd.f32 %v7267, %v7331
  %v7364 = vadd.f32 %v7268, %v7332
  %v7365 = vadd.f32 %v7269, %v7333
  %v7366 = vadd.f32 %v7270, %v7334
  %v7367 = vadd.f32 %v7271, %v7335
  %v7368 = vadd.f32 %v7272, %v7336
  %v7369 = vadd.f32 %v7273, %v7337
  %v7370 = vadd.f32 %v7274, %v7338
  %v7371 = vadd.f32 %v7275, %v7339
  %v7372 = vadd.f32 %v7276, %v7340
  %v7373 = vadd.f32 %v7277, %v7341
  %v7374 = vadd.f32 %v7278, %v7342
  %v7375 = vadd.f32 %v7279, %v7343
  %v7376 = vadd.f32 %v7280, %v7344
  %v7377 = vadd.f32 %v7281, %v7345
  %v7378 = vadd.f32 %v7282, %v7346
  %v7379 = vlaneseq
  %v7380 = vshrl.u32 %v7379, 7
  %v7381 = vsub.s32 3, %v7380
  %v7382 = vrot.slane %v7083, %v7381
  %v7383 = vlaneseq
  %v7384 = vshrl.u32 %v7383, 7
  %v7385 = vsub.s32 3, %v7384
  %v7386 = vrot.slane %v7084, %v7385
  %v7387 = vlaneseq
  %v7388 = vshrl.u32 %v7387, 7
  %v7389 = vsub.s32 3, %v7388
  %v7390 = vrot.slane %v7085, %v7389
  %v7391 = vlaneseq
  %v7392 = vshrl.u32 %v7391, 7
  %v7393 = vsub.s32 3, %v7392
  %v7394 = vrot.slane %v7086, %v7393
  %v7395 = vlaneseq
  %v7396 = vshrl.u32 %v7395, 7
  %v7397 = vsub.s32 3, %v7396
  %v7398 = vrot.slane %v7087, %v7397
  %v7399 = vlaneseq
  %v7400 = vshrl.u32 %v7399, 7
  %v7401 = vsub.s32 3, %v7400
  %v7402 = vrot.slane %v7088, %v7401
  %v7403 = vlaneseq
  %v7404 = vshrl.u32 %v7403, 7
  %v7405 = vsub.s32 3, %v7404
  %v7406 = vrot.slane %v7089, %v7405
  %v7407 = vlaneseq
  %v7408 = vshrl.u32 %v7407, 7
  %v7409 = vsub.s32 3, %v7408
  %v7410 = vrot.slane %v7090, %v7409
  %v7411 = vmul.f32 %v7382, %v7015
  %v7412 = vmul.f32 %v7382, %v7016
  %v7413 = vmul.f32 %v7382, %v7017
  %v7414 = vmul.f32 %v7382, %v7018
  %v7415 = vmul.f32 %v7386, %v7015
  %v7416 = vmul.f32 %v7386, %v7016
  %v7417 = vmul.f32 %v7386, %v7017
  %v7418 = vmul.f32 %v7386, %v7018
  %v7419 = vmul.f32 %v7390, %v7015
  %v7420 = vmul.f32 %v7390, %v7016
  %v7421 = vmul.f32 %v7390, %v7017
  %v7422 = vmul.f32 %v7390, %v7018
  %v7423 = vmul.f32 %v7394, %v7015
  %v7424 = vmul.f32 %v7394, %v7016
  %v7425 = vmul.f32 %v7394, %v7017
  %v7426 = vmul.f32 %v7394, %v7018
  %v7427 = vmul.f32 %v7398, %v7015
  %v7428 = vmul.f32 %v7398, %v7016
  %v7429 = vmul.f32 %v7398, %v7017
  %v7430 = vmul.f32 %v7398, %v7018
  %v7431 = vmul.f32 %v7402, %v7015
  %v7432 = vmul.f32 %v7402, %v7016
  %v7433 = vmul.f32 %v7402, %v7017
  %v7434 = vmul.f32 %v7402, %v7018
  %v7435 = vmul.f32 %v7406, %v7015
  %v7436 = vmul.f32 %v7406, %v7016
  %v7437 = vmul.f32 %v7406, %v7017
  %v7438 = vmul.f32 %v7406, %v7018
  %v7439 = vmul.f32 %v7410, %v7015
  %v7440 = vmul.f32 %v7410, %v7016
  %v7441 = vmul.f32 %v7410, %v7017
  %v7442 = vmul.f32 %v7410, %v7018
  %v7443 = vadd.f32 %v7347, %v7411
  %v7444 = vadd.f32 %v7348, %v7412
  %v7445 = vadd.f32 %v7349, %v7413
  %v7446 = vadd.f32 %v7350, %v7414
  %v7447 = vadd.f32 %v7351, %v7415
  %v7448 = vadd.f32 %v7352, %v7416
  %v7449 = vadd.f32 %v7353, %v7417
  %v7450 = vadd.f32 %v7354, %v7418
  %v7451 = vadd.f32 %v7355, %v7419
  %v7452 = vadd.f32 %v7356, %v7420
  %v7453 = vadd.f32 %v7357, %v7421
  %v7454 = vadd.f32 %v7358, %v7422
  %v7455 = vadd.f32 %v7359, %v7423
  %v7456 = vadd.f32 %v7360, %v7424
  %v7457 = vadd.f32 %v7361, %v7425
  %v7458 = vadd.f32 %v7362, %v7426
  %v7459 = vadd.f32 %v7363, %v7427
  %v7460 = vadd.f32 %v7364, %v7428
  %v7461 = vadd.f32 %v7365, %v7429
  %v7462 = vadd.f32 %v7366, %v7430
  %v7463 = vadd.f32 %v7367, %v7431
  %v7464 = vadd.f32 %v7368, %v7432
  %v7465 = vadd.f32 %v7369, %v7433
  %v7466 = vadd.f32 %v7370, %v7434
  %v7467 = vadd.f32 %v7371, %v7435
  %v7468 = vadd.f32 %v7372, %v7436
  %v7469 = vadd.f32 %v7373, %v7437
  %v7470 = vadd.f32 %v7374, %v7438
  %v7471 = vadd.f32 %v7375, %v7439
  %v7472 = vadd.f32 %v7376, %v7440
  %v7473 = vadd.f32 %v7377, %v7441
  %v7474 = vadd.f32 %v7378, %v7442
  %v7475 = vmax.f32 %v7443, 0.0
  %v7476 = vmax.f32 %v7444, 0.0
  %v7477 = vmax.f32 %v7445, 0.0
  %v7478 = vmax.f32 %v7446, 0.0
  %v7479 = vmax.f32 %v7447, 0.0
  %v7480 = vmax.f32 %v7448, 0.0
  %v7481 = vmax.f32 %v7449, 0.0
  %v7482 = vmax.f32 %v7450, 0.0
  %v7483 = vmax.f32 %v7451, 0.0
  %v7484 = vmax.f32 %v7452, 0.0
  %v7485 = vmax.f32 %v7453, 0.0
  %v7486 = vmax.f32 %v7454, 0.0
  %v7487 = vmax.f32 %v7455, 0.0
  %v7488 = vmax.f32 %v7456, 0.0
  %v7489 = vmax.f32 %v7457, 0.0
  %v7490 = vmax.f32 %v7458, 0.0
  %v7491 = vmax.f32 %v7459, 0.0
  %v7492 = vmax.f32 %v7460, 0.0
  %v7493 = vmax.f32 %v7461, 0.0
  %v7494 = vmax.f32 %v7462, 0.0
  %v7495 = vmax.f32 %v7463, 0.0
  %v7496 = vmax.f32 %v7464, 0.0
  %v7497 = vmax.f32 %v7465, 0.0
  %v7498 = vmax.f32 %v7466, 0.0
  %v7499 = vmax.f32 %v7467, 0.0
  %v7500 = vmax.f32 %v7468, 0.0
  %v7501 = vmax.f32 %v7469, 0.0
  %v7502 = vmax.f32 %v7470, 0.0
  %v7503 = vmax.f32 %v7471, 0.0
  %v7504 = vmax.f32 %v7472, 0.0
  %v7505 = vmax.f32 %v7473, 0.0
  %v7506 = vmax.f32 %v7474, 0.0
  %v7507 = vmul.f32 %v7475, %v7071
  %v7508 = vmul.f32 %v7476, %v7072
  %v7509 = vmul.f32 %v7477, %v7073
  %v7510 = vmul.f32 %v7478, %v7074
  %v7511 = vmul.f32 %v7479, %v7071
  %v7512 = vmul.f32 %v7480, %v7072
  %v7513 = vmul.f32 %v7481, %v7073
  %v7514 = vmul.f32 %v7482, %v7074
  %v7515 = vmul.f32 %v7483, %v7071
  %v7516 = vmul.f32 %v7484, %v7072
  %v7517 = vmul.f32 %v7485, %v7073
  %v7518 = vmul.f32 %v7486, %v7074
  %v7519 = vmul.f32 %v7487, %v7071
  %v7520 = vmul.f32 %v7488, %v7072
  %v7521 = vmul.f32 %v7489, %v7073
  %v7522 = vmul.f32 %v7490, %v7074
  %v7523 = vmul.f32 %v7491, %v7071
  %v7524 = vmul.f32 %v7492, %v7072
  %v7525 = vmul.f32 %v7493, %v7073
  %v7526 = vmul.f32 %v7494, %v7074
  %v7527 = vmul.f32 %v7495, %v7071
  %v7528 = vmul.f32 %v7496, %v7072
  %v7529 = vmul.f32 %v7497, %v7073
  %v7530 = vmul.f32 %v7498, %v7074
  %v7531 = vmul.f32 %v7499, %v7071
  %v7532 = vmul.f32 %v7500, %v7072
  %v7533 = vmul.f32 %v7501, %v7073
  %v7534 = vmul.f32 %v7502, %v7074
  %v7535 = vmul.f32 %v7503, %v7071
  %v7536 = vmul.f32 %v7504, %v7072
  %v7537 = vmul.f32 %v7505, %v7073
  %v7538 = vmul.f32 %v7506, %v7074
  %v7539 = vsel %vm517, %v7507, 0.0
  %v7540 = vsel %vm517, %v7508, 0.0
  %v7541 = vadd.f32 %v7539, %v7540
  %v7542 = vsel %vm517, %v7509, 0.0
  %v7543 = vadd.f32 %v7541, %v7542
  %v7544 = vsel %vm517, %v7510, 0.0
  %v7545 = vadd.f32 %v7543, %v7544
  %v7546 = vrot.slane %v7545, 4
  %v7547 = vadd.f32 %v7545, %v7546
  %v7548 = vrot.slane %v7547, 2
  %v7549 = vadd.f32 %v7547, %v7548
  %v7550 = vrot.slane %v7549, 1
  %v7551 = vadd.f32 %v7549, %v7550
  %v7552 = vsel %vm517, %v7511, 0.0
  %v7553 = vsel %vm517, %v7512, 0.0
  %v7554 = vadd.f32 %v7552, %v7553
  %v7555 = vsel %vm517, %v7513, 0.0
  %v7556 = vadd.f32 %v7554, %v7555
  %v7557 = vsel %vm517, %v7514, 0.0
  %v7558 = vadd.f32 %v7556, %v7557
  %v7559 = vrot.slane %v7558, 4
  %v7560 = vadd.f32 %v7558, %v7559
  %v7561 = vrot.slane %v7560, 2
  %v7562 = vadd.f32 %v7560, %v7561
  %v7563 = vrot.slane %v7562, 1
  %v7564 = vadd.f32 %v7562, %v7563
  %v7565 = vsel %vm517, %v7515, 0.0
  %v7566 = vsel %vm517, %v7516, 0.0
  %v7567 = vadd.f32 %v7565, %v7566
  %v7568 = vsel %vm517, %v7517, 0.0
  %v7569 = vadd.f32 %v7567, %v7568
  %v7570 = vsel %vm517, %v7518, 0.0
  %v7571 = vadd.f32 %v7569, %v7570
  %v7572 = vrot.slane %v7571, 4
  %v7573 = vadd.f32 %v7571, %v7572
  %v7574 = vrot.slane %v7573, 2
  %v7575 = vadd.f32 %v7573, %v7574
  %v7576 = vrot.slane %v7575, 1
  %v7577 = vadd.f32 %v7575, %v7576
  %v7578 = vsel %vm517, %v7519, 0.0
  %v7579 = vsel %vm517, %v7520, 0.0
  %v7580 = vadd.f32 %v7578, %v7579
  %v7581 = vsel %vm517, %v7521, 0.0
  %v7582 = vadd.f32 %v7580, %v7581
  %v7583 = vsel %vm517, %v7522, 0.0
  %v7584 = vadd.f32 %v7582, %v7583
  %v7585 = vrot.slane %v7584, 4
  %v7586 = vadd.f32 %v7584, %v7585
  %v7587 = vrot.slane %v7586, 2
  %v7588 = vadd.f32 %v7586, %v7587
  %v7589 = vrot.slane %v7588, 1
  %v7590 = vadd.f32 %v7588, %v7589
  %v7591 = vsel %vm517, %v7523, 0.0
  %v7592 = vsel %vm517, %v7524, 0.0
  %v7593 = vadd.f32 %v7591, %v7592
  %v7594 = vsel %vm517, %v7525, 0.0
  %v7595 = vadd.f32 %v7593, %v7594
  %v7596 = vsel %vm517, %v7526, 0.0
  %v7597 = vadd.f32 %v7595, %v7596
  %v7598 = vrot.slane %v7597, 4
  %v7599 = vadd.f32 %v7597, %v7598
  %v7600 = vrot.slane %v7599, 2
  %v7601 = vadd.f32 %v7599, %v7600
  %v7602 = vrot.slane %v7601, 1
  %v7603 = vadd.f32 %v7601, %v7602
  %v7604 = vsel %vm517, %v7527, 0.0
  %v7605 = vsel %vm517, %v7528, 0.0
  %v7606 = vadd.f32 %v7604, %v7605
  %v7607 = vsel %vm517, %v7529, 0.0
  %v7608 = vadd.f32 %v7606, %v7607
  %v7609 = vsel %vm517, %v7530, 0.0
  %v7610 = vadd.f32 %v7608, %v7609
  %v7611 = vrot.slane %v7610, 4
  %v7612 = vadd.f32 %v7610, %v7611
  %v7613 = vrot.slane %v7612, 2
  %v7614 = vadd.f32 %v7612, %v7613
  %v7615 = vrot.slane %v7614, 1
  %v7616 = vadd.f32 %v7614, %v7615
  %v7617 = vsel %vm517, %v7531, 0.0
  %v7618 = vsel %vm517, %v7532, 0.0
  %v7619 = vadd.f32 %v7617, %v7618
  %v7620 = vsel %vm517, %v7533, 0.0
  %v7621 = vadd.f32 %v7619, %v7620
  %v7622 = vsel %vm517, %v7534, 0.0
  %v7623 = vadd.f32 %v7621, %v7622
  %v7624 = vrot.slane %v7623, 4
  %v7625 = vadd.f32 %v7623, %v7624
  %v7626 = vrot.slane %v7625, 2
  %v7627 = vadd.f32 %v7625, %v7626
  %v7628 = vrot.slane %v7627, 1
  %v7629 = vadd.f32 %v7627, %v7628
  %v7630 = vsel %vm517, %v7535, 0.0
  %v7631 = vsel %vm517, %v7536, 0.0
  %v7632 = vadd.f32 %v7630, %v7631
  %v7633 = vsel %vm517, %v7537, 0.0
  %v7634 = vadd.f32 %v7632, %v7633
  %v7635 = vsel %vm517, %v7538, 0.0
  %v7636 = vadd.f32 %v7634, %v7635
  %v7637 = vrot.slane %v7636, 4
  %v7638 = vadd.f32 %v7636, %v7637
  %v7639 = vrot.slane %v7638, 2
  %v7640 = vadd.f32 %v7638, %v7639
  %v7641 = vrot.slane %v7640, 1
  %v7642 = vadd.f32 %v7640, %v7641
  %v7643 = vadd.f32 %v7551, %v7081
  %v7644 = vadd.f32 %v7564, %v7081
  %v7645 = vadd.f32 %v7577, %v7081
  %v7646 = vadd.f32 %v7590, %v7081
  %v7647 = vadd.f32 %v7603, %v7081
  %v7648 = vadd.f32 %v7616, %v7081
  %v7649 = vadd.f32 %v7629, %v7081
  %v7650 = vadd.f32 %v7642, %v7081
  %v7659 = vrot.slane %v7083, 4
  %v7660 = vrot.slane %v7084, 4
  %v7661 = vrot.slane %v7085, 4
  %v7662 = vrot.slane %v7086, 4
  %v7663 = vrot.slane %v7087, 4
  %v7664 = vrot.slane %v7088, 4
  %v7665 = vrot.slane %v7089, 4
  %v7666 = vrot.slane %v7090, 4
  %v7675 = vsub.f32 %v7643, %v7659
  %v7676 = vsub.f32 %v7644, %v7660
  %v7677 = vsub.f32 %v7645, %v7661
  %v7678 = vsub.f32 %v7646, %v7662
  %v7679 = vsub.f32 %v7647, %v7663
  %v7680 = vsub.f32 %v7648, %v7664
  %v7681 = vsub.f32 %v7649, %v7665
  %v7682 = vsub.f32 %v7650, %v7666
  %v7683 = vmul.f32 %v7675, 0.25
  %v7684 = vmul.f32 %v7676, 0.25
  %v7685 = vmul.f32 %v7677, 0.25
  %v7686 = vmul.f32 %v7678, 0.25
  %v7687 = vmul.f32 %v7679, 0.25
  %v7688 = vmul.f32 %v7680, 0.25
  %v7689 = vmul.f32 %v7681, 0.25
  %v7690 = vmul.f32 %v7682, 0.25
  %v7691 = vlaneseq
  %v7692 = vshrl.u32 %v7691, 7
  %v7693 = vsub.s32 0, %v7692
  %v7694 = vrot.slane %v7683, %v7693
  %v7695 = vlaneseq
  %v7696 = vshrl.u32 %v7695, 7
  %v7697 = vsub.s32 0, %v7696
  %v7698 = vrot.slane %v7684, %v7697
  %v7699 = vlaneseq
  %v7700 = vshrl.u32 %v7699, 7
  %v7701 = vsub.s32 0, %v7700
  %v7702 = vrot.slane %v7685, %v7701
  %v7703 = vlaneseq
  %v7704 = vshrl.u32 %v7703, 7
  %v7705 = vsub.s32 0, %v7704
  %v7706 = vrot.slane %v7686, %v7705
  %v7707 = vlaneseq
  %v7708 = vshrl.u32 %v7707, 7
  %v7709 = vsub.s32 0, %v7708
  %v7710 = vrot.slane %v7687, %v7709
  %v7711 = vlaneseq
  %v7712 = vshrl.u32 %v7711, 7
  %v7713 = vsub.s32 0, %v7712
  %v7714 = vrot.slane %v7688, %v7713
  %v7715 = vlaneseq
  %v7716 = vshrl.u32 %v7715, 7
  %v7717 = vsub.s32 0, %v7716
  %v7718 = vrot.slane %v7689, %v7717
  %v7719 = vlaneseq
  %v7720 = vshrl.u32 %v7719, 7
  %v7721 = vsub.s32 0, %v7720
  %v7722 = vrot.slane %v7690, %v7721
  %v7723 = vmul.f32 %v7694, %v7475
  %v7724 = vmul.f32 %v7694, %v7476
  %v7725 = vmul.f32 %v7694, %v7477
  %v7726 = vmul.f32 %v7694, %v7478
  %v7727 = vmul.f32 %v7698, %v7479
  %v7728 = vmul.f32 %v7698, %v7480
  %v7729 = vmul.f32 %v7698, %v7481
  %v7730 = vmul.f32 %v7698, %v7482
  %v7731 = vmul.f32 %v7702, %v7483
  %v7732 = vmul.f32 %v7702, %v7484
  %v7733 = vmul.f32 %v7702, %v7485
  %v7734 = vmul.f32 %v7702, %v7486
  %v7735 = vmul.f32 %v7706, %v7487
  %v7736 = vmul.f32 %v7706, %v7488
  %v7737 = vmul.f32 %v7706, %v7489
  %v7738 = vmul.f32 %v7706, %v7490
  %v7739 = vmul.f32 %v7710, %v7491
  %v7740 = vmul.f32 %v7710, %v7492
  %v7741 = vmul.f32 %v7710, %v7493
  %v7742 = vmul.f32 %v7710, %v7494
  %v7743 = vmul.f32 %v7714, %v7495
  %v7744 = vmul.f32 %v7714, %v7496
  %v7745 = vmul.f32 %v7714, %v7497
  %v7746 = vmul.f32 %v7714, %v7498
  %v7747 = vmul.f32 %v7718, %v7499
  %v7748 = vmul.f32 %v7718, %v7500
  %v7749 = vmul.f32 %v7718, %v7501
  %v7750 = vmul.f32 %v7718, %v7502
  %v7751 = vmul.f32 %v7722, %v7503
  %v7752 = vmul.f32 %v7722, %v7504
  %v7753 = vmul.f32 %v7722, %v7505
  %v7754 = vmul.f32 %v7722, %v7506
  %v7755 = vsel %vm517, %v7723, 0.0
  %v7756 = vsel %vm517, %v7727, 0.0
  %v7757 = vadd.f32 %v7755, %v7756
  %v7758 = vsel %vm517, %v7731, 0.0
  %v7759 = vadd.f32 %v7757, %v7758
  %v7760 = vsel %vm517, %v7735, 0.0
  %v7761 = vadd.f32 %v7759, %v7760
  %v7762 = vsel %vm517, %v7739, 0.0
  %v7763 = vadd.f32 %v7761, %v7762
  %v7764 = vsel %vm517, %v7743, 0.0
  %v7765 = vadd.f32 %v7763, %v7764
  %v7766 = vsel %vm517, %v7747, 0.0
  %v7767 = vadd.f32 %v7765, %v7766
  %v7768 = vsel %vm517, %v7751, 0.0
  %v7769 = vadd.f32 %v7767, %v7768
  %v7770 = vsel %vm517, %v7724, 0.0
  %v7771 = vsel %vm517, %v7728, 0.0
  %v7772 = vadd.f32 %v7770, %v7771
  %v7773 = vsel %vm517, %v7732, 0.0
  %v7774 = vadd.f32 %v7772, %v7773
  %v7775 = vsel %vm517, %v7736, 0.0
  %v7776 = vadd.f32 %v7774, %v7775
  %v7777 = vsel %vm517, %v7740, 0.0
  %v7778 = vadd.f32 %v7776, %v7777
  %v7779 = vsel %vm517, %v7744, 0.0
  %v7780 = vadd.f32 %v7778, %v7779
  %v7781 = vsel %vm517, %v7748, 0.0
  %v7782 = vadd.f32 %v7780, %v7781
  %v7783 = vsel %vm517, %v7752, 0.0
  %v7784 = vadd.f32 %v7782, %v7783
  %v7785 = vsel %vm517, %v7725, 0.0
  %v7786 = vsel %vm517, %v7729, 0.0
  %v7787 = vadd.f32 %v7785, %v7786
  %v7788 = vsel %vm517, %v7733, 0.0
  %v7789 = vadd.f32 %v7787, %v7788
  %v7790 = vsel %vm517, %v7737, 0.0
  %v7791 = vadd.f32 %v7789, %v7790
  %v7792 = vsel %vm517, %v7741, 0.0
  %v7793 = vadd.f32 %v7791, %v7792
  %v7794 = vsel %vm517, %v7745, 0.0
  %v7795 = vadd.f32 %v7793, %v7794
  %v7796 = vsel %vm517, %v7749, 0.0
  %v7797 = vadd.f32 %v7795, %v7796
  %v7798 = vsel %vm517, %v7753, 0.0
  %v7799 = vadd.f32 %v7797, %v7798
  %v7800 = vsel %vm517, %v7726, 0.0
  %v7801 = vsel %vm517, %v7730, 0.0
  %v7802 = vadd.f32 %v7800, %v7801
  %v7803 = vsel %vm517, %v7734, 0.0
  %v7804 = vadd.f32 %v7802, %v7803
  %v7805 = vsel %vm517, %v7738, 0.0
  %v7806 = vadd.f32 %v7804, %v7805
  %v7807 = vsel %vm517, %v7742, 0.0
  %v7808 = vadd.f32 %v7806, %v7807
  %v7809 = vsel %vm517, %v7746, 0.0
  %v7810 = vadd.f32 %v7808, %v7809
  %v7811 = vsel %vm517, %v7750, 0.0
  %v7812 = vadd.f32 %v7810, %v7811
  %v7813 = vsel %vm517, %v7754, 0.0
  %v7814 = vadd.f32 %v7812, %v7813
  %v7815 = vsel %vm794, %v7683, 0.0
  %v7816 = vsel %vm794, %v7684, 0.0
  %v7817 = vadd.f32 %v7815, %v7816
  %v7818 = vsel %vm794, %v7685, 0.0
  %v7819 = vadd.f32 %v7817, %v7818
  %v7820 = vsel %vm794, %v7686, 0.0
  %v7821 = vadd.f32 %v7819, %v7820
  %v7822 = vsel %vm794, %v7687, 0.0
  %v7823 = vadd.f32 %v7821, %v7822
  %v7824 = vsel %vm794, %v7688, 0.0
  %v7825 = vadd.f32 %v7823, %v7824
  %v7826 = vsel %vm794, %v7689, 0.0
  %v7827 = vadd.f32 %v7825, %v7826
  %v7828 = vsel %vm794, %v7690, 0.0
  %v7829 = vadd.f32 %v7827, %v7828
  %vm7830 = vcmp.gt.f32.partialorder %v7475, 0.0
  %vm7831 = vcmp.gt.f32.partialorder %v7476, 0.0
  %vm7832 = vcmp.gt.f32.partialorder %v7477, 0.0
  %vm7833 = vcmp.gt.f32.partialorder %v7478, 0.0
  %vm7834 = vcmp.gt.f32.partialorder %v7479, 0.0
  %vm7835 = vcmp.gt.f32.partialorder %v7480, 0.0
  %vm7836 = vcmp.gt.f32.partialorder %v7481, 0.0
  %vm7837 = vcmp.gt.f32.partialorder %v7482, 0.0
  %vm7838 = vcmp.gt.f32.partialorder %v7483, 0.0
  %vm7839 = vcmp.gt.f32.partialorder %v7484, 0.0
  %vm7840 = vcmp.gt.f32.partialorder %v7485, 0.0
  %vm7841 = vcmp.gt.f32.partialorder %v7486, 0.0
  %vm7842 = vcmp.gt.f32.partialorder %v7487, 0.0
  %vm7843 = vcmp.gt.f32.partialorder %v7488, 0.0
  %vm7844 = vcmp.gt.f32.partialorder %v7489, 0.0
  %vm7845 = vcmp.gt.f32.partialorder %v7490, 0.0
  %vm7846 = vcmp.gt.f32.partialorder %v7491, 0.0
  %vm7847 = vcmp.gt.f32.partialorder %v7492, 0.0
  %vm7848 = vcmp.gt.f32.partialorder %v7493, 0.0
  %vm7849 = vcmp.gt.f32.partialorder %v7494, 0.0
  %vm7850 = vcmp.gt.f32.partialorder %v7495, 0.0
  %vm7851 = vcmp.gt.f32.partialorder %v7496, 0.0
  %vm7852 = vcmp.gt.f32.partialorder %v7497, 0.0
  %vm7853 = vcmp.gt.f32.partialorder %v7498, 0.0
  %vm7854 = vcmp.gt.f32.partialorder %v7499, 0.0
  %vm7855 = vcmp.gt.f32.partialorder %v7500, 0.0
  %vm7856 = vcmp.gt.f32.partialorder %v7501, 0.0
  %vm7857 = vcmp.gt.f32.partialorder %v7502, 0.0
  %vm7858 = vcmp.gt.f32.partialorder %v7503, 0.0
  %vm7859 = vcmp.gt.f32.partialorder %v7504, 0.0
  %vm7860 = vcmp.gt.f32.partialorder %v7505, 0.0
  %vm7861 = vcmp.gt.f32.partialorder %v7506, 0.0
  %v7862 = vmul.f32 %v7694, %v7071
  %v7863 = vmul.f32 %v7694, %v7072
  %v7864 = vmul.f32 %v7694, %v7073
  %v7865 = vmul.f32 %v7694, %v7074
  %v7866 = vmul.f32 %v7698, %v7071
  %v7867 = vmul.f32 %v7698, %v7072
  %v7868 = vmul.f32 %v7698, %v7073
  %v7869 = vmul.f32 %v7698, %v7074
  %v7870 = vmul.f32 %v7702, %v7071
  %v7871 = vmul.f32 %v7702, %v7072
  %v7872 = vmul.f32 %v7702, %v7073
  %v7873 = vmul.f32 %v7702, %v7074
  %v7874 = vmul.f32 %v7706, %v7071
  %v7875 = vmul.f32 %v7706, %v7072
  %v7876 = vmul.f32 %v7706, %v7073
  %v7877 = vmul.f32 %v7706, %v7074
  %v7878 = vmul.f32 %v7710, %v7071
  %v7879 = vmul.f32 %v7710, %v7072
  %v7880 = vmul.f32 %v7710, %v7073
  %v7881 = vmul.f32 %v7710, %v7074
  %v7882 = vmul.f32 %v7714, %v7071
  %v7883 = vmul.f32 %v7714, %v7072
  %v7884 = vmul.f32 %v7714, %v7073
  %v7885 = vmul.f32 %v7714, %v7074
  %v7886 = vmul.f32 %v7718, %v7071
  %v7887 = vmul.f32 %v7718, %v7072
  %v7888 = vmul.f32 %v7718, %v7073
  %v7889 = vmul.f32 %v7718, %v7074
  %v7890 = vmul.f32 %v7722, %v7071
  %v7891 = vmul.f32 %v7722, %v7072
  %v7892 = vmul.f32 %v7722, %v7073
  %v7893 = vmul.f32 %v7722, %v7074
  %v7894 = vsel %vm7830, %v7862, 0.0
  %v7895 = vsel %vm7831, %v7863, 0.0
  %v7896 = vsel %vm7832, %v7864, 0.0
  %v7897 = vsel %vm7833, %v7865, 0.0
  %v7898 = vsel %vm7834, %v7866, 0.0
  %v7899 = vsel %vm7835, %v7867, 0.0
  %v7900 = vsel %vm7836, %v7868, 0.0
  %v7901 = vsel %vm7837, %v7869, 0.0
  %v7902 = vsel %vm7838, %v7870, 0.0
  %v7903 = vsel %vm7839, %v7871, 0.0
  %v7904 = vsel %vm7840, %v7872, 0.0
  %v7905 = vsel %vm7841, %v7873, 0.0
  %v7906 = vsel %vm7842, %v7874, 0.0
  %v7907 = vsel %vm7843, %v7875, 0.0
  %v7908 = vsel %vm7844, %v7876, 0.0
  %v7909 = vsel %vm7845, %v7877, 0.0
  %v7910 = vsel %vm7846, %v7878, 0.0
  %v7911 = vsel %vm7847, %v7879, 0.0
  %v7912 = vsel %vm7848, %v7880, 0.0
  %v7913 = vsel %vm7849, %v7881, 0.0
  %v7914 = vsel %vm7850, %v7882, 0.0
  %v7915 = vsel %vm7851, %v7883, 0.0
  %v7916 = vsel %vm7852, %v7884, 0.0
  %v7917 = vsel %vm7853, %v7885, 0.0
  %v7918 = vsel %vm7854, %v7886, 0.0
  %v7919 = vsel %vm7855, %v7887, 0.0
  %v7920 = vsel %vm7856, %v7888, 0.0
  %v7921 = vsel %vm7857, %v7889, 0.0
  %v7922 = vsel %vm7858, %v7890, 0.0
  %v7923 = vsel %vm7859, %v7891, 0.0
  %v7924 = vsel %vm7860, %v7892, 0.0
  %v7925 = vsel %vm7861, %v7893, 0.0
  %v7926 = vsel %vm517, %v7894, 0.0
  %v7927 = vsel %vm517, %v7898, 0.0
  %v7928 = vadd.f32 %v7926, %v7927
  %v7929 = vsel %vm517, %v7902, 0.0
  %v7930 = vadd.f32 %v7928, %v7929
  %v7931 = vsel %vm517, %v7906, 0.0
  %v7932 = vadd.f32 %v7930, %v7931
  %v7933 = vsel %vm517, %v7910, 0.0
  %v7934 = vadd.f32 %v7932, %v7933
  %v7935 = vsel %vm517, %v7914, 0.0
  %v7936 = vadd.f32 %v7934, %v7935
  %v7937 = vsel %vm517, %v7918, 0.0
  %v7938 = vadd.f32 %v7936, %v7937
  %v7939 = vsel %vm517, %v7922, 0.0
  %v7940 = vadd.f32 %v7938, %v7939
  %v7941 = vsel %vm517, %v7895, 0.0
  %v7942 = vsel %vm517, %v7899, 0.0
  %v7943 = vadd.f32 %v7941, %v7942
  %v7944 = vsel %vm517, %v7903, 0.0
  %v7945 = vadd.f32 %v7943, %v7944
  %v7946 = vsel %vm517, %v7907, 0.0
  %v7947 = vadd.f32 %v7945, %v7946
  %v7948 = vsel %vm517, %v7911, 0.0
  %v7949 = vadd.f32 %v7947, %v7948
  %v7950 = vsel %vm517, %v7915, 0.0
  %v7951 = vadd.f32 %v7949, %v7950
  %v7952 = vsel %vm517, %v7919, 0.0
  %v7953 = vadd.f32 %v7951, %v7952
  %v7954 = vsel %vm517, %v7923, 0.0
  %v7955 = vadd.f32 %v7953, %v7954
  %v7956 = vsel %vm517, %v7896, 0.0
  %v7957 = vsel %vm517, %v7900, 0.0
  %v7958 = vadd.f32 %v7956, %v7957
  %v7959 = vsel %vm517, %v7904, 0.0
  %v7960 = vadd.f32 %v7958, %v7959
  %v7961 = vsel %vm517, %v7908, 0.0
  %v7962 = vadd.f32 %v7960, %v7961
  %v7963 = vsel %vm517, %v7912, 0.0
  %v7964 = vadd.f32 %v7962, %v7963
  %v7965 = vsel %vm517, %v7916, 0.0
  %v7966 = vadd.f32 %v7964, %v7965
  %v7967 = vsel %vm517, %v7920, 0.0
  %v7968 = vadd.f32 %v7966, %v7967
  %v7969 = vsel %vm517, %v7924, 0.0
  %v7970 = vadd.f32 %v7968, %v7969
  %v7971 = vsel %vm517, %v7897, 0.0
  %v7972 = vsel %vm517, %v7901, 0.0
  %v7973 = vadd.f32 %v7971, %v7972
  %v7974 = vsel %vm517, %v7905, 0.0
  %v7975 = vadd.f32 %v7973, %v7974
  %v7976 = vsel %vm517, %v7909, 0.0
  %v7977 = vadd.f32 %v7975, %v7976
  %v7978 = vsel %vm517, %v7913, 0.0
  %v7979 = vadd.f32 %v7977, %v7978
  %v7980 = vsel %vm517, %v7917, 0.0
  %v7981 = vadd.f32 %v7979, %v7980
  %v7982 = vsel %vm517, %v7921, 0.0
  %v7983 = vadd.f32 %v7981, %v7982
  %v7984 = vsel %vm517, %v7925, 0.0
  %v7985 = vadd.f32 %v7983, %v7984
  %v7986 = vmul.f32 %v7094, %v7894
  %v7987 = vmul.f32 %v7094, %v7895
  %v7988 = vmul.f32 %v7094, %v7896
  %v7989 = vmul.f32 %v7094, %v7897
  %v7990 = vmul.f32 %v7098, %v7898
  %v7991 = vmul.f32 %v7098, %v7899
  %v7992 = vmul.f32 %v7098, %v7900
  %v7993 = vmul.f32 %v7098, %v7901
  %v7994 = vmul.f32 %v7102, %v7902
  %v7995 = vmul.f32 %v7102, %v7903
  %v7996 = vmul.f32 %v7102, %v7904
  %v7997 = vmul.f32 %v7102, %v7905
  %v7998 = vmul.f32 %v7106, %v7906
  %v7999 = vmul.f32 %v7106, %v7907
  %v8000 = vmul.f32 %v7106, %v7908
  %v8001 = vmul.f32 %v7106, %v7909
  %v8002 = vmul.f32 %v7110, %v7910
  %v8003 = vmul.f32 %v7110, %v7911
  %v8004 = vmul.f32 %v7110, %v7912
  %v8005 = vmul.f32 %v7110, %v7913
  %v8006 = vmul.f32 %v7114, %v7914
  %v8007 = vmul.f32 %v7114, %v7915
  %v8008 = vmul.f32 %v7114, %v7916
  %v8009 = vmul.f32 %v7114, %v7917
  %v8010 = vmul.f32 %v7118, %v7918
  %v8011 = vmul.f32 %v7118, %v7919
  %v8012 = vmul.f32 %v7118, %v7920
  %v8013 = vmul.f32 %v7118, %v7921
  %v8014 = vmul.f32 %v7122, %v7922
  %v8015 = vmul.f32 %v7122, %v7923
  %v8016 = vmul.f32 %v7122, %v7924
  %v8017 = vmul.f32 %v7122, %v7925
  %v8018 = vsel %vm517, %v7986, 0.0
  %v8019 = vsel %vm517, %v7990, 0.0
  %v8020 = vadd.f32 %v8018, %v8019
  %v8021 = vsel %vm517, %v7994, 0.0
  %v8022 = vadd.f32 %v8020, %v8021
  %v8023 = vsel %vm517, %v7998, 0.0
  %v8024 = vadd.f32 %v8022, %v8023
  %v8025 = vsel %vm517, %v8002, 0.0
  %v8026 = vadd.f32 %v8024, %v8025
  %v8027 = vsel %vm517, %v8006, 0.0
  %v8028 = vadd.f32 %v8026, %v8027
  %v8029 = vsel %vm517, %v8010, 0.0
  %v8030 = vadd.f32 %v8028, %v8029
  %v8031 = vsel %vm517, %v8014, 0.0
  %v8032 = vadd.f32 %v8030, %v8031
  %v8033 = vsel %vm517, %v7987, 0.0
  %v8034 = vsel %vm517, %v7991, 0.0
  %v8035 = vadd.f32 %v8033, %v8034
  %v8036 = vsel %vm517, %v7995, 0.0
  %v8037 = vadd.f32 %v8035, %v8036
  %v8038 = vsel %vm517, %v7999, 0.0
  %v8039 = vadd.f32 %v8037, %v8038
  %v8040 = vsel %vm517, %v8003, 0.0
  %v8041 = vadd.f32 %v8039, %v8040
  %v8042 = vsel %vm517, %v8007, 0.0
  %v8043 = vadd.f32 %v8041, %v8042
  %v8044 = vsel %vm517, %v8011, 0.0
  %v8045 = vadd.f32 %v8043, %v8044
  %v8046 = vsel %vm517, %v8015, 0.0
  %v8047 = vadd.f32 %v8045, %v8046
  %v8048 = vsel %vm517, %v7988, 0.0
  %v8049 = vsel %vm517, %v7992, 0.0
  %v8050 = vadd.f32 %v8048, %v8049
  %v8051 = vsel %vm517, %v7996, 0.0
  %v8052 = vadd.f32 %v8050, %v8051
  %v8053 = vsel %vm517, %v8000, 0.0
  %v8054 = vadd.f32 %v8052, %v8053
  %v8055 = vsel %vm517, %v8004, 0.0
  %v8056 = vadd.f32 %v8054, %v8055
  %v8057 = vsel %vm517, %v8008, 0.0
  %v8058 = vadd.f32 %v8056, %v8057
  %v8059 = vsel %vm517, %v8012, 0.0
  %v8060 = vadd.f32 %v8058, %v8059
  %v8061 = vsel %vm517, %v8016, 0.0
  %v8062 = vadd.f32 %v8060, %v8061
  %v8063 = vsel %vm517, %v7989, 0.0
  %v8064 = vsel %vm517, %v7993, 0.0
  %v8065 = vadd.f32 %v8063, %v8064
  %v8066 = vsel %vm517, %v7997, 0.0
  %v8067 = vadd.f32 %v8065, %v8066
  %v8068 = vsel %vm517, %v8001, 0.0
  %v8069 = vadd.f32 %v8067, %v8068
  %v8070 = vsel %vm517, %v8005, 0.0
  %v8071 = vadd.f32 %v8069, %v8070
  %v8072 = vsel %vm517, %v8009, 0.0
  %v8073 = vadd.f32 %v8071, %v8072
  %v8074 = vsel %vm517, %v8013, 0.0
  %v8075 = vadd.f32 %v8073, %v8074
  %v8076 = vsel %vm517, %v8017, 0.0
  %v8077 = vadd.f32 %v8075, %v8076
  %v8078 = vmax.f32 %v8032, -10.0
  %v8079 = vmax.f32 %v8047, -10.0
  %v8080 = vmax.f32 %v8062, -10.0
  %v8081 = vmax.f32 %v8077, -10.0
  %v8082 = vmin.f32 %v8078, 10.0
  %v8083 = vmin.f32 %v8079, 10.0
  %v8084 = vmin.f32 %v8080, 10.0
  %v8085 = vmin.f32 %v8081, 10.0
  %v8086 = vand.u32 2147483647, %v8032
  %v8087 = vand.u32 2147483647, %v8047
  %v8088 = vand.u32 2147483647, %v8062
  %v8089 = vand.u32 2147483647, %v8077
  %vm8090 = vcmp.eq.f32.partialorder %v8086, 10.0
  %vm8091 = vcmp.eq.f32.partialorder %v8087, 10.0
  %vm8092 = vcmp.eq.f32.partialorder %v8088, 10.0
  %vm8093 = vcmp.eq.f32.partialorder %v8089, 10.0
  %v8094 = vsel %vm8090, 0.0, %v8082
  %v8095 = vsel %vm8091, 0.0, %v8083
  %v8096 = vsel %vm8092, 0.0, %v8084
  %v8097 = vsel %vm8093, 0.0, %v8085
  %v8098 = vmul.f32 %v8094, 0.01
  %v8099 = vmul.f32 %v8095, 0.01
  %v8100 = vmul.f32 %v8096, 0.01
  %v8101 = vmul.f32 %v8097, 0.01
  %v8102 = vsub.f32 %v6655, %v8098
  %v8103 = vsub.f32 %v6656, %v8099
  %v8104 = vsub.f32 %v6657, %v8100
  %v8105 = vsub.f32 %v6658, %v8101
  %v8106 = vmul.f32 %v7190, %v7894
  %v8107 = vmul.f32 %v7190, %v7895
  %v8108 = vmul.f32 %v7190, %v7896
  %v8109 = vmul.f32 %v7190, %v7897
  %v8110 = vmul.f32 %v7194, %v7898
  %v8111 = vmul.f32 %v7194, %v7899
  %v8112 = vmul.f32 %v7194, %v7900
  %v8113 = vmul.f32 %v7194, %v7901
  %v8114 = vmul.f32 %v7198, %v7902
  %v8115 = vmul.f32 %v7198, %v7903
  %v8116 = vmul.f32 %v7198, %v7904
  %v8117 = vmul.f32 %v7198, %v7905
  %v8118 = vmul.f32 %v7202, %v7906
  %v8119 = vmul.f32 %v7202, %v7907
  %v8120 = vmul.f32 %v7202, %v7908
  %v8121 = vmul.f32 %v7202, %v7909
  %v8122 = vmul.f32 %v7206, %v7910
  %v8123 = vmul.f32 %v7206, %v7911
  %v8124 = vmul.f32 %v7206, %v7912
  %v8125 = vmul.f32 %v7206, %v7913
  %v8126 = vmul.f32 %v7210, %v7914
  %v8127 = vmul.f32 %v7210, %v7915
  %v8128 = vmul.f32 %v7210, %v7916
  %v8129 = vmul.f32 %v7210, %v7917
  %v8130 = vmul.f32 %v7214, %v7918
  %v8131 = vmul.f32 %v7214, %v7919
  %v8132 = vmul.f32 %v7214, %v7920
  %v8133 = vmul.f32 %v7214, %v7921
  %v8134 = vmul.f32 %v7218, %v7922
  %v8135 = vmul.f32 %v7218, %v7923
  %v8136 = vmul.f32 %v7218, %v7924
  %v8137 = vmul.f32 %v7218, %v7925
  %v8138 = vsel %vm517, %v8106, 0.0
  %v8139 = vsel %vm517, %v8110, 0.0
  %v8140 = vadd.f32 %v8138, %v8139
  %v8141 = vsel %vm517, %v8114, 0.0
  %v8142 = vadd.f32 %v8140, %v8141
  %v8143 = vsel %vm517, %v8118, 0.0
  %v8144 = vadd.f32 %v8142, %v8143
  %v8145 = vsel %vm517, %v8122, 0.0
  %v8146 = vadd.f32 %v8144, %v8145
  %v8147 = vsel %vm517, %v8126, 0.0
  %v8148 = vadd.f32 %v8146, %v8147
  %v8149 = vsel %vm517, %v8130, 0.0
  %v8150 = vadd.f32 %v8148, %v8149
  %v8151 = vsel %vm517, %v8134, 0.0
  %v8152 = vadd.f32 %v8150, %v8151
  %v8153 = vsel %vm517, %v8107, 0.0
  %v8154 = vsel %vm517, %v8111, 0.0
  %v8155 = vadd.f32 %v8153, %v8154
  %v8156 = vsel %vm517, %v8115, 0.0
  %v8157 = vadd.f32 %v8155, %v8156
  %v8158 = vsel %vm517, %v8119, 0.0
  %v8159 = vadd.f32 %v8157, %v8158
  %v8160 = vsel %vm517, %v8123, 0.0
  %v8161 = vadd.f32 %v8159, %v8160
  %v8162 = vsel %vm517, %v8127, 0.0
  %v8163 = vadd.f32 %v8161, %v8162
  %v8164 = vsel %vm517, %v8131, 0.0
  %v8165 = vadd.f32 %v8163, %v8164
  %v8166 = vsel %vm517, %v8135, 0.0
  %v8167 = vadd.f32 %v8165, %v8166
  %v8168 = vsel %vm517, %v8108, 0.0
  %v8169 = vsel %vm517, %v8112, 0.0
  %v8170 = vadd.f32 %v8168, %v8169
  %v8171 = vsel %vm517, %v8116, 0.0
  %v8172 = vadd.f32 %v8170, %v8171
  %v8173 = vsel %vm517, %v8120, 0.0
  %v8174 = vadd.f32 %v8172, %v8173
  %v8175 = vsel %vm517, %v8124, 0.0
  %v8176 = vadd.f32 %v8174, %v8175
  %v8177 = vsel %vm517, %v8128, 0.0
  %v8178 = vadd.f32 %v8176, %v8177
  %v8179 = vsel %vm517, %v8132, 0.0
  %v8180 = vadd.f32 %v8178, %v8179
  %v8181 = vsel %vm517, %v8136, 0.0
  %v8182 = vadd.f32 %v8180, %v8181
  %v8183 = vsel %vm517, %v8109, 0.0
  %v8184 = vsel %vm517, %v8113, 0.0
  %v8185 = vadd.f32 %v8183, %v8184
  %v8186 = vsel %vm517, %v8117, 0.0
  %v8187 = vadd.f32 %v8185, %v8186
  %v8188 = vsel %vm517, %v8121, 0.0
  %v8189 = vadd.f32 %v8187, %v8188
  %v8190 = vsel %vm517, %v8125, 0.0
  %v8191 = vadd.f32 %v8189, %v8190
  %v8192 = vsel %vm517, %v8129, 0.0
  %v8193 = vadd.f32 %v8191, %v8192
  %v8194 = vsel %vm517, %v8133, 0.0
  %v8195 = vadd.f32 %v8193, %v8194
  %v8196 = vsel %vm517, %v8137, 0.0
  %v8197 = vadd.f32 %v8195, %v8196
  %v8198 = vmax.f32 %v8152, -10.0
  %v8199 = vmax.f32 %v8167, -10.0
  %v8200 = vmax.f32 %v8182, -10.0
  %v8201 = vmax.f32 %v8197, -10.0
  %v8202 = vmin.f32 %v8198, 10.0
  %v8203 = vmin.f32 %v8199, 10.0
  %v8204 = vmin.f32 %v8200, 10.0
  %v8205 = vmin.f32 %v8201, 10.0
  %v8206 = vand.u32 2147483647, %v8152
  %v8207 = vand.u32 2147483647, %v8167
  %v8208 = vand.u32 2147483647, %v8182
  %v8209 = vand.u32 2147483647, %v8197
  %vm8210 = vcmp.eq.f32.partialorder %v8206, 10.0
  %vm8211 = vcmp.eq.f32.partialorder %v8207, 10.0
  %vm8212 = vcmp.eq.f32.partialorder %v8208, 10.0
  %vm8213 = vcmp.eq.f32.partialorder %v8209, 10.0
  %v8214 = vsel %vm8210, 0.0, %v8202
  %v8215 = vsel %vm8211, 0.0, %v8203
  %v8216 = vsel %vm8212, 0.0, %v8204
  %v8217 = vsel %vm8213, 0.0, %v8205
  %v8218 = vmul.f32 %v8214, 0.01
  %v8219 = vmul.f32 %v8215, 0.01
  %v8220 = vmul.f32 %v8216, 0.01
  %v8221 = vmul.f32 %v8217, 0.01
  %v8222 = vsub.f32 %v6775, %v8218
  %v8223 = vsub.f32 %v6776, %v8219
  %v8224 = vsub.f32 %v6777, %v8220
  %v8225 = vsub.f32 %v6778, %v8221
  %v8226 = vmul.f32 %v7286, %v7894
  %v8227 = vmul.f32 %v7286, %v7895
  %v8228 = vmul.f32 %v7286, %v7896
  %v8229 = vmul.f32 %v7286, %v7897
  %v8230 = vmul.f32 %v7290, %v7898
  %v8231 = vmul.f32 %v7290, %v7899
  %v8232 = vmul.f32 %v7290, %v7900
  %v8233 = vmul.f32 %v7290, %v7901
  %v8234 = vmul.f32 %v7294, %v7902
  %v8235 = vmul.f32 %v7294, %v7903
  %v8236 = vmul.f32 %v7294, %v7904
  %v8237 = vmul.f32 %v7294, %v7905
  %v8238 = vmul.f32 %v7298, %v7906
  %v8239 = vmul.f32 %v7298, %v7907
  %v8240 = vmul.f32 %v7298, %v7908
  %v8241 = vmul.f32 %v7298, %v7909
  %v8242 = vmul.f32 %v7302, %v7910
  %v8243 = vmul.f32 %v7302, %v7911
  %v8244 = vmul.f32 %v7302, %v7912
  %v8245 = vmul.f32 %v7302, %v7913
  %v8246 = vmul.f32 %v7306, %v7914
  %v8247 = vmul.f32 %v7306, %v7915
  %v8248 = vmul.f32 %v7306, %v7916
  %v8249 = vmul.f32 %v7306, %v7917
  %v8250 = vmul.f32 %v7310, %v7918
  %v8251 = vmul.f32 %v7310, %v7919
  %v8252 = vmul.f32 %v7310, %v7920
  %v8253 = vmul.f32 %v7310, %v7921
  %v8254 = vmul.f32 %v7314, %v7922
  %v8255 = vmul.f32 %v7314, %v7923
  %v8256 = vmul.f32 %v7314, %v7924
  %v8257 = vmul.f32 %v7314, %v7925
  %v8258 = vsel %vm517, %v8226, 0.0
  %v8259 = vsel %vm517, %v8230, 0.0
  %v8260 = vadd.f32 %v8258, %v8259
  %v8261 = vsel %vm517, %v8234, 0.0
  %v8262 = vadd.f32 %v8260, %v8261
  %v8263 = vsel %vm517, %v8238, 0.0
  %v8264 = vadd.f32 %v8262, %v8263
  %v8265 = vsel %vm517, %v8242, 0.0
  %v8266 = vadd.f32 %v8264, %v8265
  %v8267 = vsel %vm517, %v8246, 0.0
  %v8268 = vadd.f32 %v8266, %v8267
  %v8269 = vsel %vm517, %v8250, 0.0
  %v8270 = vadd.f32 %v8268, %v8269
  %v8271 = vsel %vm517, %v8254, 0.0
  %v8272 = vadd.f32 %v8270, %v8271
  %v8273 = vsel %vm517, %v8227, 0.0
  %v8274 = vsel %vm517, %v8231, 0.0
  %v8275 = vadd.f32 %v8273, %v8274
  %v8276 = vsel %vm517, %v8235, 0.0
  %v8277 = vadd.f32 %v8275, %v8276
  %v8278 = vsel %vm517, %v8239, 0.0
  %v8279 = vadd.f32 %v8277, %v8278
  %v8280 = vsel %vm517, %v8243, 0.0
  %v8281 = vadd.f32 %v8279, %v8280
  %v8282 = vsel %vm517, %v8247, 0.0
  %v8283 = vadd.f32 %v8281, %v8282
  %v8284 = vsel %vm517, %v8251, 0.0
  %v8285 = vadd.f32 %v8283, %v8284
  %v8286 = vsel %vm517, %v8255, 0.0
  %v8287 = vadd.f32 %v8285, %v8286
  %v8288 = vsel %vm517, %v8228, 0.0
  %v8289 = vsel %vm517, %v8232, 0.0
  %v8290 = vadd.f32 %v8288, %v8289
  %v8291 = vsel %vm517, %v8236, 0.0
  %v8292 = vadd.f32 %v8290, %v8291
  %v8293 = vsel %vm517, %v8240, 0.0
  %v8294 = vadd.f32 %v8292, %v8293
  %v8295 = vsel %vm517, %v8244, 0.0
  %v8296 = vadd.f32 %v8294, %v8295
  %v8297 = vsel %vm517, %v8248, 0.0
  %v8298 = vadd.f32 %v8296, %v8297
  %v8299 = vsel %vm517, %v8252, 0.0
  %v8300 = vadd.f32 %v8298, %v8299
  %v8301 = vsel %vm517, %v8256, 0.0
  %v8302 = vadd.f32 %v8300, %v8301
  %v8303 = vsel %vm517, %v8229, 0.0
  %v8304 = vsel %vm517, %v8233, 0.0
  %v8305 = vadd.f32 %v8303, %v8304
  %v8306 = vsel %vm517, %v8237, 0.0
  %v8307 = vadd.f32 %v8305, %v8306
  %v8308 = vsel %vm517, %v8241, 0.0
  %v8309 = vadd.f32 %v8307, %v8308
  %v8310 = vsel %vm517, %v8245, 0.0
  %v8311 = vadd.f32 %v8309, %v8310
  %v8312 = vsel %vm517, %v8249, 0.0
  %v8313 = vadd.f32 %v8311, %v8312
  %v8314 = vsel %vm517, %v8253, 0.0
  %v8315 = vadd.f32 %v8313, %v8314
  %v8316 = vsel %vm517, %v8257, 0.0
  %v8317 = vadd.f32 %v8315, %v8316
  %v8318 = vmax.f32 %v8272, -10.0
  %v8319 = vmax.f32 %v8287, -10.0
  %v8320 = vmax.f32 %v8302, -10.0
  %v8321 = vmax.f32 %v8317, -10.0
  %v8322 = vmin.f32 %v8318, 10.0
  %v8323 = vmin.f32 %v8319, 10.0
  %v8324 = vmin.f32 %v8320, 10.0
  %v8325 = vmin.f32 %v8321, 10.0
  %v8326 = vand.u32 2147483647, %v8272
  %v8327 = vand.u32 2147483647, %v8287
  %v8328 = vand.u32 2147483647, %v8302
  %v8329 = vand.u32 2147483647, %v8317
  %vm8330 = vcmp.eq.f32.partialorder %v8326, 10.0
  %vm8331 = vcmp.eq.f32.partialorder %v8327, 10.0
  %vm8332 = vcmp.eq.f32.partialorder %v8328, 10.0
  %vm8333 = vcmp.eq.f32.partialorder %v8329, 10.0
  %v8334 = vsel %vm8330, 0.0, %v8322
  %v8335 = vsel %vm8331, 0.0, %v8323
  %v8336 = vsel %vm8332, 0.0, %v8324
  %v8337 = vsel %vm8333, 0.0, %v8325
  %v8338 = vmul.f32 %v8334, 0.01
  %v8339 = vmul.f32 %v8335, 0.01
  %v8340 = vmul.f32 %v8336, 0.01
  %v8341 = vmul.f32 %v8337, 0.01
  %v8342 = vsub.f32 %v6895, %v8338
  %v8343 = vsub.f32 %v6896, %v8339
  %v8344 = vsub.f32 %v6897, %v8340
  %v8345 = vsub.f32 %v6898, %v8341
  %v8346 = vmul.f32 %v7382, %v7894
  %v8347 = vmul.f32 %v7382, %v7895
  %v8348 = vmul.f32 %v7382, %v7896
  %v8349 = vmul.f32 %v7382, %v7897
  %v8350 = vmul.f32 %v7386, %v7898
  %v8351 = vmul.f32 %v7386, %v7899
  %v8352 = vmul.f32 %v7386, %v7900
  %v8353 = vmul.f32 %v7386, %v7901
  %v8354 = vmul.f32 %v7390, %v7902
  %v8355 = vmul.f32 %v7390, %v7903
  %v8356 = vmul.f32 %v7390, %v7904
  %v8357 = vmul.f32 %v7390, %v7905
  %v8358 = vmul.f32 %v7394, %v7906
  %v8359 = vmul.f32 %v7394, %v7907
  %v8360 = vmul.f32 %v7394, %v7908
  %v8361 = vmul.f32 %v7394, %v7909
  %v8362 = vmul.f32 %v7398, %v7910
  %v8363 = vmul.f32 %v7398, %v7911
  %v8364 = vmul.f32 %v7398, %v7912
  %v8365 = vmul.f32 %v7398, %v7913
  %v8366 = vmul.f32 %v7402, %v7914
  %v8367 = vmul.f32 %v7402, %v7915
  %v8368 = vmul.f32 %v7402, %v7916
  %v8369 = vmul.f32 %v7402, %v7917
  %v8370 = vmul.f32 %v7406, %v7918
  %v8371 = vmul.f32 %v7406, %v7919
  %v8372 = vmul.f32 %v7406, %v7920
  %v8373 = vmul.f32 %v7406, %v7921
  %v8374 = vmul.f32 %v7410, %v7922
  %v8375 = vmul.f32 %v7410, %v7923
  %v8376 = vmul.f32 %v7410, %v7924
  %v8377 = vmul.f32 %v7410, %v7925
  %v8378 = vsel %vm517, %v8346, 0.0
  %v8379 = vsel %vm517, %v8350, 0.0
  %v8380 = vadd.f32 %v8378, %v8379
  %v8381 = vsel %vm517, %v8354, 0.0
  %v8382 = vadd.f32 %v8380, %v8381
  %v8383 = vsel %vm517, %v8358, 0.0
  %v8384 = vadd.f32 %v8382, %v8383
  %v8385 = vsel %vm517, %v8362, 0.0
  %v8386 = vadd.f32 %v8384, %v8385
  %v8387 = vsel %vm517, %v8366, 0.0
  %v8388 = vadd.f32 %v8386, %v8387
  %v8389 = vsel %vm517, %v8370, 0.0
  %v8390 = vadd.f32 %v8388, %v8389
  %v8391 = vsel %vm517, %v8374, 0.0
  %v8392 = vadd.f32 %v8390, %v8391
  %v8393 = vsel %vm517, %v8347, 0.0
  %v8394 = vsel %vm517, %v8351, 0.0
  %v8395 = vadd.f32 %v8393, %v8394
  %v8396 = vsel %vm517, %v8355, 0.0
  %v8397 = vadd.f32 %v8395, %v8396
  %v8398 = vsel %vm517, %v8359, 0.0
  %v8399 = vadd.f32 %v8397, %v8398
  %v8400 = vsel %vm517, %v8363, 0.0
  %v8401 = vadd.f32 %v8399, %v8400
  %v8402 = vsel %vm517, %v8367, 0.0
  %v8403 = vadd.f32 %v8401, %v8402
  %v8404 = vsel %vm517, %v8371, 0.0
  %v8405 = vadd.f32 %v8403, %v8404
  %v8406 = vsel %vm517, %v8375, 0.0
  %v8407 = vadd.f32 %v8405, %v8406
  %v8408 = vsel %vm517, %v8348, 0.0
  %v8409 = vsel %vm517, %v8352, 0.0
  %v8410 = vadd.f32 %v8408, %v8409
  %v8411 = vsel %vm517, %v8356, 0.0
  %v8412 = vadd.f32 %v8410, %v8411
  %v8413 = vsel %vm517, %v8360, 0.0
  %v8414 = vadd.f32 %v8412, %v8413
  %v8415 = vsel %vm517, %v8364, 0.0
  %v8416 = vadd.f32 %v8414, %v8415
  %v8417 = vsel %vm517, %v8368, 0.0
  %v8418 = vadd.f32 %v8416, %v8417
  %v8419 = vsel %vm517, %v8372, 0.0
  %v8420 = vadd.f32 %v8418, %v8419
  %v8421 = vsel %vm517, %v8376, 0.0
  %v8422 = vadd.f32 %v8420, %v8421
  %v8423 = vsel %vm517, %v8349, 0.0
  %v8424 = vsel %vm517, %v8353, 0.0
  %v8425 = vadd.f32 %v8423, %v8424
  %v8426 = vsel %vm517, %v8357, 0.0
  %v8427 = vadd.f32 %v8425, %v8426
  %v8428 = vsel %vm517, %v8361, 0.0
  %v8429 = vadd.f32 %v8427, %v8428
  %v8430 = vsel %vm517, %v8365, 0.0
  %v8431 = vadd.f32 %v8429, %v8430
  %v8432 = vsel %vm517, %v8369, 0.0
  %v8433 = vadd.f32 %v8431, %v8432
  %v8434 = vsel %vm517, %v8373, 0.0
  %v8435 = vadd.f32 %v8433, %v8434
  %v8436 = vsel %vm517, %v8377, 0.0
  %v8437 = vadd.f32 %v8435, %v8436
  %v8438 = vmax.f32 %v8392, -10.0
  %v8439 = vmax.f32 %v8407, -10.0
  %v8440 = vmax.f32 %v8422, -10.0
  %v8441 = vmax.f32 %v8437, -10.0
  %v8442 = vmin.f32 %v8438, 10.0
  %v8443 = vmin.f32 %v8439, 10.0
  %v8444 = vmin.f32 %v8440, 10.0
  %v8445 = vmin.f32 %v8441, 10.0
  %v8446 = vand.u32 2147483647, %v8392
  %v8447 = vand.u32 2147483647, %v8407
  %v8448 = vand.u32 2147483647, %v8422
  %v8449 = vand.u32 2147483647, %v8437
  %vm8450 = vcmp.eq.f32.partialorder %v8446, 10.0
  %vm8451 = vcmp.eq.f32.partialorder %v8447, 10.0
  %vm8452 = vcmp.eq.f32.partialorder %v8448, 10.0
  %vm8453 = vcmp.eq.f32.partialorder %v8449, 10.0
  %v8454 = vsel %vm8450, 0.0, %v8442
  %v8455 = vsel %vm8451, 0.0, %v8443
  %v8456 = vsel %vm8452, 0.0, %v8444
  %v8457 = vsel %vm8453, 0.0, %v8445
  %v8458 = vmul.f32 %v8454, 0.01
  %v8459 = vmul.f32 %v8455, 0.01
  %v8460 = vmul.f32 %v8456, 0.01
  %v8461 = vmul.f32 %v8457, 0.01
  %v8462 = vsub.f32 %v7015, %v8458
  %v8463 = vsub.f32 %v7016, %v8459
  %v8464 = vsub.f32 %v7017, %v8460
  %v8465 = vsub.f32 %v7018, %v8461
  %v8466 = vmax.f32 %v7940, -10.0
  %v8467 = vmax.f32 %v7955, -10.0
  %v8468 = vmax.f32 %v7970, -10.0
  %v8469 = vmax.f32 %v7985, -10.0
  %v8470 = vmin.f32 %v8466, 10.0
  %v8471 = vmin.f32 %v8467, 10.0
  %v8472 = vmin.f32 %v8468, 10.0
  %v8473 = vmin.f32 %v8469, 10.0
  %v8474 = vand.u32 2147483647, %v7940
  %v8475 = vand.u32 2147483647, %v7955
  %v8476 = vand.u32 2147483647, %v7970
  %v8477 = vand.u32 2147483647, %v7985
  %vm8478 = vcmp.eq.f32.partialorder %v8474, 10.0
  %vm8479 = vcmp.eq.f32.partialorder %v8475, 10.0
  %vm8480 = vcmp.eq.f32.partialorder %v8476, 10.0
  %vm8481 = vcmp.eq.f32.partialorder %v8477, 10.0
  %v8482 = vsel %vm8478, 0.0, %v8470
  %v8483 = vsel %vm8479, 0.0, %v8471
  %v8484 = vsel %vm8480, 0.0, %v8472
  %v8485 = vsel %vm8481, 0.0, %v8473
  %v8486 = vmul.f32 %v8482, 0.01
  %v8487 = vmul.f32 %v8483, 0.01
  %v8488 = vmul.f32 %v8484, 0.01
  %v8489 = vmul.f32 %v8485, 0.01
  %v8490 = vsub.f32 %v7043, %v8486
  %v8491 = vsub.f32 %v7044, %v8487
  %v8492 = vsub.f32 %v7045, %v8488
  %v8493 = vsub.f32 %v7046, %v8489
  %v8494 = vmax.f32 %v7769, -10.0
  %v8495 = vmax.f32 %v7784, -10.0
  %v8496 = vmax.f32 %v7799, -10.0
  %v8497 = vmax.f32 %v7814, -10.0
  %v8498 = vmin.f32 %v8494, 10.0
  %v8499 = vmin.f32 %v8495, 10.0
  %v8500 = vmin.f32 %v8496, 10.0
  %v8501 = vmin.f32 %v8497, 10.0
  %v8502 = vand.u32 2147483647, %v7769
  %v8503 = vand.u32 2147483647, %v7784
  %v8504 = vand.u32 2147483647, %v7799
  %v8505 = vand.u32 2147483647, %v7814
  %vm8506 = vcmp.eq.f32.partialorder %v8502, 10.0
  %vm8507 = vcmp.eq.f32.partialorder %v8503, 10.0
  %vm8508 = vcmp.eq.f32.partialorder %v8504, 10.0
  %vm8509 = vcmp.eq.f32.partialorder %v8505, 10.0
  %v8510 = vsel %vm8506, 0.0, %v8498
  %v8511 = vsel %vm8507, 0.0, %v8499
  %v8512 = vsel %vm8508, 0.0, %v8500
  %v8513 = vsel %vm8509, 0.0, %v8501
  %v8514 = vmul.f32 %v8510, 0.01
  %v8515 = vmul.f32 %v8511, 0.01
  %v8516 = vmul.f32 %v8512, 0.01
  %v8517 = vmul.f32 %v8513, 0.01
  %v8518 = vsub.f32 %v7071, %v8514
  %v8519 = vsub.f32 %v7072, %v8515
  %v8520 = vsub.f32 %v7073, %v8516
  %v8521 = vsub.f32 %v7074, %v8517
  %v8522 = vmax.f32 %v7829, -10.0
  %v8523 = vmin.f32 %v8522, 10.0
  %v8524 = vand.u32 2147483647, %v7829
  %vm8525 = vcmp.eq.f32.partialorder %v8524, 10.0
  %v8526 = vsel %vm8525, 0.0, %v8523
  %v8527 = vmul.f32 %v8526, 0.01
  %v8528 = vsub.f32 %v7081, %v8527
  %v8529 = vmul.f32 %v1512, %v8102
  %v8530 = vmul.f32 %v1512, %v8103
  %v8531 = vmul.f32 %v1512, %v8104
  %v8532 = vmul.f32 %v1512, %v8105
  %v8533 = vmul.f32 %v1516, %v8102
  %v8534 = vmul.f32 %v1516, %v8103
  %v8535 = vmul.f32 %v1516, %v8104
  %v8536 = vmul.f32 %v1516, %v8105
  %v8537 = vmul.f32 %v1520, %v8102
  %v8538 = vmul.f32 %v1520, %v8103
  %v8539 = vmul.f32 %v1520, %v8104
  %v8540 = vmul.f32 %v1520, %v8105
  %v8541 = vmul.f32 %v1524, %v8102
  %v8542 = vmul.f32 %v1524, %v8103
  %v8543 = vmul.f32 %v1524, %v8104
  %v8544 = vmul.f32 %v1524, %v8105
  %v8545 = vmul.f32 %v1528, %v8102
  %v8546 = vmul.f32 %v1528, %v8103
  %v8547 = vmul.f32 %v1528, %v8104
  %v8548 = vmul.f32 %v1528, %v8105
  %v8549 = vmul.f32 %v1532, %v8102
  %v8550 = vmul.f32 %v1532, %v8103
  %v8551 = vmul.f32 %v1532, %v8104
  %v8552 = vmul.f32 %v1532, %v8105
  %v8553 = vmul.f32 %v1536, %v8102
  %v8554 = vmul.f32 %v1536, %v8103
  %v8555 = vmul.f32 %v1536, %v8104
  %v8556 = vmul.f32 %v1536, %v8105
  %v8557 = vmul.f32 %v1540, %v8102
  %v8558 = vmul.f32 %v1540, %v8103
  %v8559 = vmul.f32 %v1540, %v8104
  %v8560 = vmul.f32 %v1540, %v8105
  %v8561 = vmul.f32 %v1544, %v8102
  %v8562 = vmul.f32 %v1544, %v8103
  %v8563 = vmul.f32 %v1544, %v8104
  %v8564 = vmul.f32 %v1544, %v8105
  %v8565 = vmul.f32 %v1548, %v8102
  %v8566 = vmul.f32 %v1548, %v8103
  %v8567 = vmul.f32 %v1548, %v8104
  %v8568 = vmul.f32 %v1548, %v8105
  %v8569 = vmul.f32 %v1552, %v8102
  %v8570 = vmul.f32 %v1552, %v8103
  %v8571 = vmul.f32 %v1552, %v8104
  %v8572 = vmul.f32 %v1552, %v8105
  %v8573 = vmul.f32 %v1556, %v8102
  %v8574 = vmul.f32 %v1556, %v8103
  %v8575 = vmul.f32 %v1556, %v8104
  %v8576 = vmul.f32 %v1556, %v8105
  %v8577 = vmul.f32 %v1560, %v8102
  %v8578 = vmul.f32 %v1560, %v8103
  %v8579 = vmul.f32 %v1560, %v8104
  %v8580 = vmul.f32 %v1560, %v8105
  %v8581 = vmul.f32 %v1564, %v8102
  %v8582 = vmul.f32 %v1564, %v8103
  %v8583 = vmul.f32 %v1564, %v8104
  %v8584 = vmul.f32 %v1564, %v8105
  %v8585 = vmul.f32 %v1568, %v8102
  %v8586 = vmul.f32 %v1568, %v8103
  %v8587 = vmul.f32 %v1568, %v8104
  %v8588 = vmul.f32 %v1568, %v8105
  %v8589 = vmul.f32 %v1572, %v8102
  %v8590 = vmul.f32 %v1572, %v8103
  %v8591 = vmul.f32 %v1572, %v8104
  %v8592 = vmul.f32 %v1572, %v8105
  %v8593 = vadd.f32 %v8490, %v8529
  %v8594 = vadd.f32 %v8491, %v8530
  %v8595 = vadd.f32 %v8492, %v8531
  %v8596 = vadd.f32 %v8493, %v8532
  %v8597 = vadd.f32 %v8490, %v8533
  %v8598 = vadd.f32 %v8491, %v8534
  %v8599 = vadd.f32 %v8492, %v8535
  %v8600 = vadd.f32 %v8493, %v8536
  %v8601 = vadd.f32 %v8490, %v8537
  %v8602 = vadd.f32 %v8491, %v8538
  %v8603 = vadd.f32 %v8492, %v8539
  %v8604 = vadd.f32 %v8493, %v8540
  %v8605 = vadd.f32 %v8490, %v8541
  %v8606 = vadd.f32 %v8491, %v8542
  %v8607 = vadd.f32 %v8492, %v8543
  %v8608 = vadd.f32 %v8493, %v8544
  %v8609 = vadd.f32 %v8490, %v8545
  %v8610 = vadd.f32 %v8491, %v8546
  %v8611 = vadd.f32 %v8492, %v8547
  %v8612 = vadd.f32 %v8493, %v8548
  %v8613 = vadd.f32 %v8490, %v8549
  %v8614 = vadd.f32 %v8491, %v8550
  %v8615 = vadd.f32 %v8492, %v8551
  %v8616 = vadd.f32 %v8493, %v8552
  %v8617 = vadd.f32 %v8490, %v8553
  %v8618 = vadd.f32 %v8491, %v8554
  %v8619 = vadd.f32 %v8492, %v8555
  %v8620 = vadd.f32 %v8493, %v8556
  %v8621 = vadd.f32 %v8490, %v8557
  %v8622 = vadd.f32 %v8491, %v8558
  %v8623 = vadd.f32 %v8492, %v8559
  %v8624 = vadd.f32 %v8493, %v8560
  %v8625 = vadd.f32 %v8490, %v8561
  %v8626 = vadd.f32 %v8491, %v8562
  %v8627 = vadd.f32 %v8492, %v8563
  %v8628 = vadd.f32 %v8493, %v8564
  %v8629 = vadd.f32 %v8490, %v8565
  %v8630 = vadd.f32 %v8491, %v8566
  %v8631 = vadd.f32 %v8492, %v8567
  %v8632 = vadd.f32 %v8493, %v8568
  %v8633 = vadd.f32 %v8490, %v8569
  %v8634 = vadd.f32 %v8491, %v8570
  %v8635 = vadd.f32 %v8492, %v8571
  %v8636 = vadd.f32 %v8493, %v8572
  %v8637 = vadd.f32 %v8490, %v8573
  %v8638 = vadd.f32 %v8491, %v8574
  %v8639 = vadd.f32 %v8492, %v8575
  %v8640 = vadd.f32 %v8493, %v8576
  %v8641 = vadd.f32 %v8490, %v8577
  %v8642 = vadd.f32 %v8491, %v8578
  %v8643 = vadd.f32 %v8492, %v8579
  %v8644 = vadd.f32 %v8493, %v8580
  %v8645 = vadd.f32 %v8490, %v8581
  %v8646 = vadd.f32 %v8491, %v8582
  %v8647 = vadd.f32 %v8492, %v8583
  %v8648 = vadd.f32 %v8493, %v8584
  %v8649 = vadd.f32 %v8490, %v8585
  %v8650 = vadd.f32 %v8491, %v8586
  %v8651 = vadd.f32 %v8492, %v8587
  %v8652 = vadd.f32 %v8493, %v8588
  %v8653 = vadd.f32 %v8490, %v8589
  %v8654 = vadd.f32 %v8491, %v8590
  %v8655 = vadd.f32 %v8492, %v8591
  %v8656 = vadd.f32 %v8493, %v8592
  %v8657 = vmul.f32 %v1704, %v8222
  %v8658 = vmul.f32 %v1704, %v8223
  %v8659 = vmul.f32 %v1704, %v8224
  %v8660 = vmul.f32 %v1704, %v8225
  %v8661 = vmul.f32 %v1708, %v8222
  %v8662 = vmul.f32 %v1708, %v8223
  %v8663 = vmul.f32 %v1708, %v8224
  %v8664 = vmul.f32 %v1708, %v8225
  %v8665 = vmul.f32 %v1712, %v8222
  %v8666 = vmul.f32 %v1712, %v8223
  %v8667 = vmul.f32 %v1712, %v8224
  %v8668 = vmul.f32 %v1712, %v8225
  %v8669 = vmul.f32 %v1716, %v8222
  %v8670 = vmul.f32 %v1716, %v8223
  %v8671 = vmul.f32 %v1716, %v8224
  %v8672 = vmul.f32 %v1716, %v8225
  %v8673 = vmul.f32 %v1720, %v8222
  %v8674 = vmul.f32 %v1720, %v8223
  %v8675 = vmul.f32 %v1720, %v8224
  %v8676 = vmul.f32 %v1720, %v8225
  %v8677 = vmul.f32 %v1724, %v8222
  %v8678 = vmul.f32 %v1724, %v8223
  %v8679 = vmul.f32 %v1724, %v8224
  %v8680 = vmul.f32 %v1724, %v8225
  %v8681 = vmul.f32 %v1728, %v8222
  %v8682 = vmul.f32 %v1728, %v8223
  %v8683 = vmul.f32 %v1728, %v8224
  %v8684 = vmul.f32 %v1728, %v8225
  %v8685 = vmul.f32 %v1732, %v8222
  %v8686 = vmul.f32 %v1732, %v8223
  %v8687 = vmul.f32 %v1732, %v8224
  %v8688 = vmul.f32 %v1732, %v8225
  %v8689 = vmul.f32 %v1736, %v8222
  %v8690 = vmul.f32 %v1736, %v8223
  %v8691 = vmul.f32 %v1736, %v8224
  %v8692 = vmul.f32 %v1736, %v8225
  %v8693 = vmul.f32 %v1740, %v8222
  %v8694 = vmul.f32 %v1740, %v8223
  %v8695 = vmul.f32 %v1740, %v8224
  %v8696 = vmul.f32 %v1740, %v8225
  %v8697 = vmul.f32 %v1744, %v8222
  %v8698 = vmul.f32 %v1744, %v8223
  %v8699 = vmul.f32 %v1744, %v8224
  %v8700 = vmul.f32 %v1744, %v8225
  %v8701 = vmul.f32 %v1748, %v8222
  %v8702 = vmul.f32 %v1748, %v8223
  %v8703 = vmul.f32 %v1748, %v8224
  %v8704 = vmul.f32 %v1748, %v8225
  %v8705 = vmul.f32 %v1752, %v8222
  %v8706 = vmul.f32 %v1752, %v8223
  %v8707 = vmul.f32 %v1752, %v8224
  %v8708 = vmul.f32 %v1752, %v8225
  %v8709 = vmul.f32 %v1756, %v8222
  %v8710 = vmul.f32 %v1756, %v8223
  %v8711 = vmul.f32 %v1756, %v8224
  %v8712 = vmul.f32 %v1756, %v8225
  %v8713 = vmul.f32 %v1760, %v8222
  %v8714 = vmul.f32 %v1760, %v8223
  %v8715 = vmul.f32 %v1760, %v8224
  %v8716 = vmul.f32 %v1760, %v8225
  %v8717 = vmul.f32 %v1764, %v8222
  %v8718 = vmul.f32 %v1764, %v8223
  %v8719 = vmul.f32 %v1764, %v8224
  %v8720 = vmul.f32 %v1764, %v8225
  %v8721 = vadd.f32 %v8593, %v8657
  %v8722 = vadd.f32 %v8594, %v8658
  %v8723 = vadd.f32 %v8595, %v8659
  %v8724 = vadd.f32 %v8596, %v8660
  %v8725 = vadd.f32 %v8597, %v8661
  %v8726 = vadd.f32 %v8598, %v8662
  %v8727 = vadd.f32 %v8599, %v8663
  %v8728 = vadd.f32 %v8600, %v8664
  %v8729 = vadd.f32 %v8601, %v8665
  %v8730 = vadd.f32 %v8602, %v8666
  %v8731 = vadd.f32 %v8603, %v8667
  %v8732 = vadd.f32 %v8604, %v8668
  %v8733 = vadd.f32 %v8605, %v8669
  %v8734 = vadd.f32 %v8606, %v8670
  %v8735 = vadd.f32 %v8607, %v8671
  %v8736 = vadd.f32 %v8608, %v8672
  %v8737 = vadd.f32 %v8609, %v8673
  %v8738 = vadd.f32 %v8610, %v8674
  %v8739 = vadd.f32 %v8611, %v8675
  %v8740 = vadd.f32 %v8612, %v8676
  %v8741 = vadd.f32 %v8613, %v8677
  %v8742 = vadd.f32 %v8614, %v8678
  %v8743 = vadd.f32 %v8615, %v8679
  %v8744 = vadd.f32 %v8616, %v8680
  %v8745 = vadd.f32 %v8617, %v8681
  %v8746 = vadd.f32 %v8618, %v8682
  %v8747 = vadd.f32 %v8619, %v8683
  %v8748 = vadd.f32 %v8620, %v8684
  %v8749 = vadd.f32 %v8621, %v8685
  %v8750 = vadd.f32 %v8622, %v8686
  %v8751 = vadd.f32 %v8623, %v8687
  %v8752 = vadd.f32 %v8624, %v8688
  %v8753 = vadd.f32 %v8625, %v8689
  %v8754 = vadd.f32 %v8626, %v8690
  %v8755 = vadd.f32 %v8627, %v8691
  %v8756 = vadd.f32 %v8628, %v8692
  %v8757 = vadd.f32 %v8629, %v8693
  %v8758 = vadd.f32 %v8630, %v8694
  %v8759 = vadd.f32 %v8631, %v8695
  %v8760 = vadd.f32 %v8632, %v8696
  %v8761 = vadd.f32 %v8633, %v8697
  %v8762 = vadd.f32 %v8634, %v8698
  %v8763 = vadd.f32 %v8635, %v8699
  %v8764 = vadd.f32 %v8636, %v8700
  %v8765 = vadd.f32 %v8637, %v8701
  %v8766 = vadd.f32 %v8638, %v8702
  %v8767 = vadd.f32 %v8639, %v8703
  %v8768 = vadd.f32 %v8640, %v8704
  %v8769 = vadd.f32 %v8641, %v8705
  %v8770 = vadd.f32 %v8642, %v8706
  %v8771 = vadd.f32 %v8643, %v8707
  %v8772 = vadd.f32 %v8644, %v8708
  %v8773 = vadd.f32 %v8645, %v8709
  %v8774 = vadd.f32 %v8646, %v8710
  %v8775 = vadd.f32 %v8647, %v8711
  %v8776 = vadd.f32 %v8648, %v8712
  %v8777 = vadd.f32 %v8649, %v8713
  %v8778 = vadd.f32 %v8650, %v8714
  %v8779 = vadd.f32 %v8651, %v8715
  %v8780 = vadd.f32 %v8652, %v8716
  %v8781 = vadd.f32 %v8653, %v8717
  %v8782 = vadd.f32 %v8654, %v8718
  %v8783 = vadd.f32 %v8655, %v8719
  %v8784 = vadd.f32 %v8656, %v8720
  %v8785 = vmul.f32 %v1896, %v8342
  %v8786 = vmul.f32 %v1896, %v8343
  %v8787 = vmul.f32 %v1896, %v8344
  %v8788 = vmul.f32 %v1896, %v8345
  %v8789 = vmul.f32 %v1900, %v8342
  %v8790 = vmul.f32 %v1900, %v8343
  %v8791 = vmul.f32 %v1900, %v8344
  %v8792 = vmul.f32 %v1900, %v8345
  %v8793 = vmul.f32 %v1904, %v8342
  %v8794 = vmul.f32 %v1904, %v8343
  %v8795 = vmul.f32 %v1904, %v8344
  %v8796 = vmul.f32 %v1904, %v8345
  %v8797 = vmul.f32 %v1908, %v8342
  %v8798 = vmul.f32 %v1908, %v8343
  %v8799 = vmul.f32 %v1908, %v8344
  %v8800 = vmul.f32 %v1908, %v8345
  %v8801 = vmul.f32 %v1912, %v8342
  %v8802 = vmul.f32 %v1912, %v8343
  %v8803 = vmul.f32 %v1912, %v8344
  %v8804 = vmul.f32 %v1912, %v8345
  %v8805 = vmul.f32 %v1916, %v8342
  %v8806 = vmul.f32 %v1916, %v8343
  %v8807 = vmul.f32 %v1916, %v8344
  %v8808 = vmul.f32 %v1916, %v8345
  %v8809 = vmul.f32 %v1920, %v8342
  %v8810 = vmul.f32 %v1920, %v8343
  %v8811 = vmul.f32 %v1920, %v8344
  %v8812 = vmul.f32 %v1920, %v8345
  %v8813 = vmul.f32 %v1924, %v8342
  %v8814 = vmul.f32 %v1924, %v8343
  %v8815 = vmul.f32 %v1924, %v8344
  %v8816 = vmul.f32 %v1924, %v8345
  %v8817 = vmul.f32 %v1928, %v8342
  %v8818 = vmul.f32 %v1928, %v8343
  %v8819 = vmul.f32 %v1928, %v8344
  %v8820 = vmul.f32 %v1928, %v8345
  %v8821 = vmul.f32 %v1932, %v8342
  %v8822 = vmul.f32 %v1932, %v8343
  %v8823 = vmul.f32 %v1932, %v8344
  %v8824 = vmul.f32 %v1932, %v8345
  %v8825 = vmul.f32 %v1936, %v8342
  %v8826 = vmul.f32 %v1936, %v8343
  %v8827 = vmul.f32 %v1936, %v8344
  %v8828 = vmul.f32 %v1936, %v8345
  %v8829 = vmul.f32 %v1940, %v8342
  %v8830 = vmul.f32 %v1940, %v8343
  %v8831 = vmul.f32 %v1940, %v8344
  %v8832 = vmul.f32 %v1940, %v8345
  %v8833 = vmul.f32 %v1944, %v8342
  %v8834 = vmul.f32 %v1944, %v8343
  %v8835 = vmul.f32 %v1944, %v8344
  %v8836 = vmul.f32 %v1944, %v8345
  %v8837 = vmul.f32 %v1948, %v8342
  %v8838 = vmul.f32 %v1948, %v8343
  %v8839 = vmul.f32 %v1948, %v8344
  %v8840 = vmul.f32 %v1948, %v8345
  %v8841 = vmul.f32 %v1952, %v8342
  %v8842 = vmul.f32 %v1952, %v8343
  %v8843 = vmul.f32 %v1952, %v8344
  %v8844 = vmul.f32 %v1952, %v8345
  %v8845 = vmul.f32 %v1956, %v8342
  %v8846 = vmul.f32 %v1956, %v8343
  %v8847 = vmul.f32 %v1956, %v8344
  %v8848 = vmul.f32 %v1956, %v8345
  %v8849 = vadd.f32 %v8721, %v8785
  %v8850 = vadd.f32 %v8722, %v8786
  %v8851 = vadd.f32 %v8723, %v8787
  %v8852 = vadd.f32 %v8724, %v8788
  %v8853 = vadd.f32 %v8725, %v8789
  %v8854 = vadd.f32 %v8726, %v8790
  %v8855 = vadd.f32 %v8727, %v8791
  %v8856 = vadd.f32 %v8728, %v8792
  %v8857 = vadd.f32 %v8729, %v8793
  %v8858 = vadd.f32 %v8730, %v8794
  %v8859 = vadd.f32 %v8731, %v8795
  %v8860 = vadd.f32 %v8732, %v8796
  %v8861 = vadd.f32 %v8733, %v8797
  %v8862 = vadd.f32 %v8734, %v8798
  %v8863 = vadd.f32 %v8735, %v8799
  %v8864 = vadd.f32 %v8736, %v8800
  %v8865 = vadd.f32 %v8737, %v8801
  %v8866 = vadd.f32 %v8738, %v8802
  %v8867 = vadd.f32 %v8739, %v8803
  %v8868 = vadd.f32 %v8740, %v8804
  %v8869 = vadd.f32 %v8741, %v8805
  %v8870 = vadd.f32 %v8742, %v8806
  %v8871 = vadd.f32 %v8743, %v8807
  %v8872 = vadd.f32 %v8744, %v8808
  %v8873 = vadd.f32 %v8745, %v8809
  %v8874 = vadd.f32 %v8746, %v8810
  %v8875 = vadd.f32 %v8747, %v8811
  %v8876 = vadd.f32 %v8748, %v8812
  %v8877 = vadd.f32 %v8749, %v8813
  %v8878 = vadd.f32 %v8750, %v8814
  %v8879 = vadd.f32 %v8751, %v8815
  %v8880 = vadd.f32 %v8752, %v8816
  %v8881 = vadd.f32 %v8753, %v8817
  %v8882 = vadd.f32 %v8754, %v8818
  %v8883 = vadd.f32 %v8755, %v8819
  %v8884 = vadd.f32 %v8756, %v8820
  %v8885 = vadd.f32 %v8757, %v8821
  %v8886 = vadd.f32 %v8758, %v8822
  %v8887 = vadd.f32 %v8759, %v8823
  %v8888 = vadd.f32 %v8760, %v8824
  %v8889 = vadd.f32 %v8761, %v8825
  %v8890 = vadd.f32 %v8762, %v8826
  %v8891 = vadd.f32 %v8763, %v8827
  %v8892 = vadd.f32 %v8764, %v8828
  %v8893 = vadd.f32 %v8765, %v8829
  %v8894 = vadd.f32 %v8766, %v8830
  %v8895 = vadd.f32 %v8767, %v8831
  %v8896 = vadd.f32 %v8768, %v8832
  %v8897 = vadd.f32 %v8769, %v8833
  %v8898 = vadd.f32 %v8770, %v8834
  %v8899 = vadd.f32 %v8771, %v8835
  %v8900 = vadd.f32 %v8772, %v8836
  %v8901 = vadd.f32 %v8773, %v8837
  %v8902 = vadd.f32 %v8774, %v8838
  %v8903 = vadd.f32 %v8775, %v8839
  %v8904 = vadd.f32 %v8776, %v8840
  %v8905 = vadd.f32 %v8777, %v8841
  %v8906 = vadd.f32 %v8778, %v8842
  %v8907 = vadd.f32 %v8779, %v8843
  %v8908 = vadd.f32 %v8780, %v8844
  %v8909 = vadd.f32 %v8781, %v8845
  %v8910 = vadd.f32 %v8782, %v8846
  %v8911 = vadd.f32 %v8783, %v8847
  %v8912 = vadd.f32 %v8784, %v8848
  %v8913 = vmul.f32 %v2088, %v8462
  %v8914 = vmul.f32 %v2088, %v8463
  %v8915 = vmul.f32 %v2088, %v8464
  %v8916 = vmul.f32 %v2088, %v8465
  %v8917 = vmul.f32 %v2092, %v8462
  %v8918 = vmul.f32 %v2092, %v8463
  %v8919 = vmul.f32 %v2092, %v8464
  %v8920 = vmul.f32 %v2092, %v8465
  %v8921 = vmul.f32 %v2096, %v8462
  %v8922 = vmul.f32 %v2096, %v8463
  %v8923 = vmul.f32 %v2096, %v8464
  %v8924 = vmul.f32 %v2096, %v8465
  %v8925 = vmul.f32 %v2100, %v8462
  %v8926 = vmul.f32 %v2100, %v8463
  %v8927 = vmul.f32 %v2100, %v8464
  %v8928 = vmul.f32 %v2100, %v8465
  %v8929 = vmul.f32 %v2104, %v8462
  %v8930 = vmul.f32 %v2104, %v8463
  %v8931 = vmul.f32 %v2104, %v8464
  %v8932 = vmul.f32 %v2104, %v8465
  %v8933 = vmul.f32 %v2108, %v8462
  %v8934 = vmul.f32 %v2108, %v8463
  %v8935 = vmul.f32 %v2108, %v8464
  %v8936 = vmul.f32 %v2108, %v8465
  %v8937 = vmul.f32 %v2112, %v8462
  %v8938 = vmul.f32 %v2112, %v8463
  %v8939 = vmul.f32 %v2112, %v8464
  %v8940 = vmul.f32 %v2112, %v8465
  %v8941 = vmul.f32 %v2116, %v8462
  %v8942 = vmul.f32 %v2116, %v8463
  %v8943 = vmul.f32 %v2116, %v8464
  %v8944 = vmul.f32 %v2116, %v8465
  %v8945 = vmul.f32 %v2120, %v8462
  %v8946 = vmul.f32 %v2120, %v8463
  %v8947 = vmul.f32 %v2120, %v8464
  %v8948 = vmul.f32 %v2120, %v8465
  %v8949 = vmul.f32 %v2124, %v8462
  %v8950 = vmul.f32 %v2124, %v8463
  %v8951 = vmul.f32 %v2124, %v8464
  %v8952 = vmul.f32 %v2124, %v8465
  %v8953 = vmul.f32 %v2128, %v8462
  %v8954 = vmul.f32 %v2128, %v8463
  %v8955 = vmul.f32 %v2128, %v8464
  %v8956 = vmul.f32 %v2128, %v8465
  %v8957 = vmul.f32 %v2132, %v8462
  %v8958 = vmul.f32 %v2132, %v8463
  %v8959 = vmul.f32 %v2132, %v8464
  %v8960 = vmul.f32 %v2132, %v8465
  %v8961 = vmul.f32 %v2136, %v8462
  %v8962 = vmul.f32 %v2136, %v8463
  %v8963 = vmul.f32 %v2136, %v8464
  %v8964 = vmul.f32 %v2136, %v8465
  %v8965 = vmul.f32 %v2140, %v8462
  %v8966 = vmul.f32 %v2140, %v8463
  %v8967 = vmul.f32 %v2140, %v8464
  %v8968 = vmul.f32 %v2140, %v8465
  %v8969 = vmul.f32 %v2144, %v8462
  %v8970 = vmul.f32 %v2144, %v8463
  %v8971 = vmul.f32 %v2144, %v8464
  %v8972 = vmul.f32 %v2144, %v8465
  %v8973 = vmul.f32 %v2148, %v8462
  %v8974 = vmul.f32 %v2148, %v8463
  %v8975 = vmul.f32 %v2148, %v8464
  %v8976 = vmul.f32 %v2148, %v8465
  %v8977 = vadd.f32 %v8849, %v8913
  %v8978 = vadd.f32 %v8850, %v8914
  %v8979 = vadd.f32 %v8851, %v8915
  %v8980 = vadd.f32 %v8852, %v8916
  %v8981 = vadd.f32 %v8853, %v8917
  %v8982 = vadd.f32 %v8854, %v8918
  %v8983 = vadd.f32 %v8855, %v8919
  %v8984 = vadd.f32 %v8856, %v8920
  %v8985 = vadd.f32 %v8857, %v8921
  %v8986 = vadd.f32 %v8858, %v8922
  %v8987 = vadd.f32 %v8859, %v8923
  %v8988 = vadd.f32 %v8860, %v8924
  %v8989 = vadd.f32 %v8861, %v8925
  %v8990 = vadd.f32 %v8862, %v8926
  %v8991 = vadd.f32 %v8863, %v8927
  %v8992 = vadd.f32 %v8864, %v8928
  %v8993 = vadd.f32 %v8865, %v8929
  %v8994 = vadd.f32 %v8866, %v8930
  %v8995 = vadd.f32 %v8867, %v8931
  %v8996 = vadd.f32 %v8868, %v8932
  %v8997 = vadd.f32 %v8869, %v8933
  %v8998 = vadd.f32 %v8870, %v8934
  %v8999 = vadd.f32 %v8871, %v8935
  %v9000 = vadd.f32 %v8872, %v8936
  %v9001 = vadd.f32 %v8873, %v8937
  %v9002 = vadd.f32 %v8874, %v8938
  %v9003 = vadd.f32 %v8875, %v8939
  %v9004 = vadd.f32 %v8876, %v8940
  %v9005 = vadd.f32 %v8877, %v8941
  %v9006 = vadd.f32 %v8878, %v8942
  %v9007 = vadd.f32 %v8879, %v8943
  %v9008 = vadd.f32 %v8880, %v8944
  %v9009 = vadd.f32 %v8881, %v8945
  %v9010 = vadd.f32 %v8882, %v8946
  %v9011 = vadd.f32 %v8883, %v8947
  %v9012 = vadd.f32 %v8884, %v8948
  %v9013 = vadd.f32 %v8885, %v8949
  %v9014 = vadd.f32 %v8886, %v8950
  %v9015 = vadd.f32 %v8887, %v8951
  %v9016 = vadd.f32 %v8888, %v8952
  %v9017 = vadd.f32 %v8889, %v8953
  %v9018 = vadd.f32 %v8890, %v8954
  %v9019 = vadd.f32 %v8891, %v8955
  %v9020 = vadd.f32 %v8892, %v8956
  %v9021 = vadd.f32 %v8893, %v8957
  %v9022 = vadd.f32 %v8894, %v8958
  %v9023 = vadd.f32 %v8895, %v8959
  %v9024 = vadd.f32 %v8896, %v8960
  %v9025 = vadd.f32 %v8897, %v8961
  %v9026 = vadd.f32 %v8898, %v8962
  %v9027 = vadd.f32 %v8899, %v8963
  %v9028 = vadd.f32 %v8900, %v8964
  %v9029 = vadd.f32 %v8901, %v8965
  %v9030 = vadd.f32 %v8902, %v8966
  %v9031 = vadd.f32 %v8903, %v8967
  %v9032 = vadd.f32 %v8904, %v8968
  %v9033 = vadd.f32 %v8905, %v8969
  %v9034 = vadd.f32 %v8906, %v8970
  %v9035 = vadd.f32 %v8907, %v8971
  %v9036 = vadd.f32 %v8908, %v8972
  %v9037 = vadd.f32 %v8909, %v8973
  %v9038 = vadd.f32 %v8910, %v8974
  %v9039 = vadd.f32 %v8911, %v8975
  %v9040 = vadd.f32 %v8912, %v8976
  %v9041 = vmax.f32 %v8977, 0.0
  %v9042 = vmax.f32 %v8978, 0.0
  %v9043 = vmax.f32 %v8979, 0.0
  %v9044 = vmax.f32 %v8980, 0.0
  %v9045 = vmax.f32 %v8981, 0.0
  %v9046 = vmax.f32 %v8982, 0.0
  %v9047 = vmax.f32 %v8983, 0.0
  %v9048 = vmax.f32 %v8984, 0.0
  %v9049 = vmax.f32 %v8985, 0.0
  %v9050 = vmax.f32 %v8986, 0.0
  %v9051 = vmax.f32 %v8987, 0.0
  %v9052 = vmax.f32 %v8988, 0.0
  %v9053 = vmax.f32 %v8989, 0.0
  %v9054 = vmax.f32 %v8990, 0.0
  %v9055 = vmax.f32 %v8991, 0.0
  %v9056 = vmax.f32 %v8992, 0.0
  %v9057 = vmax.f32 %v8993, 0.0
  %v9058 = vmax.f32 %v8994, 0.0
  %v9059 = vmax.f32 %v8995, 0.0
  %v9060 = vmax.f32 %v8996, 0.0
  %v9061 = vmax.f32 %v8997, 0.0
  %v9062 = vmax.f32 %v8998, 0.0
  %v9063 = vmax.f32 %v8999, 0.0
  %v9064 = vmax.f32 %v9000, 0.0
  %v9065 = vmax.f32 %v9001, 0.0
  %v9066 = vmax.f32 %v9002, 0.0
  %v9067 = vmax.f32 %v9003, 0.0
  %v9068 = vmax.f32 %v9004, 0.0
  %v9069 = vmax.f32 %v9005, 0.0
  %v9070 = vmax.f32 %v9006, 0.0
  %v9071 = vmax.f32 %v9007, 0.0
  %v9072 = vmax.f32 %v9008, 0.0
  %v9073 = vmax.f32 %v9009, 0.0
  %v9074 = vmax.f32 %v9010, 0.0
  %v9075 = vmax.f32 %v9011, 0.0
  %v9076 = vmax.f32 %v9012, 0.0
  %v9077 = vmax.f32 %v9013, 0.0
  %v9078 = vmax.f32 %v9014, 0.0
  %v9079 = vmax.f32 %v9015, 0.0
  %v9080 = vmax.f32 %v9016, 0.0
  %v9081 = vmax.f32 %v9017, 0.0
  %v9082 = vmax.f32 %v9018, 0.0
  %v9083 = vmax.f32 %v9019, 0.0
  %v9084 = vmax.f32 %v9020, 0.0
  %v9085 = vmax.f32 %v9021, 0.0
  %v9086 = vmax.f32 %v9022, 0.0
  %v9087 = vmax.f32 %v9023, 0.0
  %v9088 = vmax.f32 %v9024, 0.0
  %v9089 = vmax.f32 %v9025, 0.0
  %v9090 = vmax.f32 %v9026, 0.0
  %v9091 = vmax.f32 %v9027, 0.0
  %v9092 = vmax.f32 %v9028, 0.0
  %v9093 = vmax.f32 %v9029, 0.0
  %v9094 = vmax.f32 %v9030, 0.0
  %v9095 = vmax.f32 %v9031, 0.0
  %v9096 = vmax.f32 %v9032, 0.0
  %v9097 = vmax.f32 %v9033, 0.0
  %v9098 = vmax.f32 %v9034, 0.0
  %v9099 = vmax.f32 %v9035, 0.0
  %v9100 = vmax.f32 %v9036, 0.0
  %v9101 = vmax.f32 %v9037, 0.0
  %v9102 = vmax.f32 %v9038, 0.0
  %v9103 = vmax.f32 %v9039, 0.0
  %v9104 = vmax.f32 %v9040, 0.0
  %v9105 = vmul.f32 %v9041, %v8518
  %v9106 = vmul.f32 %v9042, %v8519
  %v9107 = vmul.f32 %v9043, %v8520
  %v9108 = vmul.f32 %v9044, %v8521
  %v9109 = vmul.f32 %v9045, %v8518
  %v9110 = vmul.f32 %v9046, %v8519
  %v9111 = vmul.f32 %v9047, %v8520
  %v9112 = vmul.f32 %v9048, %v8521
  %v9113 = vmul.f32 %v9049, %v8518
  %v9114 = vmul.f32 %v9050, %v8519
  %v9115 = vmul.f32 %v9051, %v8520
  %v9116 = vmul.f32 %v9052, %v8521
  %v9117 = vmul.f32 %v9053, %v8518
  %v9118 = vmul.f32 %v9054, %v8519
  %v9119 = vmul.f32 %v9055, %v8520
  %v9120 = vmul.f32 %v9056, %v8521
  %v9121 = vmul.f32 %v9057, %v8518
  %v9122 = vmul.f32 %v9058, %v8519
  %v9123 = vmul.f32 %v9059, %v8520
  %v9124 = vmul.f32 %v9060, %v8521
  %v9125 = vmul.f32 %v9061, %v8518
  %v9126 = vmul.f32 %v9062, %v8519
  %v9127 = vmul.f32 %v9063, %v8520
  %v9128 = vmul.f32 %v9064, %v8521
  %v9129 = vmul.f32 %v9065, %v8518
  %v9130 = vmul.f32 %v9066, %v8519
  %v9131 = vmul.f32 %v9067, %v8520
  %v9132 = vmul.f32 %v9068, %v8521
  %v9133 = vmul.f32 %v9069, %v8518
  %v9134 = vmul.f32 %v9070, %v8519
  %v9135 = vmul.f32 %v9071, %v8520
  %v9136 = vmul.f32 %v9072, %v8521
  %v9137 = vmul.f32 %v9073, %v8518
  %v9138 = vmul.f32 %v9074, %v8519
  %v9139 = vmul.f32 %v9075, %v8520
  %v9140 = vmul.f32 %v9076, %v8521
  %v9141 = vmul.f32 %v9077, %v8518
  %v9142 = vmul.f32 %v9078, %v8519
  %v9143 = vmul.f32 %v9079, %v8520
  %v9144 = vmul.f32 %v9080, %v8521
  %v9145 = vmul.f32 %v9081, %v8518
  %v9146 = vmul.f32 %v9082, %v8519
  %v9147 = vmul.f32 %v9083, %v8520
  %v9148 = vmul.f32 %v9084, %v8521
  %v9149 = vmul.f32 %v9085, %v8518
  %v9150 = vmul.f32 %v9086, %v8519
  %v9151 = vmul.f32 %v9087, %v8520
  %v9152 = vmul.f32 %v9088, %v8521
  %v9153 = vmul.f32 %v9089, %v8518
  %v9154 = vmul.f32 %v9090, %v8519
  %v9155 = vmul.f32 %v9091, %v8520
  %v9156 = vmul.f32 %v9092, %v8521
  %v9157 = vmul.f32 %v9093, %v8518
  %v9158 = vmul.f32 %v9094, %v8519
  %v9159 = vmul.f32 %v9095, %v8520
  %v9160 = vmul.f32 %v9096, %v8521
  %v9161 = vmul.f32 %v9097, %v8518
  %v9162 = vmul.f32 %v9098, %v8519
  %v9163 = vmul.f32 %v9099, %v8520
  %v9164 = vmul.f32 %v9100, %v8521
  %v9165 = vmul.f32 %v9101, %v8518
  %v9166 = vmul.f32 %v9102, %v8519
  %v9167 = vmul.f32 %v9103, %v8520
  %v9168 = vmul.f32 %v9104, %v8521
  %v9169 = vsel %vm517, %v9105, 0.0
  %v9170 = vsel %vm517, %v9106, 0.0
  %v9171 = vadd.f32 %v9169, %v9170
  %v9172 = vsel %vm517, %v9107, 0.0
  %v9173 = vadd.f32 %v9171, %v9172
  %v9174 = vsel %vm517, %v9108, 0.0
  %v9175 = vadd.f32 %v9173, %v9174
  %v9176 = vrot.slane %v9175, 4
  %v9177 = vadd.f32 %v9175, %v9176
  %v9178 = vrot.slane %v9177, 2
  %v9179 = vadd.f32 %v9177, %v9178
  %v9180 = vrot.slane %v9179, 1
  %v9181 = vadd.f32 %v9179, %v9180
  %v9182 = vsel %vm517, %v9109, 0.0
  %v9183 = vsel %vm517, %v9110, 0.0
  %v9184 = vadd.f32 %v9182, %v9183
  %v9185 = vsel %vm517, %v9111, 0.0
  %v9186 = vadd.f32 %v9184, %v9185
  %v9187 = vsel %vm517, %v9112, 0.0
  %v9188 = vadd.f32 %v9186, %v9187
  %v9189 = vrot.slane %v9188, 4
  %v9190 = vadd.f32 %v9188, %v9189
  %v9191 = vrot.slane %v9190, 2
  %v9192 = vadd.f32 %v9190, %v9191
  %v9193 = vrot.slane %v9192, 1
  %v9194 = vadd.f32 %v9192, %v9193
  %v9195 = vsel %vm517, %v9113, 0.0
  %v9196 = vsel %vm517, %v9114, 0.0
  %v9197 = vadd.f32 %v9195, %v9196
  %v9198 = vsel %vm517, %v9115, 0.0
  %v9199 = vadd.f32 %v9197, %v9198
  %v9200 = vsel %vm517, %v9116, 0.0
  %v9201 = vadd.f32 %v9199, %v9200
  %v9202 = vrot.slane %v9201, 4
  %v9203 = vadd.f32 %v9201, %v9202
  %v9204 = vrot.slane %v9203, 2
  %v9205 = vadd.f32 %v9203, %v9204
  %v9206 = vrot.slane %v9205, 1
  %v9207 = vadd.f32 %v9205, %v9206
  %v9208 = vsel %vm517, %v9117, 0.0
  %v9209 = vsel %vm517, %v9118, 0.0
  %v9210 = vadd.f32 %v9208, %v9209
  %v9211 = vsel %vm517, %v9119, 0.0
  %v9212 = vadd.f32 %v9210, %v9211
  %v9213 = vsel %vm517, %v9120, 0.0
  %v9214 = vadd.f32 %v9212, %v9213
  %v9215 = vrot.slane %v9214, 4
  %v9216 = vadd.f32 %v9214, %v9215
  %v9217 = vrot.slane %v9216, 2
  %v9218 = vadd.f32 %v9216, %v9217
  %v9219 = vrot.slane %v9218, 1
  %v9220 = vadd.f32 %v9218, %v9219
  %v9221 = vsel %vm517, %v9121, 0.0
  %v9222 = vsel %vm517, %v9122, 0.0
  %v9223 = vadd.f32 %v9221, %v9222
  %v9224 = vsel %vm517, %v9123, 0.0
  %v9225 = vadd.f32 %v9223, %v9224
  %v9226 = vsel %vm517, %v9124, 0.0
  %v9227 = vadd.f32 %v9225, %v9226
  %v9228 = vrot.slane %v9227, 4
  %v9229 = vadd.f32 %v9227, %v9228
  %v9230 = vrot.slane %v9229, 2
  %v9231 = vadd.f32 %v9229, %v9230
  %v9232 = vrot.slane %v9231, 1
  %v9233 = vadd.f32 %v9231, %v9232
  %v9234 = vsel %vm517, %v9125, 0.0
  %v9235 = vsel %vm517, %v9126, 0.0
  %v9236 = vadd.f32 %v9234, %v9235
  %v9237 = vsel %vm517, %v9127, 0.0
  %v9238 = vadd.f32 %v9236, %v9237
  %v9239 = vsel %vm517, %v9128, 0.0
  %v9240 = vadd.f32 %v9238, %v9239
  %v9241 = vrot.slane %v9240, 4
  %v9242 = vadd.f32 %v9240, %v9241
  %v9243 = vrot.slane %v9242, 2
  %v9244 = vadd.f32 %v9242, %v9243
  %v9245 = vrot.slane %v9244, 1
  %v9246 = vadd.f32 %v9244, %v9245
  %v9247 = vsel %vm517, %v9129, 0.0
  %v9248 = vsel %vm517, %v9130, 0.0
  %v9249 = vadd.f32 %v9247, %v9248
  %v9250 = vsel %vm517, %v9131, 0.0
  %v9251 = vadd.f32 %v9249, %v9250
  %v9252 = vsel %vm517, %v9132, 0.0
  %v9253 = vadd.f32 %v9251, %v9252
  %v9254 = vrot.slane %v9253, 4
  %v9255 = vadd.f32 %v9253, %v9254
  %v9256 = vrot.slane %v9255, 2
  %v9257 = vadd.f32 %v9255, %v9256
  %v9258 = vrot.slane %v9257, 1
  %v9259 = vadd.f32 %v9257, %v9258
  %v9260 = vsel %vm517, %v9133, 0.0
  %v9261 = vsel %vm517, %v9134, 0.0
  %v9262 = vadd.f32 %v9260, %v9261
  %v9263 = vsel %vm517, %v9135, 0.0
  %v9264 = vadd.f32 %v9262, %v9263
  %v9265 = vsel %vm517, %v9136, 0.0
  %v9266 = vadd.f32 %v9264, %v9265
  %v9267 = vrot.slane %v9266, 4
  %v9268 = vadd.f32 %v9266, %v9267
  %v9269 = vrot.slane %v9268, 2
  %v9270 = vadd.f32 %v9268, %v9269
  %v9271 = vrot.slane %v9270, 1
  %v9272 = vadd.f32 %v9270, %v9271
  %v9273 = vsel %vm517, %v9137, 0.0
  %v9274 = vsel %vm517, %v9138, 0.0
  %v9275 = vadd.f32 %v9273, %v9274
  %v9276 = vsel %vm517, %v9139, 0.0
  %v9277 = vadd.f32 %v9275, %v9276
  %v9278 = vsel %vm517, %v9140, 0.0
  %v9279 = vadd.f32 %v9277, %v9278
  %v9280 = vrot.slane %v9279, 4
  %v9281 = vadd.f32 %v9279, %v9280
  %v9282 = vrot.slane %v9281, 2
  %v9283 = vadd.f32 %v9281, %v9282
  %v9284 = vrot.slane %v9283, 1
  %v9285 = vadd.f32 %v9283, %v9284
  %v9286 = vsel %vm517, %v9141, 0.0
  %v9287 = vsel %vm517, %v9142, 0.0
  %v9288 = vadd.f32 %v9286, %v9287
  %v9289 = vsel %vm517, %v9143, 0.0
  %v9290 = vadd.f32 %v9288, %v9289
  %v9291 = vsel %vm517, %v9144, 0.0
  %v9292 = vadd.f32 %v9290, %v9291
  %v9293 = vrot.slane %v9292, 4
  %v9294 = vadd.f32 %v9292, %v9293
  %v9295 = vrot.slane %v9294, 2
  %v9296 = vadd.f32 %v9294, %v9295
  %v9297 = vrot.slane %v9296, 1
  %v9298 = vadd.f32 %v9296, %v9297
  %v9299 = vsel %vm517, %v9145, 0.0
  %v9300 = vsel %vm517, %v9146, 0.0
  %v9301 = vadd.f32 %v9299, %v9300
  %v9302 = vsel %vm517, %v9147, 0.0
  %v9303 = vadd.f32 %v9301, %v9302
  %v9304 = vsel %vm517, %v9148, 0.0
  %v9305 = vadd.f32 %v9303, %v9304
  %v9306 = vrot.slane %v9305, 4
  %v9307 = vadd.f32 %v9305, %v9306
  %v9308 = vrot.slane %v9307, 2
  %v9309 = vadd.f32 %v9307, %v9308
  %v9310 = vrot.slane %v9309, 1
  %v9311 = vadd.f32 %v9309, %v9310
  %v9312 = vsel %vm517, %v9149, 0.0
  %v9313 = vsel %vm517, %v9150, 0.0
  %v9314 = vadd.f32 %v9312, %v9313
  %v9315 = vsel %vm517, %v9151, 0.0
  %v9316 = vadd.f32 %v9314, %v9315
  %v9317 = vsel %vm517, %v9152, 0.0
  %v9318 = vadd.f32 %v9316, %v9317
  %v9319 = vrot.slane %v9318, 4
  %v9320 = vadd.f32 %v9318, %v9319
  %v9321 = vrot.slane %v9320, 2
  %v9322 = vadd.f32 %v9320, %v9321
  %v9323 = vrot.slane %v9322, 1
  %v9324 = vadd.f32 %v9322, %v9323
  %v9325 = vsel %vm517, %v9153, 0.0
  %v9326 = vsel %vm517, %v9154, 0.0
  %v9327 = vadd.f32 %v9325, %v9326
  %v9328 = vsel %vm517, %v9155, 0.0
  %v9329 = vadd.f32 %v9327, %v9328
  %v9330 = vsel %vm517, %v9156, 0.0
  %v9331 = vadd.f32 %v9329, %v9330
  %v9332 = vrot.slane %v9331, 4
  %v9333 = vadd.f32 %v9331, %v9332
  %v9334 = vrot.slane %v9333, 2
  %v9335 = vadd.f32 %v9333, %v9334
  %v9336 = vrot.slane %v9335, 1
  %v9337 = vadd.f32 %v9335, %v9336
  %v9338 = vsel %vm517, %v9157, 0.0
  %v9339 = vsel %vm517, %v9158, 0.0
  %v9340 = vadd.f32 %v9338, %v9339
  %v9341 = vsel %vm517, %v9159, 0.0
  %v9342 = vadd.f32 %v9340, %v9341
  %v9343 = vsel %vm517, %v9160, 0.0
  %v9344 = vadd.f32 %v9342, %v9343
  %v9345 = vrot.slane %v9344, 4
  %v9346 = vadd.f32 %v9344, %v9345
  %v9347 = vrot.slane %v9346, 2
  %v9348 = vadd.f32 %v9346, %v9347
  %v9349 = vrot.slane %v9348, 1
  %v9350 = vadd.f32 %v9348, %v9349
  %v9351 = vsel %vm517, %v9161, 0.0
  %v9352 = vsel %vm517, %v9162, 0.0
  %v9353 = vadd.f32 %v9351, %v9352
  %v9354 = vsel %vm517, %v9163, 0.0
  %v9355 = vadd.f32 %v9353, %v9354
  %v9356 = vsel %vm517, %v9164, 0.0
  %v9357 = vadd.f32 %v9355, %v9356
  %v9358 = vrot.slane %v9357, 4
  %v9359 = vadd.f32 %v9357, %v9358
  %v9360 = vrot.slane %v9359, 2
  %v9361 = vadd.f32 %v9359, %v9360
  %v9362 = vrot.slane %v9361, 1
  %v9363 = vadd.f32 %v9361, %v9362
  %v9364 = vsel %vm517, %v9165, 0.0
  %v9365 = vsel %vm517, %v9166, 0.0
  %v9366 = vadd.f32 %v9364, %v9365
  %v9367 = vsel %vm517, %v9167, 0.0
  %v9368 = vadd.f32 %v9366, %v9367
  %v9369 = vsel %vm517, %v9168, 0.0
  %v9370 = vadd.f32 %v9368, %v9369
  %v9371 = vrot.slane %v9370, 4
  %v9372 = vadd.f32 %v9370, %v9371
  %v9373 = vrot.slane %v9372, 2
  %v9374 = vadd.f32 %v9372, %v9373
  %v9375 = vrot.slane %v9374, 1
  %v9376 = vadd.f32 %v9374, %v9375
  %v9377 = vadd.f32 %v9181, %v8528
  %v9378 = vadd.f32 %v9194, %v8528
  %v9379 = vadd.f32 %v9207, %v8528
  %v9380 = vadd.f32 %v9220, %v8528
  %v9381 = vadd.f32 %v9233, %v8528
  %v9382 = vadd.f32 %v9246, %v8528
  %v9383 = vadd.f32 %v9259, %v8528
  %v9384 = vadd.f32 %v9272, %v8528
  %v9385 = vadd.f32 %v9285, %v8528
  %v9386 = vadd.f32 %v9298, %v8528
  %v9387 = vadd.f32 %v9311, %v8528
  %v9388 = vadd.f32 %v9324, %v8528
  %v9389 = vadd.f32 %v9337, %v8528
  %v9390 = vadd.f32 %v9350, %v8528
  %v9391 = vadd.f32 %v9363, %v8528
  %v9392 = vadd.f32 %v9376, %v8528
  %v9393 = vsub.f32 %v9377, %v2645
  %v9394 = vsub.f32 %v9378, %v2646
  %v9395 = vsub.f32 %v9379, %v2647
  %v9396 = vsub.f32 %v9380, %v2648
  %v9397 = vsub.f32 %v9381, %v2649
  %v9398 = vsub.f32 %v9382, %v2650
  %v9399 = vsub.f32 %v9383, %v2651
  %v9400 = vsub.f32 %v9384, %v2652
  %v9401 = vsub.f32 %v9385, %v2653
  %v9402 = vsub.f32 %v9386, %v2654
  %v9403 = vsub.f32 %v9387, %v2655
  %v9404 = vsub.f32 %v9388, %v2656
  %v9405 = vsub.f32 %v9389, %v2657
  %v9406 = vsub.f32 %v9390, %v2658
  %v9407 = vsub.f32 %v9391, %v2659
  %v9408 = vsub.f32 %v9392, %v2660
  %v9409 = vmul.f32 %v9393, %v9393
  %v9410 = vmul.f32 %v9394, %v9394
  %v9411 = vmul.f32 %v9395, %v9395
  %v9412 = vmul.f32 %v9396, %v9396
  %v9413 = vmul.f32 %v9397, %v9397
  %v9414 = vmul.f32 %v9398, %v9398
  %v9415 = vmul.f32 %v9399, %v9399
  %v9416 = vmul.f32 %v9400, %v9400
  %v9417 = vmul.f32 %v9401, %v9401
  %v9418 = vmul.f32 %v9402, %v9402
  %v9419 = vmul.f32 %v9403, %v9403
  %v9420 = vmul.f32 %v9404, %v9404
  %v9421 = vmul.f32 %v9405, %v9405
  %v9422 = vmul.f32 %v9406, %v9406
  %v9423 = vmul.f32 %v9407, %v9407
  %v9424 = vmul.f32 %v9408, %v9408
  %v9425 = vsel %vm794, %v9409, 0.0
  %v9426 = vsel %vm794, %v9410, 0.0
  %v9427 = vadd.f32 %v9425, %v9426
  %v9428 = vsel %vm794, %v9411, 0.0
  %v9429 = vadd.f32 %v9427, %v9428
  %v9430 = vsel %vm794, %v9412, 0.0
  %v9431 = vadd.f32 %v9429, %v9430
  %v9432 = vsel %vm794, %v9413, 0.0
  %v9433 = vadd.f32 %v9431, %v9432
  %v9434 = vsel %vm794, %v9414, 0.0
  %v9435 = vadd.f32 %v9433, %v9434
  %v9436 = vsel %vm794, %v9415, 0.0
  %v9437 = vadd.f32 %v9435, %v9436
  %v9438 = vsel %vm794, %v9416, 0.0
  %v9439 = vadd.f32 %v9437, %v9438
  %v9440 = vsel %vm794, %v9417, 0.0
  %v9441 = vadd.f32 %v9439, %v9440
  %v9442 = vsel %vm794, %v9418, 0.0
  %v9443 = vadd.f32 %v9441, %v9442
  %v9444 = vsel %vm794, %v9419, 0.0
  %v9445 = vadd.f32 %v9443, %v9444
  %v9446 = vsel %vm794, %v9420, 0.0
  %v9447 = vadd.f32 %v9445, %v9446
  %v9448 = vsel %vm794, %v9421, 0.0
  %v9449 = vadd.f32 %v9447, %v9448
  %v9450 = vsel %vm794, %v9422, 0.0
  %v9451 = vadd.f32 %v9449, %v9450
  %v9452 = vsel %vm794, %v9423, 0.0
  %v9453 = vadd.f32 %v9451, %v9452
  %v9454 = vsel %vm794, %v9424, 0.0
  %v9455 = vadd.f32 %v9453, %v9454
  %v9456 = vmul.f32 %v9455, 0.0625
  %v9458 = vrot.slane %v9456, 7
  %vm9460 = vcmask 1040384
  %v9461 = vsel %vm9460, %v2740, %v9458
  %vm9462 = vcmask 58368
  %9463 = vst.msk [vmem:[%s3] sm:$0x3] %vm9462, %v9461
  // Predicated region
  $region14: #{meta_learner_forward.1} parent=0 // pred_check
    _
  $region15: #{meta_learner_forward.1} parent=0 // pred_check_branch
    %9465 = sbr.rel (0) target = $region17
  $region16: #{meta_learner_forward.1} parent=0 // pred_region
    _
  $region17: #{meta_learner_forward.1} parent=0 // pred_fallthru
    _
  // Predicated region
  $region18: #{meta_learner_forward.1} parent=0 // pred_check
    _
  $region19: #{meta_learner_forward.1} parent=0 // pred_check_branch
    %9467 = sbr.rel (0) target = $region21
  $region20: #{meta_learner_forward.1} parent=0 // pred_region
    _
  $region21: #{meta_learner_forward.1} parent=0 // pred_fallthru
    _

</llo_original>
